<compile_context>
chip_gen: v6e
topology: v6e:2x2x1
jax: 0.10.0
libtpu: 0.0.40
codegen_flags: <defaults>
</compile_context>

<pallas_src>
import functools
import math

import jax
import jax.numpy as jnp
from jax.experimental import pallas as pl
from jax.experimental.pallas import tpu as pltpu


# ---------------------------------------------------------------------------
# Kernel
# ---------------------------------------------------------------------------
def _lstm_cell_kernel(x_ref, h_ref, wx_ref, wh_ref, b_ref, c_ref,
                      h_out_ref, c_out_ref, *, strict_f32):
    tH = c_ref.shape[-1]
    cdt = wx_ref.dtype

    # HIGHEST only when an exact f32 matmul is requested; bf16 weights always
    # take the native single-pass MXU path.
    prec = (jax.lax.Precision.HIGHEST
            if (cdt == jnp.float32 and strict_f32)
            else jax.lax.Precision.DEFAULT)

    # Two MXU pushes summed into one f32 accumulator (no x/h concat needed).
    gates = (jnp.dot(x_ref[...].astype(cdt), wx_ref[...],
                     preferred_element_type=jnp.float32, precision=prec)
             + jnp.dot(h_ref[...].astype(cdt), wh_ref[...],
                       preferred_element_type=jnp.float32, precision=prec)
             + b_ref[...])

    zi = gates[:, 0 * tH:1 * tH]
    zf = gates[:, 1 * tH:2 * tH]
    zg = gates[:, 2 * tH:3 * tH]
    zo = gates[:, 3 * tH:4 * tH]

    # sigmoid(z) = 0.5*tanh(0.5*z) + 0.5  -> one EUP push per element.
    i = 0.5 * jnp.tanh(0.5 * zi) + 0.5
    f = 0.5 * jnp.tanh(0.5 * zf) + 0.5
    o = 0.5 * jnp.tanh(0.5 * zo) + 0.5
    g = jnp.tanh(zg)

    c_new = f * c_ref[...].astype(jnp.float32) + i * g
    h_new = o * jnp.tanh(c_new)

    c_out_ref[...] = c_new.astype(c_out_ref.dtype)
    h_out_ref[...] = h_new.astype(h_out_ref.dtype)


# ---------------------------------------------------------------------------
# Per-generation sizing helpers
# ---------------------------------------------------------------------------
def _vmem_capacity_bytes():
    cap = 64 * 1024 * 1024          # conservative fallback (v7x per-TC VMEM)
    try:
        info = pltpu.get_tpu_info()
        cap = getattr(info, "vmem_capacity_bytes", cap) or cap
    except Exception:
        pass
    return int(cap)


def _default_vmem_budget():
    # Leave ~40% of physical VMEM as headroom (double-buffering slack +
    # compiler-internal scratch).  ~38 MiB on v7x, ~76 MiB on v5e/v6e.
    return min(int(_vmem_capacity_bytes() * 0.6), 96 * 1024 * 1024)


def _step_footprint_bytes(input_size, hidden_size, batch, tile_h, weight_bytes):
    # Streamed (double-buffered) blocks per grid step + VMEM-resident x/h0.
    streamed = ((input_size + hidden_size) * 4 * tile_h * weight_bytes   # wx+wh
                + 4 * tile_h * 4                                          # bias
                + batch * tile_h * 4 * 3)                 # c0 tile + h/c outs
    resident = batch * (input_size + hidden_size) * 4
    return 2 * streamed + resident


def choose_tile_h(input_size, hidden_size, batch, weight_dtype,
                  vmem_budget_bytes=None):
    """Largest lane-dense tile_h (multiple of 128 dividing H) that fits VMEM."""
    H = hidden_size
    if vmem_budget_bytes is None:
        vmem_budget_bytes = _default_vmem_budget()
    if H % 128 != 0:
        return H                      # single tile; (8,128) rule satisfied by
                                      # block == full array dim
    wbytes = jnp.dtype(weight_dtype).itemsize
    candidates = [th for th in range(128, H + 1, 128)
                  if H % th == 0 and
                  _step_footprint_bytes(input_size, H, batch, th, wbytes)
                  <= vmem_budget_bytes]
    if not candidates:
        return 128
    tile_h = max(candidates)

    # Prefer an even tile count (so the "parallel" grid axis can split across
    # v7x's 2 TensorCores) when there is real weight traffic to share.
    n_tiles = H // tile_h
    total_weight_bytes = (input_size + H) * 4 * H * wbytes
    if n_tiles % 2 == 1 and n_tiles > 0 and total_weight_bytes > (8 << 20):
        half = tile_h // 2
        if half >= 128 and half % 128 == 0 and H % half == 0:
            tile_h = half
    return tile_h


# ---------------------------------------------------------------------------
# Wrapper
# ---------------------------------------------------------------------------
def lstm_cell_pallas(x, h0, c0, wx_tiled, wh_tiled, b_tiled, *,
                     strict_f32=True):
    """Single LSTM-cell step. Returns (h_new, c_new); c_new is always f32."""
    B, I = x.shape
    n_tiles, I_w, four_th = wx_tiled.shape
    assert I_w == I
    tile_h = four_th // 4
    H = n_tiles * tile_h
    assert h0.shape == (B, H) and c0.shape == (B, H)
    assert wh_tiled.shape == (n_tiles, H, 4 * tile_h)
    assert b_tiled.shape == (n_tiles, 1, 4 * tile_h)

    # vmem_limit derived from the actual block sizes (+ headroom), capped well
    # below physical VMEM -- never hardcoded to the device maximum.
    wbytes = jnp.dtype(wx_tiled.dtype).itemsize
    needed = _step_footprint_bytes(I, H, B, tile_h, wbytes)
    vmem_limit = min(max(32 << 20, needed + (8 << 20)),
                     int(_vmem_capacity_bytes() * 0.8))

    kernel = functools.partial(_lstm_cell_kernel, strict_f32=strict_f32)

    return pl.pallas_call(
        kernel,
        out_shape=(
            jax.ShapeDtypeStruct((B, H), x.dtype),       # h
            jax.ShapeDtypeStruct((B, H), jnp.float32),   # c (master state f32)
        ),
        grid_spec=pltpu.PrefetchScalarGridSpec(
            num_scalar_prefetch=0,
            grid=(n_tiles,),
            in_specs=[
                # x and h0 stay VMEM-resident across all H-tiles.
                pl.BlockSpec((B, I), lambda j: (0, 0)),
                pl.BlockSpec((B, H), lambda j: (0, 0)),
                # Per-tile contiguous weight slabs (one flat DMA each).
                pl.BlockSpec((pl.Squeezed(), I, 4 * tile_h),
                             lambda j: (j, 0, 0)),
                pl.BlockSpec((pl.Squeezed(), H, 4 * tile_h),
                             lambda j: (j, 0, 0)),
                pl.BlockSpec((pl.Squeezed(), 1, 4 * tile_h),
                             lambda j: (j, 0, 0)),
                # Cell-state tile.
                pl.BlockSpec((B, tile_h), lambda j: (0, j)),
            ],
            out_specs=(
                pl.BlockSpec((B, tile_h), lambda j: (0, j)),
                pl.BlockSpec((B, tile_h), lambda j: (0, j)),
            ),
        ),
        compiler_params=pltpu.CompilerParams(
            # H-tiles are independent -> shard across TCs on v7x.
            dimension_semantics=("parallel",),
            vmem_limit_bytes=int(vmem_limit),
        ),
    )(x, h0, wx_tiled, wh_tiled, b_tiled, c0)


# ---------------------------------------------------------------------------
# Parameter construction / packing (one-time, outside the hot path)
# ---------------------------------------------------------------------------
def init_params(key, input_size, hidden_size, dtype=jnp.float32):
    """Deterministic init mimicking torch.nn.Linear (uniform +/- 1/sqrt(fan_in)).

    Returns the logical fused layout (gate order i | f | g | o):
      wx : [input_size, 4*hidden]
      wh : [hidden,     4*hidden]
      b  : [1, 4*hidden]          (b_x + b_h per gate, since they are summed)
    """
    keys = jax.random.split(key, 16)
    kx = 1.0 / math.sqrt(input_size)
    kh = 1.0 / math.sqrt(hidden_size)

    def lin(kw, kb, fan_in, bound):
        w = jax.random.uniform(kw, (hidden_size, fan_in), dtype, -bound, bound)
        bias = jax.random.uniform(kb, (hidden_size,), dtype, -bound, bound)
        return w, bias

    wii, bii = lin(keys[0], keys[1], input_size, kx)
    wif, bif = lin(keys[2], keys[3], input_size, kx)
    wig, big = lin(keys[4], keys[5], input_size, kx)
    wio, bio = lin(keys[6], keys[7], input_size, kx)
    whi, bhi = lin(keys[8], keys[9], hidden_size, kh)
    whf, bhf = lin(keys[10], keys[11], hidden_size, kh)
    whg, bhg = lin(keys[12], keys[13], hidden_size, kh)
    who, bho = lin(keys[14], keys[15], hidden_size, kh)

    # torch Linear computes x @ W.T, so transpose to [fan_in, hidden].
    wx = jnp.concatenate([wii.T, wif.T, wig.T, wio.T], axis=1)
    wh = jnp.concatenate([whi.T, whf.T, whg.T, who.T], axis=1)
    b = jnp.concatenate([bii + bhi, bif + bhf, big + bhg, bio + bho])[None, :]
    return wx, wh, b


def pack_params(wx, wh, b, tile_h, weight_dtype=jnp.float32):
    """Pack (wx, wh, b) into the tile-major contiguous kernel layout.

    Per tile j the weight slab is [rows, 4*tile_h] contiguous in HBM with
    column layout i | f | g | o (each tile_h lanes).  The dtype cast to the
    compute dtype happens HERE, once, so the kernel never re-reads f32 weights.
    """
    I, four_h = wx.shape
    H = four_h // 4
    assert H % tile_h == 0
    n_tiles = H // tile_h

    def tile_w(w):
        rows = w.shape[0]
        return (w.reshape(rows, 4, n_tiles, tile_h)
                 .transpose(2, 0, 1, 3)
                 .reshape(n_tiles, rows, 4 * tile_h)
                 .astype(weight_dtype))

    wx_t = tile_w(wx)
    wh_t = tile_w(wh)
    b_t = (b.reshape(4, n_tiles, tile_h)
            .transpose(1, 0, 2)
            .reshape(n_tiles, 1, 4 * tile_h)
            .astype(jnp.float32))
    return wx_t, wh_t, b_t


def lstm_cell_ref(x, h0, c0, wx, wh, b):
    """Pure-JAX reference matching the PyTorch forward (strict f32 matmuls)."""
    H = h0.shape[-1]
    hp = jax.lax.Precision.HIGHEST
    gates = (jnp.dot(x, wx, precision=hp)
             + jnp.dot(h0, wh, precision=hp) + b)
    i = jax.nn.sigmoid(gates[:, 0 * H:1 * H])
    f = jax.nn.sigmoid(gates[:, 1 * H:2 * H])
    g = jnp.tanh(gates[:, 2 * H:3 * H])
    o = jax.nn.sigmoid(gates[:, 3 * H:4 * H])
    c = f * c0 + i * g
    h = o * jnp.tanh(c)
    return h, c


# ---------------------------------------------------------------------------
# Demo / self-test
# ---------------------------------------------------------------------------
if __name__ == "__main__":
    B, INPUT_SIZE, HIDDEN = 8, 32, 256

    key = jax.random.PRNGKey(0)
    k_x, k_h, k_c, k_p = jax.random.split(key, 4)

    x = jax.random.normal(k_x, (B, INPUT_SIZE), jnp.float32)
    h0 = jax.random.normal(k_h, (B, HIDDEN), jnp.float32)
    c0 = jax.random.normal(k_c, (B, HIDDEN), jnp.float32)

    wx, wh, b = init_params(k_p, INPUT_SIZE, HIDDEN)
    h_ref, c_ref = lstm_cell_ref(x, h0, c0, wx, wh, b)

    # --- f32 path, VMEM-budget-derived tile (here: single tile, grid=(1,)) ---
    tile_h = choose_tile_h(INPUT_SIZE, HIDDEN, B, jnp.float32)
    wx_t, wh_t, b_t = pack_params(wx, wh, b, tile_h, weight_dtype=jnp.float32)
    h_out, c_out = lstm_cell_pallas(x, h0, c0, wx_t, wh_t, b_t,
                                    strict_f32=True)
    jax.block_until_ready((h_out, c_out))
    assert jnp.allclose(h_out, h_ref, atol=1e-5, rtol=1e-5)
    assert jnp.allclose(c_out, c_ref, atol=1e-5, rtol=1e-5)

    # --- f32 path forced to 2 lane-dense tiles (exercises the parallel grid) -
    wx_t2, wh_t2, b_t2 = pack_params(wx, wh, b, 128, weight_dtype=jnp.float32)
    h2, c2 = lstm_cell_pallas(x, h0, c0, wx_t2, wh_t2, b_t2, strict_f32=True)
    jax.block_until_ready((h2, c2))
    assert jnp.allclose(h2, h_ref, atol=1e-5, rtol=1e-5)
    assert jnp.allclose(c2, c_ref, atol=1e-5, rtol=1e-5)

    # --- bf16 weight path (weights pre-cast once at pack time) --------------
    tile_hb = choose_tile_h(INPUT_SIZE, HIDDEN, B, jnp.bfloat16)
    wx_b, wh_b, b_b = pack_params(wx, wh, b, tile_hb,
                                  weight_dtype=jnp.bfloat16)
    h_bf, c_bf = lstm_cell_pallas(x, h0, c0, wx_b, wh_b, b_b)
    jax.block_until_ready((h_bf, c_bf))
    assert jnp.allclose(h_bf, h_ref, atol=5e-2, rtol=5e-2)
    assert jnp.allclose(c_bf, c_ref, atol=5e-2, rtol=5e-2)

    # --- default (h_0=False, c_0=False) path of the PyTorch module ----------
    hz, cz = lstm_cell_pallas(x, jnp.zeros_like(h0), jnp.zeros_like(c0),
                              wx_t, wh_t, b_t, strict_f32=True)
    jax.block_until_ready((hz, cz))
    hz_ref, cz_ref = lstm_cell_ref(x, jnp.zeros_like(h0), jnp.zeros_like(c0),
                                   wx, wh, b)
    assert jnp.allclose(hz, hz_ref, atol=1e-5, rtol=1e-5)
    assert jnp.allclose(cz, cz_ref, atol=1e-5, rtol=1e-5)

    print("KERNEL_OK")
</pallas_src>

<mosaic_0001>
module attributes {stable_mosaic.version = 11 : i64} {
  func.func @_lstm_cell_kernel(%arg0: i32, %arg1: memref<8x32xf32, #tpu.memory_space<vmem>>, %arg2: memref<8x256xf32, #tpu.memory_space<vmem>>, %arg3: memref<1x32x1024xf32, #tpu.memory_space<vmem>>, %arg4: memref<1x256x1024xf32, #tpu.memory_space<vmem>>, %arg5: memref<1x1x1024xf32, #tpu.memory_space<vmem>>, %arg6: memref<8x256xf32, #tpu.memory_space<vmem>>, %arg7: memref<8x256xf32, #tpu.memory_space<vmem>>, %arg8: memref<8x256xf32, #tpu.memory_space<vmem>>) attributes {dimension_semantics = [#tpu.dimension_semantics<parallel>], iteration_bounds = array<i64: 1>, scalar_prefetch = 0 : i64, scratch_operands = 0 : i64, tpu.core_type = #tpu.core_type<tc>, window_params = [{pipeline_mode = #tpu.pipeline_mode<synchronous>, transform_indices = @transform_0, window_bounds = array<i64: 8, 32>}, {pipeline_mode = #tpu.pipeline_mode<synchronous>, transform_indices = @transform_1, window_bounds = array<i64: 8, 256>}, {transform_indices = @transform_2, window_bounds = array<i64: 1, 32, 1024>}, {transform_indices = @transform_3, window_bounds = array<i64: 1, 256, 1024>}, {transform_indices = @transform_4, window_bounds = array<i64: 1, 1, 1024>}, {transform_indices = @transform_5, window_bounds = array<i64: 8, 256>}, {transform_indices = @transform_6, window_bounds = array<i64: 8, 256>}, {transform_indices = @transform_7, window_bounds = array<i64: 8, 256>}]} {
    %c0 = arith.constant 0 : index
    %c0_0 = arith.constant 0 : index
    %0 = vector.load %arg1[%c0, %c0_0] : memref<8x32xf32, #tpu.memory_space<vmem>>, vector<8x32xf32>
    %c0_1 = arith.constant 0 : index
    %c0_2 = arith.constant 0 : index
    %c0_3 = arith.constant 0 : index
    %1 = vector.load %arg3[%c0_1, %c0_2, %c0_3] : memref<1x32x1024xf32, #tpu.memory_space<vmem>>, vector<1x32x1024xf32>
    %2 = vector.shape_cast %1 : vector<1x32x1024xf32> to vector<32x1024xf32>
    %cst = arith.constant dense<0.000000e+00> : vector<8x1024xf32>
    %3 = tpu.matmul %0, %2, %cst {dimension_numbers = #tpu.dot_dimension_numbers<[1], [0], [0], [1], [0, 0, 1, 1], [], []>, precision = #tpu.contract_precision<fp32>} : vector<8x32xf32>, vector<32x1024xf32>, vector<8x1024xf32> -> vector<8x1024xf32>
    %c0_4 = arith.constant 0 : index
    %c0_5 = arith.constant 0 : index
    %4 = vector.load %arg2[%c0_4, %c0_5] : memref<8x256xf32, #tpu.memory_space<vmem>>, vector<8x256xf32>
    %c0_6 = arith.constant 0 : index
    %c0_7 = arith.constant 0 : index
    %c0_8 = arith.constant 0 : index
    %5 = vector.load %arg4[%c0_6, %c0_7, %c0_8] : memref<1x256x1024xf32, #tpu.memory_space<vmem>>, vector<1x256x1024xf32>
    %6 = vector.shape_cast %5 : vector<1x256x1024xf32> to vector<256x1024xf32>
    %cst_9 = arith.constant dense<0.000000e+00> : vector<8x1024xf32>
    %7 = tpu.matmul %4, %6, %cst_9 {dimension_numbers = #tpu.dot_dimension_numbers<[1], [0], [0], [1], [0, 0, 1, 1], [], []>, precision = #tpu.contract_precision<fp32>} : vector<8x256xf32>, vector<256x1024xf32>, vector<8x1024xf32> -> vector<8x1024xf32>
    %8 = arith.addf %3, %7 : vector<8x1024xf32>
    %c0_10 = arith.constant 0 : index
    %c0_11 = arith.constant 0 : index
    %c0_12 = arith.constant 0 : index
    %9 = vector.load %arg5[%c0_10, %c0_11, %c0_12] : memref<1x1x1024xf32, #tpu.memory_space<vmem>>, vector<1x1x1024xf32>
    %10 = vector.shape_cast %9 : vector<1x1x1024xf32> to vector<1x1024xf32>
    %11 = vector.broadcast %10 : vector<1x1024xf32> to vector<8x1024xf32>
    %12 = arith.addf %8, %11 : vector<8x1024xf32>
    %13 = vector.extract_strided_slice %12 {offsets = [0, 0], sizes = [8, 256], strides = [1, 1]} : vector<8x1024xf32> to vector<8x256xf32>
    %14 = vector.extract_strided_slice %12 {offsets = [0, 256], sizes = [8, 256], strides = [1, 1]} : vector<8x1024xf32> to vector<8x256xf32>
    %15 = vector.extract_strided_slice %12 {offsets = [0, 512], sizes = [8, 256], strides = [1, 1]} : vector<8x1024xf32> to vector<8x256xf32>
    %16 = vector.extract_strided_slice %12 {offsets = [0, 768], sizes = [8, 256], strides = [1, 1]} : vector<8x1024xf32> to vector<8x256xf32>
    %cst_13 = arith.constant 5.000000e-01 : f32
    %17 = vector.broadcast %cst_13 : f32 to vector<8x256xf32>
    %18 = arith.mulf %17, %13 : vector<8x256xf32>
    %19 = math.tanh %18 : vector<8x256xf32>
    %cst_14 = arith.constant 5.000000e-01 : f32
    %20 = vector.broadcast %cst_14 : f32 to vector<8x256xf32>
    %21 = arith.mulf %20, %19 : vector<8x256xf32>
    %cst_15 = arith.constant 5.000000e-01 : f32
    %22 = vector.broadcast %cst_15 : f32 to vector<8x256xf32>
    %23 = arith.addf %21, %22 : vector<8x256xf32>
    %cst_16 = arith.constant 5.000000e-01 : f32
    %24 = vector.broadcast %cst_16 : f32 to vector<8x256xf32>
    %25 = arith.mulf %24, %14 : vector<8x256xf32>
    %26 = math.tanh %25 : vector<8x256xf32>
    %cst_17 = arith.constant 5.000000e-01 : f32
    %27 = vector.broadcast %cst_17 : f32 to vector<8x256xf32>
    %28 = arith.mulf %27, %26 : vector<8x256xf32>
    %cst_18 = arith.constant 5.000000e-01 : f32
    %29 = vector.broadcast %cst_18 : f32 to vector<8x256xf32>
    %30 = arith.addf %28, %29 : vector<8x256xf32>
    %cst_19 = arith.constant 5.000000e-01 : f32
    %31 = vector.broadcast %cst_19 : f32 to vector<8x256xf32>
    %32 = arith.mulf %31, %16 : vector<8x256xf32>
    %33 = math.tanh %32 : vector<8x256xf32>
    %cst_20 = arith.constant 5.000000e-01 : f32
    %34 = vector.broadcast %cst_20 : f32 to vector<8x256xf32>
    %35 = arith.mulf %34, %33 : vector<8x256xf32>
    %cst_21 = arith.constant 5.000000e-01 : f32
    %36 = vector.broadcast %cst_21 : f32 to vector<8x256xf32>
    %37 = arith.addf %35, %36 : vector<8x256xf32>
    %38 = math.tanh %15 : vector<8x256xf32>
    %c0_22 = arith.constant 0 : index
    %c0_23 = arith.constant 0 : index
    %39 = vector.load %arg6[%c0_22, %c0_23] : memref<8x256xf32, #tpu.memory_space<vmem>>, vector<8x256xf32>
    %40 = arith.mulf %30, %39 : vector<8x256xf32>
    %41 = arith.mulf %23, %38 : vector<8x256xf32>
    %42 = arith.addf %40, %41 : vector<8x256xf32>
    %43 = math.tanh %42 : vector<8x256xf32>
    %44 = arith.mulf %37, %43 : vector<8x256xf32>
    %c0_24 = arith.constant 0 : index
    %c0_25 = arith.constant 0 : index
    %45 = vector.load %arg8[%c0_24, %c0_25] : memref<8x256xf32, #tpu.memory_space<vmem>>, vector<8x256xf32>
    tpu.vector_store %arg8[%c0_24, %c0_25], %42 {strides = array<i32>} : memref<8x256xf32, #tpu.memory_space<vmem>>, vector<8x256xf32>,
    %c0_26 = arith.constant 0 : index
    %c0_27 = arith.constant 0 : index
    %46 = vector.load %arg7[%c0_26, %c0_27] : memref<8x256xf32, #tpu.memory_space<vmem>>, vector<8x256xf32>
    tpu.vector_store %arg7[%c0_26, %c0_27], %44 {strides = array<i32>} : memref<8x256xf32, #tpu.memory_space<vmem>>, vector<8x256xf32>,
    return
  }
  func.func @transform_0(%arg0: i32) -> (i32, i32) {
    %c0_i32 = arith.constant 0 : i32
    %c0_i32_0 = arith.constant 0 : i32
    %c0_i32_1 = arith.constant 0 : i32
    return %c0_i32, %c0_i32_0 : i32, i32
  }
  func.func @transform_1(%arg0: i32) -> (i32, i32) {
    %c0_i32 = arith.constant 0 : i32
    %c0_i32_0 = arith.constant 0 : i32
    %c0_i32_1 = arith.constant 0 : i32
    return %c0_i32, %c0_i32_0 : i32, i32
  }
  func.func @transform_2(%arg0: i32) -> (i32, i32, i32) {
    %c0_i32 = arith.constant 0 : i32
    %c0_i32_0 = arith.constant 0 : i32
    %c0_i32_1 = arith.constant 0 : i32
    return %arg0, %c0_i32, %c0_i32_0 : i32, i32, i32
  }
  func.func @transform_3(%arg0: i32) -> (i32, i32, i32) {
    %c0_i32 = arith.constant 0 : i32
    %c0_i32_0 = arith.constant 0 : i32
    %c0_i32_1 = arith.constant 0 : i32
    return %arg0, %c0_i32, %c0_i32_0 : i32, i32, i32
  }
  func.func @transform_4(%arg0: i32) -> (i32, i32, i32) {
    %c0_i32 = arith.constant 0 : i32
    %c0_i32_0 = arith.constant 0 : i32
    %c0_i32_1 = arith.constant 0 : i32
    return %arg0, %c0_i32, %c0_i32_0 : i32, i32, i32
  }
  func.func @transform_5(%arg0: i32) -> (i32, i32) {
    %c0_i32 = arith.constant 0 : i32
    %c0_i32_0 = arith.constant 0 : i32
    return %c0_i32, %arg0 : i32, i32
  }
  func.func @transform_6(%arg0: i32) -> (i32, i32) {
    %c0_i32 = arith.constant 0 : i32
    %c0_i32_0 = arith.constant 0 : i32
    return %c0_i32, %arg0 : i32, i32
  }
  func.func @transform_7(%arg0: i32) -> (i32, i32) {
    %c0_i32 = arith.constant 0 : i32
    %c0_i32_0 = arith.constant 0 : i32
    return %c0_i32, %arg0 : i32, i32
  }
}

</mosaic_0001>

<llo_original>
// kernel: tpu_custom_call.1
$region0: #{tpu_custom_call.1}
  #allocation0 [shape = 'u32[]', space=smem, size = 0x4, offset = 0x4, fixed_abs, tag = 'smem constant byte address 0x4 - core index']
  #allocation1 [shape = 'u32[144,128]{1,0:T(1,128)}', space=vmem, size = 0x12000, scoped, tag = 'internal scratch']
  %s0 = inlined_call_operand.hbm [shape: f32[8,32], index: 0, kind: input, shape index: {}]
  %s1 = inlined_call_operand.hbm [shape: f32[8,256], index: 1, kind: input, shape index: {}]
  %s2 = inlined_call_operand.hbm [shape: f32[1,32,1024], index: 2, kind: input, shape index: {}]
  %s3 = inlined_call_operand.hbm [shape: f32[1,256,1024], index: 3, kind: input, shape index: {}]
  %s4 = inlined_call_operand.hbm [shape: f32[1,1,1024], index: 4, kind: input, shape index: {}]
  %s5 = inlined_call_operand.hbm [shape: f32[8,256], index: 5, kind: input, shape index: {}]
  %s6 = inlined_call_operand.hbm [shape: f32[8,256], index: 6, kind: output, shape index: {0}]
  %s7 = inlined_call_operand.hbm [shape: f32[8,256], index: 7, kind: output, shape index: {1}]
  %8 = xla_tuple %s6, %s7
  %s9 = sld [smem:[#allocation0]]
  $region66: #{tpu_custom_call.1} parent=0
    _
  %s11 = ssub.s32 1, %s9
  %s12 = scalar_select 0, %s11, %s9
  $region1: #{tpu_custom_call.1} parent=0
    #allocation2 [shape = 'u8[4096]{0}', space=vmem, size = 0x1000, scoped, tag = 'input window, operand 0, single buffered']
    #allocation3 [shape = 's32[1]{0}', space=sflag, size = 0x4, scoped, tag = 'scoped memory for tpu_custom_call.1']
    #allocation4 [shape = 's32[1]{0}', space=sflag, size = 0x4, scoped, tag = 'scoped memory for tpu_custom_call.1']
    #allocation5 [shape = 'u8[8192]{0}', space=vmem, size = 0x2000, scoped, tag = 'input window, operand 1, single buffered']
    #allocation6 [shape = 's32[1]{0}', space=sflag, size = 0x4, scoped, tag = 'scoped memory for tpu_custom_call.1']
    #allocation7 [shape = 'u8[131072]{0}', space=vmem, size = 0x20000, scoped, tag = 'input window, operand 2, single buffered']
    #allocation8 [shape = 'u8[1048576]{0}', space=vmem, size = 0x100000, scoped, tag = 'input window, operand 3, single buffered']
    #allocation9 [shape = 's32[1]{0}', space=sflag, size = 0x4, scoped, tag = 'scoped memory for tpu_custom_call.1']
    #allocation10 [shape = 'u8[4096]{0}', space=vmem, size = 0x1000, scoped, tag = 'input window, operand 4, single buffered']
    #allocation11 [shape = 'u8[8192]{0}', space=vmem, size = 0x2000, scoped, tag = 'input window, operand 5, single buffered']
    #allocation12 [shape = 's32[1]{0}', space=sflag, size = 0x4, scoped, tag = 'scoped memory for tpu_custom_call.1']
    #allocation13 [shape = 'u8[8192]{0}', space=vmem, size = 0x2000, scoped, tag = 'output window, operand 0, single buffered']
    #allocation14 [shape = 'u8[8192]{0}', space=vmem, size = 0x2000, scoped, tag = 'output window, operand 1, single buffered']
    #allocation15 [shape = 's32[1]{0}', space=sflag, size = 0x4, scoped, tag = 'scoped memory for tpu_custom_call.1']
    %13 = vsyncpa [#allocation3], 0
    %14 = vsyncpa [#allocation6], 0
    %15 = vsyncpa [#allocation9], 0
    %16 = vsyncpa [#allocation12], 0
    %17 = vsyncpa [#allocation4], 0
    %18 = vsyncpa [#allocation15], 0
    // Predicated region
    $region2: #{tpu_custom_call.1} parent=1 // pred_check
      _
    $region3: #{tpu_custom_call.1} parent=1 // pred_check_branch
      %20 = sbr.rel (0) target = $region5
    $region4: #{tpu_custom_call.1} parent=1 // pred_region
      %s22 = ssub.s32 128, 128
      %23 = vsyncadd [#allocation3], %s22
      %s25 = sshll.u32 [#allocation2], 4
      %s26 = int_to_ptr.vmem [resolvable:$true] %s25
      %28 = dma.hbm_to_vmem [thread:$0]  %s0, 128, %s26, [#allocation3]
    $region5: #{tpu_custom_call.1} parent=1 // pred_fallthru
      _
    // Predicated region
    $region6: #{tpu_custom_call.1} parent=1 // pred_check
      _
    $region7: #{tpu_custom_call.1} parent=1 // pred_check_branch
      %30 = sbr.rel (0) target = $region9
    $region8: #{tpu_custom_call.1} parent=1 // pred_region
      %s32 = ssub.s32 256, 256
      %33 = vsyncadd [#allocation6], %s32
      %s35 = sshll.u32 [#allocation5], 4
      %s36 = int_to_ptr.vmem [resolvable:$true] %s35
      %38 = dma.hbm_to_vmem [thread:$0]  %s1, 256, %s36, [#allocation6]
    $region9: #{tpu_custom_call.1} parent=1 // pred_fallthru
      _
    // Predicated region
    $region10: #{tpu_custom_call.1} parent=1 // pred_check
      _
    $region11: #{tpu_custom_call.1} parent=1 // pred_check_branch
      %40 = sbr.rel (0) target = $region13
    $region12: #{tpu_custom_call.1} parent=1 // pred_region
      %s42 = ssub.s32 4096, 4096
      %43 = vsyncadd [#allocation6], %s42
      %s44 = sshll.u32 [#allocation7], 4
      %s45 = int_to_ptr.vmem [resolvable:$true] %s44
      %50 = dma.hbm_to_vmem [thread:$0]  %s2, 4096, %s45, [#allocation6], 1024, 1024, 64
    $region13: #{tpu_custom_call.1} parent=1 // pred_fallthru
      _
    // Predicated region
    $region14: #{tpu_custom_call.1} parent=1 // pred_check
      _
    $region15: #{tpu_custom_call.1} parent=1 // pred_check_branch
      %52 = sbr.rel (0) target = $region17
    $region16: #{tpu_custom_call.1} parent=1 // pred_region
      %s54 = ssub.s32 32768, 32768
      %55 = vsyncadd [#allocation9], %s54
      %s56 = sshll.u32 [#allocation8], 4
      %s57 = int_to_ptr.vmem [resolvable:$true] %s56
      %62 = dma.hbm_to_vmem [thread:$0]  %s3, 32768, %s57, [#allocation9], 1024, 1024, 64
    $region17: #{tpu_custom_call.1} parent=1 // pred_fallthru
      _
    // Predicated region
    $region18: #{tpu_custom_call.1} parent=1 // pred_check
      _
    $region19: #{tpu_custom_call.1} parent=1 // pred_check_branch
      %64 = sbr.rel (0) target = $region21
    $region20: #{tpu_custom_call.1} parent=1 // pred_region
      %s66 = ssub.s32 128, 128
      %67 = vsyncadd [#allocation9], %s66
      %s69 = sshll.u32 [#allocation10], 4
      %s70 = int_to_ptr.vmem [resolvable:$true] %s69
      %72 = dma.hbm_to_vmem [thread:$0]  %s4, 128, %s70, [#allocation9]
    $region21: #{tpu_custom_call.1} parent=1 // pred_fallthru
      _
    // Predicated region
    $region22: #{tpu_custom_call.1} parent=1 // pred_check
      _
    $region23: #{tpu_custom_call.1} parent=1 // pred_check_branch
      %74 = sbr.rel (0) target = $region25
    $region24: #{tpu_custom_call.1} parent=1 // pred_region
      %s76 = ssub.s32 256, 256
      %77 = vsyncadd [#allocation12], %s76
      %s79 = sshll.u32 [#allocation11], 4
      %s80 = int_to_ptr.vmem [resolvable:$true] %s79
      %82 = dma.hbm_to_vmem [thread:$0]  %s5, 256, %s80, [#allocation12]
    $region25: #{tpu_custom_call.1} parent=1 // pred_fallthru
      _
    // Predicated region
    $region26: #{tpu_custom_call.1} parent=1 // pred_check
      _
    $region27: #{tpu_custom_call.1} parent=1 // pred_check_branch
      %84 = sbr.rel (0) target = $region29
    $region28: #{tpu_custom_call.1} parent=1 // pred_region
      %85 = dma.done [#allocation3], 128
    $region29: #{tpu_custom_call.1} parent=1 // pred_fallthru
      _
    // Predicated region
    $region30: #{tpu_custom_call.1} parent=1 // pred_check
      _
    $region31: #{tpu_custom_call.1} parent=1 // pred_check_branch
      %87 = sbr.rel (0) target = $region33
    $region32: #{tpu_custom_call.1} parent=1 // pred_region
      %88 = dma.done [#allocation6], 256
    $region33: #{tpu_custom_call.1} parent=1 // pred_fallthru
      _
    // Predicated region
    $region34: #{tpu_custom_call.1} parent=1 // pred_check
      _
    $region35: #{tpu_custom_call.1} parent=1 // pred_check_branch
      %90 = sbr.rel (0) target = $region37
    $region36: #{tpu_custom_call.1} parent=1 // pred_region
      %91 = dma.done [#allocation6], 4096
    $region37: #{tpu_custom_call.1} parent=1 // pred_fallthru
      _
    // Predicated region
    $region38: #{tpu_custom_call.1} parent=1 // pred_check
      _
    $region39: #{tpu_custom_call.1} parent=1 // pred_check_branch
      %93 = sbr.rel (0) target = $region41
    $region40: #{tpu_custom_call.1} parent=1 // pred_region
      %94 = dma.done [#allocation9], 32768
    $region41: #{tpu_custom_call.1} parent=1 // pred_fallthru
      _
    // Predicated region
    $region42: #{tpu_custom_call.1} parent=1 // pred_check
      _
    $region43: #{tpu_custom_call.1} parent=1 // pred_check_branch
      %96 = sbr.rel (0) target = $region45
    $region44: #{tpu_custom_call.1} parent=1 // pred_region
      %97 = dma.done [#allocation9], 128
    $region45: #{tpu_custom_call.1} parent=1 // pred_fallthru
      _
    // Predicated region
    $region46: #{tpu_custom_call.1} parent=1 // pred_check
      _
    $region47: #{tpu_custom_call.1} parent=1 // pred_check_branch
      %99 = sbr.rel (0) target = $region49
    $region48: #{tpu_custom_call.1} parent=1 // pred_region
      %100 = dma.done [#allocation12], 256
    $region49: #{tpu_custom_call.1} parent=1 // pred_fallthru
      _
    %v101 = vld [vmem:[#allocation2] sm:$0xff]
    %v102 = vld [vmem:[#allocation7] sm:$0xff]
    %v103 = vld [vmem:[#allocation7 + $0x8] sm:$0xff]
    %v104 = vld [vmem:[#allocation7 + $0x10] sm:$0xff]
    %v105 = vld [vmem:[#allocation7 + $0x18] sm:$0xff]
    %v106 = vld [vmem:[#allocation7 + $0x20] sm:$0xff]
    %v107 = vld [vmem:[#allocation7 + $0x28] sm:$0xff]
    %v108 = vld [vmem:[#allocation7 + $0x30] sm:$0xff]
    %v109 = vld [vmem:[#allocation7 + $0x38] sm:$0xff]
    %v110 = vld [vmem:[#allocation7 + $0x40] sm:$0xff]
    %v111 = vld [vmem:[#allocation7 + $0x48] sm:$0xff]
    %v112 = vld [vmem:[#allocation7 + $0x50] sm:$0xff]
    %v113 = vld [vmem:[#allocation7 + $0x58] sm:$0xff]
    %v114 = vld [vmem:[#allocation7 + $0x60] sm:$0xff]
    %v115 = vld [vmem:[#allocation7 + $0x68] sm:$0xff]
    %v116 = vld [vmem:[#allocation7 + $0x70] sm:$0xff]
    %v117 = vld [vmem:[#allocation7 + $0x78] sm:$0xff]
    %v118 = vld [vmem:[#allocation7 + $0x80] sm:$0xff]
    %v119 = vld [vmem:[#allocation7 + $0x88] sm:$0xff]
    %v120 = vld [vmem:[#allocation7 + $0x90] sm:$0xff]
    %v121 = vld [vmem:[#allocation7 + $0x98] sm:$0xff]
    %v122 = vld [vmem:[#allocation7 + $0xa0] sm:$0xff]
    %v123 = vld [vmem:[#allocation7 + $0xa8] sm:$0xff]
    %v124 = vld [vmem:[#allocation7 + $0xb0] sm:$0xff]
    %v125 = vld [vmem:[#allocation7 + $0xb8] sm:$0xff]
    %v126 = vld [vmem:[#allocation7 + $0xc0] sm:$0xff]
    %v127 = vld [vmem:[#allocation7 + $0xc8] sm:$0xff]
    %v128 = vld [vmem:[#allocation7 + $0xd0] sm:$0xff]
    %v129 = vld [vmem:[#allocation7 + $0xd8] sm:$0xff]
    %v130 = vld [vmem:[#allocation7 + $0xe0] sm:$0xff]
    %v131 = vld [vmem:[#allocation7 + $0xe8] sm:$0xff]
    %v132 = vld [vmem:[#allocation7 + $0xf0] sm:$0xff]
    %v133 = vld [vmem:[#allocation7 + $0xf8] sm:$0xff]
    %v134 = vld [vmem:[#allocation5] sm:$0xff]
    %v135 = vld [vmem:[#allocation5 + $0x8] sm:$0xff]
    %v136 = vld [vmem:[#allocation8] sm:$0xff]
    %v137 = vld [vmem:[#allocation8 + $0x8] sm:$0xff]
    %v138 = vld [vmem:[#allocation8 + $0x10] sm:$0xff]
    %v139 = vld [vmem:[#allocation8 + $0x18] sm:$0xff]
    %v140 = vld [vmem:[#allocation8 + $0x20] sm:$0xff]
    %v141 = vld [vmem:[#allocation8 + $0x28] sm:$0xff]
    %v142 = vld [vmem:[#allocation8 + $0x30] sm:$0xff]
    %v143 = vld [vmem:[#allocation8 + $0x38] sm:$0xff]
    %v144 = vld [vmem:[#allocation8 + $0x40] sm:$0xff]
    %v145 = vld [vmem:[#allocation8 + $0x48] sm:$0xff]
    %v146 = vld [vmem:[#allocation8 + $0x50] sm:$0xff]
    %v147 = vld [vmem:[#allocation8 + $0x58] sm:$0xff]
    %v148 = vld [vmem:[#allocation8 + $0x60] sm:$0xff]
    %v149 = vld [vmem:[#allocation8 + $0x68] sm:$0xff]
    %v150 = vld [vmem:[#allocation8 + $0x70] sm:$0xff]
    %v151 = vld [vmem:[#allocation8 + $0x78] sm:$0xff]
    %v152 = vld [vmem:[#allocation8 + $0x80] sm:$0xff]
    %v153 = vld [vmem:[#allocation8 + $0x88] sm:$0xff]
    %v154 = vld [vmem:[#allocation8 + $0x90] sm:$0xff]
    %v155 = vld [vmem:[#allocation8 + $0x98] sm:$0xff]
    %v156 = vld [vmem:[#allocation8 + $0xa0] sm:$0xff]
    %v157 = vld [vmem:[#allocation8 + $0xa8] sm:$0xff]
    %v158 = vld [vmem:[#allocation8 + $0xb0] sm:$0xff]
    %v159 = vld [vmem:[#allocation8 + $0xb8] sm:$0xff]
    %v160 = vld [vmem:[#allocation8 + $0xc0] sm:$0xff]
    %v161 = vld [vmem:[#allocation8 + $0xc8] sm:$0xff]
    %v162 = vld [vmem:[#allocation8 + $0xd0] sm:$0xff]
    %v163 = vld [vmem:[#allocation8 + $0xd8] sm:$0xff]
    %v164 = vld [vmem:[#allocation8 + $0xe0] sm:$0xff]
    %v165 = vld [vmem:[#allocation8 + $0xe8] sm:$0xff]
    %v166 = vld [vmem:[#allocation8 + $0xf0] sm:$0xff]
    %v167 = vld [vmem:[#allocation8 + $0xf8] sm:$0xff]
    %v168 = vld [vmem:[#allocation8 + $0x100] sm:$0xff]
    %v169 = vld [vmem:[#allocation8 + $0x108] sm:$0xff]
    %v170 = vld [vmem:[#allocation8 + $0x110] sm:$0xff]
    %v171 = vld [vmem:[#allocation8 + $0x118] sm:$0xff]
    %v172 = vld [vmem:[#allocation8 + $0x120] sm:$0xff]
    %v173 = vld [vmem:[#allocation8 + $0x128] sm:$0xff]
    %v174 = vld [vmem:[#allocation8 + $0x130] sm:$0xff]
    %v175 = vld [vmem:[#allocation8 + $0x138] sm:$0xff]
    %v176 = vld [vmem:[#allocation8 + $0x140] sm:$0xff]
    %v177 = vld [vmem:[#allocation8 + $0x148] sm:$0xff]
    %v178 = vld [vmem:[#allocation8 + $0x150] sm:$0xff]
    %v179 = vld [vmem:[#allocation8 + $0x158] sm:$0xff]
    %v180 = vld [vmem:[#allocation8 + $0x160] sm:$0xff]
    %v181 = vld [vmem:[#allocation8 + $0x168] sm:$0xff]
    %v182 = vld [vmem:[#allocation8 + $0x170] sm:$0xff]
    %v183 = vld [vmem:[#allocation8 + $0x178] sm:$0xff]
    %v184 = vld [vmem:[#allocation8 + $0x180] sm:$0xff]
    %v185 = vld [vmem:[#allocation8 + $0x188] sm:$0xff]
    %v186 = vld [vmem:[#allocation8 + $0x190] sm:$0xff]
    %v187 = vld [vmem:[#allocation8 + $0x198] sm:$0xff]
    %v188 = vld [vmem:[#allocation8 + $0x1a0] sm:$0xff]
    %v189 = vld [vmem:[#allocation8 + $0x1a8] sm:$0xff]
    %v190 = vld [vmem:[#allocation8 + $0x1b0] sm:$0xff]
    %v191 = vld [vmem:[#allocation8 + $0x1b8] sm:$0xff]
    %v192 = vld [vmem:[#allocation8 + $0x1c0] sm:$0xff]
    %v193 = vld [vmem:[#allocation8 + $0x1c8] sm:$0xff]
    %v194 = vld [vmem:[#allocation8 + $0x1d0] sm:$0xff]
    %v195 = vld [vmem:[#allocation8 + $0x1d8] sm:$0xff]
    %v196 = vld [vmem:[#allocation8 + $0x1e0] sm:$0xff]
    %v197 = vld [vmem:[#allocation8 + $0x1e8] sm:$0xff]
    %v198 = vld [vmem:[#allocation8 + $0x1f0] sm:$0xff]
    %v199 = vld [vmem:[#allocation8 + $0x1f8] sm:$0xff]
    %v200 = vld [vmem:[#allocation8 + $0x200] sm:$0xff]
    %v201 = vld [vmem:[#allocation8 + $0x208] sm:$0xff]
    %v202 = vld [vmem:[#allocation8 + $0x210] sm:$0xff]
    %v203 = vld [vmem:[#allocation8 + $0x218] sm:$0xff]
    %v204 = vld [vmem:[#allocation8 + $0x220] sm:$0xff]
    %v205 = vld [vmem:[#allocation8 + $0x228] sm:$0xff]
    %v206 = vld [vmem:[#allocation8 + $0x230] sm:$0xff]
    %v207 = vld [vmem:[#allocation8 + $0x238] sm:$0xff]
    %v208 = vld [vmem:[#allocation8 + $0x240] sm:$0xff]
    %v209 = vld [vmem:[#allocation8 + $0x248] sm:$0xff]
    %v210 = vld [vmem:[#allocation8 + $0x250] sm:$0xff]
    %v211 = vld [vmem:[#allocation8 + $0x258] sm:$0xff]
    %v212 = vld [vmem:[#allocation8 + $0x260] sm:$0xff]
    %v213 = vld [vmem:[#allocation8 + $0x268] sm:$0xff]
    %v214 = vld [vmem:[#allocation8 + $0x270] sm:$0xff]
    %v215 = vld [vmem:[#allocation8 + $0x278] sm:$0xff]
    %v216 = vld [vmem:[#allocation8 + $0x280] sm:$0xff]
    %v217 = vld [vmem:[#allocation8 + $0x288] sm:$0xff]
    %v218 = vld [vmem:[#allocation8 + $0x290] sm:$0xff]
    %v219 = vld [vmem:[#allocation8 + $0x298] sm:$0xff]
    %v220 = vld [vmem:[#allocation8 + $0x2a0] sm:$0xff]
    %v221 = vld [vmem:[#allocation8 + $0x2a8] sm:$0xff]
    %v222 = vld [vmem:[#allocation8 + $0x2b0] sm:$0xff]
    %v223 = vld [vmem:[#allocation8 + $0x2b8] sm:$0xff]
    %v224 = vld [vmem:[#allocation8 + $0x2c0] sm:$0xff]
    %v225 = vld [vmem:[#allocation8 + $0x2c8] sm:$0xff]
    %v226 = vld [vmem:[#allocation8 + $0x2d0] sm:$0xff]
    %v227 = vld [vmem:[#allocation8 + $0x2d8] sm:$0xff]
    %v228 = vld [vmem:[#allocation8 + $0x2e0] sm:$0xff]
    %v229 = vld [vmem:[#allocation8 + $0x2e8] sm:$0xff]
    %v230 = vld [vmem:[#allocation8 + $0x2f0] sm:$0xff]
    %v231 = vld [vmem:[#allocation8 + $0x2f8] sm:$0xff]
    %v232 = vld [vmem:[#allocation8 + $0x300] sm:$0xff]
    %v233 = vld [vmem:[#allocation8 + $0x308] sm:$0xff]
    %v234 = vld [vmem:[#allocation8 + $0x310] sm:$0xff]
    %v235 = vld [vmem:[#allocation8 + $0x318] sm:$0xff]
    %v236 = vld [vmem:[#allocation8 + $0x320] sm:$0xff]
    %v237 = vld [vmem:[#allocation8 + $0x328] sm:$0xff]
    %v238 = vld [vmem:[#allocation8 + $0x330] sm:$0xff]
    %v239 = vld [vmem:[#allocation8 + $0x338] sm:$0xff]
    %v240 = vld [vmem:[#allocation8 + $0x340] sm:$0xff]
    %v241 = vld [vmem:[#allocation8 + $0x348] sm:$0xff]
    %v242 = vld [vmem:[#allocation8 + $0x350] sm:$0xff]
    %v243 = vld [vmem:[#allocation8 + $0x358] sm:$0xff]
    %v244 = vld [vmem:[#allocation8 + $0x360] sm:$0xff]
    %v245 = vld [vmem:[#allocation8 + $0x368] sm:$0xff]
    %v246 = vld [vmem:[#allocation8 + $0x370] sm:$0xff]
    %v247 = vld [vmem:[#allocation8 + $0x378] sm:$0xff]
    %v248 = vld [vmem:[#allocation8 + $0x380] sm:$0xff]
    %v249 = vld [vmem:[#allocation8 + $0x388] sm:$0xff]
    %v250 = vld [vmem:[#allocation8 + $0x390] sm:$0xff]
    %v251 = vld [vmem:[#allocation8 + $0x398] sm:$0xff]
    %v252 = vld [vmem:[#allocation8 + $0x3a0] sm:$0xff]
    %v253 = vld [vmem:[#allocation8 + $0x3a8] sm:$0xff]
    %v254 = vld [vmem:[#allocation8 + $0x3b0] sm:$0xff]
    %v255 = vld [vmem:[#allocation8 + $0x3b8] sm:$0xff]
    %v256 = vld [vmem:[#allocation8 + $0x3c0] sm:$0xff]
    %v257 = vld [vmem:[#allocation8 + $0x3c8] sm:$0xff]
    %v258 = vld [vmem:[#allocation8 + $0x3d0] sm:$0xff]
    %v259 = vld [vmem:[#allocation8 + $0x3d8] sm:$0xff]
    %v260 = vld [vmem:[#allocation8 + $0x3e0] sm:$0xff]
    %v261 = vld [vmem:[#allocation8 + $0x3e8] sm:$0xff]
    %v262 = vld [vmem:[#allocation8 + $0x3f0] sm:$0xff]
    %v263 = vld [vmem:[#allocation8 + $0x3f8] sm:$0xff]
    %v264 = vld [vmem:[#allocation8 + $0x400] sm:$0xff]
    %v265 = vld [vmem:[#allocation8 + $0x408] sm:$0xff]
    %v266 = vld [vmem:[#allocation8 + $0x410] sm:$0xff]
    %v267 = vld [vmem:[#allocation8 + $0x418] sm:$0xff]
    %v268 = vld [vmem:[#allocation8 + $0x420] sm:$0xff]
    %v269 = vld [vmem:[#allocation8 + $0x428] sm:$0xff]
    %v270 = vld [vmem:[#allocation8 + $0x430] sm:$0xff]
    %v271 = vld [vmem:[#allocation8 + $0x438] sm:$0xff]
    %v272 = vld [vmem:[#allocation8 + $0x440] sm:$0xff]
    %v273 = vld [vmem:[#allocation8 + $0x448] sm:$0xff]
    %v274 = vld [vmem:[#allocation8 + $0x450] sm:$0xff]
    %v275 = vld [vmem:[#allocation8 + $0x458] sm:$0xff]
    %v276 = vld [vmem:[#allocation8 + $0x460] sm:$0xff]
    %v277 = vld [vmem:[#allocation8 + $0x468] sm:$0xff]
    %v278 = vld [vmem:[#allocation8 + $0x470] sm:$0xff]
    %v279 = vld [vmem:[#allocation8 + $0x478] sm:$0xff]
    %v280 = vld [vmem:[#allocation8 + $0x480] sm:$0xff]
    %v281 = vld [vmem:[#allocation8 + $0x488] sm:$0xff]
    %v282 = vld [vmem:[#allocation8 + $0x490] sm:$0xff]
    %v283 = vld [vmem:[#allocation8 + $0x498] sm:$0xff]
    %v284 = vld [vmem:[#allocation8 + $0x4a0] sm:$0xff]
    %v285 = vld [vmem:[#allocation8 + $0x4a8] sm:$0xff]
    %v286 = vld [vmem:[#allocation8 + $0x4b0] sm:$0xff]
    %v287 = vld [vmem:[#allocation8 + $0x4b8] sm:$0xff]
    %v288 = vld [vmem:[#allocation8 + $0x4c0] sm:$0xff]
    %v289 = vld [vmem:[#allocation8 + $0x4c8] sm:$0xff]
    %v290 = vld [vmem:[#allocation8 + $0x4d0] sm:$0xff]
    %v291 = vld [vmem:[#allocation8 + $0x4d8] sm:$0xff]
    %v292 = vld [vmem:[#allocation8 + $0x4e0] sm:$0xff]
    %v293 = vld [vmem:[#allocation8 + $0x4e8] sm:$0xff]
    %v294 = vld [vmem:[#allocation8 + $0x4f0] sm:$0xff]
    %v295 = vld [vmem:[#allocation8 + $0x4f8] sm:$0xff]
    %v296 = vld [vmem:[#allocation8 + $0x500] sm:$0xff]
    %v297 = vld [vmem:[#allocation8 + $0x508] sm:$0xff]
    %v298 = vld [vmem:[#allocation8 + $0x510] sm:$0xff]
    %v299 = vld [vmem:[#allocation8 + $0x518] sm:$0xff]
    %v300 = vld [vmem:[#allocation8 + $0x520] sm:$0xff]
    %v301 = vld [vmem:[#allocation8 + $0x528] sm:$0xff]
    %v302 = vld [vmem:[#allocation8 + $0x530] sm:$0xff]
    %v303 = vld [vmem:[#allocation8 + $0x538] sm:$0xff]
    %v304 = vld [vmem:[#allocation8 + $0x540] sm:$0xff]
    %v305 = vld [vmem:[#allocation8 + $0x548] sm:$0xff]
    %v306 = vld [vmem:[#allocation8 + $0x550] sm:$0xff]
    %v307 = vld [vmem:[#allocation8 + $0x558] sm:$0xff]
    %v308 = vld [vmem:[#allocation8 + $0x560] sm:$0xff]
    %v309 = vld [vmem:[#allocation8 + $0x568] sm:$0xff]
    %v310 = vld [vmem:[#allocation8 + $0x570] sm:$0xff]
    %v311 = vld [vmem:[#allocation8 + $0x578] sm:$0xff]
    %v312 = vld [vmem:[#allocation8 + $0x580] sm:$0xff]
    %v313 = vld [vmem:[#allocation8 + $0x588] sm:$0xff]
    %v314 = vld [vmem:[#allocation8 + $0x590] sm:$0xff]
    %v315 = vld [vmem:[#allocation8 + $0x598] sm:$0xff]
    %v316 = vld [vmem:[#allocation8 + $0x5a0] sm:$0xff]
    %v317 = vld [vmem:[#allocation8 + $0x5a8] sm:$0xff]
    %v318 = vld [vmem:[#allocation8 + $0x5b0] sm:$0xff]
    %v319 = vld [vmem:[#allocation8 + $0x5b8] sm:$0xff]
    %v320 = vld [vmem:[#allocation8 + $0x5c0] sm:$0xff]
    %v321 = vld [vmem:[#allocation8 + $0x5c8] sm:$0xff]
    %v322 = vld [vmem:[#allocation8 + $0x5d0] sm:$0xff]
    %v323 = vld [vmem:[#allocation8 + $0x5d8] sm:$0xff]
    %v324 = vld [vmem:[#allocation8 + $0x5e0] sm:$0xff]
    %v325 = vld [vmem:[#allocation8 + $0x5e8] sm:$0xff]
    %v326 = vld [vmem:[#allocation8 + $0x5f0] sm:$0xff]
    %v327 = vld [vmem:[#allocation8 + $0x5f8] sm:$0xff]
    %v328 = vld [vmem:[#allocation8 + $0x600] sm:$0xff]
    %v329 = vld [vmem:[#allocation8 + $0x608] sm:$0xff]
    %v330 = vld [vmem:[#allocation8 + $0x610] sm:$0xff]
    %v331 = vld [vmem:[#allocation8 + $0x618] sm:$0xff]
    %v332 = vld [vmem:[#allocation8 + $0x620] sm:$0xff]
    %v333 = vld [vmem:[#allocation8 + $0x628] sm:$0xff]
    %v334 = vld [vmem:[#allocation8 + $0x630] sm:$0xff]
    %v335 = vld [vmem:[#allocation8 + $0x638] sm:$0xff]
    %v336 = vld [vmem:[#allocation8 + $0x640] sm:$0xff]
    %v337 = vld [vmem:[#allocation8 + $0x648] sm:$0xff]
    %v338 = vld [vmem:[#allocation8 + $0x650] sm:$0xff]
    %v339 = vld [vmem:[#allocation8 + $0x658] sm:$0xff]
    %v340 = vld [vmem:[#allocation8 + $0x660] sm:$0xff]
    %v341 = vld [vmem:[#allocation8 + $0x668] sm:$0xff]
    %v342 = vld [vmem:[#allocation8 + $0x670] sm:$0xff]
    %v343 = vld [vmem:[#allocation8 + $0x678] sm:$0xff]
    %v344 = vld [vmem:[#allocation8 + $0x680] sm:$0xff]
    %v345 = vld [vmem:[#allocation8 + $0x688] sm:$0xff]
    %v346 = vld [vmem:[#allocation8 + $0x690] sm:$0xff]
    %v347 = vld [vmem:[#allocation8 + $0x698] sm:$0xff]
    %v348 = vld [vmem:[#allocation8 + $0x6a0] sm:$0xff]
    %v349 = vld [vmem:[#allocation8 + $0x6a8] sm:$0xff]
    %v350 = vld [vmem:[#allocation8 + $0x6b0] sm:$0xff]
    %v351 = vld [vmem:[#allocation8 + $0x6b8] sm:$0xff]
    %v352 = vld [vmem:[#allocation8 + $0x6c0] sm:$0xff]
    %v353 = vld [vmem:[#allocation8 + $0x6c8] sm:$0xff]
    %v354 = vld [vmem:[#allocation8 + $0x6d0] sm:$0xff]
    %v355 = vld [vmem:[#allocation8 + $0x6d8] sm:$0xff]
    %v356 = vld [vmem:[#allocation8 + $0x6e0] sm:$0xff]
    %v357 = vld [vmem:[#allocation8 + $0x6e8] sm:$0xff]
    %v358 = vld [vmem:[#allocation8 + $0x6f0] sm:$0xff]
    %v359 = vld [vmem:[#allocation8 + $0x6f8] sm:$0xff]
    %v360 = vld [vmem:[#allocation8 + $0x700] sm:$0xff]
    %v361 = vld [vmem:[#allocation8 + $0x708] sm:$0xff]
    %v362 = vld [vmem:[#allocation8 + $0x710] sm:$0xff]
    %v363 = vld [vmem:[#allocation8 + $0x718] sm:$0xff]
    %v364 = vld [vmem:[#allocation8 + $0x720] sm:$0xff]
    %v365 = vld [vmem:[#allocation8 + $0x728] sm:$0xff]
    %v366 = vld [vmem:[#allocation8 + $0x730] sm:$0xff]
    %v367 = vld [vmem:[#allocation8 + $0x738] sm:$0xff]
    %v368 = vld [vmem:[#allocation8 + $0x740] sm:$0xff]
    %v369 = vld [vmem:[#allocation8 + $0x748] sm:$0xff]
    %v370 = vld [vmem:[#allocation8 + $0x750] sm:$0xff]
    %v371 = vld [vmem:[#allocation8 + $0x758] sm:$0xff]
    %v372 = vld [vmem:[#allocation8 + $0x760] sm:$0xff]
    %v373 = vld [vmem:[#allocation8 + $0x768] sm:$0xff]
    %v374 = vld [vmem:[#allocation8 + $0x770] sm:$0xff]
    %v375 = vld [vmem:[#allocation8 + $0x778] sm:$0xff]
    %v376 = vld [vmem:[#allocation8 + $0x780] sm:$0xff]
    %v377 = vld [vmem:[#allocation8 + $0x788] sm:$0xff]
    %v378 = vld [vmem:[#allocation8 + $0x790] sm:$0xff]
    %v379 = vld [vmem:[#allocation8 + $0x798] sm:$0xff]
    %v380 = vld [vmem:[#allocation8 + $0x7a0] sm:$0xff]
    %v381 = vld [vmem:[#allocation8 + $0x7a8] sm:$0xff]
    %v382 = vld [vmem:[#allocation8 + $0x7b0] sm:$0xff]
    %v383 = vld [vmem:[#allocation8 + $0x7b8] sm:$0xff]
    %v384 = vld [vmem:[#allocation8 + $0x7c0] sm:$0xff]
    %v385 = vld [vmem:[#allocation8 + $0x7c8] sm:$0xff]
    %v386 = vld [vmem:[#allocation8 + $0x7d0] sm:$0xff]
    %v387 = vld [vmem:[#allocation8 + $0x7d8] sm:$0xff]
    %v388 = vld [vmem:[#allocation8 + $0x7e0] sm:$0xff]
    %v389 = vld [vmem:[#allocation8 + $0x7e8] sm:$0xff]
    %v390 = vld [vmem:[#allocation8 + $0x7f0] sm:$0xff]
    %v391 = vld [vmem:[#allocation8 + $0x7f8] sm:$0xff]
    %v392 = vand.u32 %v257, 4294901760
    %393 = vmatprep.subr.mxu0 %v392
    %v394 = vand.u32 %v256, 4294901760
    %395 = vmatpush1.msra.mxu0 %v394
    %v396 = vand.u32 %v249, 4294901760
    %397 = vmatprep.subr.mxu0 %v396
    %v398 = vand.u32 %v248, 4294901760
    %399 = vmatpush1.msra.mxu0 %v398
    %v400 = vand.u32 %v241, 4294901760
    %401 = vmatprep.subr.mxu0 %v400
    %v402 = vand.u32 %v240, 4294901760
    %403 = vmatpush1.msra.mxu0 %v402
    %v404 = vand.u32 %v233, 4294901760
    %405 = vmatprep.subr.mxu0 %v404
    %v406 = vand.u32 %v232, 4294901760
    %407 = vmatpush1.msra.mxu0 %v406
    %v408 = vand.u32 %v225, 4294901760
    %409 = vmatprep.subr.mxu0 %v408
    %v410 = vand.u32 %v224, 4294901760
    %411 = vmatpush1.msra.mxu0 %v410
    %v412 = vand.u32 %v217, 4294901760
    %413 = vmatprep.subr.mxu0 %v412
    %v414 = vand.u32 %v216, 4294901760
    %415 = vmatpush1.msra.mxu0 %v414
    %v416 = vand.u32 %v209, 4294901760
    %417 = vmatprep.subr.mxu0 %v416
    %v418 = vand.u32 %v208, 4294901760
    %419 = vmatpush1.msra.mxu0 %v418
    %v420 = vand.u32 %v201, 4294901760
    %421 = vmatprep.subr.mxu0 %v420
    %v422 = vand.u32 %v200, 4294901760
    %423 = vmatpush1.msra.mxu0 %v422
    %v424 = vand.u32 %v193, 4294901760
    %425 = vmatprep.subr.mxu0 %v424
    %v426 = vand.u32 %v192, 4294901760
    %427 = vmatpush1.msra.mxu0 %v426
    %v428 = vand.u32 %v185, 4294901760
    %429 = vmatprep.subr.mxu0 %v428
    %v430 = vand.u32 %v184, 4294901760
    %431 = vmatpush1.msra.mxu0 %v430
    %v432 = vand.u32 %v177, 4294901760
    %433 = vmatprep.subr.mxu0 %v432
    %v434 = vand.u32 %v176, 4294901760
    %435 = vmatpush1.msra.mxu0 %v434
    %v436 = vand.u32 %v169, 4294901760
    %437 = vmatprep.subr.mxu0 %v436
    %v438 = vand.u32 %v168, 4294901760
    %439 = vmatpush1.msra.mxu0 %v438
    %v440 = vand.u32 %v161, 4294901760
    %441 = vmatprep.subr.mxu0 %v440
    %v442 = vand.u32 %v160, 4294901760
    %443 = vmatpush1.msra.mxu0 %v442
    %v444 = vand.u32 %v153, 4294901760
    %445 = vmatprep.subr.mxu0 %v444
    %v446 = vand.u32 %v152, 4294901760
    %447 = vmatpush1.msra.mxu0 %v446
    %v448 = vand.u32 %v145, 4294901760
    %449 = vmatprep.subr.mxu0 %v448
    %v450 = vand.u32 %v144, 4294901760
    %451 = vmatpush1.msra.mxu0 %v450
    %v452 = vand.u32 %v137, 4294901760
    %453 = vmatprep.subr.mxu0 %v452
    %v454 = vand.u32 %v136, 4294901760
    %455 = vmatpush1.msra.mxu0 %v454
    %v456 = vand.u32 %v385, 4294901760
    %457 = vmatprep.subr.mxu0 %v456
    %v458 = vand.u32 %v384, 4294901760
    %459 = vmatpush2.msra.mxu0 %v458
    %v460 = vand.u32 %v377, 4294901760
    %461 = vmatprep.subr.mxu0 %v460
    %v462 = vand.u32 %v376, 4294901760
    %463 = vmatpush2.msra.mxu0 %v462
    %v464 = vand.u32 %v369, 4294901760
    %465 = vmatprep.subr.mxu0 %v464
    %v466 = vand.u32 %v368, 4294901760
    %467 = vmatpush2.msra.mxu0 %v466
    %v468 = vand.u32 %v361, 4294901760
    %469 = vmatprep.subr.mxu0 %v468
    %v470 = vand.u32 %v360, 4294901760
    %471 = vmatpush2.msra.mxu0 %v470
    %v472 = vand.u32 %v353, 4294901760
    %473 = vmatprep.subr.mxu0 %v472
    %v474 = vand.u32 %v352, 4294901760
    %475 = vmatpush2.msra.mxu0 %v474
    %v476 = vand.u32 %v345, 4294901760
    %477 = vmatprep.subr.mxu0 %v476
    %v478 = vand.u32 %v344, 4294901760
    %479 = vmatpush2.msra.mxu0 %v478
    %v480 = vand.u32 %v337, 4294901760
    %481 = vmatprep.subr.mxu0 %v480
    %v482 = vand.u32 %v336, 4294901760
    %483 = vmatpush2.msra.mxu0 %v482
    %v484 = vand.u32 %v329, 4294901760
    %485 = vmatprep.subr.mxu0 %v484
    %v486 = vand.u32 %v328, 4294901760
    %487 = vmatpush2.msra.mxu0 %v486
    %v488 = vand.u32 %v321, 4294901760
    %489 = vmatprep.subr.mxu0 %v488
    %v490 = vand.u32 %v320, 4294901760
    %491 = vmatpush2.msra.mxu0 %v490
    %v492 = vand.u32 %v313, 4294901760
    %493 = vmatprep.subr.mxu0 %v492
    %v494 = vand.u32 %v312, 4294901760
    %495 = vmatpush2.msra.mxu0 %v494
    %v496 = vand.u32 %v305, 4294901760
    %497 = vmatprep.subr.mxu0 %v496
    %v498 = vand.u32 %v304, 4294901760
    %499 = vmatpush2.msra.mxu0 %v498
    %v500 = vand.u32 %v297, 4294901760
    %501 = vmatprep.subr.mxu0 %v500
    %v502 = vand.u32 %v296, 4294901760
    %503 = vmatpush2.msra.mxu0 %v502
    %v504 = vand.u32 %v289, 4294901760
    %505 = vmatprep.subr.mxu0 %v504
    %v506 = vand.u32 %v288, 4294901760
    %507 = vmatpush2.msra.mxu0 %v506
    %v508 = vand.u32 %v281, 4294901760
    %509 = vmatprep.subr.mxu0 %v508
    %v510 = vand.u32 %v280, 4294901760
    %511 = vmatpush2.msra.mxu0 %v510
    %v512 = vand.u32 %v273, 4294901760
    %513 = vmatprep.subr.mxu0 %v512
    %v514 = vand.u32 %v272, 4294901760
    %515 = vmatpush2.msra.mxu0 %v514
    %v516 = vand.u32 %v265, 4294901760
    %517 = vmatprep.subr.mxu0 %v516
    %v518 = vand.u32 %v264, 4294901760
    %519 = vmatpush2.msra.mxu0 %v518
    %v520 = vand.u32 %v135, 4294901760
    %v521 = vsub.f32 %v135, %v520
    %v522 = vand.u32 %v521, 4294901760
    %v523 = vsub.f32 %v521, %v522
    %v524 = vand.u32 %v523, 4294901760
    %525 = vmatprep.mubr.f32.mxu0 %v524
    %v526 = vand.u32 %v134, 4294901760
    %v527 = vsub.f32 %v134, %v526
    %v528 = vand.u32 %v527, 4294901760
    %v529 = vsub.f32 %v527, %v528
    %v530 = vand.u32 %v529, 4294901760
    %531 = vmatmul.mubr.f32.gmra.mxu0 %v530
    %v532 = vpop.f32.mrf.mxu0
    %v533 = vadd.f32 0.0, %v532
    %v534 = vpop.f32.mrf.mxu0
    %v535 = vadd.f32 0.0, %v534
    %536 = vdwg.mxu0
    %v537 = vand.u32 %v257, 4294901760
    %v538 = vsub.f32 %v257, %v537
    %v539 = vand.u32 %v538, 4294901760
    %v540 = vsub.f32 %v538, %v539
    %v541 = vand.u32 %v540, 4294901760
    %542 = vmatprep.subr.mxu0 %v541
    %v543 = vand.u32 %v256, 4294901760
    %v544 = vsub.f32 %v256, %v543
    %v545 = vand.u32 %v544, 4294901760
    %v546 = vsub.f32 %v544, %v545
    %v547 = vand.u32 %v546, 4294901760
    %548 = vmatpush1.msra.mxu0 %v547
    %v549 = vand.u32 %v249, 4294901760
    %v550 = vsub.f32 %v249, %v549
    %v551 = vand.u32 %v550, 4294901760
    %v552 = vsub.f32 %v550, %v551
    %v553 = vand.u32 %v552, 4294901760
    %554 = vmatprep.subr.mxu0 %v553
    %v555 = vand.u32 %v248, 4294901760
    %v556 = vsub.f32 %v248, %v555
    %v557 = vand.u32 %v556, 4294901760
    %v558 = vsub.f32 %v556, %v557
    %v559 = vand.u32 %v558, 4294901760
    %560 = vmatpush1.msra.mxu0 %v559
    %v561 = vand.u32 %v241, 4294901760
    %v562 = vsub.f32 %v241, %v561
    %v563 = vand.u32 %v562, 4294901760
    %v564 = vsub.f32 %v562, %v563
    %v565 = vand.u32 %v564, 4294901760
    %566 = vmatprep.subr.mxu0 %v565
    %v567 = vand.u32 %v240, 4294901760
    %v568 = vsub.f32 %v240, %v567
    %v569 = vand.u32 %v568, 4294901760
    %v570 = vsub.f32 %v568, %v569
    %v571 = vand.u32 %v570, 4294901760
    %572 = vmatpush1.msra.mxu0 %v571
    %v573 = vand.u32 %v233, 4294901760
    %v574 = vsub.f32 %v233, %v573
    %v575 = vand.u32 %v574, 4294901760
    %v576 = vsub.f32 %v574, %v575
    %v577 = vand.u32 %v576, 4294901760
    %578 = vmatprep.subr.mxu0 %v577
    %v579 = vand.u32 %v232, 4294901760
    %v580 = vsub.f32 %v232, %v579
    %v581 = vand.u32 %v580, 4294901760
    %v582 = vsub.f32 %v580, %v581
    %v583 = vand.u32 %v582, 4294901760
    %584 = vmatpush1.msra.mxu0 %v583
    %v585 = vand.u32 %v225, 4294901760
    %v586 = vsub.f32 %v225, %v585
    %v587 = vand.u32 %v586, 4294901760
    %v588 = vsub.f32 %v586, %v587
    %v589 = vand.u32 %v588, 4294901760
    %590 = vmatprep.subr.mxu0 %v589
    %v591 = vand.u32 %v224, 4294901760
    %v592 = vsub.f32 %v224, %v591
    %v593 = vand.u32 %v592, 4294901760
    %v594 = vsub.f32 %v592, %v593
    %v595 = vand.u32 %v594, 4294901760
    %596 = vmatpush1.msra.mxu0 %v595
    %v597 = vand.u32 %v217, 4294901760
    %v598 = vsub.f32 %v217, %v597
    %v599 = vand.u32 %v598, 4294901760
    %v600 = vsub.f32 %v598, %v599
    %v601 = vand.u32 %v600, 4294901760
    %602 = vmatprep.subr.mxu0 %v601
    %v603 = vand.u32 %v216, 4294901760
    %v604 = vsub.f32 %v216, %v603
    %v605 = vand.u32 %v604, 4294901760
    %v606 = vsub.f32 %v604, %v605
    %v607 = vand.u32 %v606, 4294901760
    %608 = vmatpush1.msra.mxu0 %v607
    %v609 = vand.u32 %v209, 4294901760
    %v610 = vsub.f32 %v209, %v609
    %v611 = vand.u32 %v610, 4294901760
    %v612 = vsub.f32 %v610, %v611
    %v613 = vand.u32 %v612, 4294901760
    %614 = vmatprep.subr.mxu0 %v613
    %v615 = vand.u32 %v208, 4294901760
    %v616 = vsub.f32 %v208, %v615
    %v617 = vand.u32 %v616, 4294901760
    %v618 = vsub.f32 %v616, %v617
    %v619 = vand.u32 %v618, 4294901760
    %620 = vmatpush1.msra.mxu0 %v619
    %v621 = vand.u32 %v201, 4294901760
    %v622 = vsub.f32 %v201, %v621
    %v623 = vand.u32 %v622, 4294901760
    %v624 = vsub.f32 %v622, %v623
    %v625 = vand.u32 %v624, 4294901760
    %626 = vmatprep.subr.mxu0 %v625
    %v627 = vand.u32 %v200, 4294901760
    %v628 = vsub.f32 %v200, %v627
    %v629 = vand.u32 %v628, 4294901760
    %v630 = vsub.f32 %v628, %v629
    %v631 = vand.u32 %v630, 4294901760
    %632 = vmatpush1.msra.mxu0 %v631
    %v633 = vand.u32 %v193, 4294901760
    %v634 = vsub.f32 %v193, %v633
    %v635 = vand.u32 %v634, 4294901760
    %v636 = vsub.f32 %v634, %v635
    %v637 = vand.u32 %v636, 4294901760
    %638 = vmatprep.subr.mxu0 %v637
    %v639 = vand.u32 %v192, 4294901760
    %v640 = vsub.f32 %v192, %v639
    %v641 = vand.u32 %v640, 4294901760
    %v642 = vsub.f32 %v640, %v641
    %v643 = vand.u32 %v642, 4294901760
    %644 = vmatpush1.msra.mxu0 %v643
    %v645 = vand.u32 %v185, 4294901760
    %v646 = vsub.f32 %v185, %v645
    %v647 = vand.u32 %v646, 4294901760
    %v648 = vsub.f32 %v646, %v647
    %v649 = vand.u32 %v648, 4294901760
    %650 = vmatprep.subr.mxu0 %v649
    %v651 = vand.u32 %v184, 4294901760
    %v652 = vsub.f32 %v184, %v651
    %v653 = vand.u32 %v652, 4294901760
    %v654 = vsub.f32 %v652, %v653
    %v655 = vand.u32 %v654, 4294901760
    %656 = vmatpush1.msra.mxu0 %v655
    %v657 = vand.u32 %v177, 4294901760
    %v658 = vsub.f32 %v177, %v657
    %v659 = vand.u32 %v658, 4294901760
    %v660 = vsub.f32 %v658, %v659
    %v661 = vand.u32 %v660, 4294901760
    %662 = vmatprep.subr.mxu0 %v661
    %v663 = vand.u32 %v176, 4294901760
    %v664 = vsub.f32 %v176, %v663
    %v665 = vand.u32 %v664, 4294901760
    %v666 = vsub.f32 %v664, %v665
    %v667 = vand.u32 %v666, 4294901760
    %668 = vmatpush1.msra.mxu0 %v667
    %v669 = vand.u32 %v169, 4294901760
    %v670 = vsub.f32 %v169, %v669
    %v671 = vand.u32 %v670, 4294901760
    %v672 = vsub.f32 %v670, %v671
    %v673 = vand.u32 %v672, 4294901760
    %674 = vmatprep.subr.mxu0 %v673
    %v675 = vand.u32 %v168, 4294901760
    %v676 = vsub.f32 %v168, %v675
    %v677 = vand.u32 %v676, 4294901760
    %v678 = vsub.f32 %v676, %v677
    %v679 = vand.u32 %v678, 4294901760
    %680 = vmatpush1.msra.mxu0 %v679
    %v681 = vand.u32 %v161, 4294901760
    %v682 = vsub.f32 %v161, %v681
    %v683 = vand.u32 %v682, 4294901760
    %v684 = vsub.f32 %v682, %v683
    %v685 = vand.u32 %v684, 4294901760
    %686 = vmatprep.subr.mxu0 %v685
    %v687 = vand.u32 %v160, 4294901760
    %v688 = vsub.f32 %v160, %v687
    %v689 = vand.u32 %v688, 4294901760
    %v690 = vsub.f32 %v688, %v689
    %v691 = vand.u32 %v690, 4294901760
    %692 = vmatpush1.msra.mxu0 %v691
    %v693 = vand.u32 %v153, 4294901760
    %v694 = vsub.f32 %v153, %v693
    %v695 = vand.u32 %v694, 4294901760
    %v696 = vsub.f32 %v694, %v695
    %v697 = vand.u32 %v696, 4294901760
    %698 = vmatprep.subr.mxu0 %v697
    %v699 = vand.u32 %v152, 4294901760
    %v700 = vsub.f32 %v152, %v699
    %v701 = vand.u32 %v700, 4294901760
    %v702 = vsub.f32 %v700, %v701
    %v703 = vand.u32 %v702, 4294901760
    %704 = vmatpush1.msra.mxu0 %v703
    %v705 = vand.u32 %v145, 4294901760
    %v706 = vsub.f32 %v145, %v705
    %v707 = vand.u32 %v706, 4294901760
    %v708 = vsub.f32 %v706, %v707
    %v709 = vand.u32 %v708, 4294901760
    %710 = vmatprep.subr.mxu0 %v709
    %v711 = vand.u32 %v144, 4294901760
    %v712 = vsub.f32 %v144, %v711
    %v713 = vand.u32 %v712, 4294901760
    %v714 = vsub.f32 %v712, %v713
    %v715 = vand.u32 %v714, 4294901760
    %716 = vmatpush1.msra.mxu0 %v715
    %v717 = vand.u32 %v137, 4294901760
    %v718 = vsub.f32 %v137, %v717
    %v719 = vand.u32 %v718, 4294901760
    %v720 = vsub.f32 %v718, %v719
    %v721 = vand.u32 %v720, 4294901760
    %722 = vmatprep.subr.mxu0 %v721
    %v723 = vand.u32 %v136, 4294901760
    %v724 = vsub.f32 %v136, %v723
    %v725 = vand.u32 %v724, 4294901760
    %v726 = vsub.f32 %v724, %v725
    %v727 = vand.u32 %v726, 4294901760
    %728 = vmatpush1.msra.mxu0 %v727
    %v729 = vand.u32 %v385, 4294901760
    %v730 = vsub.f32 %v385, %v729
    %v731 = vand.u32 %v730, 4294901760
    %v732 = vsub.f32 %v730, %v731
    %v733 = vand.u32 %v732, 4294901760
    %734 = vmatprep.subr.mxu0 %v733
    %v735 = vand.u32 %v384, 4294901760
    %v736 = vsub.f32 %v384, %v735
    %v737 = vand.u32 %v736, 4294901760
    %v738 = vsub.f32 %v736, %v737
    %v739 = vand.u32 %v738, 4294901760
    %740 = vmatpush2.msra.mxu0 %v739
    %v741 = vand.u32 %v377, 4294901760
    %v742 = vsub.f32 %v377, %v741
    %v743 = vand.u32 %v742, 4294901760
    %v744 = vsub.f32 %v742, %v743
    %v745 = vand.u32 %v744, 4294901760
    %746 = vmatprep.subr.mxu0 %v745
    %v747 = vand.u32 %v376, 4294901760
    %v748 = vsub.f32 %v376, %v747
    %v749 = vand.u32 %v748, 4294901760
    %v750 = vsub.f32 %v748, %v749
    %v751 = vand.u32 %v750, 4294901760
    %752 = vmatpush2.msra.mxu0 %v751
    %v753 = vand.u32 %v369, 4294901760
    %v754 = vsub.f32 %v369, %v753
    %v755 = vand.u32 %v754, 4294901760
    %v756 = vsub.f32 %v754, %v755
    %v757 = vand.u32 %v756, 4294901760
    %758 = vmatprep.subr.mxu0 %v757
    %v759 = vand.u32 %v368, 4294901760
    %v760 = vsub.f32 %v368, %v759
    %v761 = vand.u32 %v760, 4294901760
    %v762 = vsub.f32 %v760, %v761
    %v763 = vand.u32 %v762, 4294901760
    %764 = vmatpush2.msra.mxu0 %v763
    %v765 = vand.u32 %v361, 4294901760
    %v766 = vsub.f32 %v361, %v765
    %v767 = vand.u32 %v766, 4294901760
    %v768 = vsub.f32 %v766, %v767
    %v769 = vand.u32 %v768, 4294901760
    %770 = vmatprep.subr.mxu0 %v769
    %v771 = vand.u32 %v360, 4294901760
    %v772 = vsub.f32 %v360, %v771
    %v773 = vand.u32 %v772, 4294901760
    %v774 = vsub.f32 %v772, %v773
    %v775 = vand.u32 %v774, 4294901760
    %776 = vmatpush2.msra.mxu0 %v775
    %v777 = vand.u32 %v353, 4294901760
    %v778 = vsub.f32 %v353, %v777
    %v779 = vand.u32 %v778, 4294901760
    %v780 = vsub.f32 %v778, %v779
    %v781 = vand.u32 %v780, 4294901760
    %782 = vmatprep.subr.mxu0 %v781
    %v783 = vand.u32 %v352, 4294901760
    %v784 = vsub.f32 %v352, %v783
    %v785 = vand.u32 %v784, 4294901760
    %v786 = vsub.f32 %v784, %v785
    %v787 = vand.u32 %v786, 4294901760
    %788 = vmatpush2.msra.mxu0 %v787
    %v789 = vand.u32 %v345, 4294901760
    %v790 = vsub.f32 %v345, %v789
    %v791 = vand.u32 %v790, 4294901760
    %v792 = vsub.f32 %v790, %v791
    %v793 = vand.u32 %v792, 4294901760
    %794 = vmatprep.subr.mxu0 %v793
    %v795 = vand.u32 %v344, 4294901760
    %v796 = vsub.f32 %v344, %v795
    %v797 = vand.u32 %v796, 4294901760
    %v798 = vsub.f32 %v796, %v797
    %v799 = vand.u32 %v798, 4294901760
    %800 = vmatpush2.msra.mxu0 %v799
    %v801 = vand.u32 %v337, 4294901760
    %v802 = vsub.f32 %v337, %v801
    %v803 = vand.u32 %v802, 4294901760
    %v804 = vsub.f32 %v802, %v803
    %v805 = vand.u32 %v804, 4294901760
    %806 = vmatprep.subr.mxu0 %v805
    %v807 = vand.u32 %v336, 4294901760
    %v808 = vsub.f32 %v336, %v807
    %v809 = vand.u32 %v808, 4294901760
    %v810 = vsub.f32 %v808, %v809
    %v811 = vand.u32 %v810, 4294901760
    %812 = vmatpush2.msra.mxu0 %v811
    %v813 = vand.u32 %v329, 4294901760
    %v814 = vsub.f32 %v329, %v813
    %v815 = vand.u32 %v814, 4294901760
    %v816 = vsub.f32 %v814, %v815
    %v817 = vand.u32 %v816, 4294901760
    %818 = vmatprep.subr.mxu0 %v817
    %v819 = vand.u32 %v328, 4294901760
    %v820 = vsub.f32 %v328, %v819
    %v821 = vand.u32 %v820, 4294901760
    %v822 = vsub.f32 %v820, %v821
    %v823 = vand.u32 %v822, 4294901760
    %824 = vmatpush2.msra.mxu0 %v823
    %v825 = vand.u32 %v321, 4294901760
    %v826 = vsub.f32 %v321, %v825
    %v827 = vand.u32 %v826, 4294901760
    %v828 = vsub.f32 %v826, %v827
    %v829 = vand.u32 %v828, 4294901760
    %830 = vmatprep.subr.mxu0 %v829
    %v831 = vand.u32 %v320, 4294901760
    %v832 = vsub.f32 %v320, %v831
    %v833 = vand.u32 %v832, 4294901760
    %v834 = vsub.f32 %v832, %v833
    %v835 = vand.u32 %v834, 4294901760
    %836 = vmatpush2.msra.mxu0 %v835
    %v837 = vand.u32 %v313, 4294901760
    %v838 = vsub.f32 %v313, %v837
    %v839 = vand.u32 %v838, 4294901760
    %v840 = vsub.f32 %v838, %v839
    %v841 = vand.u32 %v840, 4294901760
    %842 = vmatprep.subr.mxu0 %v841
    %v843 = vand.u32 %v312, 4294901760
    %v844 = vsub.f32 %v312, %v843
    %v845 = vand.u32 %v844, 4294901760
    %v846 = vsub.f32 %v844, %v845
    %v847 = vand.u32 %v846, 4294901760
    %848 = vmatpush2.msra.mxu0 %v847
    %v849 = vand.u32 %v305, 4294901760
    %v850 = vsub.f32 %v305, %v849
    %v851 = vand.u32 %v850, 4294901760
    %v852 = vsub.f32 %v850, %v851
    %v853 = vand.u32 %v852, 4294901760
    %854 = vmatprep.subr.mxu0 %v853
    %v855 = vand.u32 %v304, 4294901760
    %v856 = vsub.f32 %v304, %v855
    %v857 = vand.u32 %v856, 4294901760
    %v858 = vsub.f32 %v856, %v857
    %v859 = vand.u32 %v858, 4294901760
    %860 = vmatpush2.msra.mxu0 %v859
    %v861 = vand.u32 %v297, 4294901760
    %v862 = vsub.f32 %v297, %v861
    %v863 = vand.u32 %v862, 4294901760
    %v864 = vsub.f32 %v862, %v863
    %v865 = vand.u32 %v864, 4294901760
    %866 = vmatprep.subr.mxu0 %v865
    %v867 = vand.u32 %v296, 4294901760
    %v868 = vsub.f32 %v296, %v867
    %v869 = vand.u32 %v868, 4294901760
    %v870 = vsub.f32 %v868, %v869
    %v871 = vand.u32 %v870, 4294901760
    %872 = vmatpush2.msra.mxu0 %v871
    %v873 = vand.u32 %v289, 4294901760
    %v874 = vsub.f32 %v289, %v873
    %v875 = vand.u32 %v874, 4294901760
    %v876 = vsub.f32 %v874, %v875
    %v877 = vand.u32 %v876, 4294901760
    %878 = vmatprep.subr.mxu0 %v877
    %v879 = vand.u32 %v288, 4294901760
    %v880 = vsub.f32 %v288, %v879
    %v881 = vand.u32 %v880, 4294901760
    %v882 = vsub.f32 %v880, %v881
    %v883 = vand.u32 %v882, 4294901760
    %884 = vmatpush2.msra.mxu0 %v883
    %v885 = vand.u32 %v281, 4294901760
    %v886 = vsub.f32 %v281, %v885
    %v887 = vand.u32 %v886, 4294901760
    %v888 = vsub.f32 %v886, %v887
    %v889 = vand.u32 %v888, 4294901760
    %890 = vmatprep.subr.mxu0 %v889
    %v891 = vand.u32 %v280, 4294901760
    %v892 = vsub.f32 %v280, %v891
    %v893 = vand.u32 %v892, 4294901760
    %v894 = vsub.f32 %v892, %v893
    %v895 = vand.u32 %v894, 4294901760
    %896 = vmatpush2.msra.mxu0 %v895
    %v897 = vand.u32 %v273, 4294901760
    %v898 = vsub.f32 %v273, %v897
    %v899 = vand.u32 %v898, 4294901760
    %v900 = vsub.f32 %v898, %v899
    %v901 = vand.u32 %v900, 4294901760
    %902 = vmatprep.subr.mxu0 %v901
    %v903 = vand.u32 %v272, 4294901760
    %v904 = vsub.f32 %v272, %v903
    %v905 = vand.u32 %v904, 4294901760
    %v906 = vsub.f32 %v904, %v905
    %v907 = vand.u32 %v906, 4294901760
    %908 = vmatpush2.msra.mxu0 %v907
    %v909 = vand.u32 %v265, 4294901760
    %v910 = vsub.f32 %v265, %v909
    %v911 = vand.u32 %v910, 4294901760
    %v912 = vsub.f32 %v910, %v911
    %v913 = vand.u32 %v912, 4294901760
    %914 = vmatprep.subr.mxu0 %v913
    %v915 = vand.u32 %v264, 4294901760
    %v916 = vsub.f32 %v264, %v915
    %v917 = vand.u32 %v916, 4294901760
    %v918 = vsub.f32 %v916, %v917
    %v919 = vand.u32 %v918, 4294901760
    %920 = vmatpush2.msra.mxu0 %v919
    %v921 = vand.u32 %v135, 4294901760
    %922 = vmatprep.mubr.f32.mxu0 %v921
    %v923 = vand.u32 %v134, 4294901760
    %924 = vmatmul.mubr.f32.gmra.mxu0 %v923
    %v925 = vpop.f32.mrf.mxu0
    %v926 = vadd.f32 %v533, %v925
    %v927 = vpop.f32.mrf.mxu0
    %v928 = vadd.f32 %v535, %v927
    %929 = vdwg.mxu0
    %v930 = vand.u32 %v257, 4294901760
    %v931 = vsub.f32 %v257, %v930
    %932 = vmatprep.subr.mxu0 %v931
    %v933 = vand.u32 %v256, 4294901760
    %v934 = vsub.f32 %v256, %v933
    %935 = vmatpush1.msra.mxu0 %v934
    %v936 = vand.u32 %v249, 4294901760
    %v937 = vsub.f32 %v249, %v936
    %938 = vmatprep.subr.mxu0 %v937
    %v939 = vand.u32 %v248, 4294901760
    %v940 = vsub.f32 %v248, %v939
    %941 = vmatpush1.msra.mxu0 %v940
    %v942 = vand.u32 %v241, 4294901760
    %v943 = vsub.f32 %v241, %v942
    %944 = vmatprep.subr.mxu0 %v943
    %v945 = vand.u32 %v240, 4294901760
    %v946 = vsub.f32 %v240, %v945
    %947 = vmatpush1.msra.mxu0 %v946
    %v948 = vand.u32 %v233, 4294901760
    %v949 = vsub.f32 %v233, %v948
    %950 = vmatprep.subr.mxu0 %v949
    %v951 = vand.u32 %v232, 4294901760
    %v952 = vsub.f32 %v232, %v951
    %953 = vmatpush1.msra.mxu0 %v952
    %v954 = vand.u32 %v225, 4294901760
    %v955 = vsub.f32 %v225, %v954
    %956 = vmatprep.subr.mxu0 %v955
    %v957 = vand.u32 %v224, 4294901760
    %v958 = vsub.f32 %v224, %v957
    %959 = vmatpush1.msra.mxu0 %v958
    %v960 = vand.u32 %v217, 4294901760
    %v961 = vsub.f32 %v217, %v960
    %962 = vmatprep.subr.mxu0 %v961
    %v963 = vand.u32 %v216, 4294901760
    %v964 = vsub.f32 %v216, %v963
    %965 = vmatpush1.msra.mxu0 %v964
    %v966 = vand.u32 %v209, 4294901760
    %v967 = vsub.f32 %v209, %v966
    %968 = vmatprep.subr.mxu0 %v967
    %v969 = vand.u32 %v208, 4294901760
    %v970 = vsub.f32 %v208, %v969
    %971 = vmatpush1.msra.mxu0 %v970
    %v972 = vand.u32 %v201, 4294901760
    %v973 = vsub.f32 %v201, %v972
    %974 = vmatprep.subr.mxu0 %v973
    %v975 = vand.u32 %v200, 4294901760
    %v976 = vsub.f32 %v200, %v975
    %977 = vmatpush1.msra.mxu0 %v976
    %v978 = vand.u32 %v193, 4294901760
    %v979 = vsub.f32 %v193, %v978
    %980 = vmatprep.subr.mxu0 %v979
    %v981 = vand.u32 %v192, 4294901760
    %v982 = vsub.f32 %v192, %v981
    %983 = vmatpush1.msra.mxu0 %v982
    %v984 = vand.u32 %v185, 4294901760
    %v985 = vsub.f32 %v185, %v984
    %986 = vmatprep.subr.mxu0 %v985
    %v987 = vand.u32 %v184, 4294901760
    %v988 = vsub.f32 %v184, %v987
    %989 = vmatpush1.msra.mxu0 %v988
    %v990 = vand.u32 %v177, 4294901760
    %v991 = vsub.f32 %v177, %v990
    %992 = vmatprep.subr.mxu0 %v991
    %v993 = vand.u32 %v176, 4294901760
    %v994 = vsub.f32 %v176, %v993
    %995 = vmatpush1.msra.mxu0 %v994
    %v996 = vand.u32 %v169, 4294901760
    %v997 = vsub.f32 %v169, %v996
    %998 = vmatprep.subr.mxu0 %v997
    %v999 = vand.u32 %v168, 4294901760
    %v1000 = vsub.f32 %v168, %v999
    %1001 = vmatpush1.msra.mxu0 %v1000
    %v1002 = vand.u32 %v161, 4294901760
    %v1003 = vsub.f32 %v161, %v1002
    %1004 = vmatprep.subr.mxu0 %v1003
    %v1005 = vand.u32 %v160, 4294901760
    %v1006 = vsub.f32 %v160, %v1005
    %1007 = vmatpush1.msra.mxu0 %v1006
    %v1008 = vand.u32 %v153, 4294901760
    %v1009 = vsub.f32 %v153, %v1008
    %1010 = vmatprep.subr.mxu0 %v1009
    %v1011 = vand.u32 %v152, 4294901760
    %v1012 = vsub.f32 %v152, %v1011
    %1013 = vmatpush1.msra.mxu0 %v1012
    %v1014 = vand.u32 %v145, 4294901760
    %v1015 = vsub.f32 %v145, %v1014
    %1016 = vmatprep.subr.mxu0 %v1015
    %v1017 = vand.u32 %v144, 4294901760
    %v1018 = vsub.f32 %v144, %v1017
    %1019 = vmatpush1.msra.mxu0 %v1018
    %v1020 = vand.u32 %v137, 4294901760
    %v1021 = vsub.f32 %v137, %v1020
    %1022 = vmatprep.subr.mxu0 %v1021
    %v1023 = vand.u32 %v136, 4294901760
    %v1024 = vsub.f32 %v136, %v1023
    %1025 = vmatpush1.msra.mxu0 %v1024
    %v1026 = vand.u32 %v385, 4294901760
    %v1027 = vsub.f32 %v385, %v1026
    %1028 = vmatprep.subr.mxu0 %v1027
    %v1029 = vand.u32 %v384, 4294901760
    %v1030 = vsub.f32 %v384, %v1029
    %1031 = vmatpush2.msra.mxu0 %v1030
    %v1032 = vand.u32 %v377, 4294901760
    %v1033 = vsub.f32 %v377, %v1032
    %1034 = vmatprep.subr.mxu0 %v1033
    %v1035 = vand.u32 %v376, 4294901760
    %v1036 = vsub.f32 %v376, %v1035
    %1037 = vmatpush2.msra.mxu0 %v1036
    %v1038 = vand.u32 %v369, 4294901760
    %v1039 = vsub.f32 %v369, %v1038
    %1040 = vmatprep.subr.mxu0 %v1039
    %v1041 = vand.u32 %v368, 4294901760
    %v1042 = vsub.f32 %v368, %v1041
    %1043 = vmatpush2.msra.mxu0 %v1042
    %v1044 = vand.u32 %v361, 4294901760
    %v1045 = vsub.f32 %v361, %v1044
    %1046 = vmatprep.subr.mxu0 %v1045
    %v1047 = vand.u32 %v360, 4294901760
    %v1048 = vsub.f32 %v360, %v1047
    %1049 = vmatpush2.msra.mxu0 %v1048
    %v1050 = vand.u32 %v353, 4294901760
    %v1051 = vsub.f32 %v353, %v1050
    %1052 = vmatprep.subr.mxu0 %v1051
    %v1053 = vand.u32 %v352, 4294901760
    %v1054 = vsub.f32 %v352, %v1053
    %1055 = vmatpush2.msra.mxu0 %v1054
    %v1056 = vand.u32 %v345, 4294901760
    %v1057 = vsub.f32 %v345, %v1056
    %1058 = vmatprep.subr.mxu0 %v1057
    %v1059 = vand.u32 %v344, 4294901760
    %v1060 = vsub.f32 %v344, %v1059
    %1061 = vmatpush2.msra.mxu0 %v1060
    %v1062 = vand.u32 %v337, 4294901760
    %v1063 = vsub.f32 %v337, %v1062
    %1064 = vmatprep.subr.mxu0 %v1063
    %v1065 = vand.u32 %v336, 4294901760
    %v1066 = vsub.f32 %v336, %v1065
    %1067 = vmatpush2.msra.mxu0 %v1066
    %v1068 = vand.u32 %v329, 4294901760
    %v1069 = vsub.f32 %v329, %v1068
    %1070 = vmatprep.subr.mxu0 %v1069
    %v1071 = vand.u32 %v328, 4294901760
    %v1072 = vsub.f32 %v328, %v1071
    %1073 = vmatpush2.msra.mxu0 %v1072
    %v1074 = vand.u32 %v321, 4294901760
    %v1075 = vsub.f32 %v321, %v1074
    %1076 = vmatprep.subr.mxu0 %v1075
    %v1077 = vand.u32 %v320, 4294901760
    %v1078 = vsub.f32 %v320, %v1077
    %1079 = vmatpush2.msra.mxu0 %v1078
    %v1080 = vand.u32 %v313, 4294901760
    %v1081 = vsub.f32 %v313, %v1080
    %1082 = vmatprep.subr.mxu0 %v1081
    %v1083 = vand.u32 %v312, 4294901760
    %v1084 = vsub.f32 %v312, %v1083
    %1085 = vmatpush2.msra.mxu0 %v1084
    %v1086 = vand.u32 %v305, 4294901760
    %v1087 = vsub.f32 %v305, %v1086
    %1088 = vmatprep.subr.mxu0 %v1087
    %v1089 = vand.u32 %v304, 4294901760
    %v1090 = vsub.f32 %v304, %v1089
    %1091 = vmatpush2.msra.mxu0 %v1090
    %v1092 = vand.u32 %v297, 4294901760
    %v1093 = vsub.f32 %v297, %v1092
    %1094 = vmatprep.subr.mxu0 %v1093
    %v1095 = vand.u32 %v296, 4294901760
    %v1096 = vsub.f32 %v296, %v1095
    %1097 = vmatpush2.msra.mxu0 %v1096
    %v1098 = vand.u32 %v289, 4294901760
    %v1099 = vsub.f32 %v289, %v1098
    %1100 = vmatprep.subr.mxu0 %v1099
    %v1101 = vand.u32 %v288, 4294901760
    %v1102 = vsub.f32 %v288, %v1101
    %1103 = vmatpush2.msra.mxu0 %v1102
    %v1104 = vand.u32 %v281, 4294901760
    %v1105 = vsub.f32 %v281, %v1104
    %1106 = vmatprep.subr.mxu0 %v1105
    %v1107 = vand.u32 %v280, 4294901760
    %v1108 = vsub.f32 %v280, %v1107
    %1109 = vmatpush2.msra.mxu0 %v1108
    %v1110 = vand.u32 %v273, 4294901760
    %v1111 = vsub.f32 %v273, %v1110
    %1112 = vmatprep.subr.mxu0 %v1111
    %v1113 = vand.u32 %v272, 4294901760
    %v1114 = vsub.f32 %v272, %v1113
    %1115 = vmatpush2.msra.mxu0 %v1114
    %v1116 = vand.u32 %v265, 4294901760
    %v1117 = vsub.f32 %v265, %v1116
    %1118 = vmatprep.subr.mxu0 %v1117
    %v1119 = vand.u32 %v264, 4294901760
    %v1120 = vsub.f32 %v264, %v1119
    %1121 = vmatpush2.msra.mxu0 %v1120
    %v1122 = vand.u32 %v135, 4294901760
    %v1123 = vsub.f32 %v135, %v1122
    %1124 = vmatprep.mubr.f32.mxu0 %v1123
    %v1125 = vand.u32 %v134, 4294901760
    %v1126 = vsub.f32 %v134, %v1125
    %1127 = vmatmul.mubr.f32.gmra.mxu0 %v1126
    %v1128 = vpop.f32.mrf.mxu0
    %v1129 = vadd.f32 %v926, %v1128
    %v1130 = vpop.f32.mrf.mxu0
    %v1131 = vadd.f32 %v928, %v1130
    %1132 = vdwg.mxu0
    %v1133 = vand.u32 %v257, 4294901760
    %1134 = vmatprep.subr.mxu0 %v1133
    %v1135 = vand.u32 %v256, 4294901760
    %1136 = vmatpush1.msra.mxu0 %v1135
    %v1137 = vand.u32 %v249, 4294901760
    %1138 = vmatprep.subr.mxu0 %v1137
    %v1139 = vand.u32 %v248, 4294901760
    %1140 = vmatpush1.msra.mxu0 %v1139
    %v1141 = vand.u32 %v241, 4294901760
    %1142 = vmatprep.subr.mxu0 %v1141
    %v1143 = vand.u32 %v240, 4294901760
    %1144 = vmatpush1.msra.mxu0 %v1143
    %v1145 = vand.u32 %v233, 4294901760
    %1146 = vmatprep.subr.mxu0 %v1145
    %v1147 = vand.u32 %v232, 4294901760
    %1148 = vmatpush1.msra.mxu0 %v1147
    %v1149 = vand.u32 %v225, 4294901760
    %1150 = vmatprep.subr.mxu0 %v1149
    %v1151 = vand.u32 %v224, 4294901760
    %1152 = vmatpush1.msra.mxu0 %v1151
    %v1153 = vand.u32 %v217, 4294901760
    %1154 = vmatprep.subr.mxu0 %v1153
    %v1155 = vand.u32 %v216, 4294901760
    %1156 = vmatpush1.msra.mxu0 %v1155
    %v1157 = vand.u32 %v209, 4294901760
    %1158 = vmatprep.subr.mxu0 %v1157
    %v1159 = vand.u32 %v208, 4294901760
    %1160 = vmatpush1.msra.mxu0 %v1159
    %v1161 = vand.u32 %v201, 4294901760
    %1162 = vmatprep.subr.mxu0 %v1161
    %v1163 = vand.u32 %v200, 4294901760
    %1164 = vmatpush1.msra.mxu0 %v1163
    %v1165 = vand.u32 %v193, 4294901760
    %1166 = vmatprep.subr.mxu0 %v1165
    %v1167 = vand.u32 %v192, 4294901760
    %1168 = vmatpush1.msra.mxu0 %v1167
    %v1169 = vand.u32 %v185, 4294901760
    %1170 = vmatprep.subr.mxu0 %v1169
    %v1171 = vand.u32 %v184, 4294901760
    %1172 = vmatpush1.msra.mxu0 %v1171
    %v1173 = vand.u32 %v177, 4294901760
    %1174 = vmatprep.subr.mxu0 %v1173
    %v1175 = vand.u32 %v176, 4294901760
    %1176 = vmatpush1.msra.mxu0 %v1175
    %v1177 = vand.u32 %v169, 4294901760
    %1178 = vmatprep.subr.mxu0 %v1177
    %v1179 = vand.u32 %v168, 4294901760
    %1180 = vmatpush1.msra.mxu0 %v1179
    %v1181 = vand.u32 %v161, 4294901760
    %1182 = vmatprep.subr.mxu0 %v1181
    %v1183 = vand.u32 %v160, 4294901760
    %1184 = vmatpush1.msra.mxu0 %v1183
    %v1185 = vand.u32 %v153, 4294901760
    %1186 = vmatprep.subr.mxu0 %v1185
    %v1187 = vand.u32 %v152, 4294901760
    %1188 = vmatpush1.msra.mxu0 %v1187
    %v1189 = vand.u32 %v145, 4294901760
    %1190 = vmatprep.subr.mxu0 %v1189
    %v1191 = vand.u32 %v144, 4294901760
    %1192 = vmatpush1.msra.mxu0 %v1191
    %v1193 = vand.u32 %v137, 4294901760
    %1194 = vmatprep.subr.mxu0 %v1193
    %v1195 = vand.u32 %v136, 4294901760
    %1196 = vmatpush1.msra.mxu0 %v1195
    %v1197 = vand.u32 %v385, 4294901760
    %1198 = vmatprep.subr.mxu0 %v1197
    %v1199 = vand.u32 %v384, 4294901760
    %1200 = vmatpush2.msra.mxu0 %v1199
    %v1201 = vand.u32 %v377, 4294901760
    %1202 = vmatprep.subr.mxu0 %v1201
    %v1203 = vand.u32 %v376, 4294901760
    %1204 = vmatpush2.msra.mxu0 %v1203
    %v1205 = vand.u32 %v369, 4294901760
    %1206 = vmatprep.subr.mxu0 %v1205
    %v1207 = vand.u32 %v368, 4294901760
    %1208 = vmatpush2.msra.mxu0 %v1207
    %v1209 = vand.u32 %v361, 4294901760
    %1210 = vmatprep.subr.mxu0 %v1209
    %v1211 = vand.u32 %v360, 4294901760
    %1212 = vmatpush2.msra.mxu0 %v1211
    %v1213 = vand.u32 %v353, 4294901760
    %1214 = vmatprep.subr.mxu0 %v1213
    %v1215 = vand.u32 %v352, 4294901760
    %1216 = vmatpush2.msra.mxu0 %v1215
    %v1217 = vand.u32 %v345, 4294901760
    %1218 = vmatprep.subr.mxu0 %v1217
    %v1219 = vand.u32 %v344, 4294901760
    %1220 = vmatpush2.msra.mxu0 %v1219
    %v1221 = vand.u32 %v337, 4294901760
    %1222 = vmatprep.subr.mxu0 %v1221
    %v1223 = vand.u32 %v336, 4294901760
    %1224 = vmatpush2.msra.mxu0 %v1223
    %v1225 = vand.u32 %v329, 4294901760
    %1226 = vmatprep.subr.mxu0 %v1225
    %v1227 = vand.u32 %v328, 4294901760
    %1228 = vmatpush2.msra.mxu0 %v1227
    %v1229 = vand.u32 %v321, 4294901760
    %1230 = vmatprep.subr.mxu0 %v1229
    %v1231 = vand.u32 %v320, 4294901760
    %1232 = vmatpush2.msra.mxu0 %v1231
    %v1233 = vand.u32 %v313, 4294901760
    %1234 = vmatprep.subr.mxu0 %v1233
    %v1235 = vand.u32 %v312, 4294901760
    %1236 = vmatpush2.msra.mxu0 %v1235
    %v1237 = vand.u32 %v305, 4294901760
    %1238 = vmatprep.subr.mxu0 %v1237
    %v1239 = vand.u32 %v304, 4294901760
    %1240 = vmatpush2.msra.mxu0 %v1239
    %v1241 = vand.u32 %v297, 4294901760
    %1242 = vmatprep.subr.mxu0 %v1241
    %v1243 = vand.u32 %v296, 4294901760
    %1244 = vmatpush2.msra.mxu0 %v1243
    %v1245 = vand.u32 %v289, 4294901760
    %1246 = vmatprep.subr.mxu0 %v1245
    %v1247 = vand.u32 %v288, 4294901760
    %1248 = vmatpush2.msra.mxu0 %v1247
    %v1249 = vand.u32 %v281, 4294901760
    %1250 = vmatprep.subr.mxu0 %v1249
    %v1251 = vand.u32 %v280, 4294901760
    %1252 = vmatpush2.msra.mxu0 %v1251
    %v1253 = vand.u32 %v273, 4294901760
    %1254 = vmatprep.subr.mxu0 %v1253
    %v1255 = vand.u32 %v272, 4294901760
    %1256 = vmatpush2.msra.mxu0 %v1255
    %v1257 = vand.u32 %v265, 4294901760
    %1258 = vmatprep.subr.mxu0 %v1257
    %v1259 = vand.u32 %v264, 4294901760
    %1260 = vmatpush2.msra.mxu0 %v1259
    %v1261 = vand.u32 %v135, 4294901760
    %v1262 = vsub.f32 %v135, %v1261
    %v1263 = vand.u32 %v1262, 4294901760
    %1264 = vmatprep.mubr.f32.mxu0 %v1263
    %v1265 = vand.u32 %v134, 4294901760
    %v1266 = vsub.f32 %v134, %v1265
    %v1267 = vand.u32 %v1266, 4294901760
    %1268 = vmatmul.mubr.f32.gmra.mxu0 %v1267
    %v1269 = vpop.f32.mrf.mxu0
    %v1270 = vadd.f32 %v1129, %v1269
    %v1271 = vpop.f32.mrf.mxu0
    %v1272 = vadd.f32 %v1131, %v1271
    %1273 = vdwg.mxu0
    %v1274 = vand.u32 %v257, 4294901760
    %v1275 = vsub.f32 %v257, %v1274
    %v1276 = vand.u32 %v1275, 4294901760
    %1277 = vmatprep.subr.mxu0 %v1276
    %v1278 = vand.u32 %v256, 4294901760
    %v1279 = vsub.f32 %v256, %v1278
    %v1280 = vand.u32 %v1279, 4294901760
    %1281 = vmatpush1.msra.mxu0 %v1280
    %v1282 = vand.u32 %v249, 4294901760
    %v1283 = vsub.f32 %v249, %v1282
    %v1284 = vand.u32 %v1283, 4294901760
    %1285 = vmatprep.subr.mxu0 %v1284
    %v1286 = vand.u32 %v248, 4294901760
    %v1287 = vsub.f32 %v248, %v1286
    %v1288 = vand.u32 %v1287, 4294901760
    %1289 = vmatpush1.msra.mxu0 %v1288
    %v1290 = vand.u32 %v241, 4294901760
    %v1291 = vsub.f32 %v241, %v1290
    %v1292 = vand.u32 %v1291, 4294901760
    %1293 = vmatprep.subr.mxu0 %v1292
    %v1294 = vand.u32 %v240, 4294901760
    %v1295 = vsub.f32 %v240, %v1294
    %v1296 = vand.u32 %v1295, 4294901760
    %1297 = vmatpush1.msra.mxu0 %v1296
    %v1298 = vand.u32 %v233, 4294901760
    %v1299 = vsub.f32 %v233, %v1298
    %v1300 = vand.u32 %v1299, 4294901760
    %1301 = vmatprep.subr.mxu0 %v1300
    %v1302 = vand.u32 %v232, 4294901760
    %v1303 = vsub.f32 %v232, %v1302
    %v1304 = vand.u32 %v1303, 4294901760
    %1305 = vmatpush1.msra.mxu0 %v1304
    %v1306 = vand.u32 %v225, 4294901760
    %v1307 = vsub.f32 %v225, %v1306
    %v1308 = vand.u32 %v1307, 4294901760
    %1309 = vmatprep.subr.mxu0 %v1308
    %v1310 = vand.u32 %v224, 4294901760
    %v1311 = vsub.f32 %v224, %v1310
    %v1312 = vand.u32 %v1311, 4294901760
    %1313 = vmatpush1.msra.mxu0 %v1312
    %v1314 = vand.u32 %v217, 4294901760
    %v1315 = vsub.f32 %v217, %v1314
    %v1316 = vand.u32 %v1315, 4294901760
    %1317 = vmatprep.subr.mxu0 %v1316
    %v1318 = vand.u32 %v216, 4294901760
    %v1319 = vsub.f32 %v216, %v1318
    %v1320 = vand.u32 %v1319, 4294901760
    %1321 = vmatpush1.msra.mxu0 %v1320
    %v1322 = vand.u32 %v209, 4294901760
    %v1323 = vsub.f32 %v209, %v1322
    %v1324 = vand.u32 %v1323, 4294901760
    %1325 = vmatprep.subr.mxu0 %v1324
    %v1326 = vand.u32 %v208, 4294901760
    %v1327 = vsub.f32 %v208, %v1326
    %v1328 = vand.u32 %v1327, 4294901760
    %1329 = vmatpush1.msra.mxu0 %v1328
    %v1330 = vand.u32 %v201, 4294901760
    %v1331 = vsub.f32 %v201, %v1330
    %v1332 = vand.u32 %v1331, 4294901760
    %1333 = vmatprep.subr.mxu0 %v1332
    %v1334 = vand.u32 %v200, 4294901760
    %v1335 = vsub.f32 %v200, %v1334
    %v1336 = vand.u32 %v1335, 4294901760
    %1337 = vmatpush1.msra.mxu0 %v1336
    %v1338 = vand.u32 %v193, 4294901760
    %v1339 = vsub.f32 %v193, %v1338
    %v1340 = vand.u32 %v1339, 4294901760
    %1341 = vmatprep.subr.mxu0 %v1340
    %v1342 = vand.u32 %v192, 4294901760
    %v1343 = vsub.f32 %v192, %v1342
    %v1344 = vand.u32 %v1343, 4294901760
    %1345 = vmatpush1.msra.mxu0 %v1344
    %v1346 = vand.u32 %v185, 4294901760
    %v1347 = vsub.f32 %v185, %v1346
    %v1348 = vand.u32 %v1347, 4294901760
    %1349 = vmatprep.subr.mxu0 %v1348
    %v1350 = vand.u32 %v184, 4294901760
    %v1351 = vsub.f32 %v184, %v1350
    %v1352 = vand.u32 %v1351, 4294901760
    %1353 = vmatpush1.msra.mxu0 %v1352
    %v1354 = vand.u32 %v177, 4294901760
    %v1355 = vsub.f32 %v177, %v1354
    %v1356 = vand.u32 %v1355, 4294901760
    %1357 = vmatprep.subr.mxu0 %v1356
    %v1358 = vand.u32 %v176, 4294901760
    %v1359 = vsub.f32 %v176, %v1358
    %v1360 = vand.u32 %v1359, 4294901760
    %1361 = vmatpush1.msra.mxu0 %v1360
    %v1362 = vand.u32 %v169, 4294901760
    %v1363 = vsub.f32 %v169, %v1362
    %v1364 = vand.u32 %v1363, 4294901760
    %1365 = vmatprep.subr.mxu0 %v1364
    %v1366 = vand.u32 %v168, 4294901760
    %v1367 = vsub.f32 %v168, %v1366
    %v1368 = vand.u32 %v1367, 4294901760
    %1369 = vmatpush1.msra.mxu0 %v1368
    %v1370 = vand.u32 %v161, 4294901760
    %v1371 = vsub.f32 %v161, %v1370
    %v1372 = vand.u32 %v1371, 4294901760
    %1373 = vmatprep.subr.mxu0 %v1372
    %v1374 = vand.u32 %v160, 4294901760
    %v1375 = vsub.f32 %v160, %v1374
    %v1376 = vand.u32 %v1375, 4294901760
    %1377 = vmatpush1.msra.mxu0 %v1376
    %v1378 = vand.u32 %v153, 4294901760
    %v1379 = vsub.f32 %v153, %v1378
    %v1380 = vand.u32 %v1379, 4294901760
    %1381 = vmatprep.subr.mxu0 %v1380
    %v1382 = vand.u32 %v152, 4294901760
    %v1383 = vsub.f32 %v152, %v1382
    %v1384 = vand.u32 %v1383, 4294901760
    %1385 = vmatpush1.msra.mxu0 %v1384
    %v1386 = vand.u32 %v145, 4294901760
    %v1387 = vsub.f32 %v145, %v1386
    %v1388 = vand.u32 %v1387, 4294901760
    %1389 = vmatprep.subr.mxu0 %v1388
    %v1390 = vand.u32 %v144, 4294901760
    %v1391 = vsub.f32 %v144, %v1390
    %v1392 = vand.u32 %v1391, 4294901760
    %1393 = vmatpush1.msra.mxu0 %v1392
    %v1394 = vand.u32 %v137, 4294901760
    %v1395 = vsub.f32 %v137, %v1394
    %v1396 = vand.u32 %v1395, 4294901760
    %1397 = vmatprep.subr.mxu0 %v1396
    %v1398 = vand.u32 %v136, 4294901760
    %v1399 = vsub.f32 %v136, %v1398
    %v1400 = vand.u32 %v1399, 4294901760
    %1401 = vmatpush1.msra.mxu0 %v1400
    %v1402 = vand.u32 %v385, 4294901760
    %v1403 = vsub.f32 %v385, %v1402
    %v1404 = vand.u32 %v1403, 4294901760
    %1405 = vmatprep.subr.mxu0 %v1404
    %v1406 = vand.u32 %v384, 4294901760
    %v1407 = vsub.f32 %v384, %v1406
    %v1408 = vand.u32 %v1407, 4294901760
    %1409 = vmatpush2.msra.mxu0 %v1408
    %v1410 = vand.u32 %v377, 4294901760
    %v1411 = vsub.f32 %v377, %v1410
    %v1412 = vand.u32 %v1411, 4294901760
    %1413 = vmatprep.subr.mxu0 %v1412
    %v1414 = vand.u32 %v376, 4294901760
    %v1415 = vsub.f32 %v376, %v1414
    %v1416 = vand.u32 %v1415, 4294901760
    %1417 = vmatpush2.msra.mxu0 %v1416
    %v1418 = vand.u32 %v369, 4294901760
    %v1419 = vsub.f32 %v369, %v1418
    %v1420 = vand.u32 %v1419, 4294901760
    %1421 = vmatprep.subr.mxu0 %v1420
    %v1422 = vand.u32 %v368, 4294901760
    %v1423 = vsub.f32 %v368, %v1422
    %v1424 = vand.u32 %v1423, 4294901760
    %1425 = vmatpush2.msra.mxu0 %v1424
    %v1426 = vand.u32 %v361, 4294901760
    %v1427 = vsub.f32 %v361, %v1426
    %v1428 = vand.u32 %v1427, 4294901760
    %1429 = vmatprep.subr.mxu0 %v1428
    %v1430 = vand.u32 %v360, 4294901760
    %v1431 = vsub.f32 %v360, %v1430
    %v1432 = vand.u32 %v1431, 4294901760
    %1433 = vmatpush2.msra.mxu0 %v1432
    %v1434 = vand.u32 %v353, 4294901760
    %v1435 = vsub.f32 %v353, %v1434
    %v1436 = vand.u32 %v1435, 4294901760
    %1437 = vmatprep.subr.mxu0 %v1436
    %v1438 = vand.u32 %v352, 4294901760
    %v1439 = vsub.f32 %v352, %v1438
    %v1440 = vand.u32 %v1439, 4294901760
    %1441 = vmatpush2.msra.mxu0 %v1440
    %v1442 = vand.u32 %v345, 4294901760
    %v1443 = vsub.f32 %v345, %v1442
    %v1444 = vand.u32 %v1443, 4294901760
    %1445 = vmatprep.subr.mxu0 %v1444
    %v1446 = vand.u32 %v344, 4294901760
    %v1447 = vsub.f32 %v344, %v1446
    %v1448 = vand.u32 %v1447, 4294901760
    %1449 = vmatpush2.msra.mxu0 %v1448
    %v1450 = vand.u32 %v337, 4294901760
    %v1451 = vsub.f32 %v337, %v1450
    %v1452 = vand.u32 %v1451, 4294901760
    %1453 = vmatprep.subr.mxu0 %v1452
    %v1454 = vand.u32 %v336, 4294901760
    %v1455 = vsub.f32 %v336, %v1454
    %v1456 = vand.u32 %v1455, 4294901760
    %1457 = vmatpush2.msra.mxu0 %v1456
    %v1458 = vand.u32 %v329, 4294901760
    %v1459 = vsub.f32 %v329, %v1458
    %v1460 = vand.u32 %v1459, 4294901760
    %1461 = vmatprep.subr.mxu0 %v1460
    %v1462 = vand.u32 %v328, 4294901760
    %v1463 = vsub.f32 %v328, %v1462
    %v1464 = vand.u32 %v1463, 4294901760
    %1465 = vmatpush2.msra.mxu0 %v1464
    %v1466 = vand.u32 %v321, 4294901760
    %v1467 = vsub.f32 %v321, %v1466
    %v1468 = vand.u32 %v1467, 4294901760
    %1469 = vmatprep.subr.mxu0 %v1468
    %v1470 = vand.u32 %v320, 4294901760
    %v1471 = vsub.f32 %v320, %v1470
    %v1472 = vand.u32 %v1471, 4294901760
    %1473 = vmatpush2.msra.mxu0 %v1472
    %v1474 = vand.u32 %v313, 4294901760
    %v1475 = vsub.f32 %v313, %v1474
    %v1476 = vand.u32 %v1475, 4294901760
    %1477 = vmatprep.subr.mxu0 %v1476
    %v1478 = vand.u32 %v312, 4294901760
    %v1479 = vsub.f32 %v312, %v1478
    %v1480 = vand.u32 %v1479, 4294901760
    %1481 = vmatpush2.msra.mxu0 %v1480
    %v1482 = vand.u32 %v305, 4294901760
    %v1483 = vsub.f32 %v305, %v1482
    %v1484 = vand.u32 %v1483, 4294901760
    %1485 = vmatprep.subr.mxu0 %v1484
    %v1486 = vand.u32 %v304, 4294901760
    %v1487 = vsub.f32 %v304, %v1486
    %v1488 = vand.u32 %v1487, 4294901760
    %1489 = vmatpush2.msra.mxu0 %v1488
    %v1490 = vand.u32 %v297, 4294901760
    %v1491 = vsub.f32 %v297, %v1490
    %v1492 = vand.u32 %v1491, 4294901760
    %1493 = vmatprep.subr.mxu0 %v1492
    %v1494 = vand.u32 %v296, 4294901760
    %v1495 = vsub.f32 %v296, %v1494
    %v1496 = vand.u32 %v1495, 4294901760
    %1497 = vmatpush2.msra.mxu0 %v1496
    %v1498 = vand.u32 %v289, 4294901760
    %v1499 = vsub.f32 %v289, %v1498
    %v1500 = vand.u32 %v1499, 4294901760
    %1501 = vmatprep.subr.mxu0 %v1500
    %v1502 = vand.u32 %v288, 4294901760
    %v1503 = vsub.f32 %v288, %v1502
    %v1504 = vand.u32 %v1503, 4294901760
    %1505 = vmatpush2.msra.mxu0 %v1504
    %v1506 = vand.u32 %v281, 4294901760
    %v1507 = vsub.f32 %v281, %v1506
    %v1508 = vand.u32 %v1507, 4294901760
    %1509 = vmatprep.subr.mxu0 %v1508
    %v1510 = vand.u32 %v280, 4294901760
    %v1511 = vsub.f32 %v280, %v1510
    %v1512 = vand.u32 %v1511, 4294901760
    %1513 = vmatpush2.msra.mxu0 %v1512
    %v1514 = vand.u32 %v273, 4294901760
    %v1515 = vsub.f32 %v273, %v1514
    %v1516 = vand.u32 %v1515, 4294901760
    %1517 = vmatprep.subr.mxu0 %v1516
    %v1518 = vand.u32 %v272, 4294901760
    %v1519 = vsub.f32 %v272, %v1518
    %v1520 = vand.u32 %v1519, 4294901760
    %1521 = vmatpush2.msra.mxu0 %v1520
    %v1522 = vand.u32 %v265, 4294901760
    %v1523 = vsub.f32 %v265, %v1522
    %v1524 = vand.u32 %v1523, 4294901760
    %1525 = vmatprep.subr.mxu0 %v1524
    %v1526 = vand.u32 %v264, 4294901760
    %v1527 = vsub.f32 %v264, %v1526
    %v1528 = vand.u32 %v1527, 4294901760
    %1529 = vmatpush2.msra.mxu0 %v1528
    %v1530 = vand.u32 %v135, 4294901760
    %1531 = vmatprep.mubr.f32.mxu0 %v1530
    %v1532 = vand.u32 %v134, 4294901760
    %1533 = vmatmul.mubr.f32.gmra.mxu0 %v1532
    %v1534 = vpop.f32.mrf.mxu0
    %v1535 = vadd.f32 %v1270, %v1534
    %v1536 = vpop.f32.mrf.mxu0
    %v1537 = vadd.f32 %v1272, %v1536
    %1538 = vdwg.mxu0
    %v1539 = vand.u32 %v257, 4294901760
    %1540 = vmatprep.subr.mxu0 %v1539
    %v1541 = vand.u32 %v256, 4294901760
    %1542 = vmatpush1.msra.mxu0 %v1541
    %v1543 = vand.u32 %v249, 4294901760
    %1544 = vmatprep.subr.mxu0 %v1543
    %v1545 = vand.u32 %v248, 4294901760
    %1546 = vmatpush1.msra.mxu0 %v1545
    %v1547 = vand.u32 %v241, 4294901760
    %1548 = vmatprep.subr.mxu0 %v1547
    %v1549 = vand.u32 %v240, 4294901760
    %1550 = vmatpush1.msra.mxu0 %v1549
    %v1551 = vand.u32 %v233, 4294901760
    %1552 = vmatprep.subr.mxu0 %v1551
    %v1553 = vand.u32 %v232, 4294901760
    %1554 = vmatpush1.msra.mxu0 %v1553
    %v1555 = vand.u32 %v225, 4294901760
    %1556 = vmatprep.subr.mxu0 %v1555
    %v1557 = vand.u32 %v224, 4294901760
    %1558 = vmatpush1.msra.mxu0 %v1557
    %v1559 = vand.u32 %v217, 4294901760
    %1560 = vmatprep.subr.mxu0 %v1559
    %v1561 = vand.u32 %v216, 4294901760
    %1562 = vmatpush1.msra.mxu0 %v1561
    %v1563 = vand.u32 %v209, 4294901760
    %1564 = vmatprep.subr.mxu0 %v1563
    %v1565 = vand.u32 %v208, 4294901760
    %1566 = vmatpush1.msra.mxu0 %v1565
    %v1567 = vand.u32 %v201, 4294901760
    %1568 = vmatprep.subr.mxu0 %v1567
    %v1569 = vand.u32 %v200, 4294901760
    %1570 = vmatpush1.msra.mxu0 %v1569
    %v1571 = vand.u32 %v193, 4294901760
    %1572 = vmatprep.subr.mxu0 %v1571
    %v1573 = vand.u32 %v192, 4294901760
    %1574 = vmatpush1.msra.mxu0 %v1573
    %v1575 = vand.u32 %v185, 4294901760
    %1576 = vmatprep.subr.mxu0 %v1575
    %v1577 = vand.u32 %v184, 4294901760
    %1578 = vmatpush1.msra.mxu0 %v1577
    %v1579 = vand.u32 %v177, 4294901760
    %1580 = vmatprep.subr.mxu0 %v1579
    %v1581 = vand.u32 %v176, 4294901760
    %1582 = vmatpush1.msra.mxu0 %v1581
    %v1583 = vand.u32 %v169, 4294901760
    %1584 = vmatprep.subr.mxu0 %v1583
    %v1585 = vand.u32 %v168, 4294901760
    %1586 = vmatpush1.msra.mxu0 %v1585
    %v1587 = vand.u32 %v161, 4294901760
    %1588 = vmatprep.subr.mxu0 %v1587
    %v1589 = vand.u32 %v160, 4294901760
    %1590 = vmatpush1.msra.mxu0 %v1589
    %v1591 = vand.u32 %v153, 4294901760
    %1592 = vmatprep.subr.mxu0 %v1591
    %v1593 = vand.u32 %v152, 4294901760
    %1594 = vmatpush1.msra.mxu0 %v1593
    %v1595 = vand.u32 %v145, 4294901760
    %1596 = vmatprep.subr.mxu0 %v1595
    %v1597 = vand.u32 %v144, 4294901760
    %1598 = vmatpush1.msra.mxu0 %v1597
    %v1599 = vand.u32 %v137, 4294901760
    %1600 = vmatprep.subr.mxu0 %v1599
    %v1601 = vand.u32 %v136, 4294901760
    %1602 = vmatpush1.msra.mxu0 %v1601
    %v1603 = vand.u32 %v385, 4294901760
    %1604 = vmatprep.subr.mxu0 %v1603
    %v1605 = vand.u32 %v384, 4294901760
    %1606 = vmatpush2.msra.mxu0 %v1605
    %v1607 = vand.u32 %v377, 4294901760
    %1608 = vmatprep.subr.mxu0 %v1607
    %v1609 = vand.u32 %v376, 4294901760
    %1610 = vmatpush2.msra.mxu0 %v1609
    %v1611 = vand.u32 %v369, 4294901760
    %1612 = vmatprep.subr.mxu0 %v1611
    %v1613 = vand.u32 %v368, 4294901760
    %1614 = vmatpush2.msra.mxu0 %v1613
    %v1615 = vand.u32 %v361, 4294901760
    %1616 = vmatprep.subr.mxu0 %v1615
    %v1617 = vand.u32 %v360, 4294901760
    %1618 = vmatpush2.msra.mxu0 %v1617
    %v1619 = vand.u32 %v353, 4294901760
    %1620 = vmatprep.subr.mxu0 %v1619
    %v1621 = vand.u32 %v352, 4294901760
    %1622 = vmatpush2.msra.mxu0 %v1621
    %v1623 = vand.u32 %v345, 4294901760
    %1624 = vmatprep.subr.mxu0 %v1623
    %v1625 = vand.u32 %v344, 4294901760
    %1626 = vmatpush2.msra.mxu0 %v1625
    %v1627 = vand.u32 %v337, 4294901760
    %1628 = vmatprep.subr.mxu0 %v1627
    %v1629 = vand.u32 %v336, 4294901760
    %1630 = vmatpush2.msra.mxu0 %v1629
    %v1631 = vand.u32 %v329, 4294901760
    %1632 = vmatprep.subr.mxu0 %v1631
    %v1633 = vand.u32 %v328, 4294901760
    %1634 = vmatpush2.msra.mxu0 %v1633
    %v1635 = vand.u32 %v321, 4294901760
    %1636 = vmatprep.subr.mxu0 %v1635
    %v1637 = vand.u32 %v320, 4294901760
    %1638 = vmatpush2.msra.mxu0 %v1637
    %v1639 = vand.u32 %v313, 4294901760
    %1640 = vmatprep.subr.mxu0 %v1639
    %v1641 = vand.u32 %v312, 4294901760
    %1642 = vmatpush2.msra.mxu0 %v1641
    %v1643 = vand.u32 %v305, 4294901760
    %1644 = vmatprep.subr.mxu0 %v1643
    %v1645 = vand.u32 %v304, 4294901760
    %1646 = vmatpush2.msra.mxu0 %v1645
    %v1647 = vand.u32 %v297, 4294901760
    %1648 = vmatprep.subr.mxu0 %v1647
    %v1649 = vand.u32 %v296, 4294901760
    %1650 = vmatpush2.msra.mxu0 %v1649
    %v1651 = vand.u32 %v289, 4294901760
    %1652 = vmatprep.subr.mxu0 %v1651
    %v1653 = vand.u32 %v288, 4294901760
    %1654 = vmatpush2.msra.mxu0 %v1653
    %v1655 = vand.u32 %v281, 4294901760
    %1656 = vmatprep.subr.mxu0 %v1655
    %v1657 = vand.u32 %v280, 4294901760
    %1658 = vmatpush2.msra.mxu0 %v1657
    %v1659 = vand.u32 %v273, 4294901760
    %1660 = vmatprep.subr.mxu0 %v1659
    %v1661 = vand.u32 %v272, 4294901760
    %1662 = vmatpush2.msra.mxu0 %v1661
    %v1663 = vand.u32 %v265, 4294901760
    %1664 = vmatprep.subr.mxu0 %v1663
    %v1665 = vand.u32 %v264, 4294901760
    %1666 = vmatpush2.msra.mxu0 %v1665
    %v1667 = vand.u32 %v135, 4294901760
    %1668 = vmatprep.mubr.f32.mxu0 %v1667
    %v1669 = vand.u32 %v134, 4294901760
    %1670 = vmatmul.mubr.f32.gmra.mxu0 %v1669
    %v1671 = vpop.f32.mrf.mxu0
    %v1672 = vadd.f32 %v1535, %v1671
    %v1673 = vpop.f32.mrf.mxu0
    %v1674 = vadd.f32 %v1537, %v1673
    %1675 = vdwg.mxu0
    %v1676 = vand.u32 %v259, 4294901760
    %1677 = vmatprep.subr.mxu0 %v1676
    %v1678 = vand.u32 %v258, 4294901760
    %1679 = vmatpush1.msra.mxu0 %v1678
    %v1680 = vand.u32 %v251, 4294901760
    %1681 = vmatprep.subr.mxu0 %v1680
    %v1682 = vand.u32 %v250, 4294901760
    %1683 = vmatpush1.msra.mxu0 %v1682
    %v1684 = vand.u32 %v243, 4294901760
    %1685 = vmatprep.subr.mxu0 %v1684
    %v1686 = vand.u32 %v242, 4294901760
    %1687 = vmatpush1.msra.mxu0 %v1686
    %v1688 = vand.u32 %v235, 4294901760
    %1689 = vmatprep.subr.mxu0 %v1688
    %v1690 = vand.u32 %v234, 4294901760
    %1691 = vmatpush1.msra.mxu0 %v1690
    %v1692 = vand.u32 %v227, 4294901760
    %1693 = vmatprep.subr.mxu0 %v1692
    %v1694 = vand.u32 %v226, 4294901760
    %1695 = vmatpush1.msra.mxu0 %v1694
    %v1696 = vand.u32 %v219, 4294901760
    %1697 = vmatprep.subr.mxu0 %v1696
    %v1698 = vand.u32 %v218, 4294901760
    %1699 = vmatpush1.msra.mxu0 %v1698
    %v1700 = vand.u32 %v211, 4294901760
    %1701 = vmatprep.subr.mxu0 %v1700
    %v1702 = vand.u32 %v210, 4294901760
    %1703 = vmatpush1.msra.mxu0 %v1702
    %v1704 = vand.u32 %v203, 4294901760
    %1705 = vmatprep.subr.mxu0 %v1704
    %v1706 = vand.u32 %v202, 4294901760
    %1707 = vmatpush1.msra.mxu0 %v1706
    %v1708 = vand.u32 %v195, 4294901760
    %1709 = vmatprep.subr.mxu0 %v1708
    %v1710 = vand.u32 %v194, 4294901760
    %1711 = vmatpush1.msra.mxu0 %v1710
    %v1712 = vand.u32 %v187, 4294901760
    %1713 = vmatprep.subr.mxu0 %v1712
    %v1714 = vand.u32 %v186, 4294901760
    %1715 = vmatpush1.msra.mxu0 %v1714
    %v1716 = vand.u32 %v179, 4294901760
    %1717 = vmatprep.subr.mxu0 %v1716
    %v1718 = vand.u32 %v178, 4294901760
    %1719 = vmatpush1.msra.mxu0 %v1718
    %v1720 = vand.u32 %v171, 4294901760
    %1721 = vmatprep.subr.mxu0 %v1720
    %v1722 = vand.u32 %v170, 4294901760
    %1723 = vmatpush1.msra.mxu0 %v1722
    %v1724 = vand.u32 %v163, 4294901760
    %1725 = vmatprep.subr.mxu0 %v1724
    %v1726 = vand.u32 %v162, 4294901760
    %1727 = vmatpush1.msra.mxu0 %v1726
    %v1728 = vand.u32 %v155, 4294901760
    %1729 = vmatprep.subr.mxu0 %v1728
    %v1730 = vand.u32 %v154, 4294901760
    %1731 = vmatpush1.msra.mxu0 %v1730
    %v1732 = vand.u32 %v147, 4294901760
    %1733 = vmatprep.subr.mxu0 %v1732
    %v1734 = vand.u32 %v146, 4294901760
    %1735 = vmatpush1.msra.mxu0 %v1734
    %v1736 = vand.u32 %v139, 4294901760
    %1737 = vmatprep.subr.mxu0 %v1736
    %v1738 = vand.u32 %v138, 4294901760
    %1739 = vmatpush1.msra.mxu0 %v1738
    %v1740 = vand.u32 %v387, 4294901760
    %1741 = vmatprep.subr.mxu0 %v1740
    %v1742 = vand.u32 %v386, 4294901760
    %1743 = vmatpush2.msra.mxu0 %v1742
    %v1744 = vand.u32 %v379, 4294901760
    %1745 = vmatprep.subr.mxu0 %v1744
    %v1746 = vand.u32 %v378, 4294901760
    %1747 = vmatpush2.msra.mxu0 %v1746
    %v1748 = vand.u32 %v371, 4294901760
    %1749 = vmatprep.subr.mxu0 %v1748
    %v1750 = vand.u32 %v370, 4294901760
    %1751 = vmatpush2.msra.mxu0 %v1750
    %v1752 = vand.u32 %v363, 4294901760
    %1753 = vmatprep.subr.mxu0 %v1752
    %v1754 = vand.u32 %v362, 4294901760
    %1755 = vmatpush2.msra.mxu0 %v1754
    %v1756 = vand.u32 %v355, 4294901760
    %1757 = vmatprep.subr.mxu0 %v1756
    %v1758 = vand.u32 %v354, 4294901760
    %1759 = vmatpush2.msra.mxu0 %v1758
    %v1760 = vand.u32 %v347, 4294901760
    %1761 = vmatprep.subr.mxu0 %v1760
    %v1762 = vand.u32 %v346, 4294901760
    %1763 = vmatpush2.msra.mxu0 %v1762
    %v1764 = vand.u32 %v339, 4294901760
    %1765 = vmatprep.subr.mxu0 %v1764
    %v1766 = vand.u32 %v338, 4294901760
    %1767 = vmatpush2.msra.mxu0 %v1766
    %v1768 = vand.u32 %v331, 4294901760
    %1769 = vmatprep.subr.mxu0 %v1768
    %v1770 = vand.u32 %v330, 4294901760
    %1771 = vmatpush2.msra.mxu0 %v1770
    %v1772 = vand.u32 %v323, 4294901760
    %1773 = vmatprep.subr.mxu0 %v1772
    %v1774 = vand.u32 %v322, 4294901760
    %1775 = vmatpush2.msra.mxu0 %v1774
    %v1776 = vand.u32 %v315, 4294901760
    %1777 = vmatprep.subr.mxu0 %v1776
    %v1778 = vand.u32 %v314, 4294901760
    %1779 = vmatpush2.msra.mxu0 %v1778
    %v1780 = vand.u32 %v307, 4294901760
    %1781 = vmatprep.subr.mxu0 %v1780
    %v1782 = vand.u32 %v306, 4294901760
    %1783 = vmatpush2.msra.mxu0 %v1782
    %v1784 = vand.u32 %v299, 4294901760
    %1785 = vmatprep.subr.mxu0 %v1784
    %v1786 = vand.u32 %v298, 4294901760
    %1787 = vmatpush2.msra.mxu0 %v1786
    %v1788 = vand.u32 %v291, 4294901760
    %1789 = vmatprep.subr.mxu0 %v1788
    %v1790 = vand.u32 %v290, 4294901760
    %1791 = vmatpush2.msra.mxu0 %v1790
    %v1792 = vand.u32 %v283, 4294901760
    %1793 = vmatprep.subr.mxu0 %v1792
    %v1794 = vand.u32 %v282, 4294901760
    %1795 = vmatpush2.msra.mxu0 %v1794
    %v1796 = vand.u32 %v275, 4294901760
    %1797 = vmatprep.subr.mxu0 %v1796
    %v1798 = vand.u32 %v274, 4294901760
    %1799 = vmatpush2.msra.mxu0 %v1798
    %v1800 = vand.u32 %v267, 4294901760
    %1801 = vmatprep.subr.mxu0 %v1800
    %v1802 = vand.u32 %v266, 4294901760
    %1803 = vmatpush2.msra.mxu0 %v1802
    %v1804 = vand.u32 %v135, 4294901760
    %v1805 = vsub.f32 %v135, %v1804
    %v1806 = vand.u32 %v1805, 4294901760
    %v1807 = vsub.f32 %v1805, %v1806
    %v1808 = vand.u32 %v1807, 4294901760
    %1809 = vmatprep.mubr.f32.mxu0 %v1808
    %v1810 = vand.u32 %v134, 4294901760
    %v1811 = vsub.f32 %v134, %v1810
    %v1812 = vand.u32 %v1811, 4294901760
    %v1813 = vsub.f32 %v1811, %v1812
    %v1814 = vand.u32 %v1813, 4294901760
    %1815 = vmatmul.mubr.f32.gmra.mxu0 %v1814
    %v1816 = vpop.f32.mrf.mxu0
    %v1817 = vadd.f32 0.0, %v1816
    %v1818 = vpop.f32.mrf.mxu0
    %v1819 = vadd.f32 0.0, %v1818
    %1820 = vdwg.mxu0
    %v1821 = vand.u32 %v259, 4294901760
    %v1822 = vsub.f32 %v259, %v1821
    %v1823 = vand.u32 %v1822, 4294901760
    %v1824 = vsub.f32 %v1822, %v1823
    %v1825 = vand.u32 %v1824, 4294901760
    %1826 = vmatprep.subr.mxu0 %v1825
    %v1827 = vand.u32 %v258, 4294901760
    %v1828 = vsub.f32 %v258, %v1827
    %v1829 = vand.u32 %v1828, 4294901760
    %v1830 = vsub.f32 %v1828, %v1829
    %v1831 = vand.u32 %v1830, 4294901760
    %1832 = vmatpush1.msra.mxu0 %v1831
    %v1833 = vand.u32 %v251, 4294901760
    %v1834 = vsub.f32 %v251, %v1833
    %v1835 = vand.u32 %v1834, 4294901760
    %v1836 = vsub.f32 %v1834, %v1835
    %v1837 = vand.u32 %v1836, 4294901760
    %1838 = vmatprep.subr.mxu0 %v1837
    %v1839 = vand.u32 %v250, 4294901760
    %v1840 = vsub.f32 %v250, %v1839
    %v1841 = vand.u32 %v1840, 4294901760
    %v1842 = vsub.f32 %v1840, %v1841
    %v1843 = vand.u32 %v1842, 4294901760
    %1844 = vmatpush1.msra.mxu0 %v1843
    %v1845 = vand.u32 %v243, 4294901760
    %v1846 = vsub.f32 %v243, %v1845
    %v1847 = vand.u32 %v1846, 4294901760
    %v1848 = vsub.f32 %v1846, %v1847
    %v1849 = vand.u32 %v1848, 4294901760
    %1850 = vmatprep.subr.mxu0 %v1849
    %v1851 = vand.u32 %v242, 4294901760
    %v1852 = vsub.f32 %v242, %v1851
    %v1853 = vand.u32 %v1852, 4294901760
    %v1854 = vsub.f32 %v1852, %v1853
    %v1855 = vand.u32 %v1854, 4294901760
    %1856 = vmatpush1.msra.mxu0 %v1855
    %v1857 = vand.u32 %v235, 4294901760
    %v1858 = vsub.f32 %v235, %v1857
    %v1859 = vand.u32 %v1858, 4294901760
    %v1860 = vsub.f32 %v1858, %v1859
    %v1861 = vand.u32 %v1860, 4294901760
    %1862 = vmatprep.subr.mxu0 %v1861
    %v1863 = vand.u32 %v234, 4294901760
    %v1864 = vsub.f32 %v234, %v1863
    %v1865 = vand.u32 %v1864, 4294901760
    %v1866 = vsub.f32 %v1864, %v1865
    %v1867 = vand.u32 %v1866, 4294901760
    %1868 = vmatpush1.msra.mxu0 %v1867
    %v1869 = vand.u32 %v227, 4294901760
    %v1870 = vsub.f32 %v227, %v1869
    %v1871 = vand.u32 %v1870, 4294901760
    %v1872 = vsub.f32 %v1870, %v1871
    %v1873 = vand.u32 %v1872, 4294901760
    %1874 = vmatprep.subr.mxu0 %v1873
    %v1875 = vand.u32 %v226, 4294901760
    %v1876 = vsub.f32 %v226, %v1875
    %v1877 = vand.u32 %v1876, 4294901760
    %v1878 = vsub.f32 %v1876, %v1877
    %v1879 = vand.u32 %v1878, 4294901760
    %1880 = vmatpush1.msra.mxu0 %v1879
    %v1881 = vand.u32 %v219, 4294901760
    %v1882 = vsub.f32 %v219, %v1881
    %v1883 = vand.u32 %v1882, 4294901760
    %v1884 = vsub.f32 %v1882, %v1883
    %v1885 = vand.u32 %v1884, 4294901760
    %1886 = vmatprep.subr.mxu0 %v1885
    %v1887 = vand.u32 %v218, 4294901760
    %v1888 = vsub.f32 %v218, %v1887
    %v1889 = vand.u32 %v1888, 4294901760
    %v1890 = vsub.f32 %v1888, %v1889
    %v1891 = vand.u32 %v1890, 4294901760
    %1892 = vmatpush1.msra.mxu0 %v1891
    %v1893 = vand.u32 %v211, 4294901760
    %v1894 = vsub.f32 %v211, %v1893
    %v1895 = vand.u32 %v1894, 4294901760
    %v1896 = vsub.f32 %v1894, %v1895
    %v1897 = vand.u32 %v1896, 4294901760
    %1898 = vmatprep.subr.mxu0 %v1897
    %v1899 = vand.u32 %v210, 4294901760
    %v1900 = vsub.f32 %v210, %v1899
    %v1901 = vand.u32 %v1900, 4294901760
    %v1902 = vsub.f32 %v1900, %v1901
    %v1903 = vand.u32 %v1902, 4294901760
    %1904 = vmatpush1.msra.mxu0 %v1903
    %v1905 = vand.u32 %v203, 4294901760
    %v1906 = vsub.f32 %v203, %v1905
    %v1907 = vand.u32 %v1906, 4294901760
    %v1908 = vsub.f32 %v1906, %v1907
    %v1909 = vand.u32 %v1908, 4294901760
    %1910 = vmatprep.subr.mxu0 %v1909
    %v1911 = vand.u32 %v202, 4294901760
    %v1912 = vsub.f32 %v202, %v1911
    %v1913 = vand.u32 %v1912, 4294901760
    %v1914 = vsub.f32 %v1912, %v1913
    %v1915 = vand.u32 %v1914, 4294901760
    %1916 = vmatpush1.msra.mxu0 %v1915
    %v1917 = vand.u32 %v195, 4294901760
    %v1918 = vsub.f32 %v195, %v1917
    %v1919 = vand.u32 %v1918, 4294901760
    %v1920 = vsub.f32 %v1918, %v1919
    %v1921 = vand.u32 %v1920, 4294901760
    %1922 = vmatprep.subr.mxu0 %v1921
    %v1923 = vand.u32 %v194, 4294901760
    %v1924 = vsub.f32 %v194, %v1923
    %v1925 = vand.u32 %v1924, 4294901760
    %v1926 = vsub.f32 %v1924, %v1925
    %v1927 = vand.u32 %v1926, 4294901760
    %1928 = vmatpush1.msra.mxu0 %v1927
    %v1929 = vand.u32 %v187, 4294901760
    %v1930 = vsub.f32 %v187, %v1929
    %v1931 = vand.u32 %v1930, 4294901760
    %v1932 = vsub.f32 %v1930, %v1931
    %v1933 = vand.u32 %v1932, 4294901760
    %1934 = vmatprep.subr.mxu0 %v1933
    %v1935 = vand.u32 %v186, 4294901760
    %v1936 = vsub.f32 %v186, %v1935
    %v1937 = vand.u32 %v1936, 4294901760
    %v1938 = vsub.f32 %v1936, %v1937
    %v1939 = vand.u32 %v1938, 4294901760
    %1940 = vmatpush1.msra.mxu0 %v1939
    %v1941 = vand.u32 %v179, 4294901760
    %v1942 = vsub.f32 %v179, %v1941
    %v1943 = vand.u32 %v1942, 4294901760
    %v1944 = vsub.f32 %v1942, %v1943
    %v1945 = vand.u32 %v1944, 4294901760
    %1946 = vmatprep.subr.mxu0 %v1945
    %v1947 = vand.u32 %v178, 4294901760
    %v1948 = vsub.f32 %v178, %v1947
    %v1949 = vand.u32 %v1948, 4294901760
    %v1950 = vsub.f32 %v1948, %v1949
    %v1951 = vand.u32 %v1950, 4294901760
    %1952 = vmatpush1.msra.mxu0 %v1951
    %v1953 = vand.u32 %v171, 4294901760
    %v1954 = vsub.f32 %v171, %v1953
    %v1955 = vand.u32 %v1954, 4294901760
    %v1956 = vsub.f32 %v1954, %v1955
    %v1957 = vand.u32 %v1956, 4294901760
    %1958 = vmatprep.subr.mxu0 %v1957
    %v1959 = vand.u32 %v170, 4294901760
    %v1960 = vsub.f32 %v170, %v1959
    %v1961 = vand.u32 %v1960, 4294901760
    %v1962 = vsub.f32 %v1960, %v1961
    %v1963 = vand.u32 %v1962, 4294901760
    %1964 = vmatpush1.msra.mxu0 %v1963
    %v1965 = vand.u32 %v163, 4294901760
    %v1966 = vsub.f32 %v163, %v1965
    %v1967 = vand.u32 %v1966, 4294901760
    %v1968 = vsub.f32 %v1966, %v1967
    %v1969 = vand.u32 %v1968, 4294901760
    %1970 = vmatprep.subr.mxu0 %v1969
    %v1971 = vand.u32 %v162, 4294901760
    %v1972 = vsub.f32 %v162, %v1971
    %v1973 = vand.u32 %v1972, 4294901760
    %v1974 = vsub.f32 %v1972, %v1973
    %v1975 = vand.u32 %v1974, 4294901760
    %1976 = vmatpush1.msra.mxu0 %v1975
    %v1977 = vand.u32 %v155, 4294901760
    %v1978 = vsub.f32 %v155, %v1977
    %v1979 = vand.u32 %v1978, 4294901760
    %v1980 = vsub.f32 %v1978, %v1979
    %v1981 = vand.u32 %v1980, 4294901760
    %1982 = vmatprep.subr.mxu0 %v1981
    %v1983 = vand.u32 %v154, 4294901760
    %v1984 = vsub.f32 %v154, %v1983
    %v1985 = vand.u32 %v1984, 4294901760
    %v1986 = vsub.f32 %v1984, %v1985
    %v1987 = vand.u32 %v1986, 4294901760
    %1988 = vmatpush1.msra.mxu0 %v1987
    %v1989 = vand.u32 %v147, 4294901760
    %v1990 = vsub.f32 %v147, %v1989
    %v1991 = vand.u32 %v1990, 4294901760
    %v1992 = vsub.f32 %v1990, %v1991
    %v1993 = vand.u32 %v1992, 4294901760
    %1994 = vmatprep.subr.mxu0 %v1993
    %v1995 = vand.u32 %v146, 4294901760
    %v1996 = vsub.f32 %v146, %v1995
    %v1997 = vand.u32 %v1996, 4294901760
    %v1998 = vsub.f32 %v1996, %v1997
    %v1999 = vand.u32 %v1998, 4294901760
    %2000 = vmatpush1.msra.mxu0 %v1999
    %v2001 = vand.u32 %v139, 4294901760
    %v2002 = vsub.f32 %v139, %v2001
    %v2003 = vand.u32 %v2002, 4294901760
    %v2004 = vsub.f32 %v2002, %v2003
    %v2005 = vand.u32 %v2004, 4294901760
    %2006 = vmatprep.subr.mxu0 %v2005
    %v2007 = vand.u32 %v138, 4294901760
    %v2008 = vsub.f32 %v138, %v2007
    %v2009 = vand.u32 %v2008, 4294901760
    %v2010 = vsub.f32 %v2008, %v2009
    %v2011 = vand.u32 %v2010, 4294901760
    %2012 = vmatpush1.msra.mxu0 %v2011
    %v2013 = vand.u32 %v387, 4294901760
    %v2014 = vsub.f32 %v387, %v2013
    %v2015 = vand.u32 %v2014, 4294901760
    %v2016 = vsub.f32 %v2014, %v2015
    %v2017 = vand.u32 %v2016, 4294901760
    %2018 = vmatprep.subr.mxu0 %v2017
    %v2019 = vand.u32 %v386, 4294901760
    %v2020 = vsub.f32 %v386, %v2019
    %v2021 = vand.u32 %v2020, 4294901760
    %v2022 = vsub.f32 %v2020, %v2021
    %v2023 = vand.u32 %v2022, 4294901760
    %2024 = vmatpush2.msra.mxu0 %v2023
    %v2025 = vand.u32 %v379, 4294901760
    %v2026 = vsub.f32 %v379, %v2025
    %v2027 = vand.u32 %v2026, 4294901760
    %v2028 = vsub.f32 %v2026, %v2027
    %v2029 = vand.u32 %v2028, 4294901760
    %2030 = vmatprep.subr.mxu0 %v2029
    %v2031 = vand.u32 %v378, 4294901760
    %v2032 = vsub.f32 %v378, %v2031
    %v2033 = vand.u32 %v2032, 4294901760
    %v2034 = vsub.f32 %v2032, %v2033
    %v2035 = vand.u32 %v2034, 4294901760
    %2036 = vmatpush2.msra.mxu0 %v2035
    %v2037 = vand.u32 %v371, 4294901760
    %v2038 = vsub.f32 %v371, %v2037
    %v2039 = vand.u32 %v2038, 4294901760
    %v2040 = vsub.f32 %v2038, %v2039
    %v2041 = vand.u32 %v2040, 4294901760
    %2042 = vmatprep.subr.mxu0 %v2041
    %v2043 = vand.u32 %v370, 4294901760
    %v2044 = vsub.f32 %v370, %v2043
    %v2045 = vand.u32 %v2044, 4294901760
    %v2046 = vsub.f32 %v2044, %v2045
    %v2047 = vand.u32 %v2046, 4294901760
    %2048 = vmatpush2.msra.mxu0 %v2047
    %v2049 = vand.u32 %v363, 4294901760
    %v2050 = vsub.f32 %v363, %v2049
    %v2051 = vand.u32 %v2050, 4294901760
    %v2052 = vsub.f32 %v2050, %v2051
    %v2053 = vand.u32 %v2052, 4294901760
    %2054 = vmatprep.subr.mxu0 %v2053
    %v2055 = vand.u32 %v362, 4294901760
    %v2056 = vsub.f32 %v362, %v2055
    %v2057 = vand.u32 %v2056, 4294901760
    %v2058 = vsub.f32 %v2056, %v2057
    %v2059 = vand.u32 %v2058, 4294901760
    %2060 = vmatpush2.msra.mxu0 %v2059
    %v2061 = vand.u32 %v355, 4294901760
    %v2062 = vsub.f32 %v355, %v2061
    %v2063 = vand.u32 %v2062, 4294901760
    %v2064 = vsub.f32 %v2062, %v2063
    %v2065 = vand.u32 %v2064, 4294901760
    %2066 = vmatprep.subr.mxu0 %v2065
    %v2067 = vand.u32 %v354, 4294901760
    %v2068 = vsub.f32 %v354, %v2067
    %v2069 = vand.u32 %v2068, 4294901760
    %v2070 = vsub.f32 %v2068, %v2069
    %v2071 = vand.u32 %v2070, 4294901760
    %2072 = vmatpush2.msra.mxu0 %v2071
    %v2073 = vand.u32 %v347, 4294901760
    %v2074 = vsub.f32 %v347, %v2073
    %v2075 = vand.u32 %v2074, 4294901760
    %v2076 = vsub.f32 %v2074, %v2075
    %v2077 = vand.u32 %v2076, 4294901760
    %2078 = vmatprep.subr.mxu0 %v2077
    %v2079 = vand.u32 %v346, 4294901760
    %v2080 = vsub.f32 %v346, %v2079
    %v2081 = vand.u32 %v2080, 4294901760
    %v2082 = vsub.f32 %v2080, %v2081
    %v2083 = vand.u32 %v2082, 4294901760
    %2084 = vmatpush2.msra.mxu0 %v2083
    %v2085 = vand.u32 %v339, 4294901760
    %v2086 = vsub.f32 %v339, %v2085
    %v2087 = vand.u32 %v2086, 4294901760
    %v2088 = vsub.f32 %v2086, %v2087
    %v2089 = vand.u32 %v2088, 4294901760
    %2090 = vmatprep.subr.mxu0 %v2089
    %v2091 = vand.u32 %v338, 4294901760
    %v2092 = vsub.f32 %v338, %v2091
    %v2093 = vand.u32 %v2092, 4294901760
    %v2094 = vsub.f32 %v2092, %v2093
    %v2095 = vand.u32 %v2094, 4294901760
    %2096 = vmatpush2.msra.mxu0 %v2095
    %v2097 = vand.u32 %v331, 4294901760
    %v2098 = vsub.f32 %v331, %v2097
    %v2099 = vand.u32 %v2098, 4294901760
    %v2100 = vsub.f32 %v2098, %v2099
    %v2101 = vand.u32 %v2100, 4294901760
    %2102 = vmatprep.subr.mxu0 %v2101
    %v2103 = vand.u32 %v330, 4294901760
    %v2104 = vsub.f32 %v330, %v2103
    %v2105 = vand.u32 %v2104, 4294901760
    %v2106 = vsub.f32 %v2104, %v2105
    %v2107 = vand.u32 %v2106, 4294901760
    %2108 = vmatpush2.msra.mxu0 %v2107
    %v2109 = vand.u32 %v323, 4294901760
    %v2110 = vsub.f32 %v323, %v2109
    %v2111 = vand.u32 %v2110, 4294901760
    %v2112 = vsub.f32 %v2110, %v2111
    %v2113 = vand.u32 %v2112, 4294901760
    %2114 = vmatprep.subr.mxu0 %v2113
    %v2115 = vand.u32 %v322, 4294901760
    %v2116 = vsub.f32 %v322, %v2115
    %v2117 = vand.u32 %v2116, 4294901760
    %v2118 = vsub.f32 %v2116, %v2117
    %v2119 = vand.u32 %v2118, 4294901760
    %2120 = vmatpush2.msra.mxu0 %v2119
    %v2121 = vand.u32 %v315, 4294901760
    %v2122 = vsub.f32 %v315, %v2121
    %v2123 = vand.u32 %v2122, 4294901760
    %v2124 = vsub.f32 %v2122, %v2123
    %v2125 = vand.u32 %v2124, 4294901760
    %2126 = vmatprep.subr.mxu0 %v2125
    %v2127 = vand.u32 %v314, 4294901760
    %v2128 = vsub.f32 %v314, %v2127
    %v2129 = vand.u32 %v2128, 4294901760
    %v2130 = vsub.f32 %v2128, %v2129
    %v2131 = vand.u32 %v2130, 4294901760
    %2132 = vmatpush2.msra.mxu0 %v2131
    %v2133 = vand.u32 %v307, 4294901760
    %v2134 = vsub.f32 %v307, %v2133
    %v2135 = vand.u32 %v2134, 4294901760
    %v2136 = vsub.f32 %v2134, %v2135
    %v2137 = vand.u32 %v2136, 4294901760
    %2138 = vmatprep.subr.mxu0 %v2137
    %v2139 = vand.u32 %v306, 4294901760
    %v2140 = vsub.f32 %v306, %v2139
    %v2141 = vand.u32 %v2140, 4294901760
    %v2142 = vsub.f32 %v2140, %v2141
    %v2143 = vand.u32 %v2142, 4294901760
    %2144 = vmatpush2.msra.mxu0 %v2143
    %v2145 = vand.u32 %v299, 4294901760
    %v2146 = vsub.f32 %v299, %v2145
    %v2147 = vand.u32 %v2146, 4294901760
    %v2148 = vsub.f32 %v2146, %v2147
    %v2149 = vand.u32 %v2148, 4294901760
    %2150 = vmatprep.subr.mxu0 %v2149
    %v2151 = vand.u32 %v298, 4294901760
    %v2152 = vsub.f32 %v298, %v2151
    %v2153 = vand.u32 %v2152, 4294901760
    %v2154 = vsub.f32 %v2152, %v2153
    %v2155 = vand.u32 %v2154, 4294901760
    %2156 = vmatpush2.msra.mxu0 %v2155
    %v2157 = vand.u32 %v291, 4294901760
    %v2158 = vsub.f32 %v291, %v2157
    %v2159 = vand.u32 %v2158, 4294901760
    %v2160 = vsub.f32 %v2158, %v2159
    %v2161 = vand.u32 %v2160, 4294901760
    %2162 = vmatprep.subr.mxu0 %v2161
    %v2163 = vand.u32 %v290, 4294901760
    %v2164 = vsub.f32 %v290, %v2163
    %v2165 = vand.u32 %v2164, 4294901760
    %v2166 = vsub.f32 %v2164, %v2165
    %v2167 = vand.u32 %v2166, 4294901760
    %2168 = vmatpush2.msra.mxu0 %v2167
    %v2169 = vand.u32 %v283, 4294901760
    %v2170 = vsub.f32 %v283, %v2169
    %v2171 = vand.u32 %v2170, 4294901760
    %v2172 = vsub.f32 %v2170, %v2171
    %v2173 = vand.u32 %v2172, 4294901760
    %2174 = vmatprep.subr.mxu0 %v2173
    %v2175 = vand.u32 %v282, 4294901760
    %v2176 = vsub.f32 %v282, %v2175
    %v2177 = vand.u32 %v2176, 4294901760
    %v2178 = vsub.f32 %v2176, %v2177
    %v2179 = vand.u32 %v2178, 4294901760
    %2180 = vmatpush2.msra.mxu0 %v2179
    %v2181 = vand.u32 %v275, 4294901760
    %v2182 = vsub.f32 %v275, %v2181
    %v2183 = vand.u32 %v2182, 4294901760
    %v2184 = vsub.f32 %v2182, %v2183
    %v2185 = vand.u32 %v2184, 4294901760
    %2186 = vmatprep.subr.mxu0 %v2185
    %v2187 = vand.u32 %v274, 4294901760
    %v2188 = vsub.f32 %v274, %v2187
    %v2189 = vand.u32 %v2188, 4294901760
    %v2190 = vsub.f32 %v2188, %v2189
    %v2191 = vand.u32 %v2190, 4294901760
    %2192 = vmatpush2.msra.mxu0 %v2191
    %v2193 = vand.u32 %v267, 4294901760
    %v2194 = vsub.f32 %v267, %v2193
    %v2195 = vand.u32 %v2194, 4294901760
    %v2196 = vsub.f32 %v2194, %v2195
    %v2197 = vand.u32 %v2196, 4294901760
    %2198 = vmatprep.subr.mxu0 %v2197
    %v2199 = vand.u32 %v266, 4294901760
    %v2200 = vsub.f32 %v266, %v2199
    %v2201 = vand.u32 %v2200, 4294901760
    %v2202 = vsub.f32 %v2200, %v2201
    %v2203 = vand.u32 %v2202, 4294901760
    %2204 = vmatpush2.msra.mxu0 %v2203
    %v2205 = vand.u32 %v135, 4294901760
    %2206 = vmatprep.mubr.f32.mxu0 %v2205
    %v2207 = vand.u32 %v134, 4294901760
    %2208 = vmatmul.mubr.f32.gmra.mxu0 %v2207
    %v2209 = vpop.f32.mrf.mxu0
    %v2210 = vadd.f32 %v1817, %v2209
    %v2211 = vpop.f32.mrf.mxu0
    %v2212 = vadd.f32 %v1819, %v2211
    %2213 = vdwg.mxu0
    %v2214 = vand.u32 %v259, 4294901760
    %v2215 = vsub.f32 %v259, %v2214
    %2216 = vmatprep.subr.mxu0 %v2215
    %v2217 = vand.u32 %v258, 4294901760
    %v2218 = vsub.f32 %v258, %v2217
    %2219 = vmatpush1.msra.mxu0 %v2218
    %v2220 = vand.u32 %v251, 4294901760
    %v2221 = vsub.f32 %v251, %v2220
    %2222 = vmatprep.subr.mxu0 %v2221
    %v2223 = vand.u32 %v250, 4294901760
    %v2224 = vsub.f32 %v250, %v2223
    %2225 = vmatpush1.msra.mxu0 %v2224
    %v2226 = vand.u32 %v243, 4294901760
    %v2227 = vsub.f32 %v243, %v2226
    %2228 = vmatprep.subr.mxu0 %v2227
    %v2229 = vand.u32 %v242, 4294901760
    %v2230 = vsub.f32 %v242, %v2229
    %2231 = vmatpush1.msra.mxu0 %v2230
    %v2232 = vand.u32 %v235, 4294901760
    %v2233 = vsub.f32 %v235, %v2232
    %2234 = vmatprep.subr.mxu0 %v2233
    %v2235 = vand.u32 %v234, 4294901760
    %v2236 = vsub.f32 %v234, %v2235
    %2237 = vmatpush1.msra.mxu0 %v2236
    %v2238 = vand.u32 %v227, 4294901760
    %v2239 = vsub.f32 %v227, %v2238
    %2240 = vmatprep.subr.mxu0 %v2239
    %v2241 = vand.u32 %v226, 4294901760
    %v2242 = vsub.f32 %v226, %v2241
    %2243 = vmatpush1.msra.mxu0 %v2242
    %v2244 = vand.u32 %v219, 4294901760
    %v2245 = vsub.f32 %v219, %v2244
    %2246 = vmatprep.subr.mxu0 %v2245
    %v2247 = vand.u32 %v218, 4294901760
    %v2248 = vsub.f32 %v218, %v2247
    %2249 = vmatpush1.msra.mxu0 %v2248
    %v2250 = vand.u32 %v211, 4294901760
    %v2251 = vsub.f32 %v211, %v2250
    %2252 = vmatprep.subr.mxu0 %v2251
    %v2253 = vand.u32 %v210, 4294901760
    %v2254 = vsub.f32 %v210, %v2253
    %2255 = vmatpush1.msra.mxu0 %v2254
    %v2256 = vand.u32 %v203, 4294901760
    %v2257 = vsub.f32 %v203, %v2256
    %2258 = vmatprep.subr.mxu0 %v2257
    %v2259 = vand.u32 %v202, 4294901760
    %v2260 = vsub.f32 %v202, %v2259
    %2261 = vmatpush1.msra.mxu0 %v2260
    %v2262 = vand.u32 %v195, 4294901760
    %v2263 = vsub.f32 %v195, %v2262
    %2264 = vmatprep.subr.mxu0 %v2263
    %v2265 = vand.u32 %v194, 4294901760
    %v2266 = vsub.f32 %v194, %v2265
    %2267 = vmatpush1.msra.mxu0 %v2266
    %v2268 = vand.u32 %v187, 4294901760
    %v2269 = vsub.f32 %v187, %v2268
    %2270 = vmatprep.subr.mxu0 %v2269
    %v2271 = vand.u32 %v186, 4294901760
    %v2272 = vsub.f32 %v186, %v2271
    %2273 = vmatpush1.msra.mxu0 %v2272
    %v2274 = vand.u32 %v179, 4294901760
    %v2275 = vsub.f32 %v179, %v2274
    %2276 = vmatprep.subr.mxu0 %v2275
    %v2277 = vand.u32 %v178, 4294901760
    %v2278 = vsub.f32 %v178, %v2277
    %2279 = vmatpush1.msra.mxu0 %v2278
    %v2280 = vand.u32 %v171, 4294901760
    %v2281 = vsub.f32 %v171, %v2280
    %2282 = vmatprep.subr.mxu0 %v2281
    %v2283 = vand.u32 %v170, 4294901760
    %v2284 = vsub.f32 %v170, %v2283
    %2285 = vmatpush1.msra.mxu0 %v2284
    %v2286 = vand.u32 %v163, 4294901760
    %v2287 = vsub.f32 %v163, %v2286
    %2288 = vmatprep.subr.mxu0 %v2287
    %v2289 = vand.u32 %v162, 4294901760
    %v2290 = vsub.f32 %v162, %v2289
    %2291 = vmatpush1.msra.mxu0 %v2290
    %v2292 = vand.u32 %v155, 4294901760
    %v2293 = vsub.f32 %v155, %v2292
    %2294 = vmatprep.subr.mxu0 %v2293
    %v2295 = vand.u32 %v154, 4294901760
    %v2296 = vsub.f32 %v154, %v2295
    %2297 = vmatpush1.msra.mxu0 %v2296
    %v2298 = vand.u32 %v147, 4294901760
    %v2299 = vsub.f32 %v147, %v2298
    %2300 = vmatprep.subr.mxu0 %v2299
    %v2301 = vand.u32 %v146, 4294901760
    %v2302 = vsub.f32 %v146, %v2301
    %2303 = vmatpush1.msra.mxu0 %v2302
    %v2304 = vand.u32 %v139, 4294901760
    %v2305 = vsub.f32 %v139, %v2304
    %2306 = vmatprep.subr.mxu0 %v2305
    %v2307 = vand.u32 %v138, 4294901760
    %v2308 = vsub.f32 %v138, %v2307
    %2309 = vmatpush1.msra.mxu0 %v2308
    %v2310 = vand.u32 %v387, 4294901760
    %v2311 = vsub.f32 %v387, %v2310
    %2312 = vmatprep.subr.mxu0 %v2311
    %v2313 = vand.u32 %v386, 4294901760
    %v2314 = vsub.f32 %v386, %v2313
    %2315 = vmatpush2.msra.mxu0 %v2314
    %v2316 = vand.u32 %v379, 4294901760
    %v2317 = vsub.f32 %v379, %v2316
    %2318 = vmatprep.subr.mxu0 %v2317
    %v2319 = vand.u32 %v378, 4294901760
    %v2320 = vsub.f32 %v378, %v2319
    %2321 = vmatpush2.msra.mxu0 %v2320
    %v2322 = vand.u32 %v371, 4294901760
    %v2323 = vsub.f32 %v371, %v2322
    %2324 = vmatprep.subr.mxu0 %v2323
    %v2325 = vand.u32 %v370, 4294901760
    %v2326 = vsub.f32 %v370, %v2325
    %2327 = vmatpush2.msra.mxu0 %v2326
    %v2328 = vand.u32 %v363, 4294901760
    %v2329 = vsub.f32 %v363, %v2328
    %2330 = vmatprep.subr.mxu0 %v2329
    %v2331 = vand.u32 %v362, 4294901760
    %v2332 = vsub.f32 %v362, %v2331
    %2333 = vmatpush2.msra.mxu0 %v2332
    %v2334 = vand.u32 %v355, 4294901760
    %v2335 = vsub.f32 %v355, %v2334
    %2336 = vmatprep.subr.mxu0 %v2335
    %v2337 = vand.u32 %v354, 4294901760
    %v2338 = vsub.f32 %v354, %v2337
    %2339 = vmatpush2.msra.mxu0 %v2338
    %v2340 = vand.u32 %v347, 4294901760
    %v2341 = vsub.f32 %v347, %v2340
    %2342 = vmatprep.subr.mxu0 %v2341
    %v2343 = vand.u32 %v346, 4294901760
    %v2344 = vsub.f32 %v346, %v2343
    %2345 = vmatpush2.msra.mxu0 %v2344
    %v2346 = vand.u32 %v339, 4294901760
    %v2347 = vsub.f32 %v339, %v2346
    %2348 = vmatprep.subr.mxu0 %v2347
    %v2349 = vand.u32 %v338, 4294901760
    %v2350 = vsub.f32 %v338, %v2349
    %2351 = vmatpush2.msra.mxu0 %v2350
    %v2352 = vand.u32 %v331, 4294901760
    %v2353 = vsub.f32 %v331, %v2352
    %2354 = vmatprep.subr.mxu0 %v2353
    %v2355 = vand.u32 %v330, 4294901760
    %v2356 = vsub.f32 %v330, %v2355
    %2357 = vmatpush2.msra.mxu0 %v2356
    %v2358 = vand.u32 %v323, 4294901760
    %v2359 = vsub.f32 %v323, %v2358
    %2360 = vmatprep.subr.mxu0 %v2359
    %v2361 = vand.u32 %v322, 4294901760
    %v2362 = vsub.f32 %v322, %v2361
    %2363 = vmatpush2.msra.mxu0 %v2362
    %v2364 = vand.u32 %v315, 4294901760
    %v2365 = vsub.f32 %v315, %v2364
    %2366 = vmatprep.subr.mxu0 %v2365
    %v2367 = vand.u32 %v314, 4294901760
    %v2368 = vsub.f32 %v314, %v2367
    %2369 = vmatpush2.msra.mxu0 %v2368
    %v2370 = vand.u32 %v307, 4294901760
    %v2371 = vsub.f32 %v307, %v2370
    %2372 = vmatprep.subr.mxu0 %v2371
    %v2373 = vand.u32 %v306, 4294901760
    %v2374 = vsub.f32 %v306, %v2373
    %2375 = vmatpush2.msra.mxu0 %v2374
    %v2376 = vand.u32 %v299, 4294901760
    %v2377 = vsub.f32 %v299, %v2376
    %2378 = vmatprep.subr.mxu0 %v2377
    %v2379 = vand.u32 %v298, 4294901760
    %v2380 = vsub.f32 %v298, %v2379
    %2381 = vmatpush2.msra.mxu0 %v2380
    %v2382 = vand.u32 %v291, 4294901760
    %v2383 = vsub.f32 %v291, %v2382
    %2384 = vmatprep.subr.mxu0 %v2383
    %v2385 = vand.u32 %v290, 4294901760
    %v2386 = vsub.f32 %v290, %v2385
    %2387 = vmatpush2.msra.mxu0 %v2386
    %v2388 = vand.u32 %v283, 4294901760
    %v2389 = vsub.f32 %v283, %v2388
    %2390 = vmatprep.subr.mxu0 %v2389
    %v2391 = vand.u32 %v282, 4294901760
    %v2392 = vsub.f32 %v282, %v2391
    %2393 = vmatpush2.msra.mxu0 %v2392
    %v2394 = vand.u32 %v275, 4294901760
    %v2395 = vsub.f32 %v275, %v2394
    %2396 = vmatprep.subr.mxu0 %v2395
    %v2397 = vand.u32 %v274, 4294901760
    %v2398 = vsub.f32 %v274, %v2397
    %2399 = vmatpush2.msra.mxu0 %v2398
    %v2400 = vand.u32 %v267, 4294901760
    %v2401 = vsub.f32 %v267, %v2400
    %2402 = vmatprep.subr.mxu0 %v2401
    %v2403 = vand.u32 %v266, 4294901760
    %v2404 = vsub.f32 %v266, %v2403
    %2405 = vmatpush2.msra.mxu0 %v2404
    %v2406 = vand.u32 %v135, 4294901760
    %v2407 = vsub.f32 %v135, %v2406
    %2408 = vmatprep.mubr.f32.mxu0 %v2407
    %v2409 = vand.u32 %v134, 4294901760
    %v2410 = vsub.f32 %v134, %v2409
    %2411 = vmatmul.mubr.f32.gmra.mxu0 %v2410
    %v2412 = vpop.f32.mrf.mxu0
    %v2413 = vadd.f32 %v2210, %v2412
    %v2414 = vpop.f32.mrf.mxu0
    %v2415 = vadd.f32 %v2212, %v2414
    %2416 = vdwg.mxu0
    %v2417 = vand.u32 %v259, 4294901760
    %2418 = vmatprep.subr.mxu0 %v2417
    %v2419 = vand.u32 %v258, 4294901760
    %2420 = vmatpush1.msra.mxu0 %v2419
    %v2421 = vand.u32 %v251, 4294901760
    %2422 = vmatprep.subr.mxu0 %v2421
    %v2423 = vand.u32 %v250, 4294901760
    %2424 = vmatpush1.msra.mxu0 %v2423
    %v2425 = vand.u32 %v243, 4294901760
    %2426 = vmatprep.subr.mxu0 %v2425
    %v2427 = vand.u32 %v242, 4294901760
    %2428 = vmatpush1.msra.mxu0 %v2427
    %v2429 = vand.u32 %v235, 4294901760
    %2430 = vmatprep.subr.mxu0 %v2429
    %v2431 = vand.u32 %v234, 4294901760
    %2432 = vmatpush1.msra.mxu0 %v2431
    %v2433 = vand.u32 %v227, 4294901760
    %2434 = vmatprep.subr.mxu0 %v2433
    %v2435 = vand.u32 %v226, 4294901760
    %2436 = vmatpush1.msra.mxu0 %v2435
    %v2437 = vand.u32 %v219, 4294901760
    %2438 = vmatprep.subr.mxu0 %v2437
    %v2439 = vand.u32 %v218, 4294901760
    %2440 = vmatpush1.msra.mxu0 %v2439
    %v2441 = vand.u32 %v211, 4294901760
    %2442 = vmatprep.subr.mxu0 %v2441
    %v2443 = vand.u32 %v210, 4294901760
    %2444 = vmatpush1.msra.mxu0 %v2443
    %v2445 = vand.u32 %v203, 4294901760
    %2446 = vmatprep.subr.mxu0 %v2445
    %v2447 = vand.u32 %v202, 4294901760
    %2448 = vmatpush1.msra.mxu0 %v2447
    %v2449 = vand.u32 %v195, 4294901760
    %2450 = vmatprep.subr.mxu0 %v2449
    %v2451 = vand.u32 %v194, 4294901760
    %2452 = vmatpush1.msra.mxu0 %v2451
    %v2453 = vand.u32 %v187, 4294901760
    %2454 = vmatprep.subr.mxu0 %v2453
    %v2455 = vand.u32 %v186, 4294901760
    %2456 = vmatpush1.msra.mxu0 %v2455
    %v2457 = vand.u32 %v179, 4294901760
    %2458 = vmatprep.subr.mxu0 %v2457
    %v2459 = vand.u32 %v178, 4294901760
    %2460 = vmatpush1.msra.mxu0 %v2459
    %v2461 = vand.u32 %v171, 4294901760
    %2462 = vmatprep.subr.mxu0 %v2461
    %v2463 = vand.u32 %v170, 4294901760
    %2464 = vmatpush1.msra.mxu0 %v2463
    %v2465 = vand.u32 %v163, 4294901760
    %2466 = vmatprep.subr.mxu0 %v2465
    %v2467 = vand.u32 %v162, 4294901760
    %2468 = vmatpush1.msra.mxu0 %v2467
    %v2469 = vand.u32 %v155, 4294901760
    %2470 = vmatprep.subr.mxu0 %v2469
    %v2471 = vand.u32 %v154, 4294901760
    %2472 = vmatpush1.msra.mxu0 %v2471
    %v2473 = vand.u32 %v147, 4294901760
    %2474 = vmatprep.subr.mxu0 %v2473
    %v2475 = vand.u32 %v146, 4294901760
    %2476 = vmatpush1.msra.mxu0 %v2475
    %v2477 = vand.u32 %v139, 4294901760
    %2478 = vmatprep.subr.mxu0 %v2477
    %v2479 = vand.u32 %v138, 4294901760
    %2480 = vmatpush1.msra.mxu0 %v2479
    %v2481 = vand.u32 %v387, 4294901760
    %2482 = vmatprep.subr.mxu0 %v2481
    %v2483 = vand.u32 %v386, 4294901760
    %2484 = vmatpush2.msra.mxu0 %v2483
    %v2485 = vand.u32 %v379, 4294901760
    %2486 = vmatprep.subr.mxu0 %v2485
    %v2487 = vand.u32 %v378, 4294901760
    %2488 = vmatpush2.msra.mxu0 %v2487
    %v2489 = vand.u32 %v371, 4294901760
    %2490 = vmatprep.subr.mxu0 %v2489
    %v2491 = vand.u32 %v370, 4294901760
    %2492 = vmatpush2.msra.mxu0 %v2491
    %v2493 = vand.u32 %v363, 4294901760
    %2494 = vmatprep.subr.mxu0 %v2493
    %v2495 = vand.u32 %v362, 4294901760
    %2496 = vmatpush2.msra.mxu0 %v2495
    %v2497 = vand.u32 %v355, 4294901760
    %2498 = vmatprep.subr.mxu0 %v2497
    %v2499 = vand.u32 %v354, 4294901760
    %2500 = vmatpush2.msra.mxu0 %v2499
    %v2501 = vand.u32 %v347, 4294901760
    %2502 = vmatprep.subr.mxu0 %v2501
    %v2503 = vand.u32 %v346, 4294901760
    %2504 = vmatpush2.msra.mxu0 %v2503
    %v2505 = vand.u32 %v339, 4294901760
    %2506 = vmatprep.subr.mxu0 %v2505
    %v2507 = vand.u32 %v338, 4294901760
    %2508 = vmatpush2.msra.mxu0 %v2507
    %v2509 = vand.u32 %v331, 4294901760
    %2510 = vmatprep.subr.mxu0 %v2509
    %v2511 = vand.u32 %v330, 4294901760
    %2512 = vmatpush2.msra.mxu0 %v2511
    %v2513 = vand.u32 %v323, 4294901760
    %2514 = vmatprep.subr.mxu0 %v2513
    %v2515 = vand.u32 %v322, 4294901760
    %2516 = vmatpush2.msra.mxu0 %v2515
    %v2517 = vand.u32 %v315, 4294901760
    %2518 = vmatprep.subr.mxu0 %v2517
    %v2519 = vand.u32 %v314, 4294901760
    %2520 = vmatpush2.msra.mxu0 %v2519
    %v2521 = vand.u32 %v307, 4294901760
    %2522 = vmatprep.subr.mxu0 %v2521
    %v2523 = vand.u32 %v306, 4294901760
    %2524 = vmatpush2.msra.mxu0 %v2523
    %v2525 = vand.u32 %v299, 4294901760
    %2526 = vmatprep.subr.mxu0 %v2525
    %v2527 = vand.u32 %v298, 4294901760
    %2528 = vmatpush2.msra.mxu0 %v2527
    %v2529 = vand.u32 %v291, 4294901760
    %2530 = vmatprep.subr.mxu0 %v2529
    %v2531 = vand.u32 %v290, 4294901760
    %2532 = vmatpush2.msra.mxu0 %v2531
    %v2533 = vand.u32 %v283, 4294901760
    %2534 = vmatprep.subr.mxu0 %v2533
    %v2535 = vand.u32 %v282, 4294901760
    %2536 = vmatpush2.msra.mxu0 %v2535
    %v2537 = vand.u32 %v275, 4294901760
    %2538 = vmatprep.subr.mxu0 %v2537
    %v2539 = vand.u32 %v274, 4294901760
    %2540 = vmatpush2.msra.mxu0 %v2539
    %v2541 = vand.u32 %v267, 4294901760
    %2542 = vmatprep.subr.mxu0 %v2541
    %v2543 = vand.u32 %v266, 4294901760
    %2544 = vmatpush2.msra.mxu0 %v2543
    %v2545 = vand.u32 %v135, 4294901760
    %v2546 = vsub.f32 %v135, %v2545
    %v2547 = vand.u32 %v2546, 4294901760
    %2548 = vmatprep.mubr.f32.mxu0 %v2547
    %v2549 = vand.u32 %v134, 4294901760
    %v2550 = vsub.f32 %v134, %v2549
    %v2551 = vand.u32 %v2550, 4294901760
    %2552 = vmatmul.mubr.f32.gmra.mxu0 %v2551
    %v2553 = vpop.f32.mrf.mxu0
    %v2554 = vadd.f32 %v2413, %v2553
    %v2555 = vpop.f32.mrf.mxu0
    %v2556 = vadd.f32 %v2415, %v2555
    %2557 = vdwg.mxu0
    %v2558 = vand.u32 %v259, 4294901760
    %v2559 = vsub.f32 %v259, %v2558
    %v2560 = vand.u32 %v2559, 4294901760
    %2561 = vmatprep.subr.mxu0 %v2560
    %v2562 = vand.u32 %v258, 4294901760
    %v2563 = vsub.f32 %v258, %v2562
    %v2564 = vand.u32 %v2563, 4294901760
    %2565 = vmatpush1.msra.mxu0 %v2564
    %v2566 = vand.u32 %v251, 4294901760
    %v2567 = vsub.f32 %v251, %v2566
    %v2568 = vand.u32 %v2567, 4294901760
    %2569 = vmatprep.subr.mxu0 %v2568
    %v2570 = vand.u32 %v250, 4294901760
    %v2571 = vsub.f32 %v250, %v2570
    %v2572 = vand.u32 %v2571, 4294901760
    %2573 = vmatpush1.msra.mxu0 %v2572
    %v2574 = vand.u32 %v243, 4294901760
    %v2575 = vsub.f32 %v243, %v2574
    %v2576 = vand.u32 %v2575, 4294901760
    %2577 = vmatprep.subr.mxu0 %v2576
    %v2578 = vand.u32 %v242, 4294901760
    %v2579 = vsub.f32 %v242, %v2578
    %v2580 = vand.u32 %v2579, 4294901760
    %2581 = vmatpush1.msra.mxu0 %v2580
    %v2582 = vand.u32 %v235, 4294901760
    %v2583 = vsub.f32 %v235, %v2582
    %v2584 = vand.u32 %v2583, 4294901760
    %2585 = vmatprep.subr.mxu0 %v2584
    %v2586 = vand.u32 %v234, 4294901760
    %v2587 = vsub.f32 %v234, %v2586
    %v2588 = vand.u32 %v2587, 4294901760
    %2589 = vmatpush1.msra.mxu0 %v2588
    %v2590 = vand.u32 %v227, 4294901760
    %v2591 = vsub.f32 %v227, %v2590
    %v2592 = vand.u32 %v2591, 4294901760
    %2593 = vmatprep.subr.mxu0 %v2592
    %v2594 = vand.u32 %v226, 4294901760
    %v2595 = vsub.f32 %v226, %v2594
    %v2596 = vand.u32 %v2595, 4294901760
    %2597 = vmatpush1.msra.mxu0 %v2596
    %v2598 = vand.u32 %v219, 4294901760
    %v2599 = vsub.f32 %v219, %v2598
    %v2600 = vand.u32 %v2599, 4294901760
    %2601 = vmatprep.subr.mxu0 %v2600
    %v2602 = vand.u32 %v218, 4294901760
    %v2603 = vsub.f32 %v218, %v2602
    %v2604 = vand.u32 %v2603, 4294901760
    %2605 = vmatpush1.msra.mxu0 %v2604
    %v2606 = vand.u32 %v211, 4294901760
    %v2607 = vsub.f32 %v211, %v2606
    %v2608 = vand.u32 %v2607, 4294901760
    %2609 = vmatprep.subr.mxu0 %v2608
    %v2610 = vand.u32 %v210, 4294901760
    %v2611 = vsub.f32 %v210, %v2610
    %v2612 = vand.u32 %v2611, 4294901760
    %2613 = vmatpush1.msra.mxu0 %v2612
    %v2614 = vand.u32 %v203, 4294901760
    %v2615 = vsub.f32 %v203, %v2614
    %v2616 = vand.u32 %v2615, 4294901760
    %2617 = vmatprep.subr.mxu0 %v2616
    %v2618 = vand.u32 %v202, 4294901760
    %v2619 = vsub.f32 %v202, %v2618
    %v2620 = vand.u32 %v2619, 4294901760
    %2621 = vmatpush1.msra.mxu0 %v2620
    %v2622 = vand.u32 %v195, 4294901760
    %v2623 = vsub.f32 %v195, %v2622
    %v2624 = vand.u32 %v2623, 4294901760
    %2625 = vmatprep.subr.mxu0 %v2624
    %v2626 = vand.u32 %v194, 4294901760
    %v2627 = vsub.f32 %v194, %v2626
    %v2628 = vand.u32 %v2627, 4294901760
    %2629 = vmatpush1.msra.mxu0 %v2628
    %v2630 = vand.u32 %v187, 4294901760
    %v2631 = vsub.f32 %v187, %v2630
    %v2632 = vand.u32 %v2631, 4294901760
    %2633 = vmatprep.subr.mxu0 %v2632
    %v2634 = vand.u32 %v186, 4294901760
    %v2635 = vsub.f32 %v186, %v2634
    %v2636 = vand.u32 %v2635, 4294901760
    %2637 = vmatpush1.msra.mxu0 %v2636
    %v2638 = vand.u32 %v179, 4294901760
    %v2639 = vsub.f32 %v179, %v2638
    %v2640 = vand.u32 %v2639, 4294901760
    %2641 = vmatprep.subr.mxu0 %v2640
    %v2642 = vand.u32 %v178, 4294901760
    %v2643 = vsub.f32 %v178, %v2642
    %v2644 = vand.u32 %v2643, 4294901760
    %2645 = vmatpush1.msra.mxu0 %v2644
    %v2646 = vand.u32 %v171, 4294901760
    %v2647 = vsub.f32 %v171, %v2646
    %v2648 = vand.u32 %v2647, 4294901760
    %2649 = vmatprep.subr.mxu0 %v2648
    %v2650 = vand.u32 %v170, 4294901760
    %v2651 = vsub.f32 %v170, %v2650
    %v2652 = vand.u32 %v2651, 4294901760
    %2653 = vmatpush1.msra.mxu0 %v2652
    %v2654 = vand.u32 %v163, 4294901760
    %v2655 = vsub.f32 %v163, %v2654
    %v2656 = vand.u32 %v2655, 4294901760
    %2657 = vmatprep.subr.mxu0 %v2656
    %v2658 = vand.u32 %v162, 4294901760
    %v2659 = vsub.f32 %v162, %v2658
    %v2660 = vand.u32 %v2659, 4294901760
    %2661 = vmatpush1.msra.mxu0 %v2660
    %v2662 = vand.u32 %v155, 4294901760
    %v2663 = vsub.f32 %v155, %v2662
    %v2664 = vand.u32 %v2663, 4294901760
    %2665 = vmatprep.subr.mxu0 %v2664
    %v2666 = vand.u32 %v154, 4294901760
    %v2667 = vsub.f32 %v154, %v2666
    %v2668 = vand.u32 %v2667, 4294901760
    %2669 = vmatpush1.msra.mxu0 %v2668
    %v2670 = vand.u32 %v147, 4294901760
    %v2671 = vsub.f32 %v147, %v2670
    %v2672 = vand.u32 %v2671, 4294901760
    %2673 = vmatprep.subr.mxu0 %v2672
    %v2674 = vand.u32 %v146, 4294901760
    %v2675 = vsub.f32 %v146, %v2674
    %v2676 = vand.u32 %v2675, 4294901760
    %2677 = vmatpush1.msra.mxu0 %v2676
    %v2678 = vand.u32 %v139, 4294901760
    %v2679 = vsub.f32 %v139, %v2678
    %v2680 = vand.u32 %v2679, 4294901760
    %2681 = vmatprep.subr.mxu0 %v2680
    %v2682 = vand.u32 %v138, 4294901760
    %v2683 = vsub.f32 %v138, %v2682
    %v2684 = vand.u32 %v2683, 4294901760
    %2685 = vmatpush1.msra.mxu0 %v2684
    %v2686 = vand.u32 %v387, 4294901760
    %v2687 = vsub.f32 %v387, %v2686
    %v2688 = vand.u32 %v2687, 4294901760
    %2689 = vmatprep.subr.mxu0 %v2688
    %v2690 = vand.u32 %v386, 4294901760
    %v2691 = vsub.f32 %v386, %v2690
    %v2692 = vand.u32 %v2691, 4294901760
    %2693 = vmatpush2.msra.mxu0 %v2692
    %v2694 = vand.u32 %v379, 4294901760
    %v2695 = vsub.f32 %v379, %v2694
    %v2696 = vand.u32 %v2695, 4294901760
    %2697 = vmatprep.subr.mxu0 %v2696
    %v2698 = vand.u32 %v378, 4294901760
    %v2699 = vsub.f32 %v378, %v2698
    %v2700 = vand.u32 %v2699, 4294901760
    %2701 = vmatpush2.msra.mxu0 %v2700
    %v2702 = vand.u32 %v371, 4294901760
    %v2703 = vsub.f32 %v371, %v2702
    %v2704 = vand.u32 %v2703, 4294901760
    %2705 = vmatprep.subr.mxu0 %v2704
    %v2706 = vand.u32 %v370, 4294901760
    %v2707 = vsub.f32 %v370, %v2706
    %v2708 = vand.u32 %v2707, 4294901760
    %2709 = vmatpush2.msra.mxu0 %v2708
    %v2710 = vand.u32 %v363, 4294901760
    %v2711 = vsub.f32 %v363, %v2710
    %v2712 = vand.u32 %v2711, 4294901760
    %2713 = vmatprep.subr.mxu0 %v2712
    %v2714 = vand.u32 %v362, 4294901760
    %v2715 = vsub.f32 %v362, %v2714
    %v2716 = vand.u32 %v2715, 4294901760
    %2717 = vmatpush2.msra.mxu0 %v2716
    %v2718 = vand.u32 %v355, 4294901760
    %v2719 = vsub.f32 %v355, %v2718
    %v2720 = vand.u32 %v2719, 4294901760
    %2721 = vmatprep.subr.mxu0 %v2720
    %v2722 = vand.u32 %v354, 4294901760
    %v2723 = vsub.f32 %v354, %v2722
    %v2724 = vand.u32 %v2723, 4294901760
    %2725 = vmatpush2.msra.mxu0 %v2724
    %v2726 = vand.u32 %v347, 4294901760
    %v2727 = vsub.f32 %v347, %v2726
    %v2728 = vand.u32 %v2727, 4294901760
    %2729 = vmatprep.subr.mxu0 %v2728
    %v2730 = vand.u32 %v346, 4294901760
    %v2731 = vsub.f32 %v346, %v2730
    %v2732 = vand.u32 %v2731, 4294901760
    %2733 = vmatpush2.msra.mxu0 %v2732
    %v2734 = vand.u32 %v339, 4294901760
    %v2735 = vsub.f32 %v339, %v2734
    %v2736 = vand.u32 %v2735, 4294901760
    %2737 = vmatprep.subr.mxu0 %v2736
    %v2738 = vand.u32 %v338, 4294901760
    %v2739 = vsub.f32 %v338, %v2738
    %v2740 = vand.u32 %v2739, 4294901760
    %2741 = vmatpush2.msra.mxu0 %v2740
    %v2742 = vand.u32 %v331, 4294901760
    %v2743 = vsub.f32 %v331, %v2742
    %v2744 = vand.u32 %v2743, 4294901760
    %2745 = vmatprep.subr.mxu0 %v2744
    %v2746 = vand.u32 %v330, 4294901760
    %v2747 = vsub.f32 %v330, %v2746
    %v2748 = vand.u32 %v2747, 4294901760
    %2749 = vmatpush2.msra.mxu0 %v2748
    %v2750 = vand.u32 %v323, 4294901760
    %v2751 = vsub.f32 %v323, %v2750
    %v2752 = vand.u32 %v2751, 4294901760
    %2753 = vmatprep.subr.mxu0 %v2752
    %v2754 = vand.u32 %v322, 4294901760
    %v2755 = vsub.f32 %v322, %v2754
    %v2756 = vand.u32 %v2755, 4294901760
    %2757 = vmatpush2.msra.mxu0 %v2756
    %v2758 = vand.u32 %v315, 4294901760
    %v2759 = vsub.f32 %v315, %v2758
    %v2760 = vand.u32 %v2759, 4294901760
    %2761 = vmatprep.subr.mxu0 %v2760
    %v2762 = vand.u32 %v314, 4294901760
    %v2763 = vsub.f32 %v314, %v2762
    %v2764 = vand.u32 %v2763, 4294901760
    %2765 = vmatpush2.msra.mxu0 %v2764
    %v2766 = vand.u32 %v307, 4294901760
    %v2767 = vsub.f32 %v307, %v2766
    %v2768 = vand.u32 %v2767, 4294901760
    %2769 = vmatprep.subr.mxu0 %v2768
    %v2770 = vand.u32 %v306, 4294901760
    %v2771 = vsub.f32 %v306, %v2770
    %v2772 = vand.u32 %v2771, 4294901760
    %2773 = vmatpush2.msra.mxu0 %v2772
    %v2774 = vand.u32 %v299, 4294901760
    %v2775 = vsub.f32 %v299, %v2774
    %v2776 = vand.u32 %v2775, 4294901760
    %2777 = vmatprep.subr.mxu0 %v2776
    %v2778 = vand.u32 %v298, 4294901760
    %v2779 = vsub.f32 %v298, %v2778
    %v2780 = vand.u32 %v2779, 4294901760
    %2781 = vmatpush2.msra.mxu0 %v2780
    %v2782 = vand.u32 %v291, 4294901760
    %v2783 = vsub.f32 %v291, %v2782
    %v2784 = vand.u32 %v2783, 4294901760
    %2785 = vmatprep.subr.mxu0 %v2784
    %v2786 = vand.u32 %v290, 4294901760
    %v2787 = vsub.f32 %v290, %v2786
    %v2788 = vand.u32 %v2787, 4294901760
    %2789 = vmatpush2.msra.mxu0 %v2788
    %v2790 = vand.u32 %v283, 4294901760
    %v2791 = vsub.f32 %v283, %v2790
    %v2792 = vand.u32 %v2791, 4294901760
    %2793 = vmatprep.subr.mxu0 %v2792
    %v2794 = vand.u32 %v282, 4294901760
    %v2795 = vsub.f32 %v282, %v2794
    %v2796 = vand.u32 %v2795, 4294901760
    %2797 = vmatpush2.msra.mxu0 %v2796
    %v2798 = vand.u32 %v275, 4294901760
    %v2799 = vsub.f32 %v275, %v2798
    %v2800 = vand.u32 %v2799, 4294901760
    %2801 = vmatprep.subr.mxu0 %v2800
    %v2802 = vand.u32 %v274, 4294901760
    %v2803 = vsub.f32 %v274, %v2802
    %v2804 = vand.u32 %v2803, 4294901760
    %2805 = vmatpush2.msra.mxu0 %v2804
    %v2806 = vand.u32 %v267, 4294901760
    %v2807 = vsub.f32 %v267, %v2806
    %v2808 = vand.u32 %v2807, 4294901760
    %2809 = vmatprep.subr.mxu0 %v2808
    %v2810 = vand.u32 %v266, 4294901760
    %v2811 = vsub.f32 %v266, %v2810
    %v2812 = vand.u32 %v2811, 4294901760
    %2813 = vmatpush2.msra.mxu0 %v2812
    %v2814 = vand.u32 %v135, 4294901760
    %2815 = vmatprep.mubr.f32.mxu0 %v2814
    %v2816 = vand.u32 %v134, 4294901760
    %2817 = vmatmul.mubr.f32.gmra.mxu0 %v2816
    %v2818 = vpop.f32.mrf.mxu0
    %v2819 = vadd.f32 %v2554, %v2818
    %v2820 = vpop.f32.mrf.mxu0
    %v2821 = vadd.f32 %v2556, %v2820
    %2822 = vdwg.mxu0
    %v2823 = vand.u32 %v259, 4294901760
    %2824 = vmatprep.subr.mxu0 %v2823
    %v2825 = vand.u32 %v258, 4294901760
    %2826 = vmatpush1.msra.mxu0 %v2825
    %v2827 = vand.u32 %v251, 4294901760
    %2828 = vmatprep.subr.mxu0 %v2827
    %v2829 = vand.u32 %v250, 4294901760
    %2830 = vmatpush1.msra.mxu0 %v2829
    %v2831 = vand.u32 %v243, 4294901760
    %2832 = vmatprep.subr.mxu0 %v2831
    %v2833 = vand.u32 %v242, 4294901760
    %2834 = vmatpush1.msra.mxu0 %v2833
    %v2835 = vand.u32 %v235, 4294901760
    %2836 = vmatprep.subr.mxu0 %v2835
    %v2837 = vand.u32 %v234, 4294901760
    %2838 = vmatpush1.msra.mxu0 %v2837
    %v2839 = vand.u32 %v227, 4294901760
    %2840 = vmatprep.subr.mxu0 %v2839
    %v2841 = vand.u32 %v226, 4294901760
    %2842 = vmatpush1.msra.mxu0 %v2841
    %v2843 = vand.u32 %v219, 4294901760
    %2844 = vmatprep.subr.mxu0 %v2843
    %v2845 = vand.u32 %v218, 4294901760
    %2846 = vmatpush1.msra.mxu0 %v2845
    %v2847 = vand.u32 %v211, 4294901760
    %2848 = vmatprep.subr.mxu0 %v2847
    %v2849 = vand.u32 %v210, 4294901760
    %2850 = vmatpush1.msra.mxu0 %v2849
    %v2851 = vand.u32 %v203, 4294901760
    %2852 = vmatprep.subr.mxu0 %v2851
    %v2853 = vand.u32 %v202, 4294901760
    %2854 = vmatpush1.msra.mxu0 %v2853
    %v2855 = vand.u32 %v195, 4294901760
    %2856 = vmatprep.subr.mxu0 %v2855
    %v2857 = vand.u32 %v194, 4294901760
    %2858 = vmatpush1.msra.mxu0 %v2857
    %v2859 = vand.u32 %v187, 4294901760
    %2860 = vmatprep.subr.mxu0 %v2859
    %v2861 = vand.u32 %v186, 4294901760
    %2862 = vmatpush1.msra.mxu0 %v2861
    %v2863 = vand.u32 %v179, 4294901760
    %2864 = vmatprep.subr.mxu0 %v2863
    %v2865 = vand.u32 %v178, 4294901760
    %2866 = vmatpush1.msra.mxu0 %v2865
    %v2867 = vand.u32 %v171, 4294901760
    %2868 = vmatprep.subr.mxu0 %v2867
    %v2869 = vand.u32 %v170, 4294901760
    %2870 = vmatpush1.msra.mxu0 %v2869
    %v2871 = vand.u32 %v163, 4294901760
    %2872 = vmatprep.subr.mxu0 %v2871
    %v2873 = vand.u32 %v162, 4294901760
    %2874 = vmatpush1.msra.mxu0 %v2873
    %v2875 = vand.u32 %v155, 4294901760
    %2876 = vmatprep.subr.mxu0 %v2875
    %v2877 = vand.u32 %v154, 4294901760
    %2878 = vmatpush1.msra.mxu0 %v2877
    %v2879 = vand.u32 %v147, 4294901760
    %2880 = vmatprep.subr.mxu0 %v2879
    %v2881 = vand.u32 %v146, 4294901760
    %2882 = vmatpush1.msra.mxu0 %v2881
    %v2883 = vand.u32 %v139, 4294901760
    %2884 = vmatprep.subr.mxu0 %v2883
    %v2885 = vand.u32 %v138, 4294901760
    %2886 = vmatpush1.msra.mxu0 %v2885
    %v2887 = vand.u32 %v387, 4294901760
    %2888 = vmatprep.subr.mxu0 %v2887
    %v2889 = vand.u32 %v386, 4294901760
    %2890 = vmatpush2.msra.mxu0 %v2889
    %v2891 = vand.u32 %v379, 4294901760
    %2892 = vmatprep.subr.mxu0 %v2891
    %v2893 = vand.u32 %v378, 4294901760
    %2894 = vmatpush2.msra.mxu0 %v2893
    %v2895 = vand.u32 %v371, 4294901760
    %2896 = vmatprep.subr.mxu0 %v2895
    %v2897 = vand.u32 %v370, 4294901760
    %2898 = vmatpush2.msra.mxu0 %v2897
    %v2899 = vand.u32 %v363, 4294901760
    %2900 = vmatprep.subr.mxu0 %v2899
    %v2901 = vand.u32 %v362, 4294901760
    %2902 = vmatpush2.msra.mxu0 %v2901
    %v2903 = vand.u32 %v355, 4294901760
    %2904 = vmatprep.subr.mxu0 %v2903
    %v2905 = vand.u32 %v354, 4294901760
    %2906 = vmatpush2.msra.mxu0 %v2905
    %v2907 = vand.u32 %v347, 4294901760
    %2908 = vmatprep.subr.mxu0 %v2907
    %v2909 = vand.u32 %v346, 4294901760
    %2910 = vmatpush2.msra.mxu0 %v2909
    %v2911 = vand.u32 %v339, 4294901760
    %2912 = vmatprep.subr.mxu0 %v2911
    %v2913 = vand.u32 %v338, 4294901760
    %2914 = vmatpush2.msra.mxu0 %v2913
    %v2915 = vand.u32 %v331, 4294901760
    %2916 = vmatprep.subr.mxu0 %v2915
    %v2917 = vand.u32 %v330, 4294901760
    %2918 = vmatpush2.msra.mxu0 %v2917
    %v2919 = vand.u32 %v323, 4294901760
    %2920 = vmatprep.subr.mxu0 %v2919
    %v2921 = vand.u32 %v322, 4294901760
    %2922 = vmatpush2.msra.mxu0 %v2921
    %v2923 = vand.u32 %v315, 4294901760
    %2924 = vmatprep.subr.mxu0 %v2923
    %v2925 = vand.u32 %v314, 4294901760
    %2926 = vmatpush2.msra.mxu0 %v2925
    %v2927 = vand.u32 %v307, 4294901760
    %2928 = vmatprep.subr.mxu0 %v2927
    %v2929 = vand.u32 %v306, 4294901760
    %2930 = vmatpush2.msra.mxu0 %v2929
    %v2931 = vand.u32 %v299, 4294901760
    %2932 = vmatprep.subr.mxu0 %v2931
    %v2933 = vand.u32 %v298, 4294901760
    %2934 = vmatpush2.msra.mxu0 %v2933
    %v2935 = vand.u32 %v291, 4294901760
    %2936 = vmatprep.subr.mxu0 %v2935
    %v2937 = vand.u32 %v290, 4294901760
    %2938 = vmatpush2.msra.mxu0 %v2937
    %v2939 = vand.u32 %v283, 4294901760
    %2940 = vmatprep.subr.mxu0 %v2939
    %v2941 = vand.u32 %v282, 4294901760
    %2942 = vmatpush2.msra.mxu0 %v2941
    %v2943 = vand.u32 %v275, 4294901760
    %2944 = vmatprep.subr.mxu0 %v2943
    %v2945 = vand.u32 %v274, 4294901760
    %2946 = vmatpush2.msra.mxu0 %v2945
    %v2947 = vand.u32 %v267, 4294901760
    %2948 = vmatprep.subr.mxu0 %v2947
    %v2949 = vand.u32 %v266, 4294901760
    %2950 = vmatpush2.msra.mxu0 %v2949
    %v2951 = vand.u32 %v135, 4294901760
    %2952 = vmatprep.mubr.f32.mxu0 %v2951
    %v2953 = vand.u32 %v134, 4294901760
    %2954 = vmatmul.mubr.f32.gmra.mxu0 %v2953
    %v2955 = vpop.f32.mrf.mxu0
    %v2956 = vadd.f32 %v2819, %v2955
    %v2957 = vpop.f32.mrf.mxu0
    %v2958 = vadd.f32 %v2821, %v2957
    %2959 = vdwg.mxu0
    %v2960 = vand.u32 %v261, 4294901760
    %2961 = vmatprep.subr.mxu0 %v2960
    %v2962 = vand.u32 %v260, 4294901760
    %2963 = vmatpush1.msra.mxu0 %v2962
    %v2964 = vand.u32 %v253, 4294901760
    %2965 = vmatprep.subr.mxu0 %v2964
    %v2966 = vand.u32 %v252, 4294901760
    %2967 = vmatpush1.msra.mxu0 %v2966
    %v2968 = vand.u32 %v245, 4294901760
    %2969 = vmatprep.subr.mxu0 %v2968
    %v2970 = vand.u32 %v244, 4294901760
    %2971 = vmatpush1.msra.mxu0 %v2970
    %v2972 = vand.u32 %v237, 4294901760
    %2973 = vmatprep.subr.mxu0 %v2972
    %v2974 = vand.u32 %v236, 4294901760
    %2975 = vmatpush1.msra.mxu0 %v2974
    %v2976 = vand.u32 %v229, 4294901760
    %2977 = vmatprep.subr.mxu0 %v2976
    %v2978 = vand.u32 %v228, 4294901760
    %2979 = vmatpush1.msra.mxu0 %v2978
    %v2980 = vand.u32 %v221, 4294901760
    %2981 = vmatprep.subr.mxu0 %v2980
    %v2982 = vand.u32 %v220, 4294901760
    %2983 = vmatpush1.msra.mxu0 %v2982
    %v2984 = vand.u32 %v213, 4294901760
    %2985 = vmatprep.subr.mxu0 %v2984
    %v2986 = vand.u32 %v212, 4294901760
    %2987 = vmatpush1.msra.mxu0 %v2986
    %v2988 = vand.u32 %v205, 4294901760
    %2989 = vmatprep.subr.mxu0 %v2988
    %v2990 = vand.u32 %v204, 4294901760
    %2991 = vmatpush1.msra.mxu0 %v2990
    %v2992 = vand.u32 %v197, 4294901760
    %2993 = vmatprep.subr.mxu0 %v2992
    %v2994 = vand.u32 %v196, 4294901760
    %2995 = vmatpush1.msra.mxu0 %v2994
    %v2996 = vand.u32 %v189, 4294901760
    %2997 = vmatprep.subr.mxu0 %v2996
    %v2998 = vand.u32 %v188, 4294901760
    %2999 = vmatpush1.msra.mxu0 %v2998
    %v3000 = vand.u32 %v181, 4294901760
    %3001 = vmatprep.subr.mxu0 %v3000
    %v3002 = vand.u32 %v180, 4294901760
    %3003 = vmatpush1.msra.mxu0 %v3002
    %v3004 = vand.u32 %v173, 4294901760
    %3005 = vmatprep.subr.mxu0 %v3004
    %v3006 = vand.u32 %v172, 4294901760
    %3007 = vmatpush1.msra.mxu0 %v3006
    %v3008 = vand.u32 %v165, 4294901760
    %3009 = vmatprep.subr.mxu0 %v3008
    %v3010 = vand.u32 %v164, 4294901760
    %3011 = vmatpush1.msra.mxu0 %v3010
    %v3012 = vand.u32 %v157, 4294901760
    %3013 = vmatprep.subr.mxu0 %v3012
    %v3014 = vand.u32 %v156, 4294901760
    %3015 = vmatpush1.msra.mxu0 %v3014
    %v3016 = vand.u32 %v149, 4294901760
    %3017 = vmatprep.subr.mxu0 %v3016
    %v3018 = vand.u32 %v148, 4294901760
    %3019 = vmatpush1.msra.mxu0 %v3018
    %v3020 = vand.u32 %v141, 4294901760
    %3021 = vmatprep.subr.mxu0 %v3020
    %v3022 = vand.u32 %v140, 4294901760
    %3023 = vmatpush1.msra.mxu0 %v3022
    %v3024 = vand.u32 %v389, 4294901760
    %3025 = vmatprep.subr.mxu0 %v3024
    %v3026 = vand.u32 %v388, 4294901760
    %3027 = vmatpush2.msra.mxu0 %v3026
    %v3028 = vand.u32 %v381, 4294901760
    %3029 = vmatprep.subr.mxu0 %v3028
    %v3030 = vand.u32 %v380, 4294901760
    %3031 = vmatpush2.msra.mxu0 %v3030
    %v3032 = vand.u32 %v373, 4294901760
    %3033 = vmatprep.subr.mxu0 %v3032
    %v3034 = vand.u32 %v372, 4294901760
    %3035 = vmatpush2.msra.mxu0 %v3034
    %v3036 = vand.u32 %v365, 4294901760
    %3037 = vmatprep.subr.mxu0 %v3036
    %v3038 = vand.u32 %v364, 4294901760
    %3039 = vmatpush2.msra.mxu0 %v3038
    %v3040 = vand.u32 %v357, 4294901760
    %3041 = vmatprep.subr.mxu0 %v3040
    %v3042 = vand.u32 %v356, 4294901760
    %3043 = vmatpush2.msra.mxu0 %v3042
    %v3044 = vand.u32 %v349, 4294901760
    %3045 = vmatprep.subr.mxu0 %v3044
    %v3046 = vand.u32 %v348, 4294901760
    %3047 = vmatpush2.msra.mxu0 %v3046
    %v3048 = vand.u32 %v341, 4294901760
    %3049 = vmatprep.subr.mxu0 %v3048
    %v3050 = vand.u32 %v340, 4294901760
    %3051 = vmatpush2.msra.mxu0 %v3050
    %v3052 = vand.u32 %v333, 4294901760
    %3053 = vmatprep.subr.mxu0 %v3052
    %v3054 = vand.u32 %v332, 4294901760
    %3055 = vmatpush2.msra.mxu0 %v3054
    %v3056 = vand.u32 %v325, 4294901760
    %3057 = vmatprep.subr.mxu0 %v3056
    %v3058 = vand.u32 %v324, 4294901760
    %3059 = vmatpush2.msra.mxu0 %v3058
    %v3060 = vand.u32 %v317, 4294901760
    %3061 = vmatprep.subr.mxu0 %v3060
    %v3062 = vand.u32 %v316, 4294901760
    %3063 = vmatpush2.msra.mxu0 %v3062
    %v3064 = vand.u32 %v309, 4294901760
    %3065 = vmatprep.subr.mxu0 %v3064
    %v3066 = vand.u32 %v308, 4294901760
    %3067 = vmatpush2.msra.mxu0 %v3066
    %v3068 = vand.u32 %v301, 4294901760
    %3069 = vmatprep.subr.mxu0 %v3068
    %v3070 = vand.u32 %v300, 4294901760
    %3071 = vmatpush2.msra.mxu0 %v3070
    %v3072 = vand.u32 %v293, 4294901760
    %3073 = vmatprep.subr.mxu0 %v3072
    %v3074 = vand.u32 %v292, 4294901760
    %3075 = vmatpush2.msra.mxu0 %v3074
    %v3076 = vand.u32 %v285, 4294901760
    %3077 = vmatprep.subr.mxu0 %v3076
    %v3078 = vand.u32 %v284, 4294901760
    %3079 = vmatpush2.msra.mxu0 %v3078
    %v3080 = vand.u32 %v277, 4294901760
    %3081 = vmatprep.subr.mxu0 %v3080
    %v3082 = vand.u32 %v276, 4294901760
    %3083 = vmatpush2.msra.mxu0 %v3082
    %v3084 = vand.u32 %v269, 4294901760
    %3085 = vmatprep.subr.mxu0 %v3084
    %v3086 = vand.u32 %v268, 4294901760
    %3087 = vmatpush2.msra.mxu0 %v3086
    %v3088 = vand.u32 %v135, 4294901760
    %v3089 = vsub.f32 %v135, %v3088
    %v3090 = vand.u32 %v3089, 4294901760
    %v3091 = vsub.f32 %v3089, %v3090
    %v3092 = vand.u32 %v3091, 4294901760
    %3093 = vmatprep.mubr.f32.mxu0 %v3092
    %v3094 = vand.u32 %v134, 4294901760
    %v3095 = vsub.f32 %v134, %v3094
    %v3096 = vand.u32 %v3095, 4294901760
    %v3097 = vsub.f32 %v3095, %v3096
    %v3098 = vand.u32 %v3097, 4294901760
    %3099 = vmatmul.mubr.f32.gmra.mxu0 %v3098
    %v3100 = vpop.f32.mrf.mxu0
    %v3101 = vadd.f32 0.0, %v3100
    %v3102 = vpop.f32.mrf.mxu0
    %v3103 = vadd.f32 0.0, %v3102
    %3104 = vdwg.mxu0
    %v3105 = vand.u32 %v261, 4294901760
    %v3106 = vsub.f32 %v261, %v3105
    %v3107 = vand.u32 %v3106, 4294901760
    %v3108 = vsub.f32 %v3106, %v3107
    %v3109 = vand.u32 %v3108, 4294901760
    %3110 = vmatprep.subr.mxu0 %v3109
    %v3111 = vand.u32 %v260, 4294901760
    %v3112 = vsub.f32 %v260, %v3111
    %v3113 = vand.u32 %v3112, 4294901760
    %v3114 = vsub.f32 %v3112, %v3113
    %v3115 = vand.u32 %v3114, 4294901760
    %3116 = vmatpush1.msra.mxu0 %v3115
    %v3117 = vand.u32 %v253, 4294901760
    %v3118 = vsub.f32 %v253, %v3117
    %v3119 = vand.u32 %v3118, 4294901760
    %v3120 = vsub.f32 %v3118, %v3119
    %v3121 = vand.u32 %v3120, 4294901760
    %3122 = vmatprep.subr.mxu0 %v3121
    %v3123 = vand.u32 %v252, 4294901760
    %v3124 = vsub.f32 %v252, %v3123
    %v3125 = vand.u32 %v3124, 4294901760
    %v3126 = vsub.f32 %v3124, %v3125
    %v3127 = vand.u32 %v3126, 4294901760
    %3128 = vmatpush1.msra.mxu0 %v3127
    %v3129 = vand.u32 %v245, 4294901760
    %v3130 = vsub.f32 %v245, %v3129
    %v3131 = vand.u32 %v3130, 4294901760
    %v3132 = vsub.f32 %v3130, %v3131
    %v3133 = vand.u32 %v3132, 4294901760
    %3134 = vmatprep.subr.mxu0 %v3133
    %v3135 = vand.u32 %v244, 4294901760
    %v3136 = vsub.f32 %v244, %v3135
    %v3137 = vand.u32 %v3136, 4294901760
    %v3138 = vsub.f32 %v3136, %v3137
    %v3139 = vand.u32 %v3138, 4294901760
    %3140 = vmatpush1.msra.mxu0 %v3139
    %v3141 = vand.u32 %v237, 4294901760
    %v3142 = vsub.f32 %v237, %v3141
    %v3143 = vand.u32 %v3142, 4294901760
    %v3144 = vsub.f32 %v3142, %v3143
    %v3145 = vand.u32 %v3144, 4294901760
    %3146 = vmatprep.subr.mxu0 %v3145
    %v3147 = vand.u32 %v236, 4294901760
    %v3148 = vsub.f32 %v236, %v3147
    %v3149 = vand.u32 %v3148, 4294901760
    %v3150 = vsub.f32 %v3148, %v3149
    %v3151 = vand.u32 %v3150, 4294901760
    %3152 = vmatpush1.msra.mxu0 %v3151
    %v3153 = vand.u32 %v229, 4294901760
    %v3154 = vsub.f32 %v229, %v3153
    %v3155 = vand.u32 %v3154, 4294901760
    %v3156 = vsub.f32 %v3154, %v3155
    %v3157 = vand.u32 %v3156, 4294901760
    %3158 = vmatprep.subr.mxu0 %v3157
    %v3159 = vand.u32 %v228, 4294901760
    %v3160 = vsub.f32 %v228, %v3159
    %v3161 = vand.u32 %v3160, 4294901760
    %v3162 = vsub.f32 %v3160, %v3161
    %v3163 = vand.u32 %v3162, 4294901760
    %3164 = vmatpush1.msra.mxu0 %v3163
    %v3165 = vand.u32 %v221, 4294901760
    %v3166 = vsub.f32 %v221, %v3165
    %v3167 = vand.u32 %v3166, 4294901760
    %v3168 = vsub.f32 %v3166, %v3167
    %v3169 = vand.u32 %v3168, 4294901760
    %3170 = vmatprep.subr.mxu0 %v3169
    %v3171 = vand.u32 %v220, 4294901760
    %v3172 = vsub.f32 %v220, %v3171
    %v3173 = vand.u32 %v3172, 4294901760
    %v3174 = vsub.f32 %v3172, %v3173
    %v3175 = vand.u32 %v3174, 4294901760
    %3176 = vmatpush1.msra.mxu0 %v3175
    %v3177 = vand.u32 %v213, 4294901760
    %v3178 = vsub.f32 %v213, %v3177
    %v3179 = vand.u32 %v3178, 4294901760
    %v3180 = vsub.f32 %v3178, %v3179
    %v3181 = vand.u32 %v3180, 4294901760
    %3182 = vmatprep.subr.mxu0 %v3181
    %v3183 = vand.u32 %v212, 4294901760
    %v3184 = vsub.f32 %v212, %v3183
    %v3185 = vand.u32 %v3184, 4294901760
    %v3186 = vsub.f32 %v3184, %v3185
    %v3187 = vand.u32 %v3186, 4294901760
    %3188 = vmatpush1.msra.mxu0 %v3187
    %v3189 = vand.u32 %v205, 4294901760
    %v3190 = vsub.f32 %v205, %v3189
    %v3191 = vand.u32 %v3190, 4294901760
    %v3192 = vsub.f32 %v3190, %v3191
    %v3193 = vand.u32 %v3192, 4294901760
    %3194 = vmatprep.subr.mxu0 %v3193
    %v3195 = vand.u32 %v204, 4294901760
    %v3196 = vsub.f32 %v204, %v3195
    %v3197 = vand.u32 %v3196, 4294901760
    %v3198 = vsub.f32 %v3196, %v3197
    %v3199 = vand.u32 %v3198, 4294901760
    %3200 = vmatpush1.msra.mxu0 %v3199
    %v3201 = vand.u32 %v197, 4294901760
    %v3202 = vsub.f32 %v197, %v3201
    %v3203 = vand.u32 %v3202, 4294901760
    %v3204 = vsub.f32 %v3202, %v3203
    %v3205 = vand.u32 %v3204, 4294901760
    %3206 = vmatprep.subr.mxu0 %v3205
    %v3207 = vand.u32 %v196, 4294901760
    %v3208 = vsub.f32 %v196, %v3207
    %v3209 = vand.u32 %v3208, 4294901760
    %v3210 = vsub.f32 %v3208, %v3209
    %v3211 = vand.u32 %v3210, 4294901760
    %3212 = vmatpush1.msra.mxu0 %v3211
    %v3213 = vand.u32 %v189, 4294901760
    %v3214 = vsub.f32 %v189, %v3213
    %v3215 = vand.u32 %v3214, 4294901760
    %v3216 = vsub.f32 %v3214, %v3215
    %v3217 = vand.u32 %v3216, 4294901760
    %3218 = vmatprep.subr.mxu0 %v3217
    %v3219 = vand.u32 %v188, 4294901760
    %v3220 = vsub.f32 %v188, %v3219
    %v3221 = vand.u32 %v3220, 4294901760
    %v3222 = vsub.f32 %v3220, %v3221
    %v3223 = vand.u32 %v3222, 4294901760
    %3224 = vmatpush1.msra.mxu0 %v3223
    %v3225 = vand.u32 %v181, 4294901760
    %v3226 = vsub.f32 %v181, %v3225
    %v3227 = vand.u32 %v3226, 4294901760
    %v3228 = vsub.f32 %v3226, %v3227
    %v3229 = vand.u32 %v3228, 4294901760
    %3230 = vmatprep.subr.mxu0 %v3229
    %v3231 = vand.u32 %v180, 4294901760
    %v3232 = vsub.f32 %v180, %v3231
    %v3233 = vand.u32 %v3232, 4294901760
    %v3234 = vsub.f32 %v3232, %v3233
    %v3235 = vand.u32 %v3234, 4294901760
    %3236 = vmatpush1.msra.mxu0 %v3235
    %v3237 = vand.u32 %v173, 4294901760
    %v3238 = vsub.f32 %v173, %v3237
    %v3239 = vand.u32 %v3238, 4294901760
    %v3240 = vsub.f32 %v3238, %v3239
    %v3241 = vand.u32 %v3240, 4294901760
    %3242 = vmatprep.subr.mxu0 %v3241
    %v3243 = vand.u32 %v172, 4294901760
    %v3244 = vsub.f32 %v172, %v3243
    %v3245 = vand.u32 %v3244, 4294901760
    %v3246 = vsub.f32 %v3244, %v3245
    %v3247 = vand.u32 %v3246, 4294901760
    %3248 = vmatpush1.msra.mxu0 %v3247
    %v3249 = vand.u32 %v165, 4294901760
    %v3250 = vsub.f32 %v165, %v3249
    %v3251 = vand.u32 %v3250, 4294901760
    %v3252 = vsub.f32 %v3250, %v3251
    %v3253 = vand.u32 %v3252, 4294901760
    %3254 = vmatprep.subr.mxu0 %v3253
    %v3255 = vand.u32 %v164, 4294901760
    %v3256 = vsub.f32 %v164, %v3255
    %v3257 = vand.u32 %v3256, 4294901760
    %v3258 = vsub.f32 %v3256, %v3257
    %v3259 = vand.u32 %v3258, 4294901760
    %3260 = vmatpush1.msra.mxu0 %v3259
    %v3261 = vand.u32 %v157, 4294901760
    %v3262 = vsub.f32 %v157, %v3261
    %v3263 = vand.u32 %v3262, 4294901760
    %v3264 = vsub.f32 %v3262, %v3263
    %v3265 = vand.u32 %v3264, 4294901760
    %3266 = vmatprep.subr.mxu0 %v3265
    %v3267 = vand.u32 %v156, 4294901760
    %v3268 = vsub.f32 %v156, %v3267
    %v3269 = vand.u32 %v3268, 4294901760
    %v3270 = vsub.f32 %v3268, %v3269
    %v3271 = vand.u32 %v3270, 4294901760
    %3272 = vmatpush1.msra.mxu0 %v3271
    %v3273 = vand.u32 %v149, 4294901760
    %v3274 = vsub.f32 %v149, %v3273
    %v3275 = vand.u32 %v3274, 4294901760
    %v3276 = vsub.f32 %v3274, %v3275
    %v3277 = vand.u32 %v3276, 4294901760
    %3278 = vmatprep.subr.mxu0 %v3277
    %v3279 = vand.u32 %v148, 4294901760
    %v3280 = vsub.f32 %v148, %v3279
    %v3281 = vand.u32 %v3280, 4294901760
    %v3282 = vsub.f32 %v3280, %v3281
    %v3283 = vand.u32 %v3282, 4294901760
    %3284 = vmatpush1.msra.mxu0 %v3283
    %v3285 = vand.u32 %v141, 4294901760
    %v3286 = vsub.f32 %v141, %v3285
    %v3287 = vand.u32 %v3286, 4294901760
    %v3288 = vsub.f32 %v3286, %v3287
    %v3289 = vand.u32 %v3288, 4294901760
    %3290 = vmatprep.subr.mxu0 %v3289
    %v3291 = vand.u32 %v140, 4294901760
    %v3292 = vsub.f32 %v140, %v3291
    %v3293 = vand.u32 %v3292, 4294901760
    %v3294 = vsub.f32 %v3292, %v3293
    %v3295 = vand.u32 %v3294, 4294901760
    %3296 = vmatpush1.msra.mxu0 %v3295
    %v3297 = vand.u32 %v389, 4294901760
    %v3298 = vsub.f32 %v389, %v3297
    %v3299 = vand.u32 %v3298, 4294901760
    %v3300 = vsub.f32 %v3298, %v3299
    %v3301 = vand.u32 %v3300, 4294901760
    %3302 = vmatprep.subr.mxu0 %v3301
    %v3303 = vand.u32 %v388, 4294901760
    %v3304 = vsub.f32 %v388, %v3303
    %v3305 = vand.u32 %v3304, 4294901760
    %v3306 = vsub.f32 %v3304, %v3305
    %v3307 = vand.u32 %v3306, 4294901760
    %3308 = vmatpush2.msra.mxu0 %v3307
    %v3309 = vand.u32 %v381, 4294901760
    %v3310 = vsub.f32 %v381, %v3309
    %v3311 = vand.u32 %v3310, 4294901760
    %v3312 = vsub.f32 %v3310, %v3311
    %v3313 = vand.u32 %v3312, 4294901760
    %3314 = vmatprep.subr.mxu0 %v3313
    %v3315 = vand.u32 %v380, 4294901760
    %v3316 = vsub.f32 %v380, %v3315
    %v3317 = vand.u32 %v3316, 4294901760
    %v3318 = vsub.f32 %v3316, %v3317
    %v3319 = vand.u32 %v3318, 4294901760
    %3320 = vmatpush2.msra.mxu0 %v3319
    %v3321 = vand.u32 %v373, 4294901760
    %v3322 = vsub.f32 %v373, %v3321
    %v3323 = vand.u32 %v3322, 4294901760
    %v3324 = vsub.f32 %v3322, %v3323
    %v3325 = vand.u32 %v3324, 4294901760
    %3326 = vmatprep.subr.mxu0 %v3325
    %v3327 = vand.u32 %v372, 4294901760
    %v3328 = vsub.f32 %v372, %v3327
    %v3329 = vand.u32 %v3328, 4294901760
    %v3330 = vsub.f32 %v3328, %v3329
    %v3331 = vand.u32 %v3330, 4294901760
    %3332 = vmatpush2.msra.mxu0 %v3331
    %v3333 = vand.u32 %v365, 4294901760
    %v3334 = vsub.f32 %v365, %v3333
    %v3335 = vand.u32 %v3334, 4294901760
    %v3336 = vsub.f32 %v3334, %v3335
    %v3337 = vand.u32 %v3336, 4294901760
    %3338 = vmatprep.subr.mxu0 %v3337
    %v3339 = vand.u32 %v364, 4294901760
    %v3340 = vsub.f32 %v364, %v3339
    %v3341 = vand.u32 %v3340, 4294901760
    %v3342 = vsub.f32 %v3340, %v3341
    %v3343 = vand.u32 %v3342, 4294901760
    %3344 = vmatpush2.msra.mxu0 %v3343
    %v3345 = vand.u32 %v357, 4294901760
    %v3346 = vsub.f32 %v357, %v3345
    %v3347 = vand.u32 %v3346, 4294901760
    %v3348 = vsub.f32 %v3346, %v3347
    %v3349 = vand.u32 %v3348, 4294901760
    %3350 = vmatprep.subr.mxu0 %v3349
    %v3351 = vand.u32 %v356, 4294901760
    %v3352 = vsub.f32 %v356, %v3351
    %v3353 = vand.u32 %v3352, 4294901760
    %v3354 = vsub.f32 %v3352, %v3353
    %v3355 = vand.u32 %v3354, 4294901760
    %3356 = vmatpush2.msra.mxu0 %v3355
    %v3357 = vand.u32 %v349, 4294901760
    %v3358 = vsub.f32 %v349, %v3357
    %v3359 = vand.u32 %v3358, 4294901760
    %v3360 = vsub.f32 %v3358, %v3359
    %v3361 = vand.u32 %v3360, 4294901760
    %3362 = vmatprep.subr.mxu0 %v3361
    %v3363 = vand.u32 %v348, 4294901760
    %v3364 = vsub.f32 %v348, %v3363
    %v3365 = vand.u32 %v3364, 4294901760
    %v3366 = vsub.f32 %v3364, %v3365
    %v3367 = vand.u32 %v3366, 4294901760
    %3368 = vmatpush2.msra.mxu0 %v3367
    %v3369 = vand.u32 %v341, 4294901760
    %v3370 = vsub.f32 %v341, %v3369
    %v3371 = vand.u32 %v3370, 4294901760
    %v3372 = vsub.f32 %v3370, %v3371
    %v3373 = vand.u32 %v3372, 4294901760
    %3374 = vmatprep.subr.mxu0 %v3373
    %v3375 = vand.u32 %v340, 4294901760
    %v3376 = vsub.f32 %v340, %v3375
    %v3377 = vand.u32 %v3376, 4294901760
    %v3378 = vsub.f32 %v3376, %v3377
    %v3379 = vand.u32 %v3378, 4294901760
    %3380 = vmatpush2.msra.mxu0 %v3379
    %v3381 = vand.u32 %v333, 4294901760
    %v3382 = vsub.f32 %v333, %v3381
    %v3383 = vand.u32 %v3382, 4294901760
    %v3384 = vsub.f32 %v3382, %v3383
    %v3385 = vand.u32 %v3384, 4294901760
    %3386 = vmatprep.subr.mxu0 %v3385
    %v3387 = vand.u32 %v332, 4294901760
    %v3388 = vsub.f32 %v332, %v3387
    %v3389 = vand.u32 %v3388, 4294901760
    %v3390 = vsub.f32 %v3388, %v3389
    %v3391 = vand.u32 %v3390, 4294901760
    %3392 = vmatpush2.msra.mxu0 %v3391
    %v3393 = vand.u32 %v325, 4294901760
    %v3394 = vsub.f32 %v325, %v3393
    %v3395 = vand.u32 %v3394, 4294901760
    %v3396 = vsub.f32 %v3394, %v3395
    %v3397 = vand.u32 %v3396, 4294901760
    %3398 = vmatprep.subr.mxu0 %v3397
    %v3399 = vand.u32 %v324, 4294901760
    %v3400 = vsub.f32 %v324, %v3399
    %v3401 = vand.u32 %v3400, 4294901760
    %v3402 = vsub.f32 %v3400, %v3401
    %v3403 = vand.u32 %v3402, 4294901760
    %3404 = vmatpush2.msra.mxu0 %v3403
    %v3405 = vand.u32 %v317, 4294901760
    %v3406 = vsub.f32 %v317, %v3405
    %v3407 = vand.u32 %v3406, 4294901760
    %v3408 = vsub.f32 %v3406, %v3407
    %v3409 = vand.u32 %v3408, 4294901760
    %3410 = vmatprep.subr.mxu0 %v3409
    %v3411 = vand.u32 %v316, 4294901760
    %v3412 = vsub.f32 %v316, %v3411
    %v3413 = vand.u32 %v3412, 4294901760
    %v3414 = vsub.f32 %v3412, %v3413
    %v3415 = vand.u32 %v3414, 4294901760
    %3416 = vmatpush2.msra.mxu0 %v3415
    %v3417 = vand.u32 %v309, 4294901760
    %v3418 = vsub.f32 %v309, %v3417
    %v3419 = vand.u32 %v3418, 4294901760
    %v3420 = vsub.f32 %v3418, %v3419
    %v3421 = vand.u32 %v3420, 4294901760
    %3422 = vmatprep.subr.mxu0 %v3421
    %v3423 = vand.u32 %v308, 4294901760
    %v3424 = vsub.f32 %v308, %v3423
    %v3425 = vand.u32 %v3424, 4294901760
    %v3426 = vsub.f32 %v3424, %v3425
    %v3427 = vand.u32 %v3426, 4294901760
    %3428 = vmatpush2.msra.mxu0 %v3427
    %v3429 = vand.u32 %v301, 4294901760
    %v3430 = vsub.f32 %v301, %v3429
    %v3431 = vand.u32 %v3430, 4294901760
    %v3432 = vsub.f32 %v3430, %v3431
    %v3433 = vand.u32 %v3432, 4294901760
    %3434 = vmatprep.subr.mxu0 %v3433
    %v3435 = vand.u32 %v300, 4294901760
    %v3436 = vsub.f32 %v300, %v3435
    %v3437 = vand.u32 %v3436, 4294901760
    %v3438 = vsub.f32 %v3436, %v3437
    %v3439 = vand.u32 %v3438, 4294901760
    %3440 = vmatpush2.msra.mxu0 %v3439
    %v3441 = vand.u32 %v293, 4294901760
    %v3442 = vsub.f32 %v293, %v3441
    %v3443 = vand.u32 %v3442, 4294901760
    %v3444 = vsub.f32 %v3442, %v3443
    %v3445 = vand.u32 %v3444, 4294901760
    %3446 = vmatprep.subr.mxu0 %v3445
    %v3447 = vand.u32 %v292, 4294901760
    %v3448 = vsub.f32 %v292, %v3447
    %v3449 = vand.u32 %v3448, 4294901760
    %v3450 = vsub.f32 %v3448, %v3449
    %v3451 = vand.u32 %v3450, 4294901760
    %3452 = vmatpush2.msra.mxu0 %v3451
    %v3453 = vand.u32 %v285, 4294901760
    %v3454 = vsub.f32 %v285, %v3453
    %v3455 = vand.u32 %v3454, 4294901760
    %v3456 = vsub.f32 %v3454, %v3455
    %v3457 = vand.u32 %v3456, 4294901760
    %3458 = vmatprep.subr.mxu0 %v3457
    %v3459 = vand.u32 %v284, 4294901760
    %v3460 = vsub.f32 %v284, %v3459
    %v3461 = vand.u32 %v3460, 4294901760
    %v3462 = vsub.f32 %v3460, %v3461
    %v3463 = vand.u32 %v3462, 4294901760
    %3464 = vmatpush2.msra.mxu0 %v3463
    %v3465 = vand.u32 %v277, 4294901760
    %v3466 = vsub.f32 %v277, %v3465
    %v3467 = vand.u32 %v3466, 4294901760
    %v3468 = vsub.f32 %v3466, %v3467
    %v3469 = vand.u32 %v3468, 4294901760
    %3470 = vmatprep.subr.mxu0 %v3469
    %v3471 = vand.u32 %v276, 4294901760
    %v3472 = vsub.f32 %v276, %v3471
    %v3473 = vand.u32 %v3472, 4294901760
    %v3474 = vsub.f32 %v3472, %v3473
    %v3475 = vand.u32 %v3474, 4294901760
    %3476 = vmatpush2.msra.mxu0 %v3475
    %v3477 = vand.u32 %v269, 4294901760
    %v3478 = vsub.f32 %v269, %v3477
    %v3479 = vand.u32 %v3478, 4294901760
    %v3480 = vsub.f32 %v3478, %v3479
    %v3481 = vand.u32 %v3480, 4294901760
    %3482 = vmatprep.subr.mxu0 %v3481
    %v3483 = vand.u32 %v268, 4294901760
    %v3484 = vsub.f32 %v268, %v3483
    %v3485 = vand.u32 %v3484, 4294901760
    %v3486 = vsub.f32 %v3484, %v3485
    %v3487 = vand.u32 %v3486, 4294901760
    %3488 = vmatpush2.msra.mxu0 %v3487
    %v3489 = vand.u32 %v135, 4294901760
    %3490 = vmatprep.mubr.f32.mxu0 %v3489
    %v3491 = vand.u32 %v134, 4294901760
    %3492 = vmatmul.mubr.f32.gmra.mxu0 %v3491
    %v3493 = vpop.f32.mrf.mxu0
    %v3494 = vadd.f32 %v3101, %v3493
    %v3495 = vpop.f32.mrf.mxu0
    %v3496 = vadd.f32 %v3103, %v3495
    %3497 = vdwg.mxu0
    %v3498 = vand.u32 %v261, 4294901760
    %v3499 = vsub.f32 %v261, %v3498
    %3500 = vmatprep.subr.mxu0 %v3499
    %v3501 = vand.u32 %v260, 4294901760
    %v3502 = vsub.f32 %v260, %v3501
    %3503 = vmatpush1.msra.mxu0 %v3502
    %v3504 = vand.u32 %v253, 4294901760
    %v3505 = vsub.f32 %v253, %v3504
    %3506 = vmatprep.subr.mxu0 %v3505
    %v3507 = vand.u32 %v252, 4294901760
    %v3508 = vsub.f32 %v252, %v3507
    %3509 = vmatpush1.msra.mxu0 %v3508
    %v3510 = vand.u32 %v245, 4294901760
    %v3511 = vsub.f32 %v245, %v3510
    %3512 = vmatprep.subr.mxu0 %v3511
    %v3513 = vand.u32 %v244, 4294901760
    %v3514 = vsub.f32 %v244, %v3513
    %3515 = vmatpush1.msra.mxu0 %v3514
    %v3516 = vand.u32 %v237, 4294901760
    %v3517 = vsub.f32 %v237, %v3516
    %3518 = vmatprep.subr.mxu0 %v3517
    %v3519 = vand.u32 %v236, 4294901760
    %v3520 = vsub.f32 %v236, %v3519
    %3521 = vmatpush1.msra.mxu0 %v3520
    %v3522 = vand.u32 %v229, 4294901760
    %v3523 = vsub.f32 %v229, %v3522
    %3524 = vmatprep.subr.mxu0 %v3523
    %v3525 = vand.u32 %v228, 4294901760
    %v3526 = vsub.f32 %v228, %v3525
    %3527 = vmatpush1.msra.mxu0 %v3526
    %v3528 = vand.u32 %v221, 4294901760
    %v3529 = vsub.f32 %v221, %v3528
    %3530 = vmatprep.subr.mxu0 %v3529
    %v3531 = vand.u32 %v220, 4294901760
    %v3532 = vsub.f32 %v220, %v3531
    %3533 = vmatpush1.msra.mxu0 %v3532
    %v3534 = vand.u32 %v213, 4294901760
    %v3535 = vsub.f32 %v213, %v3534
    %3536 = vmatprep.subr.mxu0 %v3535
    %v3537 = vand.u32 %v212, 4294901760
    %v3538 = vsub.f32 %v212, %v3537
    %3539 = vmatpush1.msra.mxu0 %v3538
    %v3540 = vand.u32 %v205, 4294901760
    %v3541 = vsub.f32 %v205, %v3540
    %3542 = vmatprep.subr.mxu0 %v3541
    %v3543 = vand.u32 %v204, 4294901760
    %v3544 = vsub.f32 %v204, %v3543
    %3545 = vmatpush1.msra.mxu0 %v3544
    %v3546 = vand.u32 %v197, 4294901760
    %v3547 = vsub.f32 %v197, %v3546
    %3548 = vmatprep.subr.mxu0 %v3547
    %v3549 = vand.u32 %v196, 4294901760
    %v3550 = vsub.f32 %v196, %v3549
    %3551 = vmatpush1.msra.mxu0 %v3550
    %v3552 = vand.u32 %v189, 4294901760
    %v3553 = vsub.f32 %v189, %v3552
    %3554 = vmatprep.subr.mxu0 %v3553
    %v3555 = vand.u32 %v188, 4294901760
    %v3556 = vsub.f32 %v188, %v3555
    %3557 = vmatpush1.msra.mxu0 %v3556
    %v3558 = vand.u32 %v181, 4294901760
    %v3559 = vsub.f32 %v181, %v3558
    %3560 = vmatprep.subr.mxu0 %v3559
    %v3561 = vand.u32 %v180, 4294901760
    %v3562 = vsub.f32 %v180, %v3561
    %3563 = vmatpush1.msra.mxu0 %v3562
    %v3564 = vand.u32 %v173, 4294901760
    %v3565 = vsub.f32 %v173, %v3564
    %3566 = vmatprep.subr.mxu0 %v3565
    %v3567 = vand.u32 %v172, 4294901760
    %v3568 = vsub.f32 %v172, %v3567
    %3569 = vmatpush1.msra.mxu0 %v3568
    %v3570 = vand.u32 %v165, 4294901760
    %v3571 = vsub.f32 %v165, %v3570
    %3572 = vmatprep.subr.mxu0 %v3571
    %v3573 = vand.u32 %v164, 4294901760
    %v3574 = vsub.f32 %v164, %v3573
    %3575 = vmatpush1.msra.mxu0 %v3574
    %v3576 = vand.u32 %v157, 4294901760
    %v3577 = vsub.f32 %v157, %v3576
    %3578 = vmatprep.subr.mxu0 %v3577
    %v3579 = vand.u32 %v156, 4294901760
    %v3580 = vsub.f32 %v156, %v3579
    %3581 = vmatpush1.msra.mxu0 %v3580
    %v3582 = vand.u32 %v149, 4294901760
    %v3583 = vsub.f32 %v149, %v3582
    %3584 = vmatprep.subr.mxu0 %v3583
    %v3585 = vand.u32 %v148, 4294901760
    %v3586 = vsub.f32 %v148, %v3585
    %3587 = vmatpush1.msra.mxu0 %v3586
    %v3588 = vand.u32 %v141, 4294901760
    %v3589 = vsub.f32 %v141, %v3588
    %3590 = vmatprep.subr.mxu0 %v3589
    %v3591 = vand.u32 %v140, 4294901760
    %v3592 = vsub.f32 %v140, %v3591
    %3593 = vmatpush1.msra.mxu0 %v3592
    %v3594 = vand.u32 %v389, 4294901760
    %v3595 = vsub.f32 %v389, %v3594
    %3596 = vmatprep.subr.mxu0 %v3595
    %v3597 = vand.u32 %v388, 4294901760
    %v3598 = vsub.f32 %v388, %v3597
    %3599 = vmatpush2.msra.mxu0 %v3598
    %v3600 = vand.u32 %v381, 4294901760
    %v3601 = vsub.f32 %v381, %v3600
    %3602 = vmatprep.subr.mxu0 %v3601
    %v3603 = vand.u32 %v380, 4294901760
    %v3604 = vsub.f32 %v380, %v3603
    %3605 = vmatpush2.msra.mxu0 %v3604
    %v3606 = vand.u32 %v373, 4294901760
    %v3607 = vsub.f32 %v373, %v3606
    %3608 = vmatprep.subr.mxu0 %v3607
    %v3609 = vand.u32 %v372, 4294901760
    %v3610 = vsub.f32 %v372, %v3609
    %3611 = vmatpush2.msra.mxu0 %v3610
    %v3612 = vand.u32 %v365, 4294901760
    %v3613 = vsub.f32 %v365, %v3612
    %3614 = vmatprep.subr.mxu0 %v3613
    %v3615 = vand.u32 %v364, 4294901760
    %v3616 = vsub.f32 %v364, %v3615
    %3617 = vmatpush2.msra.mxu0 %v3616
    %v3618 = vand.u32 %v357, 4294901760
    %v3619 = vsub.f32 %v357, %v3618
    %3620 = vmatprep.subr.mxu0 %v3619
    %v3621 = vand.u32 %v356, 4294901760
    %v3622 = vsub.f32 %v356, %v3621
    %3623 = vmatpush2.msra.mxu0 %v3622
    %v3624 = vand.u32 %v349, 4294901760
    %v3625 = vsub.f32 %v349, %v3624
    %3626 = vmatprep.subr.mxu0 %v3625
    %v3627 = vand.u32 %v348, 4294901760
    %v3628 = vsub.f32 %v348, %v3627
    %3629 = vmatpush2.msra.mxu0 %v3628
    %v3630 = vand.u32 %v341, 4294901760
    %v3631 = vsub.f32 %v341, %v3630
    %3632 = vmatprep.subr.mxu0 %v3631
    %v3633 = vand.u32 %v340, 4294901760
    %v3634 = vsub.f32 %v340, %v3633
    %3635 = vmatpush2.msra.mxu0 %v3634
    %v3636 = vand.u32 %v333, 4294901760
    %v3637 = vsub.f32 %v333, %v3636
    %3638 = vmatprep.subr.mxu0 %v3637
    %v3639 = vand.u32 %v332, 4294901760
    %v3640 = vsub.f32 %v332, %v3639
    %3641 = vmatpush2.msra.mxu0 %v3640
    %v3642 = vand.u32 %v325, 4294901760
    %v3643 = vsub.f32 %v325, %v3642
    %3644 = vmatprep.subr.mxu0 %v3643
    %v3645 = vand.u32 %v324, 4294901760
    %v3646 = vsub.f32 %v324, %v3645
    %3647 = vmatpush2.msra.mxu0 %v3646
    %v3648 = vand.u32 %v317, 4294901760
    %v3649 = vsub.f32 %v317, %v3648
    %3650 = vmatprep.subr.mxu0 %v3649
    %v3651 = vand.u32 %v316, 4294901760
    %v3652 = vsub.f32 %v316, %v3651
    %3653 = vmatpush2.msra.mxu0 %v3652
    %v3654 = vand.u32 %v309, 4294901760
    %v3655 = vsub.f32 %v309, %v3654
    %3656 = vmatprep.subr.mxu0 %v3655
    %v3657 = vand.u32 %v308, 4294901760
    %v3658 = vsub.f32 %v308, %v3657
    %3659 = vmatpush2.msra.mxu0 %v3658
    %v3660 = vand.u32 %v301, 4294901760
    %v3661 = vsub.f32 %v301, %v3660
    %3662 = vmatprep.subr.mxu0 %v3661
    %v3663 = vand.u32 %v300, 4294901760
    %v3664 = vsub.f32 %v300, %v3663
    %3665 = vmatpush2.msra.mxu0 %v3664
    %v3666 = vand.u32 %v293, 4294901760
    %v3667 = vsub.f32 %v293, %v3666
    %3668 = vmatprep.subr.mxu0 %v3667
    %v3669 = vand.u32 %v292, 4294901760
    %v3670 = vsub.f32 %v292, %v3669
    %3671 = vmatpush2.msra.mxu0 %v3670
    %v3672 = vand.u32 %v285, 4294901760
    %v3673 = vsub.f32 %v285, %v3672
    %3674 = vmatprep.subr.mxu0 %v3673
    %v3675 = vand.u32 %v284, 4294901760
    %v3676 = vsub.f32 %v284, %v3675
    %3677 = vmatpush2.msra.mxu0 %v3676
    %v3678 = vand.u32 %v277, 4294901760
    %v3679 = vsub.f32 %v277, %v3678
    %3680 = vmatprep.subr.mxu0 %v3679
    %v3681 = vand.u32 %v276, 4294901760
    %v3682 = vsub.f32 %v276, %v3681
    %3683 = vmatpush2.msra.mxu0 %v3682
    %v3684 = vand.u32 %v269, 4294901760
    %v3685 = vsub.f32 %v269, %v3684
    %3686 = vmatprep.subr.mxu0 %v3685
    %v3687 = vand.u32 %v268, 4294901760
    %v3688 = vsub.f32 %v268, %v3687
    %3689 = vmatpush2.msra.mxu0 %v3688
    %v3690 = vand.u32 %v135, 4294901760
    %v3691 = vsub.f32 %v135, %v3690
    %3692 = vmatprep.mubr.f32.mxu0 %v3691
    %v3693 = vand.u32 %v134, 4294901760
    %v3694 = vsub.f32 %v134, %v3693
    %3695 = vmatmul.mubr.f32.gmra.mxu0 %v3694
    %v3696 = vpop.f32.mrf.mxu0
    %v3697 = vadd.f32 %v3494, %v3696
    %v3698 = vpop.f32.mrf.mxu0
    %v3699 = vadd.f32 %v3496, %v3698
    %3700 = vdwg.mxu0
    %v3701 = vand.u32 %v261, 4294901760
    %3702 = vmatprep.subr.mxu0 %v3701
    %v3703 = vand.u32 %v260, 4294901760
    %3704 = vmatpush1.msra.mxu0 %v3703
    %v3705 = vand.u32 %v253, 4294901760
    %3706 = vmatprep.subr.mxu0 %v3705
    %v3707 = vand.u32 %v252, 4294901760
    %3708 = vmatpush1.msra.mxu0 %v3707
    %v3709 = vand.u32 %v245, 4294901760
    %3710 = vmatprep.subr.mxu0 %v3709
    %v3711 = vand.u32 %v244, 4294901760
    %3712 = vmatpush1.msra.mxu0 %v3711
    %v3713 = vand.u32 %v237, 4294901760
    %3714 = vmatprep.subr.mxu0 %v3713
    %v3715 = vand.u32 %v236, 4294901760
    %3716 = vmatpush1.msra.mxu0 %v3715
    %v3717 = vand.u32 %v229, 4294901760
    %3718 = vmatprep.subr.mxu0 %v3717
    %v3719 = vand.u32 %v228, 4294901760
    %3720 = vmatpush1.msra.mxu0 %v3719
    %v3721 = vand.u32 %v221, 4294901760
    %3722 = vmatprep.subr.mxu0 %v3721
    %v3723 = vand.u32 %v220, 4294901760
    %3724 = vmatpush1.msra.mxu0 %v3723
    %v3725 = vand.u32 %v213, 4294901760
    %3726 = vmatprep.subr.mxu0 %v3725
    %v3727 = vand.u32 %v212, 4294901760
    %3728 = vmatpush1.msra.mxu0 %v3727
    %v3729 = vand.u32 %v205, 4294901760
    %3730 = vmatprep.subr.mxu0 %v3729
    %v3731 = vand.u32 %v204, 4294901760
    %3732 = vmatpush1.msra.mxu0 %v3731
    %v3733 = vand.u32 %v197, 4294901760
    %3734 = vmatprep.subr.mxu0 %v3733
    %v3735 = vand.u32 %v196, 4294901760
    %3736 = vmatpush1.msra.mxu0 %v3735
    %v3737 = vand.u32 %v189, 4294901760
    %3738 = vmatprep.subr.mxu0 %v3737
    %v3739 = vand.u32 %v188, 4294901760
    %3740 = vmatpush1.msra.mxu0 %v3739
    %v3741 = vand.u32 %v181, 4294901760
    %3742 = vmatprep.subr.mxu0 %v3741
    %v3743 = vand.u32 %v180, 4294901760
    %3744 = vmatpush1.msra.mxu0 %v3743
    %v3745 = vand.u32 %v173, 4294901760
    %3746 = vmatprep.subr.mxu0 %v3745
    %v3747 = vand.u32 %v172, 4294901760
    %3748 = vmatpush1.msra.mxu0 %v3747
    %v3749 = vand.u32 %v165, 4294901760
    %3750 = vmatprep.subr.mxu0 %v3749
    %v3751 = vand.u32 %v164, 4294901760
    %3752 = vmatpush1.msra.mxu0 %v3751
    %v3753 = vand.u32 %v157, 4294901760
    %3754 = vmatprep.subr.mxu0 %v3753
    %v3755 = vand.u32 %v156, 4294901760
    %3756 = vmatpush1.msra.mxu0 %v3755
    %v3757 = vand.u32 %v149, 4294901760
    %3758 = vmatprep.subr.mxu0 %v3757
    %v3759 = vand.u32 %v148, 4294901760
    %3760 = vmatpush1.msra.mxu0 %v3759
    %v3761 = vand.u32 %v141, 4294901760
    %3762 = vmatprep.subr.mxu0 %v3761
    %v3763 = vand.u32 %v140, 4294901760
    %3764 = vmatpush1.msra.mxu0 %v3763
    %v3765 = vand.u32 %v389, 4294901760
    %3766 = vmatprep.subr.mxu0 %v3765
    %v3767 = vand.u32 %v388, 4294901760
    %3768 = vmatpush2.msra.mxu0 %v3767
    %v3769 = vand.u32 %v381, 4294901760
    %3770 = vmatprep.subr.mxu0 %v3769
    %v3771 = vand.u32 %v380, 4294901760
    %3772 = vmatpush2.msra.mxu0 %v3771
    %v3773 = vand.u32 %v373, 4294901760
    %3774 = vmatprep.subr.mxu0 %v3773
    %v3775 = vand.u32 %v372, 4294901760
    %3776 = vmatpush2.msra.mxu0 %v3775
    %v3777 = vand.u32 %v365, 4294901760
    %3778 = vmatprep.subr.mxu0 %v3777
    %v3779 = vand.u32 %v364, 4294901760
    %3780 = vmatpush2.msra.mxu0 %v3779
    %v3781 = vand.u32 %v357, 4294901760
    %3782 = vmatprep.subr.mxu0 %v3781
    %v3783 = vand.u32 %v356, 4294901760
    %3784 = vmatpush2.msra.mxu0 %v3783
    %v3785 = vand.u32 %v349, 4294901760
    %3786 = vmatprep.subr.mxu0 %v3785
    %v3787 = vand.u32 %v348, 4294901760
    %3788 = vmatpush2.msra.mxu0 %v3787
    %v3789 = vand.u32 %v341, 4294901760
    %3790 = vmatprep.subr.mxu0 %v3789
    %v3791 = vand.u32 %v340, 4294901760
    %3792 = vmatpush2.msra.mxu0 %v3791
    %v3793 = vand.u32 %v333, 4294901760
    %3794 = vmatprep.subr.mxu0 %v3793
    %v3795 = vand.u32 %v332, 4294901760
    %3796 = vmatpush2.msra.mxu0 %v3795
    %v3797 = vand.u32 %v325, 4294901760
    %3798 = vmatprep.subr.mxu0 %v3797
    %v3799 = vand.u32 %v324, 4294901760
    %3800 = vmatpush2.msra.mxu0 %v3799
    %v3801 = vand.u32 %v317, 4294901760
    %3802 = vmatprep.subr.mxu0 %v3801
    %v3803 = vand.u32 %v316, 4294901760
    %3804 = vmatpush2.msra.mxu0 %v3803
    %v3805 = vand.u32 %v309, 4294901760
    %3806 = vmatprep.subr.mxu0 %v3805
    %v3807 = vand.u32 %v308, 4294901760
    %3808 = vmatpush2.msra.mxu0 %v3807
    %v3809 = vand.u32 %v301, 4294901760
    %3810 = vmatprep.subr.mxu0 %v3809
    %v3811 = vand.u32 %v300, 4294901760
    %3812 = vmatpush2.msra.mxu0 %v3811
    %v3813 = vand.u32 %v293, 4294901760
    %3814 = vmatprep.subr.mxu0 %v3813
    %v3815 = vand.u32 %v292, 4294901760
    %3816 = vmatpush2.msra.mxu0 %v3815
    %v3817 = vand.u32 %v285, 4294901760
    %3818 = vmatprep.subr.mxu0 %v3817
    %v3819 = vand.u32 %v284, 4294901760
    %3820 = vmatpush2.msra.mxu0 %v3819
    %v3821 = vand.u32 %v277, 4294901760
    %3822 = vmatprep.subr.mxu0 %v3821
    %v3823 = vand.u32 %v276, 4294901760
    %3824 = vmatpush2.msra.mxu0 %v3823
    %v3825 = vand.u32 %v269, 4294901760
    %3826 = vmatprep.subr.mxu0 %v3825
    %v3827 = vand.u32 %v268, 4294901760
    %3828 = vmatpush2.msra.mxu0 %v3827
    %v3829 = vand.u32 %v135, 4294901760
    %v3830 = vsub.f32 %v135, %v3829
    %v3831 = vand.u32 %v3830, 4294901760
    %3832 = vmatprep.mubr.f32.mxu0 %v3831
    %v3833 = vand.u32 %v134, 4294901760
    %v3834 = vsub.f32 %v134, %v3833
    %v3835 = vand.u32 %v3834, 4294901760
    %3836 = vmatmul.mubr.f32.gmra.mxu0 %v3835
    %v3837 = vpop.f32.mrf.mxu0
    %v3838 = vadd.f32 %v3697, %v3837
    %v3839 = vpop.f32.mrf.mxu0
    %v3840 = vadd.f32 %v3699, %v3839
    %3841 = vdwg.mxu0
    %v3842 = vand.u32 %v261, 4294901760
    %v3843 = vsub.f32 %v261, %v3842
    %v3844 = vand.u32 %v3843, 4294901760
    %3845 = vmatprep.subr.mxu0 %v3844
    %v3846 = vand.u32 %v260, 4294901760
    %v3847 = vsub.f32 %v260, %v3846
    %v3848 = vand.u32 %v3847, 4294901760
    %3849 = vmatpush1.msra.mxu0 %v3848
    %v3850 = vand.u32 %v253, 4294901760
    %v3851 = vsub.f32 %v253, %v3850
    %v3852 = vand.u32 %v3851, 4294901760
    %3853 = vmatprep.subr.mxu0 %v3852
    %v3854 = vand.u32 %v252, 4294901760
    %v3855 = vsub.f32 %v252, %v3854
    %v3856 = vand.u32 %v3855, 4294901760
    %3857 = vmatpush1.msra.mxu0 %v3856
    %v3858 = vand.u32 %v245, 4294901760
    %v3859 = vsub.f32 %v245, %v3858
    %v3860 = vand.u32 %v3859, 4294901760
    %3861 = vmatprep.subr.mxu0 %v3860
    %v3862 = vand.u32 %v244, 4294901760
    %v3863 = vsub.f32 %v244, %v3862
    %v3864 = vand.u32 %v3863, 4294901760
    %3865 = vmatpush1.msra.mxu0 %v3864
    %v3866 = vand.u32 %v237, 4294901760
    %v3867 = vsub.f32 %v237, %v3866
    %v3868 = vand.u32 %v3867, 4294901760
    %3869 = vmatprep.subr.mxu0 %v3868
    %v3870 = vand.u32 %v236, 4294901760
    %v3871 = vsub.f32 %v236, %v3870
    %v3872 = vand.u32 %v3871, 4294901760
    %3873 = vmatpush1.msra.mxu0 %v3872
    %v3874 = vand.u32 %v229, 4294901760
    %v3875 = vsub.f32 %v229, %v3874
    %v3876 = vand.u32 %v3875, 4294901760
    %3877 = vmatprep.subr.mxu0 %v3876
    %v3878 = vand.u32 %v228, 4294901760
    %v3879 = vsub.f32 %v228, %v3878
    %v3880 = vand.u32 %v3879, 4294901760
    %3881 = vmatpush1.msra.mxu0 %v3880
    %v3882 = vand.u32 %v221, 4294901760
    %v3883 = vsub.f32 %v221, %v3882
    %v3884 = vand.u32 %v3883, 4294901760
    %3885 = vmatprep.subr.mxu0 %v3884
    %v3886 = vand.u32 %v220, 4294901760
    %v3887 = vsub.f32 %v220, %v3886
    %v3888 = vand.u32 %v3887, 4294901760
    %3889 = vmatpush1.msra.mxu0 %v3888
    %v3890 = vand.u32 %v213, 4294901760
    %v3891 = vsub.f32 %v213, %v3890
    %v3892 = vand.u32 %v3891, 4294901760
    %3893 = vmatprep.subr.mxu0 %v3892
    %v3894 = vand.u32 %v212, 4294901760
    %v3895 = vsub.f32 %v212, %v3894
    %v3896 = vand.u32 %v3895, 4294901760
    %3897 = vmatpush1.msra.mxu0 %v3896
    %v3898 = vand.u32 %v205, 4294901760
    %v3899 = vsub.f32 %v205, %v3898
    %v3900 = vand.u32 %v3899, 4294901760
    %3901 = vmatprep.subr.mxu0 %v3900
    %v3902 = vand.u32 %v204, 4294901760
    %v3903 = vsub.f32 %v204, %v3902
    %v3904 = vand.u32 %v3903, 4294901760
    %3905 = vmatpush1.msra.mxu0 %v3904
    %v3906 = vand.u32 %v197, 4294901760
    %v3907 = vsub.f32 %v197, %v3906
    %v3908 = vand.u32 %v3907, 4294901760
    %3909 = vmatprep.subr.mxu0 %v3908
    %v3910 = vand.u32 %v196, 4294901760
    %v3911 = vsub.f32 %v196, %v3910
    %v3912 = vand.u32 %v3911, 4294901760
    %3913 = vmatpush1.msra.mxu0 %v3912
    %v3914 = vand.u32 %v189, 4294901760
    %v3915 = vsub.f32 %v189, %v3914
    %v3916 = vand.u32 %v3915, 4294901760
    %3917 = vmatprep.subr.mxu0 %v3916
    %v3918 = vand.u32 %v188, 4294901760
    %v3919 = vsub.f32 %v188, %v3918
    %v3920 = vand.u32 %v3919, 4294901760
    %3921 = vmatpush1.msra.mxu0 %v3920
    %v3922 = vand.u32 %v181, 4294901760
    %v3923 = vsub.f32 %v181, %v3922
    %v3924 = vand.u32 %v3923, 4294901760
    %3925 = vmatprep.subr.mxu0 %v3924
    %v3926 = vand.u32 %v180, 4294901760
    %v3927 = vsub.f32 %v180, %v3926
    %v3928 = vand.u32 %v3927, 4294901760
    %3929 = vmatpush1.msra.mxu0 %v3928
    %v3930 = vand.u32 %v173, 4294901760
    %v3931 = vsub.f32 %v173, %v3930
    %v3932 = vand.u32 %v3931, 4294901760
    %3933 = vmatprep.subr.mxu0 %v3932
    %v3934 = vand.u32 %v172, 4294901760
    %v3935 = vsub.f32 %v172, %v3934
    %v3936 = vand.u32 %v3935, 4294901760
    %3937 = vmatpush1.msra.mxu0 %v3936
    %v3938 = vand.u32 %v165, 4294901760
    %v3939 = vsub.f32 %v165, %v3938
    %v3940 = vand.u32 %v3939, 4294901760
    %3941 = vmatprep.subr.mxu0 %v3940
    %v3942 = vand.u32 %v164, 4294901760
    %v3943 = vsub.f32 %v164, %v3942
    %v3944 = vand.u32 %v3943, 4294901760
    %3945 = vmatpush1.msra.mxu0 %v3944
    %v3946 = vand.u32 %v157, 4294901760
    %v3947 = vsub.f32 %v157, %v3946
    %v3948 = vand.u32 %v3947, 4294901760
    %3949 = vmatprep.subr.mxu0 %v3948
    %v3950 = vand.u32 %v156, 4294901760
    %v3951 = vsub.f32 %v156, %v3950
    %v3952 = vand.u32 %v3951, 4294901760
    %3953 = vmatpush1.msra.mxu0 %v3952
    %v3954 = vand.u32 %v149, 4294901760
    %v3955 = vsub.f32 %v149, %v3954
    %v3956 = vand.u32 %v3955, 4294901760
    %3957 = vmatprep.subr.mxu0 %v3956
    %v3958 = vand.u32 %v148, 4294901760
    %v3959 = vsub.f32 %v148, %v3958
    %v3960 = vand.u32 %v3959, 4294901760
    %3961 = vmatpush1.msra.mxu0 %v3960
    %v3962 = vand.u32 %v141, 4294901760
    %v3963 = vsub.f32 %v141, %v3962
    %v3964 = vand.u32 %v3963, 4294901760
    %3965 = vmatprep.subr.mxu0 %v3964
    %v3966 = vand.u32 %v140, 4294901760
    %v3967 = vsub.f32 %v140, %v3966
    %v3968 = vand.u32 %v3967, 4294901760
    %3969 = vmatpush1.msra.mxu0 %v3968
    %v3970 = vand.u32 %v389, 4294901760
    %v3971 = vsub.f32 %v389, %v3970
    %v3972 = vand.u32 %v3971, 4294901760
    %3973 = vmatprep.subr.mxu0 %v3972
    %v3974 = vand.u32 %v388, 4294901760
    %v3975 = vsub.f32 %v388, %v3974
    %v3976 = vand.u32 %v3975, 4294901760
    %3977 = vmatpush2.msra.mxu0 %v3976
    %v3978 = vand.u32 %v381, 4294901760
    %v3979 = vsub.f32 %v381, %v3978
    %v3980 = vand.u32 %v3979, 4294901760
    %3981 = vmatprep.subr.mxu0 %v3980
    %v3982 = vand.u32 %v380, 4294901760
    %v3983 = vsub.f32 %v380, %v3982
    %v3984 = vand.u32 %v3983, 4294901760
    %3985 = vmatpush2.msra.mxu0 %v3984
    %v3986 = vand.u32 %v373, 4294901760
    %v3987 = vsub.f32 %v373, %v3986
    %v3988 = vand.u32 %v3987, 4294901760
    %3989 = vmatprep.subr.mxu0 %v3988
    %v3990 = vand.u32 %v372, 4294901760
    %v3991 = vsub.f32 %v372, %v3990
    %v3992 = vand.u32 %v3991, 4294901760
    %3993 = vmatpush2.msra.mxu0 %v3992
    %v3994 = vand.u32 %v365, 4294901760
    %v3995 = vsub.f32 %v365, %v3994
    %v3996 = vand.u32 %v3995, 4294901760
    %3997 = vmatprep.subr.mxu0 %v3996
    %v3998 = vand.u32 %v364, 4294901760
    %v3999 = vsub.f32 %v364, %v3998
    %v4000 = vand.u32 %v3999, 4294901760
    %4001 = vmatpush2.msra.mxu0 %v4000
    %v4002 = vand.u32 %v357, 4294901760
    %v4003 = vsub.f32 %v357, %v4002
    %v4004 = vand.u32 %v4003, 4294901760
    %4005 = vmatprep.subr.mxu0 %v4004
    %v4006 = vand.u32 %v356, 4294901760
    %v4007 = vsub.f32 %v356, %v4006
    %v4008 = vand.u32 %v4007, 4294901760
    %4009 = vmatpush2.msra.mxu0 %v4008
    %v4010 = vand.u32 %v349, 4294901760
    %v4011 = vsub.f32 %v349, %v4010
    %v4012 = vand.u32 %v4011, 4294901760
    %4013 = vmatprep.subr.mxu0 %v4012
    %v4014 = vand.u32 %v348, 4294901760
    %v4015 = vsub.f32 %v348, %v4014
    %v4016 = vand.u32 %v4015, 4294901760
    %4017 = vmatpush2.msra.mxu0 %v4016
    %v4018 = vand.u32 %v341, 4294901760
    %v4019 = vsub.f32 %v341, %v4018
    %v4020 = vand.u32 %v4019, 4294901760
    %4021 = vmatprep.subr.mxu0 %v4020
    %v4022 = vand.u32 %v340, 4294901760
    %v4023 = vsub.f32 %v340, %v4022
    %v4024 = vand.u32 %v4023, 4294901760
    %4025 = vmatpush2.msra.mxu0 %v4024
    %v4026 = vand.u32 %v333, 4294901760
    %v4027 = vsub.f32 %v333, %v4026
    %v4028 = vand.u32 %v4027, 4294901760
    %4029 = vmatprep.subr.mxu0 %v4028
    %v4030 = vand.u32 %v332, 4294901760
    %v4031 = vsub.f32 %v332, %v4030
    %v4032 = vand.u32 %v4031, 4294901760
    %4033 = vmatpush2.msra.mxu0 %v4032
    %v4034 = vand.u32 %v325, 4294901760
    %v4035 = vsub.f32 %v325, %v4034
    %v4036 = vand.u32 %v4035, 4294901760
    %4037 = vmatprep.subr.mxu0 %v4036
    %v4038 = vand.u32 %v324, 4294901760
    %v4039 = vsub.f32 %v324, %v4038
    %v4040 = vand.u32 %v4039, 4294901760
    %4041 = vmatpush2.msra.mxu0 %v4040
    %v4042 = vand.u32 %v317, 4294901760
    %v4043 = vsub.f32 %v317, %v4042
    %v4044 = vand.u32 %v4043, 4294901760
    %4045 = vmatprep.subr.mxu0 %v4044
    %v4046 = vand.u32 %v316, 4294901760
    %v4047 = vsub.f32 %v316, %v4046
    %v4048 = vand.u32 %v4047, 4294901760
    %4049 = vmatpush2.msra.mxu0 %v4048
    %v4050 = vand.u32 %v309, 4294901760
    %v4051 = vsub.f32 %v309, %v4050
    %v4052 = vand.u32 %v4051, 4294901760
    %4053 = vmatprep.subr.mxu0 %v4052
    %v4054 = vand.u32 %v308, 4294901760
    %v4055 = vsub.f32 %v308, %v4054
    %v4056 = vand.u32 %v4055, 4294901760
    %4057 = vmatpush2.msra.mxu0 %v4056
    %v4058 = vand.u32 %v301, 4294901760
    %v4059 = vsub.f32 %v301, %v4058
    %v4060 = vand.u32 %v4059, 4294901760
    %4061 = vmatprep.subr.mxu0 %v4060
    %v4062 = vand.u32 %v300, 4294901760
    %v4063 = vsub.f32 %v300, %v4062
    %v4064 = vand.u32 %v4063, 4294901760
    %4065 = vmatpush2.msra.mxu0 %v4064
    %v4066 = vand.u32 %v293, 4294901760
    %v4067 = vsub.f32 %v293, %v4066
    %v4068 = vand.u32 %v4067, 4294901760
    %4069 = vmatprep.subr.mxu0 %v4068
    %v4070 = vand.u32 %v292, 4294901760
    %v4071 = vsub.f32 %v292, %v4070
    %v4072 = vand.u32 %v4071, 4294901760
    %4073 = vmatpush2.msra.mxu0 %v4072
    %v4074 = vand.u32 %v285, 4294901760
    %v4075 = vsub.f32 %v285, %v4074
    %v4076 = vand.u32 %v4075, 4294901760
    %4077 = vmatprep.subr.mxu0 %v4076
    %v4078 = vand.u32 %v284, 4294901760
    %v4079 = vsub.f32 %v284, %v4078
    %v4080 = vand.u32 %v4079, 4294901760
    %4081 = vmatpush2.msra.mxu0 %v4080
    %v4082 = vand.u32 %v277, 4294901760
    %v4083 = vsub.f32 %v277, %v4082
    %v4084 = vand.u32 %v4083, 4294901760
    %4085 = vmatprep.subr.mxu0 %v4084
    %v4086 = vand.u32 %v276, 4294901760
    %v4087 = vsub.f32 %v276, %v4086
    %v4088 = vand.u32 %v4087, 4294901760
    %4089 = vmatpush2.msra.mxu0 %v4088
    %v4090 = vand.u32 %v269, 4294901760
    %v4091 = vsub.f32 %v269, %v4090
    %v4092 = vand.u32 %v4091, 4294901760
    %4093 = vmatprep.subr.mxu0 %v4092
    %v4094 = vand.u32 %v268, 4294901760
    %v4095 = vsub.f32 %v268, %v4094
    %v4096 = vand.u32 %v4095, 4294901760
    %4097 = vmatpush2.msra.mxu0 %v4096
    %v4098 = vand.u32 %v135, 4294901760
    %4099 = vmatprep.mubr.f32.mxu0 %v4098
    %v4100 = vand.u32 %v134, 4294901760
    %4101 = vmatmul.mubr.f32.gmra.mxu0 %v4100
    %v4102 = vpop.f32.mrf.mxu0
    %v4103 = vadd.f32 %v3838, %v4102
    %v4104 = vpop.f32.mrf.mxu0
    %v4105 = vadd.f32 %v3840, %v4104
    %4106 = vdwg.mxu0
    %v4107 = vand.u32 %v261, 4294901760
    %4108 = vmatprep.subr.mxu0 %v4107
    %v4109 = vand.u32 %v260, 4294901760
    %4110 = vmatpush1.msra.mxu0 %v4109
    %v4111 = vand.u32 %v253, 4294901760
    %4112 = vmatprep.subr.mxu0 %v4111
    %v4113 = vand.u32 %v252, 4294901760
    %4114 = vmatpush1.msra.mxu0 %v4113
    %v4115 = vand.u32 %v245, 4294901760
    %4116 = vmatprep.subr.mxu0 %v4115
    %v4117 = vand.u32 %v244, 4294901760
    %4118 = vmatpush1.msra.mxu0 %v4117
    %v4119 = vand.u32 %v237, 4294901760
    %4120 = vmatprep.subr.mxu0 %v4119
    %v4121 = vand.u32 %v236, 4294901760
    %4122 = vmatpush1.msra.mxu0 %v4121
    %v4123 = vand.u32 %v229, 4294901760
    %4124 = vmatprep.subr.mxu0 %v4123
    %v4125 = vand.u32 %v228, 4294901760
    %4126 = vmatpush1.msra.mxu0 %v4125
    %v4127 = vand.u32 %v221, 4294901760
    %4128 = vmatprep.subr.mxu0 %v4127
    %v4129 = vand.u32 %v220, 4294901760
    %4130 = vmatpush1.msra.mxu0 %v4129
    %v4131 = vand.u32 %v213, 4294901760
    %4132 = vmatprep.subr.mxu0 %v4131
    %v4133 = vand.u32 %v212, 4294901760
    %4134 = vmatpush1.msra.mxu0 %v4133
    %v4135 = vand.u32 %v205, 4294901760
    %4136 = vmatprep.subr.mxu0 %v4135
    %v4137 = vand.u32 %v204, 4294901760
    %4138 = vmatpush1.msra.mxu0 %v4137
    %v4139 = vand.u32 %v197, 4294901760
    %4140 = vmatprep.subr.mxu0 %v4139
    %v4141 = vand.u32 %v196, 4294901760
    %4142 = vmatpush1.msra.mxu0 %v4141
    %v4143 = vand.u32 %v189, 4294901760
    %4144 = vmatprep.subr.mxu0 %v4143
    %v4145 = vand.u32 %v188, 4294901760
    %4146 = vmatpush1.msra.mxu0 %v4145
    %v4147 = vand.u32 %v181, 4294901760
    %4148 = vmatprep.subr.mxu0 %v4147
    %v4149 = vand.u32 %v180, 4294901760
    %4150 = vmatpush1.msra.mxu0 %v4149
    %v4151 = vand.u32 %v173, 4294901760
    %4152 = vmatprep.subr.mxu0 %v4151
    %v4153 = vand.u32 %v172, 4294901760
    %4154 = vmatpush1.msra.mxu0 %v4153
    %v4155 = vand.u32 %v165, 4294901760
    %4156 = vmatprep.subr.mxu0 %v4155
    %v4157 = vand.u32 %v164, 4294901760
    %4158 = vmatpush1.msra.mxu0 %v4157
    %v4159 = vand.u32 %v157, 4294901760
    %4160 = vmatprep.subr.mxu0 %v4159
    %v4161 = vand.u32 %v156, 4294901760
    %4162 = vmatpush1.msra.mxu0 %v4161
    %v4163 = vand.u32 %v149, 4294901760
    %4164 = vmatprep.subr.mxu0 %v4163
    %v4165 = vand.u32 %v148, 4294901760
    %4166 = vmatpush1.msra.mxu0 %v4165
    %v4167 = vand.u32 %v141, 4294901760
    %4168 = vmatprep.subr.mxu0 %v4167
    %v4169 = vand.u32 %v140, 4294901760
    %4170 = vmatpush1.msra.mxu0 %v4169
    %v4171 = vand.u32 %v389, 4294901760
    %4172 = vmatprep.subr.mxu0 %v4171
    %v4173 = vand.u32 %v388, 4294901760
    %4174 = vmatpush2.msra.mxu0 %v4173
    %v4175 = vand.u32 %v381, 4294901760
    %4176 = vmatprep.subr.mxu0 %v4175
    %v4177 = vand.u32 %v380, 4294901760
    %4178 = vmatpush2.msra.mxu0 %v4177
    %v4179 = vand.u32 %v373, 4294901760
    %4180 = vmatprep.subr.mxu0 %v4179
    %v4181 = vand.u32 %v372, 4294901760
    %4182 = vmatpush2.msra.mxu0 %v4181
    %v4183 = vand.u32 %v365, 4294901760
    %4184 = vmatprep.subr.mxu0 %v4183
    %v4185 = vand.u32 %v364, 4294901760
    %4186 = vmatpush2.msra.mxu0 %v4185
    %v4187 = vand.u32 %v357, 4294901760
    %4188 = vmatprep.subr.mxu0 %v4187
    %v4189 = vand.u32 %v356, 4294901760
    %4190 = vmatpush2.msra.mxu0 %v4189
    %v4191 = vand.u32 %v349, 4294901760
    %4192 = vmatprep.subr.mxu0 %v4191
    %v4193 = vand.u32 %v348, 4294901760
    %4194 = vmatpush2.msra.mxu0 %v4193
    %v4195 = vand.u32 %v341, 4294901760
    %4196 = vmatprep.subr.mxu0 %v4195
    %v4197 = vand.u32 %v340, 4294901760
    %4198 = vmatpush2.msra.mxu0 %v4197
    %v4199 = vand.u32 %v333, 4294901760
    %4200 = vmatprep.subr.mxu0 %v4199
    %v4201 = vand.u32 %v332, 4294901760
    %4202 = vmatpush2.msra.mxu0 %v4201
    %v4203 = vand.u32 %v325, 4294901760
    %4204 = vmatprep.subr.mxu0 %v4203
    %v4205 = vand.u32 %v324, 4294901760
    %4206 = vmatpush2.msra.mxu0 %v4205
    %v4207 = vand.u32 %v317, 4294901760
    %4208 = vmatprep.subr.mxu0 %v4207
    %v4209 = vand.u32 %v316, 4294901760
    %4210 = vmatpush2.msra.mxu0 %v4209
    %v4211 = vand.u32 %v309, 4294901760
    %4212 = vmatprep.subr.mxu0 %v4211
    %v4213 = vand.u32 %v308, 4294901760
    %4214 = vmatpush2.msra.mxu0 %v4213
    %v4215 = vand.u32 %v301, 4294901760
    %4216 = vmatprep.subr.mxu0 %v4215
    %v4217 = vand.u32 %v300, 4294901760
    %4218 = vmatpush2.msra.mxu0 %v4217
    %v4219 = vand.u32 %v293, 4294901760
    %4220 = vmatprep.subr.mxu0 %v4219
    %v4221 = vand.u32 %v292, 4294901760
    %4222 = vmatpush2.msra.mxu0 %v4221
    %v4223 = vand.u32 %v285, 4294901760
    %4224 = vmatprep.subr.mxu0 %v4223
    %v4225 = vand.u32 %v284, 4294901760
    %4226 = vmatpush2.msra.mxu0 %v4225
    %v4227 = vand.u32 %v277, 4294901760
    %4228 = vmatprep.subr.mxu0 %v4227
    %v4229 = vand.u32 %v276, 4294901760
    %4230 = vmatpush2.msra.mxu0 %v4229
    %v4231 = vand.u32 %v269, 4294901760
    %4232 = vmatprep.subr.mxu0 %v4231
    %v4233 = vand.u32 %v268, 4294901760
    %4234 = vmatpush2.msra.mxu0 %v4233
    %v4235 = vand.u32 %v135, 4294901760
    %4236 = vmatprep.mubr.f32.mxu0 %v4235
    %v4237 = vand.u32 %v134, 4294901760
    %4238 = vmatmul.mubr.f32.gmra.mxu0 %v4237
    %v4239 = vpop.f32.mrf.mxu0
    %v4240 = vadd.f32 %v4103, %v4239
    %v4241 = vpop.f32.mrf.mxu0
    %v4242 = vadd.f32 %v4105, %v4241
    %4243 = vdwg.mxu0
    %v4244 = vand.u32 %v263, 4294901760
    %4245 = vmatprep.subr.mxu0 %v4244
    %v4246 = vand.u32 %v262, 4294901760
    %4247 = vmatpush1.msra.mxu0 %v4246
    %v4248 = vand.u32 %v255, 4294901760
    %4249 = vmatprep.subr.mxu0 %v4248
    %v4250 = vand.u32 %v254, 4294901760
    %4251 = vmatpush1.msra.mxu0 %v4250
    %v4252 = vand.u32 %v247, 4294901760
    %4253 = vmatprep.subr.mxu0 %v4252
    %v4254 = vand.u32 %v246, 4294901760
    %4255 = vmatpush1.msra.mxu0 %v4254
    %v4256 = vand.u32 %v239, 4294901760
    %4257 = vmatprep.subr.mxu0 %v4256
    %v4258 = vand.u32 %v238, 4294901760
    %4259 = vmatpush1.msra.mxu0 %v4258
    %v4260 = vand.u32 %v231, 4294901760
    %4261 = vmatprep.subr.mxu0 %v4260
    %v4262 = vand.u32 %v230, 4294901760
    %4263 = vmatpush1.msra.mxu0 %v4262
    %v4264 = vand.u32 %v223, 4294901760
    %4265 = vmatprep.subr.mxu0 %v4264
    %v4266 = vand.u32 %v222, 4294901760
    %4267 = vmatpush1.msra.mxu0 %v4266
    %v4268 = vand.u32 %v215, 4294901760
    %4269 = vmatprep.subr.mxu0 %v4268
    %v4270 = vand.u32 %v214, 4294901760
    %4271 = vmatpush1.msra.mxu0 %v4270
    %v4272 = vand.u32 %v207, 4294901760
    %4273 = vmatprep.subr.mxu0 %v4272
    %v4274 = vand.u32 %v206, 4294901760
    %4275 = vmatpush1.msra.mxu0 %v4274
    %v4276 = vand.u32 %v199, 4294901760
    %4277 = vmatprep.subr.mxu0 %v4276
    %v4278 = vand.u32 %v198, 4294901760
    %4279 = vmatpush1.msra.mxu0 %v4278
    %v4280 = vand.u32 %v191, 4294901760
    %4281 = vmatprep.subr.mxu0 %v4280
    %v4282 = vand.u32 %v190, 4294901760
    %4283 = vmatpush1.msra.mxu0 %v4282
    %v4284 = vand.u32 %v183, 4294901760
    %4285 = vmatprep.subr.mxu0 %v4284
    %v4286 = vand.u32 %v182, 4294901760
    %4287 = vmatpush1.msra.mxu0 %v4286
    %v4288 = vand.u32 %v175, 4294901760
    %4289 = vmatprep.subr.mxu0 %v4288
    %v4290 = vand.u32 %v174, 4294901760
    %4291 = vmatpush1.msra.mxu0 %v4290
    %v4292 = vand.u32 %v167, 4294901760
    %4293 = vmatprep.subr.mxu0 %v4292
    %v4294 = vand.u32 %v166, 4294901760
    %4295 = vmatpush1.msra.mxu0 %v4294
    %v4296 = vand.u32 %v159, 4294901760
    %4297 = vmatprep.subr.mxu0 %v4296
    %v4298 = vand.u32 %v158, 4294901760
    %4299 = vmatpush1.msra.mxu0 %v4298
    %v4300 = vand.u32 %v151, 4294901760
    %4301 = vmatprep.subr.mxu0 %v4300
    %v4302 = vand.u32 %v150, 4294901760
    %4303 = vmatpush1.msra.mxu0 %v4302
    %v4304 = vand.u32 %v143, 4294901760
    %4305 = vmatprep.subr.mxu0 %v4304
    %v4306 = vand.u32 %v142, 4294901760
    %4307 = vmatpush1.msra.mxu0 %v4306
    %v4308 = vand.u32 %v391, 4294901760
    %4309 = vmatprep.subr.mxu0 %v4308
    %v4310 = vand.u32 %v390, 4294901760
    %4311 = vmatpush2.msra.mxu0 %v4310
    %v4312 = vand.u32 %v383, 4294901760
    %4313 = vmatprep.subr.mxu0 %v4312
    %v4314 = vand.u32 %v382, 4294901760
    %4315 = vmatpush2.msra.mxu0 %v4314
    %v4316 = vand.u32 %v375, 4294901760
    %4317 = vmatprep.subr.mxu0 %v4316
    %v4318 = vand.u32 %v374, 4294901760
    %4319 = vmatpush2.msra.mxu0 %v4318
    %v4320 = vand.u32 %v367, 4294901760
    %4321 = vmatprep.subr.mxu0 %v4320
    %v4322 = vand.u32 %v366, 4294901760
    %4323 = vmatpush2.msra.mxu0 %v4322
    %v4324 = vand.u32 %v359, 4294901760
    %4325 = vmatprep.subr.mxu0 %v4324
    %v4326 = vand.u32 %v358, 4294901760
    %4327 = vmatpush2.msra.mxu0 %v4326
    %v4328 = vand.u32 %v351, 4294901760
    %4329 = vmatprep.subr.mxu0 %v4328
    %v4330 = vand.u32 %v350, 4294901760
    %4331 = vmatpush2.msra.mxu0 %v4330
    %v4332 = vand.u32 %v343, 4294901760
    %4333 = vmatprep.subr.mxu0 %v4332
    %v4334 = vand.u32 %v342, 4294901760
    %4335 = vmatpush2.msra.mxu0 %v4334
    %v4336 = vand.u32 %v335, 4294901760
    %4337 = vmatprep.subr.mxu0 %v4336
    %v4338 = vand.u32 %v334, 4294901760
    %4339 = vmatpush2.msra.mxu0 %v4338
    %v4340 = vand.u32 %v327, 4294901760
    %4341 = vmatprep.subr.mxu0 %v4340
    %v4342 = vand.u32 %v326, 4294901760
    %4343 = vmatpush2.msra.mxu0 %v4342
    %v4344 = vand.u32 %v319, 4294901760
    %4345 = vmatprep.subr.mxu0 %v4344
    %v4346 = vand.u32 %v318, 4294901760
    %4347 = vmatpush2.msra.mxu0 %v4346
    %v4348 = vand.u32 %v311, 4294901760
    %4349 = vmatprep.subr.mxu0 %v4348
    %v4350 = vand.u32 %v310, 4294901760
    %4351 = vmatpush2.msra.mxu0 %v4350
    %v4352 = vand.u32 %v303, 4294901760
    %4353 = vmatprep.subr.mxu0 %v4352
    %v4354 = vand.u32 %v302, 4294901760
    %4355 = vmatpush2.msra.mxu0 %v4354
    %v4356 = vand.u32 %v295, 4294901760
    %4357 = vmatprep.subr.mxu0 %v4356
    %v4358 = vand.u32 %v294, 4294901760
    %4359 = vmatpush2.msra.mxu0 %v4358
    %v4360 = vand.u32 %v287, 4294901760
    %4361 = vmatprep.subr.mxu0 %v4360
    %v4362 = vand.u32 %v286, 4294901760
    %4363 = vmatpush2.msra.mxu0 %v4362
    %v4364 = vand.u32 %v279, 4294901760
    %4365 = vmatprep.subr.mxu0 %v4364
    %v4366 = vand.u32 %v278, 4294901760
    %4367 = vmatpush2.msra.mxu0 %v4366
    %v4368 = vand.u32 %v271, 4294901760
    %4369 = vmatprep.subr.mxu0 %v4368
    %v4370 = vand.u32 %v270, 4294901760
    %4371 = vmatpush2.msra.mxu0 %v4370
    %v4372 = vand.u32 %v135, 4294901760
    %v4373 = vsub.f32 %v135, %v4372
    %v4374 = vand.u32 %v4373, 4294901760
    %v4375 = vsub.f32 %v4373, %v4374
    %v4376 = vand.u32 %v4375, 4294901760
    %4377 = vmatprep.mubr.f32.mxu0 %v4376
    %v4378 = vand.u32 %v134, 4294901760
    %v4379 = vsub.f32 %v134, %v4378
    %v4380 = vand.u32 %v4379, 4294901760
    %v4381 = vsub.f32 %v4379, %v4380
    %v4382 = vand.u32 %v4381, 4294901760
    %4383 = vmatmul.mubr.f32.gmra.mxu0 %v4382
    %v4384 = vpop.f32.mrf.mxu0
    %v4385 = vadd.f32 0.0, %v4384
    %v4386 = vpop.f32.mrf.mxu0
    %v4387 = vadd.f32 0.0, %v4386
    %4388 = vdwg.mxu0
    %v4389 = vand.u32 %v263, 4294901760
    %v4390 = vsub.f32 %v263, %v4389
    %v4391 = vand.u32 %v4390, 4294901760
    %v4392 = vsub.f32 %v4390, %v4391
    %v4393 = vand.u32 %v4392, 4294901760
    %4394 = vmatprep.subr.mxu0 %v4393
    %v4395 = vand.u32 %v262, 4294901760
    %v4396 = vsub.f32 %v262, %v4395
    %v4397 = vand.u32 %v4396, 4294901760
    %v4398 = vsub.f32 %v4396, %v4397
    %v4399 = vand.u32 %v4398, 4294901760
    %4400 = vmatpush1.msra.mxu0 %v4399
    %v4401 = vand.u32 %v255, 4294901760
    %v4402 = vsub.f32 %v255, %v4401
    %v4403 = vand.u32 %v4402, 4294901760
    %v4404 = vsub.f32 %v4402, %v4403
    %v4405 = vand.u32 %v4404, 4294901760
    %4406 = vmatprep.subr.mxu0 %v4405
    %v4407 = vand.u32 %v254, 4294901760
    %v4408 = vsub.f32 %v254, %v4407
    %v4409 = vand.u32 %v4408, 4294901760
    %v4410 = vsub.f32 %v4408, %v4409
    %v4411 = vand.u32 %v4410, 4294901760
    %4412 = vmatpush1.msra.mxu0 %v4411
    %v4413 = vand.u32 %v247, 4294901760
    %v4414 = vsub.f32 %v247, %v4413
    %v4415 = vand.u32 %v4414, 4294901760
    %v4416 = vsub.f32 %v4414, %v4415
    %v4417 = vand.u32 %v4416, 4294901760
    %4418 = vmatprep.subr.mxu0 %v4417
    %v4419 = vand.u32 %v246, 4294901760
    %v4420 = vsub.f32 %v246, %v4419
    %v4421 = vand.u32 %v4420, 4294901760
    %v4422 = vsub.f32 %v4420, %v4421
    %v4423 = vand.u32 %v4422, 4294901760
    %4424 = vmatpush1.msra.mxu0 %v4423
    %v4425 = vand.u32 %v239, 4294901760
    %v4426 = vsub.f32 %v239, %v4425
    %v4427 = vand.u32 %v4426, 4294901760
    %v4428 = vsub.f32 %v4426, %v4427
    %v4429 = vand.u32 %v4428, 4294901760
    %4430 = vmatprep.subr.mxu0 %v4429
    %v4431 = vand.u32 %v238, 4294901760
    %v4432 = vsub.f32 %v238, %v4431
    %v4433 = vand.u32 %v4432, 4294901760
    %v4434 = vsub.f32 %v4432, %v4433
    %v4435 = vand.u32 %v4434, 4294901760
    %4436 = vmatpush1.msra.mxu0 %v4435
    %v4437 = vand.u32 %v231, 4294901760
    %v4438 = vsub.f32 %v231, %v4437
    %v4439 = vand.u32 %v4438, 4294901760
    %v4440 = vsub.f32 %v4438, %v4439
    %v4441 = vand.u32 %v4440, 4294901760
    %4442 = vmatprep.subr.mxu0 %v4441
    %v4443 = vand.u32 %v230, 4294901760
    %v4444 = vsub.f32 %v230, %v4443
    %v4445 = vand.u32 %v4444, 4294901760
    %v4446 = vsub.f32 %v4444, %v4445
    %v4447 = vand.u32 %v4446, 4294901760
    %4448 = vmatpush1.msra.mxu0 %v4447
    %v4449 = vand.u32 %v223, 4294901760
    %v4450 = vsub.f32 %v223, %v4449
    %v4451 = vand.u32 %v4450, 4294901760
    %v4452 = vsub.f32 %v4450, %v4451
    %v4453 = vand.u32 %v4452, 4294901760
    %4454 = vmatprep.subr.mxu0 %v4453
    %v4455 = vand.u32 %v222, 4294901760
    %v4456 = vsub.f32 %v222, %v4455
    %v4457 = vand.u32 %v4456, 4294901760
    %v4458 = vsub.f32 %v4456, %v4457
    %v4459 = vand.u32 %v4458, 4294901760
    %4460 = vmatpush1.msra.mxu0 %v4459
    %v4461 = vand.u32 %v215, 4294901760
    %v4462 = vsub.f32 %v215, %v4461
    %v4463 = vand.u32 %v4462, 4294901760
    %v4464 = vsub.f32 %v4462, %v4463
    %v4465 = vand.u32 %v4464, 4294901760
    %4466 = vmatprep.subr.mxu0 %v4465
    %v4467 = vand.u32 %v214, 4294901760
    %v4468 = vsub.f32 %v214, %v4467
    %v4469 = vand.u32 %v4468, 4294901760
    %v4470 = vsub.f32 %v4468, %v4469
    %v4471 = vand.u32 %v4470, 4294901760
    %4472 = vmatpush1.msra.mxu0 %v4471
    %v4473 = vand.u32 %v207, 4294901760
    %v4474 = vsub.f32 %v207, %v4473
    %v4475 = vand.u32 %v4474, 4294901760
    %v4476 = vsub.f32 %v4474, %v4475
    %v4477 = vand.u32 %v4476, 4294901760
    %4478 = vmatprep.subr.mxu0 %v4477
    %v4479 = vand.u32 %v206, 4294901760
    %v4480 = vsub.f32 %v206, %v4479
    %v4481 = vand.u32 %v4480, 4294901760
    %v4482 = vsub.f32 %v4480, %v4481
    %v4483 = vand.u32 %v4482, 4294901760
    %4484 = vmatpush1.msra.mxu0 %v4483
    %v4485 = vand.u32 %v199, 4294901760
    %v4486 = vsub.f32 %v199, %v4485
    %v4487 = vand.u32 %v4486, 4294901760
    %v4488 = vsub.f32 %v4486, %v4487
    %v4489 = vand.u32 %v4488, 4294901760
    %4490 = vmatprep.subr.mxu0 %v4489
    %v4491 = vand.u32 %v198, 4294901760
    %v4492 = vsub.f32 %v198, %v4491
    %v4493 = vand.u32 %v4492, 4294901760
    %v4494 = vsub.f32 %v4492, %v4493
    %v4495 = vand.u32 %v4494, 4294901760
    %4496 = vmatpush1.msra.mxu0 %v4495
    %v4497 = vand.u32 %v191, 4294901760
    %v4498 = vsub.f32 %v191, %v4497
    %v4499 = vand.u32 %v4498, 4294901760
    %v4500 = vsub.f32 %v4498, %v4499
    %v4501 = vand.u32 %v4500, 4294901760
    %4502 = vmatprep.subr.mxu0 %v4501
    %v4503 = vand.u32 %v190, 4294901760
    %v4504 = vsub.f32 %v190, %v4503
    %v4505 = vand.u32 %v4504, 4294901760
    %v4506 = vsub.f32 %v4504, %v4505
    %v4507 = vand.u32 %v4506, 4294901760
    %4508 = vmatpush1.msra.mxu0 %v4507
    %v4509 = vand.u32 %v183, 4294901760
    %v4510 = vsub.f32 %v183, %v4509
    %v4511 = vand.u32 %v4510, 4294901760
    %v4512 = vsub.f32 %v4510, %v4511
    %v4513 = vand.u32 %v4512, 4294901760
    %4514 = vmatprep.subr.mxu0 %v4513
    %v4515 = vand.u32 %v182, 4294901760
    %v4516 = vsub.f32 %v182, %v4515
    %v4517 = vand.u32 %v4516, 4294901760
    %v4518 = vsub.f32 %v4516, %v4517
    %v4519 = vand.u32 %v4518, 4294901760
    %4520 = vmatpush1.msra.mxu0 %v4519
    %v4521 = vand.u32 %v175, 4294901760
    %v4522 = vsub.f32 %v175, %v4521
    %v4523 = vand.u32 %v4522, 4294901760
    %v4524 = vsub.f32 %v4522, %v4523
    %v4525 = vand.u32 %v4524, 4294901760
    %4526 = vmatprep.subr.mxu0 %v4525
    %v4527 = vand.u32 %v174, 4294901760
    %v4528 = vsub.f32 %v174, %v4527
    %v4529 = vand.u32 %v4528, 4294901760
    %v4530 = vsub.f32 %v4528, %v4529
    %v4531 = vand.u32 %v4530, 4294901760
    %4532 = vmatpush1.msra.mxu0 %v4531
    %v4533 = vand.u32 %v167, 4294901760
    %v4534 = vsub.f32 %v167, %v4533
    %v4535 = vand.u32 %v4534, 4294901760
    %v4536 = vsub.f32 %v4534, %v4535
    %v4537 = vand.u32 %v4536, 4294901760
    %4538 = vmatprep.subr.mxu0 %v4537
    %v4539 = vand.u32 %v166, 4294901760
    %v4540 = vsub.f32 %v166, %v4539
    %v4541 = vand.u32 %v4540, 4294901760
    %v4542 = vsub.f32 %v4540, %v4541
    %v4543 = vand.u32 %v4542, 4294901760
    %4544 = vmatpush1.msra.mxu0 %v4543
    %v4545 = vand.u32 %v159, 4294901760
    %v4546 = vsub.f32 %v159, %v4545
    %v4547 = vand.u32 %v4546, 4294901760
    %v4548 = vsub.f32 %v4546, %v4547
    %v4549 = vand.u32 %v4548, 4294901760
    %4550 = vmatprep.subr.mxu0 %v4549
    %v4551 = vand.u32 %v158, 4294901760
    %v4552 = vsub.f32 %v158, %v4551
    %v4553 = vand.u32 %v4552, 4294901760
    %v4554 = vsub.f32 %v4552, %v4553
    %v4555 = vand.u32 %v4554, 4294901760
    %4556 = vmatpush1.msra.mxu0 %v4555
    %v4557 = vand.u32 %v151, 4294901760
    %v4558 = vsub.f32 %v151, %v4557
    %v4559 = vand.u32 %v4558, 4294901760
    %v4560 = vsub.f32 %v4558, %v4559
    %v4561 = vand.u32 %v4560, 4294901760
    %4562 = vmatprep.subr.mxu0 %v4561
    %v4563 = vand.u32 %v150, 4294901760
    %v4564 = vsub.f32 %v150, %v4563
    %v4565 = vand.u32 %v4564, 4294901760
    %v4566 = vsub.f32 %v4564, %v4565
    %v4567 = vand.u32 %v4566, 4294901760
    %4568 = vmatpush1.msra.mxu0 %v4567
    %v4569 = vand.u32 %v143, 4294901760
    %v4570 = vsub.f32 %v143, %v4569
    %v4571 = vand.u32 %v4570, 4294901760
    %v4572 = vsub.f32 %v4570, %v4571
    %v4573 = vand.u32 %v4572, 4294901760
    %4574 = vmatprep.subr.mxu0 %v4573
    %v4575 = vand.u32 %v142, 4294901760
    %v4576 = vsub.f32 %v142, %v4575
    %v4577 = vand.u32 %v4576, 4294901760
    %v4578 = vsub.f32 %v4576, %v4577
    %v4579 = vand.u32 %v4578, 4294901760
    %4580 = vmatpush1.msra.mxu0 %v4579
    %v4581 = vand.u32 %v391, 4294901760
    %v4582 = vsub.f32 %v391, %v4581
    %v4583 = vand.u32 %v4582, 4294901760
    %v4584 = vsub.f32 %v4582, %v4583
    %v4585 = vand.u32 %v4584, 4294901760
    %4586 = vmatprep.subr.mxu0 %v4585
    %v4587 = vand.u32 %v390, 4294901760
    %v4588 = vsub.f32 %v390, %v4587
    %v4589 = vand.u32 %v4588, 4294901760
    %v4590 = vsub.f32 %v4588, %v4589
    %v4591 = vand.u32 %v4590, 4294901760
    %4592 = vmatpush2.msra.mxu0 %v4591
    %v4593 = vand.u32 %v383, 4294901760
    %v4594 = vsub.f32 %v383, %v4593
    %v4595 = vand.u32 %v4594, 4294901760
    %v4596 = vsub.f32 %v4594, %v4595
    %v4597 = vand.u32 %v4596, 4294901760
    %4598 = vmatprep.subr.mxu0 %v4597
    %v4599 = vand.u32 %v382, 4294901760
    %v4600 = vsub.f32 %v382, %v4599
    %v4601 = vand.u32 %v4600, 4294901760
    %v4602 = vsub.f32 %v4600, %v4601
    %v4603 = vand.u32 %v4602, 4294901760
    %4604 = vmatpush2.msra.mxu0 %v4603
    %v4605 = vand.u32 %v375, 4294901760
    %v4606 = vsub.f32 %v375, %v4605
    %v4607 = vand.u32 %v4606, 4294901760
    %v4608 = vsub.f32 %v4606, %v4607
    %v4609 = vand.u32 %v4608, 4294901760
    %4610 = vmatprep.subr.mxu0 %v4609
    %v4611 = vand.u32 %v374, 4294901760
    %v4612 = vsub.f32 %v374, %v4611
    %v4613 = vand.u32 %v4612, 4294901760
    %v4614 = vsub.f32 %v4612, %v4613
    %v4615 = vand.u32 %v4614, 4294901760
    %4616 = vmatpush2.msra.mxu0 %v4615
    %v4617 = vand.u32 %v367, 4294901760
    %v4618 = vsub.f32 %v367, %v4617
    %v4619 = vand.u32 %v4618, 4294901760
    %v4620 = vsub.f32 %v4618, %v4619
    %v4621 = vand.u32 %v4620, 4294901760
    %4622 = vmatprep.subr.mxu0 %v4621
    %v4623 = vand.u32 %v366, 4294901760
    %v4624 = vsub.f32 %v366, %v4623
    %v4625 = vand.u32 %v4624, 4294901760
    %v4626 = vsub.f32 %v4624, %v4625
    %v4627 = vand.u32 %v4626, 4294901760
    %4628 = vmatpush2.msra.mxu0 %v4627
    %v4629 = vand.u32 %v359, 4294901760
    %v4630 = vsub.f32 %v359, %v4629
    %v4631 = vand.u32 %v4630, 4294901760
    %v4632 = vsub.f32 %v4630, %v4631
    %v4633 = vand.u32 %v4632, 4294901760
    %4634 = vmatprep.subr.mxu0 %v4633
    %v4635 = vand.u32 %v358, 4294901760
    %v4636 = vsub.f32 %v358, %v4635
    %v4637 = vand.u32 %v4636, 4294901760
    %v4638 = vsub.f32 %v4636, %v4637
    %v4639 = vand.u32 %v4638, 4294901760
    %4640 = vmatpush2.msra.mxu0 %v4639
    %v4641 = vand.u32 %v351, 4294901760
    %v4642 = vsub.f32 %v351, %v4641
    %v4643 = vand.u32 %v4642, 4294901760
    %v4644 = vsub.f32 %v4642, %v4643
    %v4645 = vand.u32 %v4644, 4294901760
    %4646 = vmatprep.subr.mxu0 %v4645
    %v4647 = vand.u32 %v350, 4294901760
    %v4648 = vsub.f32 %v350, %v4647
    %v4649 = vand.u32 %v4648, 4294901760
    %v4650 = vsub.f32 %v4648, %v4649
    %v4651 = vand.u32 %v4650, 4294901760
    %4652 = vmatpush2.msra.mxu0 %v4651
    %v4653 = vand.u32 %v343, 4294901760
    %v4654 = vsub.f32 %v343, %v4653
    %v4655 = vand.u32 %v4654, 4294901760
    %v4656 = vsub.f32 %v4654, %v4655
    %v4657 = vand.u32 %v4656, 4294901760
    %4658 = vmatprep.subr.mxu0 %v4657
    %v4659 = vand.u32 %v342, 4294901760
    %v4660 = vsub.f32 %v342, %v4659
    %v4661 = vand.u32 %v4660, 4294901760
    %v4662 = vsub.f32 %v4660, %v4661
    %v4663 = vand.u32 %v4662, 4294901760
    %4664 = vmatpush2.msra.mxu0 %v4663
    %v4665 = vand.u32 %v335, 4294901760
    %v4666 = vsub.f32 %v335, %v4665
    %v4667 = vand.u32 %v4666, 4294901760
    %v4668 = vsub.f32 %v4666, %v4667
    %v4669 = vand.u32 %v4668, 4294901760
    %4670 = vmatprep.subr.mxu0 %v4669
    %v4671 = vand.u32 %v334, 4294901760
    %v4672 = vsub.f32 %v334, %v4671
    %v4673 = vand.u32 %v4672, 4294901760
    %v4674 = vsub.f32 %v4672, %v4673
    %v4675 = vand.u32 %v4674, 4294901760
    %4676 = vmatpush2.msra.mxu0 %v4675
    %v4677 = vand.u32 %v327, 4294901760
    %v4678 = vsub.f32 %v327, %v4677
    %v4679 = vand.u32 %v4678, 4294901760
    %v4680 = vsub.f32 %v4678, %v4679
    %v4681 = vand.u32 %v4680, 4294901760
    %4682 = vmatprep.subr.mxu0 %v4681
    %v4683 = vand.u32 %v326, 4294901760
    %v4684 = vsub.f32 %v326, %v4683
    %v4685 = vand.u32 %v4684, 4294901760
    %v4686 = vsub.f32 %v4684, %v4685
    %v4687 = vand.u32 %v4686, 4294901760
    %4688 = vmatpush2.msra.mxu0 %v4687
    %v4689 = vand.u32 %v319, 4294901760
    %v4690 = vsub.f32 %v319, %v4689
    %v4691 = vand.u32 %v4690, 4294901760
    %v4692 = vsub.f32 %v4690, %v4691
    %v4693 = vand.u32 %v4692, 4294901760
    %4694 = vmatprep.subr.mxu0 %v4693
    %v4695 = vand.u32 %v318, 4294901760
    %v4696 = vsub.f32 %v318, %v4695
    %v4697 = vand.u32 %v4696, 4294901760
    %v4698 = vsub.f32 %v4696, %v4697
    %v4699 = vand.u32 %v4698, 4294901760
    %4700 = vmatpush2.msra.mxu0 %v4699
    %v4701 = vand.u32 %v311, 4294901760
    %v4702 = vsub.f32 %v311, %v4701
    %v4703 = vand.u32 %v4702, 4294901760
    %v4704 = vsub.f32 %v4702, %v4703
    %v4705 = vand.u32 %v4704, 4294901760
    %4706 = vmatprep.subr.mxu0 %v4705
    %v4707 = vand.u32 %v310, 4294901760
    %v4708 = vsub.f32 %v310, %v4707
    %v4709 = vand.u32 %v4708, 4294901760
    %v4710 = vsub.f32 %v4708, %v4709
    %v4711 = vand.u32 %v4710, 4294901760
    %4712 = vmatpush2.msra.mxu0 %v4711
    %v4713 = vand.u32 %v303, 4294901760
    %v4714 = vsub.f32 %v303, %v4713
    %v4715 = vand.u32 %v4714, 4294901760
    %v4716 = vsub.f32 %v4714, %v4715
    %v4717 = vand.u32 %v4716, 4294901760
    %4718 = vmatprep.subr.mxu0 %v4717
    %v4719 = vand.u32 %v302, 4294901760
    %v4720 = vsub.f32 %v302, %v4719
    %v4721 = vand.u32 %v4720, 4294901760
    %v4722 = vsub.f32 %v4720, %v4721
    %v4723 = vand.u32 %v4722, 4294901760
    %4724 = vmatpush2.msra.mxu0 %v4723
    %v4725 = vand.u32 %v295, 4294901760
    %v4726 = vsub.f32 %v295, %v4725
    %v4727 = vand.u32 %v4726, 4294901760
    %v4728 = vsub.f32 %v4726, %v4727
    %v4729 = vand.u32 %v4728, 4294901760
    %4730 = vmatprep.subr.mxu0 %v4729
    %v4731 = vand.u32 %v294, 4294901760
    %v4732 = vsub.f32 %v294, %v4731
    %v4733 = vand.u32 %v4732, 4294901760
    %v4734 = vsub.f32 %v4732, %v4733
    %v4735 = vand.u32 %v4734, 4294901760
    %4736 = vmatpush2.msra.mxu0 %v4735
    %v4737 = vand.u32 %v287, 4294901760
    %v4738 = vsub.f32 %v287, %v4737
    %v4739 = vand.u32 %v4738, 4294901760
    %v4740 = vsub.f32 %v4738, %v4739
    %v4741 = vand.u32 %v4740, 4294901760
    %4742 = vmatprep.subr.mxu0 %v4741
    %v4743 = vand.u32 %v286, 4294901760
    %v4744 = vsub.f32 %v286, %v4743
    %v4745 = vand.u32 %v4744, 4294901760
    %v4746 = vsub.f32 %v4744, %v4745
    %v4747 = vand.u32 %v4746, 4294901760
    %4748 = vmatpush2.msra.mxu0 %v4747
    %v4749 = vand.u32 %v279, 4294901760
    %v4750 = vsub.f32 %v279, %v4749
    %v4751 = vand.u32 %v4750, 4294901760
    %v4752 = vsub.f32 %v4750, %v4751
    %v4753 = vand.u32 %v4752, 4294901760
    %4754 = vmatprep.subr.mxu0 %v4753
    %v4755 = vand.u32 %v278, 4294901760
    %v4756 = vsub.f32 %v278, %v4755
    %v4757 = vand.u32 %v4756, 4294901760
    %v4758 = vsub.f32 %v4756, %v4757
    %v4759 = vand.u32 %v4758, 4294901760
    %4760 = vmatpush2.msra.mxu0 %v4759
    %v4761 = vand.u32 %v271, 4294901760
    %v4762 = vsub.f32 %v271, %v4761
    %v4763 = vand.u32 %v4762, 4294901760
    %v4764 = vsub.f32 %v4762, %v4763
    %v4765 = vand.u32 %v4764, 4294901760
    %4766 = vmatprep.subr.mxu0 %v4765
    %v4767 = vand.u32 %v270, 4294901760
    %v4768 = vsub.f32 %v270, %v4767
    %v4769 = vand.u32 %v4768, 4294901760
    %v4770 = vsub.f32 %v4768, %v4769
    %v4771 = vand.u32 %v4770, 4294901760
    %4772 = vmatpush2.msra.mxu0 %v4771
    %v4773 = vand.u32 %v135, 4294901760
    %4774 = vmatprep.mubr.f32.mxu0 %v4773
    %v4775 = vand.u32 %v134, 4294901760
    %4776 = vmatmul.mubr.f32.gmra.mxu0 %v4775
    %v4777 = vpop.f32.mrf.mxu0
    %v4778 = vadd.f32 %v4385, %v4777
    %v4779 = vpop.f32.mrf.mxu0
    %v4780 = vadd.f32 %v4387, %v4779
    %4781 = vdwg.mxu0
    %v4782 = vand.u32 %v263, 4294901760
    %v4783 = vsub.f32 %v263, %v4782
    %4784 = vmatprep.subr.mxu0 %v4783
    %v4785 = vand.u32 %v262, 4294901760
    %v4786 = vsub.f32 %v262, %v4785
    %4787 = vmatpush1.msra.mxu0 %v4786
    %v4788 = vand.u32 %v255, 4294901760
    %v4789 = vsub.f32 %v255, %v4788
    %4790 = vmatprep.subr.mxu0 %v4789
    %v4791 = vand.u32 %v254, 4294901760
    %v4792 = vsub.f32 %v254, %v4791
    %4793 = vmatpush1.msra.mxu0 %v4792
    %v4794 = vand.u32 %v247, 4294901760
    %v4795 = vsub.f32 %v247, %v4794
    %4796 = vmatprep.subr.mxu0 %v4795
    %v4797 = vand.u32 %v246, 4294901760
    %v4798 = vsub.f32 %v246, %v4797
    %4799 = vmatpush1.msra.mxu0 %v4798
    %v4800 = vand.u32 %v239, 4294901760
    %v4801 = vsub.f32 %v239, %v4800
    %4802 = vmatprep.subr.mxu0 %v4801
    %v4803 = vand.u32 %v238, 4294901760
    %v4804 = vsub.f32 %v238, %v4803
    %4805 = vmatpush1.msra.mxu0 %v4804
    %v4806 = vand.u32 %v231, 4294901760
    %v4807 = vsub.f32 %v231, %v4806
    %4808 = vmatprep.subr.mxu0 %v4807
    %v4809 = vand.u32 %v230, 4294901760
    %v4810 = vsub.f32 %v230, %v4809
    %4811 = vmatpush1.msra.mxu0 %v4810
    %v4812 = vand.u32 %v223, 4294901760
    %v4813 = vsub.f32 %v223, %v4812
    %4814 = vmatprep.subr.mxu0 %v4813
    %v4815 = vand.u32 %v222, 4294901760
    %v4816 = vsub.f32 %v222, %v4815
    %4817 = vmatpush1.msra.mxu0 %v4816
    %v4818 = vand.u32 %v215, 4294901760
    %v4819 = vsub.f32 %v215, %v4818
    %4820 = vmatprep.subr.mxu0 %v4819
    %v4821 = vand.u32 %v214, 4294901760
    %v4822 = vsub.f32 %v214, %v4821
    %4823 = vmatpush1.msra.mxu0 %v4822
    %v4824 = vand.u32 %v207, 4294901760
    %v4825 = vsub.f32 %v207, %v4824
    %4826 = vmatprep.subr.mxu0 %v4825
    %v4827 = vand.u32 %v206, 4294901760
    %v4828 = vsub.f32 %v206, %v4827
    %4829 = vmatpush1.msra.mxu0 %v4828
    %v4830 = vand.u32 %v199, 4294901760
    %v4831 = vsub.f32 %v199, %v4830
    %4832 = vmatprep.subr.mxu0 %v4831
    %v4833 = vand.u32 %v198, 4294901760
    %v4834 = vsub.f32 %v198, %v4833
    %4835 = vmatpush1.msra.mxu0 %v4834
    %v4836 = vand.u32 %v191, 4294901760
    %v4837 = vsub.f32 %v191, %v4836
    %4838 = vmatprep.subr.mxu0 %v4837
    %v4839 = vand.u32 %v190, 4294901760
    %v4840 = vsub.f32 %v190, %v4839
    %4841 = vmatpush1.msra.mxu0 %v4840
    %v4842 = vand.u32 %v183, 4294901760
    %v4843 = vsub.f32 %v183, %v4842
    %4844 = vmatprep.subr.mxu0 %v4843
    %v4845 = vand.u32 %v182, 4294901760
    %v4846 = vsub.f32 %v182, %v4845
    %4847 = vmatpush1.msra.mxu0 %v4846
    %v4848 = vand.u32 %v175, 4294901760
    %v4849 = vsub.f32 %v175, %v4848
    %4850 = vmatprep.subr.mxu0 %v4849
    %v4851 = vand.u32 %v174, 4294901760
    %v4852 = vsub.f32 %v174, %v4851
    %4853 = vmatpush1.msra.mxu0 %v4852
    %v4854 = vand.u32 %v167, 4294901760
    %v4855 = vsub.f32 %v167, %v4854
    %4856 = vmatprep.subr.mxu0 %v4855
    %v4857 = vand.u32 %v166, 4294901760
    %v4858 = vsub.f32 %v166, %v4857
    %4859 = vmatpush1.msra.mxu0 %v4858
    %v4860 = vand.u32 %v159, 4294901760
    %v4861 = vsub.f32 %v159, %v4860
    %4862 = vmatprep.subr.mxu0 %v4861
    %v4863 = vand.u32 %v158, 4294901760
    %v4864 = vsub.f32 %v158, %v4863
    %4865 = vmatpush1.msra.mxu0 %v4864
    %v4866 = vand.u32 %v151, 4294901760
    %v4867 = vsub.f32 %v151, %v4866
    %4868 = vmatprep.subr.mxu0 %v4867
    %v4869 = vand.u32 %v150, 4294901760
    %v4870 = vsub.f32 %v150, %v4869
    %4871 = vmatpush1.msra.mxu0 %v4870
    %v4872 = vand.u32 %v143, 4294901760
    %v4873 = vsub.f32 %v143, %v4872
    %4874 = vmatprep.subr.mxu0 %v4873
    %v4875 = vand.u32 %v142, 4294901760
    %v4876 = vsub.f32 %v142, %v4875
    %4877 = vmatpush1.msra.mxu0 %v4876
    %v4878 = vand.u32 %v391, 4294901760
    %v4879 = vsub.f32 %v391, %v4878
    %4880 = vmatprep.subr.mxu0 %v4879
    %v4881 = vand.u32 %v390, 4294901760
    %v4882 = vsub.f32 %v390, %v4881
    %4883 = vmatpush2.msra.mxu0 %v4882
    %v4884 = vand.u32 %v383, 4294901760
    %v4885 = vsub.f32 %v383, %v4884
    %4886 = vmatprep.subr.mxu0 %v4885
    %v4887 = vand.u32 %v382, 4294901760
    %v4888 = vsub.f32 %v382, %v4887
    %4889 = vmatpush2.msra.mxu0 %v4888
    %v4890 = vand.u32 %v375, 4294901760
    %v4891 = vsub.f32 %v375, %v4890
    %4892 = vmatprep.subr.mxu0 %v4891
    %v4893 = vand.u32 %v374, 4294901760
    %v4894 = vsub.f32 %v374, %v4893
    %4895 = vmatpush2.msra.mxu0 %v4894
    %v4896 = vand.u32 %v367, 4294901760
    %v4897 = vsub.f32 %v367, %v4896
    %4898 = vmatprep.subr.mxu0 %v4897
    %v4899 = vand.u32 %v366, 4294901760
    %v4900 = vsub.f32 %v366, %v4899
    %4901 = vmatpush2.msra.mxu0 %v4900
    %v4902 = vand.u32 %v359, 4294901760
    %v4903 = vsub.f32 %v359, %v4902
    %4904 = vmatprep.subr.mxu0 %v4903
    %v4905 = vand.u32 %v358, 4294901760
    %v4906 = vsub.f32 %v358, %v4905
    %4907 = vmatpush2.msra.mxu0 %v4906
    %v4908 = vand.u32 %v351, 4294901760
    %v4909 = vsub.f32 %v351, %v4908
    %4910 = vmatprep.subr.mxu0 %v4909
    %v4911 = vand.u32 %v350, 4294901760
    %v4912 = vsub.f32 %v350, %v4911
    %4913 = vmatpush2.msra.mxu0 %v4912
    %v4914 = vand.u32 %v343, 4294901760
    %v4915 = vsub.f32 %v343, %v4914
    %4916 = vmatprep.subr.mxu0 %v4915
    %v4917 = vand.u32 %v342, 4294901760
    %v4918 = vsub.f32 %v342, %v4917
    %4919 = vmatpush2.msra.mxu0 %v4918
    %v4920 = vand.u32 %v335, 4294901760
    %v4921 = vsub.f32 %v335, %v4920
    %4922 = vmatprep.subr.mxu0 %v4921
    %v4923 = vand.u32 %v334, 4294901760
    %v4924 = vsub.f32 %v334, %v4923
    %4925 = vmatpush2.msra.mxu0 %v4924
    %v4926 = vand.u32 %v327, 4294901760
    %v4927 = vsub.f32 %v327, %v4926
    %4928 = vmatprep.subr.mxu0 %v4927
    %v4929 = vand.u32 %v326, 4294901760
    %v4930 = vsub.f32 %v326, %v4929
    %4931 = vmatpush2.msra.mxu0 %v4930
    %v4932 = vand.u32 %v319, 4294901760
    %v4933 = vsub.f32 %v319, %v4932
    %4934 = vmatprep.subr.mxu0 %v4933
    %v4935 = vand.u32 %v318, 4294901760
    %v4936 = vsub.f32 %v318, %v4935
    %4937 = vmatpush2.msra.mxu0 %v4936
    %v4938 = vand.u32 %v311, 4294901760
    %v4939 = vsub.f32 %v311, %v4938
    %4940 = vmatprep.subr.mxu0 %v4939
    %v4941 = vand.u32 %v310, 4294901760
    %v4942 = vsub.f32 %v310, %v4941
    %4943 = vmatpush2.msra.mxu0 %v4942
    %v4944 = vand.u32 %v303, 4294901760
    %v4945 = vsub.f32 %v303, %v4944
    %4946 = vmatprep.subr.mxu0 %v4945
    %v4947 = vand.u32 %v302, 4294901760
    %v4948 = vsub.f32 %v302, %v4947
    %4949 = vmatpush2.msra.mxu0 %v4948
    %v4950 = vand.u32 %v295, 4294901760
    %v4951 = vsub.f32 %v295, %v4950
    %4952 = vmatprep.subr.mxu0 %v4951
    %v4953 = vand.u32 %v294, 4294901760
    %v4954 = vsub.f32 %v294, %v4953
    %4955 = vmatpush2.msra.mxu0 %v4954
    %v4956 = vand.u32 %v287, 4294901760
    %v4957 = vsub.f32 %v287, %v4956
    %4958 = vmatprep.subr.mxu0 %v4957
    %v4959 = vand.u32 %v286, 4294901760
    %v4960 = vsub.f32 %v286, %v4959
    %4961 = vmatpush2.msra.mxu0 %v4960
    %v4962 = vand.u32 %v279, 4294901760
    %v4963 = vsub.f32 %v279, %v4962
    %4964 = vmatprep.subr.mxu0 %v4963
    %v4965 = vand.u32 %v278, 4294901760
    %v4966 = vsub.f32 %v278, %v4965
    %4967 = vmatpush2.msra.mxu0 %v4966
    %v4968 = vand.u32 %v271, 4294901760
    %v4969 = vsub.f32 %v271, %v4968
    %4970 = vmatprep.subr.mxu0 %v4969
    %v4971 = vand.u32 %v270, 4294901760
    %v4972 = vsub.f32 %v270, %v4971
    %4973 = vmatpush2.msra.mxu0 %v4972
    %v4974 = vand.u32 %v135, 4294901760
    %v4975 = vsub.f32 %v135, %v4974
    %4976 = vmatprep.mubr.f32.mxu0 %v4975
    %v4977 = vand.u32 %v134, 4294901760
    %v4978 = vsub.f32 %v134, %v4977
    %4979 = vmatmul.mubr.f32.gmra.mxu0 %v4978
    %v4980 = vpop.f32.mrf.mxu0
    %v4981 = vadd.f32 %v4778, %v4980
    %v4982 = vpop.f32.mrf.mxu0
    %v4983 = vadd.f32 %v4780, %v4982
    %4984 = vdwg.mxu0
    %v4985 = vand.u32 %v263, 4294901760
    %4986 = vmatprep.subr.mxu0 %v4985
    %v4987 = vand.u32 %v262, 4294901760
    %4988 = vmatpush1.msra.mxu0 %v4987
    %v4989 = vand.u32 %v255, 4294901760
    %4990 = vmatprep.subr.mxu0 %v4989
    %v4991 = vand.u32 %v254, 4294901760
    %4992 = vmatpush1.msra.mxu0 %v4991
    %v4993 = vand.u32 %v247, 4294901760
    %4994 = vmatprep.subr.mxu0 %v4993
    %v4995 = vand.u32 %v246, 4294901760
    %4996 = vmatpush1.msra.mxu0 %v4995
    %v4997 = vand.u32 %v239, 4294901760
    %4998 = vmatprep.subr.mxu0 %v4997
    %v4999 = vand.u32 %v238, 4294901760
    %5000 = vmatpush1.msra.mxu0 %v4999
    %v5001 = vand.u32 %v231, 4294901760
    %5002 = vmatprep.subr.mxu0 %v5001
    %v5003 = vand.u32 %v230, 4294901760
    %5004 = vmatpush1.msra.mxu0 %v5003
    %v5005 = vand.u32 %v223, 4294901760
    %5006 = vmatprep.subr.mxu0 %v5005
    %v5007 = vand.u32 %v222, 4294901760
    %5008 = vmatpush1.msra.mxu0 %v5007
    %v5009 = vand.u32 %v215, 4294901760
    %5010 = vmatprep.subr.mxu0 %v5009
    %v5011 = vand.u32 %v214, 4294901760
    %5012 = vmatpush1.msra.mxu0 %v5011
    %v5013 = vand.u32 %v207, 4294901760
    %5014 = vmatprep.subr.mxu0 %v5013
    %v5015 = vand.u32 %v206, 4294901760
    %5016 = vmatpush1.msra.mxu0 %v5015
    %v5017 = vand.u32 %v199, 4294901760
    %5018 = vmatprep.subr.mxu0 %v5017
    %v5019 = vand.u32 %v198, 4294901760
    %5020 = vmatpush1.msra.mxu0 %v5019
    %v5021 = vand.u32 %v191, 4294901760
    %5022 = vmatprep.subr.mxu0 %v5021
    %v5023 = vand.u32 %v190, 4294901760
    %5024 = vmatpush1.msra.mxu0 %v5023
    %v5025 = vand.u32 %v183, 4294901760
    %5026 = vmatprep.subr.mxu0 %v5025
    %v5027 = vand.u32 %v182, 4294901760
    %5028 = vmatpush1.msra.mxu0 %v5027
    %v5029 = vand.u32 %v175, 4294901760
    %5030 = vmatprep.subr.mxu0 %v5029
    %v5031 = vand.u32 %v174, 4294901760
    %5032 = vmatpush1.msra.mxu0 %v5031
    %v5033 = vand.u32 %v167, 4294901760
    %5034 = vmatprep.subr.mxu0 %v5033
    %v5035 = vand.u32 %v166, 4294901760
    %5036 = vmatpush1.msra.mxu0 %v5035
    %v5037 = vand.u32 %v159, 4294901760
    %5038 = vmatprep.subr.mxu0 %v5037
    %v5039 = vand.u32 %v158, 4294901760
    %5040 = vmatpush1.msra.mxu0 %v5039
    %v5041 = vand.u32 %v151, 4294901760
    %5042 = vmatprep.subr.mxu0 %v5041
    %v5043 = vand.u32 %v150, 4294901760
    %5044 = vmatpush1.msra.mxu0 %v5043
    %v5045 = vand.u32 %v143, 4294901760
    %5046 = vmatprep.subr.mxu0 %v5045
    %v5047 = vand.u32 %v142, 4294901760
    %5048 = vmatpush1.msra.mxu0 %v5047
    %v5049 = vand.u32 %v391, 4294901760
    %5050 = vmatprep.subr.mxu0 %v5049
    %v5051 = vand.u32 %v390, 4294901760
    %5052 = vmatpush2.msra.mxu0 %v5051
    %v5053 = vand.u32 %v383, 4294901760
    %5054 = vmatprep.subr.mxu0 %v5053
    %v5055 = vand.u32 %v382, 4294901760
    %5056 = vmatpush2.msra.mxu0 %v5055
    %v5057 = vand.u32 %v375, 4294901760
    %5058 = vmatprep.subr.mxu0 %v5057
    %v5059 = vand.u32 %v374, 4294901760
    %5060 = vmatpush2.msra.mxu0 %v5059
    %v5061 = vand.u32 %v367, 4294901760
    %5062 = vmatprep.subr.mxu0 %v5061
    %v5063 = vand.u32 %v366, 4294901760
    %5064 = vmatpush2.msra.mxu0 %v5063
    %v5065 = vand.u32 %v359, 4294901760
    %5066 = vmatprep.subr.mxu0 %v5065
    %v5067 = vand.u32 %v358, 4294901760
    %5068 = vmatpush2.msra.mxu0 %v5067
    %v5069 = vand.u32 %v351, 4294901760
    %5070 = vmatprep.subr.mxu0 %v5069
    %v5071 = vand.u32 %v350, 4294901760
    %5072 = vmatpush2.msra.mxu0 %v5071
    %v5073 = vand.u32 %v343, 4294901760
    %5074 = vmatprep.subr.mxu0 %v5073
    %v5075 = vand.u32 %v342, 4294901760
    %5076 = vmatpush2.msra.mxu0 %v5075
    %v5077 = vand.u32 %v335, 4294901760
    %5078 = vmatprep.subr.mxu0 %v5077
    %v5079 = vand.u32 %v334, 4294901760
    %5080 = vmatpush2.msra.mxu0 %v5079
    %v5081 = vand.u32 %v327, 4294901760
    %5082 = vmatprep.subr.mxu0 %v5081
    %v5083 = vand.u32 %v326, 4294901760
    %5084 = vmatpush2.msra.mxu0 %v5083
    %v5085 = vand.u32 %v319, 4294901760
    %5086 = vmatprep.subr.mxu0 %v5085
    %v5087 = vand.u32 %v318, 4294901760
    %5088 = vmatpush2.msra.mxu0 %v5087
    %v5089 = vand.u32 %v311, 4294901760
    %5090 = vmatprep.subr.mxu0 %v5089
    %v5091 = vand.u32 %v310, 4294901760
    %5092 = vmatpush2.msra.mxu0 %v5091
    %v5093 = vand.u32 %v303, 4294901760
    %5094 = vmatprep.subr.mxu0 %v5093
    %v5095 = vand.u32 %v302, 4294901760
    %5096 = vmatpush2.msra.mxu0 %v5095
    %v5097 = vand.u32 %v295, 4294901760
    %5098 = vmatprep.subr.mxu0 %v5097
    %v5099 = vand.u32 %v294, 4294901760
    %5100 = vmatpush2.msra.mxu0 %v5099
    %v5101 = vand.u32 %v287, 4294901760
    %5102 = vmatprep.subr.mxu0 %v5101
    %v5103 = vand.u32 %v286, 4294901760
    %5104 = vmatpush2.msra.mxu0 %v5103
    %v5105 = vand.u32 %v279, 4294901760
    %5106 = vmatprep.subr.mxu0 %v5105
    %v5107 = vand.u32 %v278, 4294901760
    %5108 = vmatpush2.msra.mxu0 %v5107
    %v5109 = vand.u32 %v271, 4294901760
    %5110 = vmatprep.subr.mxu0 %v5109
    %v5111 = vand.u32 %v270, 4294901760
    %5112 = vmatpush2.msra.mxu0 %v5111
    %v5113 = vand.u32 %v135, 4294901760
    %v5114 = vsub.f32 %v135, %v5113
    %v5115 = vand.u32 %v5114, 4294901760
    %5116 = vmatprep.mubr.f32.mxu0 %v5115
    %v5117 = vand.u32 %v134, 4294901760
    %v5118 = vsub.f32 %v134, %v5117
    %v5119 = vand.u32 %v5118, 4294901760
    %5120 = vmatmul.mubr.f32.gmra.mxu0 %v5119
    %v5121 = vpop.f32.mrf.mxu0
    %v5122 = vadd.f32 %v4981, %v5121
    %v5123 = vpop.f32.mrf.mxu0
    %v5124 = vadd.f32 %v4983, %v5123
    %5125 = vdwg.mxu0
    %v5126 = vand.u32 %v263, 4294901760
    %v5127 = vsub.f32 %v263, %v5126
    %v5128 = vand.u32 %v5127, 4294901760
    %5129 = vmatprep.subr.mxu0 %v5128
    %v5130 = vand.u32 %v262, 4294901760
    %v5131 = vsub.f32 %v262, %v5130
    %v5132 = vand.u32 %v5131, 4294901760
    %5133 = vmatpush1.msra.mxu0 %v5132
    %v5134 = vand.u32 %v255, 4294901760
    %v5135 = vsub.f32 %v255, %v5134
    %v5136 = vand.u32 %v5135, 4294901760
    %5137 = vmatprep.subr.mxu0 %v5136
    %v5138 = vand.u32 %v254, 4294901760
    %v5139 = vsub.f32 %v254, %v5138
    %v5140 = vand.u32 %v5139, 4294901760
    %5141 = vmatpush1.msra.mxu0 %v5140
    %v5142 = vand.u32 %v247, 4294901760
    %v5143 = vsub.f32 %v247, %v5142
    %v5144 = vand.u32 %v5143, 4294901760
    %5145 = vmatprep.subr.mxu0 %v5144
    %v5146 = vand.u32 %v246, 4294901760
    %v5147 = vsub.f32 %v246, %v5146
    %v5148 = vand.u32 %v5147, 4294901760
    %5149 = vmatpush1.msra.mxu0 %v5148
    %v5150 = vand.u32 %v239, 4294901760
    %v5151 = vsub.f32 %v239, %v5150
    %v5152 = vand.u32 %v5151, 4294901760
    %5153 = vmatprep.subr.mxu0 %v5152
    %v5154 = vand.u32 %v238, 4294901760
    %v5155 = vsub.f32 %v238, %v5154
    %v5156 = vand.u32 %v5155, 4294901760
    %5157 = vmatpush1.msra.mxu0 %v5156
    %v5158 = vand.u32 %v231, 4294901760
    %v5159 = vsub.f32 %v231, %v5158
    %v5160 = vand.u32 %v5159, 4294901760
    %5161 = vmatprep.subr.mxu0 %v5160
    %v5162 = vand.u32 %v230, 4294901760
    %v5163 = vsub.f32 %v230, %v5162
    %v5164 = vand.u32 %v5163, 4294901760
    %5165 = vmatpush1.msra.mxu0 %v5164
    %v5166 = vand.u32 %v223, 4294901760
    %v5167 = vsub.f32 %v223, %v5166
    %v5168 = vand.u32 %v5167, 4294901760
    %5169 = vmatprep.subr.mxu0 %v5168
    %v5170 = vand.u32 %v222, 4294901760
    %v5171 = vsub.f32 %v222, %v5170
    %v5172 = vand.u32 %v5171, 4294901760
    %5173 = vmatpush1.msra.mxu0 %v5172
    %v5174 = vand.u32 %v215, 4294901760
    %v5175 = vsub.f32 %v215, %v5174
    %v5176 = vand.u32 %v5175, 4294901760
    %5177 = vmatprep.subr.mxu0 %v5176
    %v5178 = vand.u32 %v214, 4294901760
    %v5179 = vsub.f32 %v214, %v5178
    %v5180 = vand.u32 %v5179, 4294901760
    %5181 = vmatpush1.msra.mxu0 %v5180
    %v5182 = vand.u32 %v207, 4294901760
    %v5183 = vsub.f32 %v207, %v5182
    %v5184 = vand.u32 %v5183, 4294901760
    %5185 = vmatprep.subr.mxu0 %v5184
    %v5186 = vand.u32 %v206, 4294901760
    %v5187 = vsub.f32 %v206, %v5186
    %v5188 = vand.u32 %v5187, 4294901760
    %5189 = vmatpush1.msra.mxu0 %v5188
    %v5190 = vand.u32 %v199, 4294901760
    %v5191 = vsub.f32 %v199, %v5190
    %v5192 = vand.u32 %v5191, 4294901760
    %5193 = vmatprep.subr.mxu0 %v5192
    %v5194 = vand.u32 %v198, 4294901760
    %v5195 = vsub.f32 %v198, %v5194
    %v5196 = vand.u32 %v5195, 4294901760
    %5197 = vmatpush1.msra.mxu0 %v5196
    %v5198 = vand.u32 %v191, 4294901760
    %v5199 = vsub.f32 %v191, %v5198
    %v5200 = vand.u32 %v5199, 4294901760
    %5201 = vmatprep.subr.mxu0 %v5200
    %v5202 = vand.u32 %v190, 4294901760
    %v5203 = vsub.f32 %v190, %v5202
    %v5204 = vand.u32 %v5203, 4294901760
    %5205 = vmatpush1.msra.mxu0 %v5204
    %v5206 = vand.u32 %v183, 4294901760
    %v5207 = vsub.f32 %v183, %v5206
    %v5208 = vand.u32 %v5207, 4294901760
    %5209 = vmatprep.subr.mxu0 %v5208
    %v5210 = vand.u32 %v182, 4294901760
    %v5211 = vsub.f32 %v182, %v5210
    %v5212 = vand.u32 %v5211, 4294901760
    %5213 = vmatpush1.msra.mxu0 %v5212
    %v5214 = vand.u32 %v175, 4294901760
    %v5215 = vsub.f32 %v175, %v5214
    %v5216 = vand.u32 %v5215, 4294901760
    %5217 = vmatprep.subr.mxu0 %v5216
    %v5218 = vand.u32 %v174, 4294901760
    %v5219 = vsub.f32 %v174, %v5218
    %v5220 = vand.u32 %v5219, 4294901760
    %5221 = vmatpush1.msra.mxu0 %v5220
    %v5222 = vand.u32 %v167, 4294901760
    %v5223 = vsub.f32 %v167, %v5222
    %v5224 = vand.u32 %v5223, 4294901760
    %5225 = vmatprep.subr.mxu0 %v5224
    %v5226 = vand.u32 %v166, 4294901760
    %v5227 = vsub.f32 %v166, %v5226
    %v5228 = vand.u32 %v5227, 4294901760
    %5229 = vmatpush1.msra.mxu0 %v5228
    %v5230 = vand.u32 %v159, 4294901760
    %v5231 = vsub.f32 %v159, %v5230
    %v5232 = vand.u32 %v5231, 4294901760
    %5233 = vmatprep.subr.mxu0 %v5232
    %v5234 = vand.u32 %v158, 4294901760
    %v5235 = vsub.f32 %v158, %v5234
    %v5236 = vand.u32 %v5235, 4294901760
    %5237 = vmatpush1.msra.mxu0 %v5236
    %v5238 = vand.u32 %v151, 4294901760
    %v5239 = vsub.f32 %v151, %v5238
    %v5240 = vand.u32 %v5239, 4294901760
    %5241 = vmatprep.subr.mxu0 %v5240
    %v5242 = vand.u32 %v150, 4294901760
    %v5243 = vsub.f32 %v150, %v5242
    %v5244 = vand.u32 %v5243, 4294901760
    %5245 = vmatpush1.msra.mxu0 %v5244
    %v5246 = vand.u32 %v143, 4294901760
    %v5247 = vsub.f32 %v143, %v5246
    %v5248 = vand.u32 %v5247, 4294901760
    %5249 = vmatprep.subr.mxu0 %v5248
    %v5250 = vand.u32 %v142, 4294901760
    %v5251 = vsub.f32 %v142, %v5250
    %v5252 = vand.u32 %v5251, 4294901760
    %5253 = vmatpush1.msra.mxu0 %v5252
    %v5254 = vand.u32 %v391, 4294901760
    %v5255 = vsub.f32 %v391, %v5254
    %v5256 = vand.u32 %v5255, 4294901760
    %5257 = vmatprep.subr.mxu0 %v5256
    %v5258 = vand.u32 %v390, 4294901760
    %v5259 = vsub.f32 %v390, %v5258
    %v5260 = vand.u32 %v5259, 4294901760
    %5261 = vmatpush2.msra.mxu0 %v5260
    %v5262 = vand.u32 %v383, 4294901760
    %v5263 = vsub.f32 %v383, %v5262
    %v5264 = vand.u32 %v5263, 4294901760
    %5265 = vmatprep.subr.mxu0 %v5264
    %v5266 = vand.u32 %v382, 4294901760
    %v5267 = vsub.f32 %v382, %v5266
    %v5268 = vand.u32 %v5267, 4294901760
    %5269 = vmatpush2.msra.mxu0 %v5268
    %v5270 = vand.u32 %v375, 4294901760
    %v5271 = vsub.f32 %v375, %v5270
    %v5272 = vand.u32 %v5271, 4294901760
    %5273 = vmatprep.subr.mxu0 %v5272
    %v5274 = vand.u32 %v374, 4294901760
    %v5275 = vsub.f32 %v374, %v5274
    %v5276 = vand.u32 %v5275, 4294901760
    %5277 = vmatpush2.msra.mxu0 %v5276
    %v5278 = vand.u32 %v367, 4294901760
    %v5279 = vsub.f32 %v367, %v5278
    %v5280 = vand.u32 %v5279, 4294901760
    %5281 = vmatprep.subr.mxu0 %v5280
    %v5282 = vand.u32 %v366, 4294901760
    %v5283 = vsub.f32 %v366, %v5282
    %v5284 = vand.u32 %v5283, 4294901760
    %5285 = vmatpush2.msra.mxu0 %v5284
    %v5286 = vand.u32 %v359, 4294901760
    %v5287 = vsub.f32 %v359, %v5286
    %v5288 = vand.u32 %v5287, 4294901760
    %5289 = vmatprep.subr.mxu0 %v5288
    %v5290 = vand.u32 %v358, 4294901760
    %v5291 = vsub.f32 %v358, %v5290
    %v5292 = vand.u32 %v5291, 4294901760
    %5293 = vmatpush2.msra.mxu0 %v5292
    %v5294 = vand.u32 %v351, 4294901760
    %v5295 = vsub.f32 %v351, %v5294
    %v5296 = vand.u32 %v5295, 4294901760
    %5297 = vmatprep.subr.mxu0 %v5296
    %v5298 = vand.u32 %v350, 4294901760
    %v5299 = vsub.f32 %v350, %v5298
    %v5300 = vand.u32 %v5299, 4294901760
    %5301 = vmatpush2.msra.mxu0 %v5300
    %v5302 = vand.u32 %v343, 4294901760
    %v5303 = vsub.f32 %v343, %v5302
    %v5304 = vand.u32 %v5303, 4294901760
    %5305 = vmatprep.subr.mxu0 %v5304
    %v5306 = vand.u32 %v342, 4294901760
    %v5307 = vsub.f32 %v342, %v5306
    %v5308 = vand.u32 %v5307, 4294901760
    %5309 = vmatpush2.msra.mxu0 %v5308
    %v5310 = vand.u32 %v335, 4294901760
    %v5311 = vsub.f32 %v335, %v5310
    %v5312 = vand.u32 %v5311, 4294901760
    %5313 = vmatprep.subr.mxu0 %v5312
    %v5314 = vand.u32 %v334, 4294901760
    %v5315 = vsub.f32 %v334, %v5314
    %v5316 = vand.u32 %v5315, 4294901760
    %5317 = vmatpush2.msra.mxu0 %v5316
    %v5318 = vand.u32 %v327, 4294901760
    %v5319 = vsub.f32 %v327, %v5318
    %v5320 = vand.u32 %v5319, 4294901760
    %5321 = vmatprep.subr.mxu0 %v5320
    %v5322 = vand.u32 %v326, 4294901760
    %v5323 = vsub.f32 %v326, %v5322
    %v5324 = vand.u32 %v5323, 4294901760
    %5325 = vmatpush2.msra.mxu0 %v5324
    %v5326 = vand.u32 %v319, 4294901760
    %v5327 = vsub.f32 %v319, %v5326
    %v5328 = vand.u32 %v5327, 4294901760
    %5329 = vmatprep.subr.mxu0 %v5328
    %v5330 = vand.u32 %v318, 4294901760
    %v5331 = vsub.f32 %v318, %v5330
    %v5332 = vand.u32 %v5331, 4294901760
    %5333 = vmatpush2.msra.mxu0 %v5332
    %v5334 = vand.u32 %v311, 4294901760
    %v5335 = vsub.f32 %v311, %v5334
    %v5336 = vand.u32 %v5335, 4294901760
    %5337 = vmatprep.subr.mxu0 %v5336
    %v5338 = vand.u32 %v310, 4294901760
    %v5339 = vsub.f32 %v310, %v5338
    %v5340 = vand.u32 %v5339, 4294901760
    %5341 = vmatpush2.msra.mxu0 %v5340
    %v5342 = vand.u32 %v303, 4294901760
    %v5343 = vsub.f32 %v303, %v5342
    %v5344 = vand.u32 %v5343, 4294901760
    %5345 = vmatprep.subr.mxu0 %v5344
    %v5346 = vand.u32 %v302, 4294901760
    %v5347 = vsub.f32 %v302, %v5346
    %v5348 = vand.u32 %v5347, 4294901760
    %5349 = vmatpush2.msra.mxu0 %v5348
    %v5350 = vand.u32 %v295, 4294901760
    %v5351 = vsub.f32 %v295, %v5350
    %v5352 = vand.u32 %v5351, 4294901760
    %5353 = vmatprep.subr.mxu0 %v5352
    %v5354 = vand.u32 %v294, 4294901760
    %v5355 = vsub.f32 %v294, %v5354
    %v5356 = vand.u32 %v5355, 4294901760
    %5357 = vmatpush2.msra.mxu0 %v5356
    %v5358 = vand.u32 %v287, 4294901760
    %v5359 = vsub.f32 %v287, %v5358
    %v5360 = vand.u32 %v5359, 4294901760
    %5361 = vmatprep.subr.mxu0 %v5360
    %v5362 = vand.u32 %v286, 4294901760
    %v5363 = vsub.f32 %v286, %v5362
    %v5364 = vand.u32 %v5363, 4294901760
    %5365 = vmatpush2.msra.mxu0 %v5364
    %v5366 = vand.u32 %v279, 4294901760
    %v5367 = vsub.f32 %v279, %v5366
    %v5368 = vand.u32 %v5367, 4294901760
    %5369 = vmatprep.subr.mxu0 %v5368
    %v5370 = vand.u32 %v278, 4294901760
    %v5371 = vsub.f32 %v278, %v5370
    %v5372 = vand.u32 %v5371, 4294901760
    %5373 = vmatpush2.msra.mxu0 %v5372
    %v5374 = vand.u32 %v271, 4294901760
    %v5375 = vsub.f32 %v271, %v5374
    %v5376 = vand.u32 %v5375, 4294901760
    %5377 = vmatprep.subr.mxu0 %v5376
    %v5378 = vand.u32 %v270, 4294901760
    %v5379 = vsub.f32 %v270, %v5378
    %v5380 = vand.u32 %v5379, 4294901760
    %5381 = vmatpush2.msra.mxu0 %v5380
    %v5382 = vand.u32 %v135, 4294901760
    %5383 = vmatprep.mubr.f32.mxu0 %v5382
    %v5384 = vand.u32 %v134, 4294901760
    %5385 = vmatmul.mubr.f32.gmra.mxu0 %v5384
    %v5386 = vpop.f32.mrf.mxu0
    %v5387 = vadd.f32 %v5122, %v5386
    %v5388 = vpop.f32.mrf.mxu0
    %v5389 = vadd.f32 %v5124, %v5388
    %5390 = vdwg.mxu0
    %v5391 = vand.u32 %v263, 4294901760
    %5392 = vmatprep.subr.mxu0 %v5391
    %v5393 = vand.u32 %v262, 4294901760
    %5394 = vmatpush1.msra.mxu0 %v5393
    %v5395 = vand.u32 %v255, 4294901760
    %5396 = vmatprep.subr.mxu0 %v5395
    %v5397 = vand.u32 %v254, 4294901760
    %5398 = vmatpush1.msra.mxu0 %v5397
    %v5399 = vand.u32 %v247, 4294901760
    %5400 = vmatprep.subr.mxu0 %v5399
    %v5401 = vand.u32 %v246, 4294901760
    %5402 = vmatpush1.msra.mxu0 %v5401
    %v5403 = vand.u32 %v239, 4294901760
    %5404 = vmatprep.subr.mxu0 %v5403
    %v5405 = vand.u32 %v238, 4294901760
    %5406 = vmatpush1.msra.mxu0 %v5405
    %v5407 = vand.u32 %v231, 4294901760
    %5408 = vmatprep.subr.mxu0 %v5407
    %v5409 = vand.u32 %v230, 4294901760
    %5410 = vmatpush1.msra.mxu0 %v5409
    %v5411 = vand.u32 %v223, 4294901760
    %5412 = vmatprep.subr.mxu0 %v5411
    %v5413 = vand.u32 %v222, 4294901760
    %5414 = vmatpush1.msra.mxu0 %v5413
    %v5415 = vand.u32 %v215, 4294901760
    %5416 = vmatprep.subr.mxu0 %v5415
    %v5417 = vand.u32 %v214, 4294901760
    %5418 = vmatpush1.msra.mxu0 %v5417
    %v5419 = vand.u32 %v207, 4294901760
    %5420 = vmatprep.subr.mxu0 %v5419
    %v5421 = vand.u32 %v206, 4294901760
    %5422 = vmatpush1.msra.mxu0 %v5421
    %v5423 = vand.u32 %v199, 4294901760
    %5424 = vmatprep.subr.mxu0 %v5423
    %v5425 = vand.u32 %v198, 4294901760
    %5426 = vmatpush1.msra.mxu0 %v5425
    %v5427 = vand.u32 %v191, 4294901760
    %5428 = vmatprep.subr.mxu0 %v5427
    %v5429 = vand.u32 %v190, 4294901760
    %5430 = vmatpush1.msra.mxu0 %v5429
    %v5431 = vand.u32 %v183, 4294901760
    %5432 = vmatprep.subr.mxu0 %v5431
    %v5433 = vand.u32 %v182, 4294901760
    %5434 = vmatpush1.msra.mxu0 %v5433
    %v5435 = vand.u32 %v175, 4294901760
    %5436 = vmatprep.subr.mxu0 %v5435
    %v5437 = vand.u32 %v174, 4294901760
    %5438 = vmatpush1.msra.mxu0 %v5437
    %v5439 = vand.u32 %v167, 4294901760
    %5440 = vmatprep.subr.mxu0 %v5439
    %v5441 = vand.u32 %v166, 4294901760
    %5442 = vmatpush1.msra.mxu0 %v5441
    %v5443 = vand.u32 %v159, 4294901760
    %5444 = vmatprep.subr.mxu0 %v5443
    %v5445 = vand.u32 %v158, 4294901760
    %5446 = vmatpush1.msra.mxu0 %v5445
    %v5447 = vand.u32 %v151, 4294901760
    %5448 = vmatprep.subr.mxu0 %v5447
    %v5449 = vand.u32 %v150, 4294901760
    %5450 = vmatpush1.msra.mxu0 %v5449
    %v5451 = vand.u32 %v143, 4294901760
    %5452 = vmatprep.subr.mxu0 %v5451
    %v5453 = vand.u32 %v142, 4294901760
    %5454 = vmatpush1.msra.mxu0 %v5453
    %v5455 = vand.u32 %v391, 4294901760
    %5456 = vmatprep.subr.mxu0 %v5455
    %v5457 = vand.u32 %v390, 4294901760
    %5458 = vmatpush2.msra.mxu0 %v5457
    %v5459 = vand.u32 %v383, 4294901760
    %5460 = vmatprep.subr.mxu0 %v5459
    %v5461 = vand.u32 %v382, 4294901760
    %5462 = vmatpush2.msra.mxu0 %v5461
    %v5463 = vand.u32 %v375, 4294901760
    %5464 = vmatprep.subr.mxu0 %v5463
    %v5465 = vand.u32 %v374, 4294901760
    %5466 = vmatpush2.msra.mxu0 %v5465
    %v5467 = vand.u32 %v367, 4294901760
    %5468 = vmatprep.subr.mxu0 %v5467
    %v5469 = vand.u32 %v366, 4294901760
    %5470 = vmatpush2.msra.mxu0 %v5469
    %v5471 = vand.u32 %v359, 4294901760
    %5472 = vmatprep.subr.mxu0 %v5471
    %v5473 = vand.u32 %v358, 4294901760
    %5474 = vmatpush2.msra.mxu0 %v5473
    %v5475 = vand.u32 %v351, 4294901760
    %5476 = vmatprep.subr.mxu0 %v5475
    %v5477 = vand.u32 %v350, 4294901760
    %5478 = vmatpush2.msra.mxu0 %v5477
    %v5479 = vand.u32 %v343, 4294901760
    %5480 = vmatprep.subr.mxu0 %v5479
    %v5481 = vand.u32 %v342, 4294901760
    %5482 = vmatpush2.msra.mxu0 %v5481
    %v5483 = vand.u32 %v335, 4294901760
    %5484 = vmatprep.subr.mxu0 %v5483
    %v5485 = vand.u32 %v334, 4294901760
    %5486 = vmatpush2.msra.mxu0 %v5485
    %v5487 = vand.u32 %v327, 4294901760
    %5488 = vmatprep.subr.mxu0 %v5487
    %v5489 = vand.u32 %v326, 4294901760
    %5490 = vmatpush2.msra.mxu0 %v5489
    %v5491 = vand.u32 %v319, 4294901760
    %5492 = vmatprep.subr.mxu0 %v5491
    %v5493 = vand.u32 %v318, 4294901760
    %5494 = vmatpush2.msra.mxu0 %v5493
    %v5495 = vand.u32 %v311, 4294901760
    %5496 = vmatprep.subr.mxu0 %v5495
    %v5497 = vand.u32 %v310, 4294901760
    %5498 = vmatpush2.msra.mxu0 %v5497
    %v5499 = vand.u32 %v303, 4294901760
    %5500 = vmatprep.subr.mxu0 %v5499
    %v5501 = vand.u32 %v302, 4294901760
    %5502 = vmatpush2.msra.mxu0 %v5501
    %v5503 = vand.u32 %v295, 4294901760
    %5504 = vmatprep.subr.mxu0 %v5503
    %v5505 = vand.u32 %v294, 4294901760
    %5506 = vmatpush2.msra.mxu0 %v5505
    %v5507 = vand.u32 %v287, 4294901760
    %5508 = vmatprep.subr.mxu0 %v5507
    %v5509 = vand.u32 %v286, 4294901760
    %5510 = vmatpush2.msra.mxu0 %v5509
    %v5511 = vand.u32 %v279, 4294901760
    %5512 = vmatprep.subr.mxu0 %v5511
    %v5513 = vand.u32 %v278, 4294901760
    %5514 = vmatpush2.msra.mxu0 %v5513
    %v5515 = vand.u32 %v271, 4294901760
    %5516 = vmatprep.subr.mxu0 %v5515
    %v5517 = vand.u32 %v270, 4294901760
    %5518 = vmatpush2.msra.mxu0 %v5517
    %v5519 = vand.u32 %v135, 4294901760
    %5520 = vmatprep.mubr.f32.mxu0 %v5519
    %v5521 = vand.u32 %v134, 4294901760
    %5522 = vmatmul.mubr.f32.gmra.mxu0 %v5521
    %v5523 = vpop.f32.mrf.mxu0
    %v5524 = vadd.f32 %v5387, %v5523
    %v5525 = vpop.f32.mrf.mxu0
    %v5526 = vadd.f32 %v5389, %v5525
    %5527 = vdwg.mxu0
    %vm5528 = vcmask 261120
    %v5530 = vsel %vm5528, %v101, 0
    %5532 = vmatprep.subr.mxu0 0.0
    %5533 = vmatpush1.msra.mxu0 0.0
    %5534 = vmatprep.subr.mxu0 0.0
    %5535 = vmatpush1.msra.mxu0 0.0
    %5536 = vmatprep.subr.mxu0 0.0
    %5537 = vmatpush1.msra.mxu0 0.0
    %5538 = vmatprep.subr.mxu0 0.0
    %5539 = vmatpush1.msra.mxu0 0.0
    %5540 = vmatprep.subr.mxu0 0.0
    %5541 = vmatpush1.msra.mxu0 0.0
    %5542 = vmatprep.subr.mxu0 0.0
    %5543 = vmatpush1.msra.mxu0 0.0
    %5544 = vmatprep.subr.mxu0 0.0
    %5545 = vmatpush1.msra.mxu0 0.0
    %5546 = vmatprep.subr.mxu0 0.0
    %5547 = vmatpush1.msra.mxu0 0.0
    %5548 = vmatprep.subr.mxu0 0.0
    %5549 = vmatpush1.msra.mxu0 0.0
    %5550 = vmatprep.subr.mxu0 0.0
    %5551 = vmatpush1.msra.mxu0 0.0
    %5552 = vmatprep.subr.mxu0 0.0
    %5553 = vmatpush1.msra.mxu0 0.0
    %5554 = vmatprep.subr.mxu0 0.0
    %5555 = vmatpush1.msra.mxu0 0.0
    %v5556 = vand.u32 %v127, 4294901760
    %5557 = vmatprep.subr.mxu0 %v5556
    %v5558 = vand.u32 %v126, 4294901760
    %5559 = vmatpush1.msra.mxu0 %v5558
    %v5560 = vand.u32 %v119, 4294901760
    %5561 = vmatprep.subr.mxu0 %v5560
    %v5562 = vand.u32 %v118, 4294901760
    %5563 = vmatpush1.msra.mxu0 %v5562
    %v5564 = vand.u32 %v111, 4294901760
    %5565 = vmatprep.subr.mxu0 %v5564
    %v5566 = vand.u32 %v110, 4294901760
    %5567 = vmatpush1.msra.mxu0 %v5566
    %v5568 = vand.u32 %v103, 4294901760
    %5569 = vmatprep.subr.mxu0 %v5568
    %v5570 = vand.u32 %v102, 4294901760
    %5571 = vmatpush1.msra.mxu0 %v5570
    %5572 = vmatprep.subr.mxu0 0.0
    %5573 = vmatpush2.msra.mxu0 0.0
    %5574 = vmatprep.subr.mxu0 0.0
    %5575 = vmatpush2.msra.mxu0 0.0
    %5576 = vmatprep.subr.mxu0 0.0
    %5577 = vmatpush2.msra.mxu0 0.0
    %5578 = vmatprep.subr.mxu0 0.0
    %5579 = vmatpush2.msra.mxu0 0.0
    %5580 = vmatprep.subr.mxu0 0.0
    %5581 = vmatpush2.msra.mxu0 0.0
    %5582 = vmatprep.subr.mxu0 0.0
    %5583 = vmatpush2.msra.mxu0 0.0
    %5584 = vmatprep.subr.mxu0 0.0
    %5585 = vmatpush2.msra.mxu0 0.0
    %5586 = vmatprep.subr.mxu0 0.0
    %5587 = vmatpush2.msra.mxu0 0.0
    %5588 = vmatprep.subr.mxu0 0.0
    %5589 = vmatpush2.msra.mxu0 0.0
    %5590 = vmatprep.subr.mxu0 0.0
    %5591 = vmatpush2.msra.mxu0 0.0
    %5592 = vmatprep.subr.mxu0 0.0
    %5593 = vmatpush2.msra.mxu0 0.0
    %5594 = vmatprep.subr.mxu0 0.0
    %5595 = vmatpush2.msra.mxu0 0.0
    %5596 = vmatprep.subr.mxu0 0.0
    %5597 = vmatpush2.msra.mxu0 0.0
    %5598 = vmatprep.subr.mxu0 0.0
    %5599 = vmatpush2.msra.mxu0 0.0
    %5600 = vmatprep.subr.mxu0 0.0
    %5601 = vmatpush2.msra.mxu0 0.0
    %5602 = vmatprep.subr.mxu0 0.0
    %5603 = vmatpush2.msra.mxu0 0.0
    %5604 = vmatprep.mubr.f32.mxu0 0.0
    %v5605 = vand.u32 %v5530, 4294901760
    %v5606 = vsub.f32 %v5530, %v5605
    %v5607 = vand.u32 %v5606, 4294901760
    %v5608 = vsub.f32 %v5606, %v5607
    %v5609 = vand.u32 %v5608, 4294901760
    %5610 = vmatmul.mubr.f32.gmra.mxu0 %v5609
    %v5611 = vpop.f32.mrf.mxu0
    %v5612 = vadd.f32 %v1672, %v5611
    %v5613 = vpop.f32.mrf.mxu0
    %v5614 = vadd.f32 %v1674, %v5613
    %5615 = vdwg.mxu0
    %5616 = vmatprep.subr.mxu0 0.0
    %5617 = vmatpush1.msra.mxu0 0.0
    %5618 = vmatprep.subr.mxu0 0.0
    %5619 = vmatpush1.msra.mxu0 0.0
    %5620 = vmatprep.subr.mxu0 0.0
    %5621 = vmatpush1.msra.mxu0 0.0
    %5622 = vmatprep.subr.mxu0 0.0
    %5623 = vmatpush1.msra.mxu0 0.0
    %5624 = vmatprep.subr.mxu0 0.0
    %5625 = vmatpush1.msra.mxu0 0.0
    %5626 = vmatprep.subr.mxu0 0.0
    %5627 = vmatpush1.msra.mxu0 0.0
    %5628 = vmatprep.subr.mxu0 0.0
    %5629 = vmatpush1.msra.mxu0 0.0
    %5630 = vmatprep.subr.mxu0 0.0
    %5631 = vmatpush1.msra.mxu0 0.0
    %5632 = vmatprep.subr.mxu0 0.0
    %5633 = vmatpush1.msra.mxu0 0.0
    %5634 = vmatprep.subr.mxu0 0.0
    %5635 = vmatpush1.msra.mxu0 0.0
    %5636 = vmatprep.subr.mxu0 0.0
    %5637 = vmatpush1.msra.mxu0 0.0
    %5638 = vmatprep.subr.mxu0 0.0
    %5639 = vmatpush1.msra.mxu0 0.0
    %v5640 = vand.u32 %v127, 4294901760
    %v5641 = vsub.f32 %v127, %v5640
    %v5642 = vand.u32 %v5641, 4294901760
    %v5643 = vsub.f32 %v5641, %v5642
    %v5644 = vand.u32 %v5643, 4294901760
    %5645 = vmatprep.subr.mxu0 %v5644
    %v5646 = vand.u32 %v126, 4294901760
    %v5647 = vsub.f32 %v126, %v5646
    %v5648 = vand.u32 %v5647, 4294901760
    %v5649 = vsub.f32 %v5647, %v5648
    %v5650 = vand.u32 %v5649, 4294901760
    %5651 = vmatpush1.msra.mxu0 %v5650
    %v5652 = vand.u32 %v119, 4294901760
    %v5653 = vsub.f32 %v119, %v5652
    %v5654 = vand.u32 %v5653, 4294901760
    %v5655 = vsub.f32 %v5653, %v5654
    %v5656 = vand.u32 %v5655, 4294901760
    %5657 = vmatprep.subr.mxu0 %v5656
    %v5658 = vand.u32 %v118, 4294901760
    %v5659 = vsub.f32 %v118, %v5658
    %v5660 = vand.u32 %v5659, 4294901760
    %v5661 = vsub.f32 %v5659, %v5660
    %v5662 = vand.u32 %v5661, 4294901760
    %5663 = vmatpush1.msra.mxu0 %v5662
    %v5664 = vand.u32 %v111, 4294901760
    %v5665 = vsub.f32 %v111, %v5664
    %v5666 = vand.u32 %v5665, 4294901760
    %v5667 = vsub.f32 %v5665, %v5666
    %v5668 = vand.u32 %v5667, 4294901760
    %5669 = vmatprep.subr.mxu0 %v5668
    %v5670 = vand.u32 %v110, 4294901760
    %v5671 = vsub.f32 %v110, %v5670
    %v5672 = vand.u32 %v5671, 4294901760
    %v5673 = vsub.f32 %v5671, %v5672
    %v5674 = vand.u32 %v5673, 4294901760
    %5675 = vmatpush1.msra.mxu0 %v5674
    %v5676 = vand.u32 %v103, 4294901760
    %v5677 = vsub.f32 %v103, %v5676
    %v5678 = vand.u32 %v5677, 4294901760
    %v5679 = vsub.f32 %v5677, %v5678
    %v5680 = vand.u32 %v5679, 4294901760
    %5681 = vmatprep.subr.mxu0 %v5680
    %v5682 = vand.u32 %v102, 4294901760
    %v5683 = vsub.f32 %v102, %v5682
    %v5684 = vand.u32 %v5683, 4294901760
    %v5685 = vsub.f32 %v5683, %v5684
    %v5686 = vand.u32 %v5685, 4294901760
    %5687 = vmatpush1.msra.mxu0 %v5686
    %5688 = vmatprep.subr.mxu0 0.0
    %5689 = vmatpush2.msra.mxu0 0.0
    %5690 = vmatprep.subr.mxu0 0.0
    %5691 = vmatpush2.msra.mxu0 0.0
    %5692 = vmatprep.subr.mxu0 0.0
    %5693 = vmatpush2.msra.mxu0 0.0
    %5694 = vmatprep.subr.mxu0 0.0
    %5695 = vmatpush2.msra.mxu0 0.0
    %5696 = vmatprep.subr.mxu0 0.0
    %5697 = vmatpush2.msra.mxu0 0.0
    %5698 = vmatprep.subr.mxu0 0.0
    %5699 = vmatpush2.msra.mxu0 0.0
    %5700 = vmatprep.subr.mxu0 0.0
    %5701 = vmatpush2.msra.mxu0 0.0
    %5702 = vmatprep.subr.mxu0 0.0
    %5703 = vmatpush2.msra.mxu0 0.0
    %5704 = vmatprep.subr.mxu0 0.0
    %5705 = vmatpush2.msra.mxu0 0.0
    %5706 = vmatprep.subr.mxu0 0.0
    %5707 = vmatpush2.msra.mxu0 0.0
    %5708 = vmatprep.subr.mxu0 0.0
    %5709 = vmatpush2.msra.mxu0 0.0
    %5710 = vmatprep.subr.mxu0 0.0
    %5711 = vmatpush2.msra.mxu0 0.0
    %5712 = vmatprep.subr.mxu0 0.0
    %5713 = vmatpush2.msra.mxu0 0.0
    %5714 = vmatprep.subr.mxu0 0.0
    %5715 = vmatpush2.msra.mxu0 0.0
    %5716 = vmatprep.subr.mxu0 0.0
    %5717 = vmatpush2.msra.mxu0 0.0
    %5718 = vmatprep.subr.mxu0 0.0
    %5719 = vmatpush2.msra.mxu0 0.0
    %5720 = vmatprep.mubr.f32.mxu0 0.0
    %v5721 = vand.u32 %v5530, 4294901760
    %5722 = vmatmul.mubr.f32.gmra.mxu0 %v5721
    %v5723 = vpop.f32.mrf.mxu0
    %v5724 = vadd.f32 %v5612, %v5723
    %v5725 = vpop.f32.mrf.mxu0
    %v5726 = vadd.f32 %v5614, %v5725
    %5727 = vdwg.mxu0
    %5728 = vmatprep.subr.mxu0 0.0
    %5729 = vmatpush1.msra.mxu0 0.0
    %5730 = vmatprep.subr.mxu0 0.0
    %5731 = vmatpush1.msra.mxu0 0.0
    %5732 = vmatprep.subr.mxu0 0.0
    %5733 = vmatpush1.msra.mxu0 0.0
    %5734 = vmatprep.subr.mxu0 0.0
    %5735 = vmatpush1.msra.mxu0 0.0
    %5736 = vmatprep.subr.mxu0 0.0
    %5737 = vmatpush1.msra.mxu0 0.0
    %5738 = vmatprep.subr.mxu0 0.0
    %5739 = vmatpush1.msra.mxu0 0.0
    %5740 = vmatprep.subr.mxu0 0.0
    %5741 = vmatpush1.msra.mxu0 0.0
    %5742 = vmatprep.subr.mxu0 0.0
    %5743 = vmatpush1.msra.mxu0 0.0
    %5744 = vmatprep.subr.mxu0 0.0
    %5745 = vmatpush1.msra.mxu0 0.0
    %5746 = vmatprep.subr.mxu0 0.0
    %5747 = vmatpush1.msra.mxu0 0.0
    %5748 = vmatprep.subr.mxu0 0.0
    %5749 = vmatpush1.msra.mxu0 0.0
    %5750 = vmatprep.subr.mxu0 0.0
    %5751 = vmatpush1.msra.mxu0 0.0
    %v5752 = vand.u32 %v127, 4294901760
    %v5753 = vsub.f32 %v127, %v5752
    %5754 = vmatprep.subr.mxu0 %v5753
    %v5755 = vand.u32 %v126, 4294901760
    %v5756 = vsub.f32 %v126, %v5755
    %5757 = vmatpush1.msra.mxu0 %v5756
    %v5758 = vand.u32 %v119, 4294901760
    %v5759 = vsub.f32 %v119, %v5758
    %5760 = vmatprep.subr.mxu0 %v5759
    %v5761 = vand.u32 %v118, 4294901760
    %v5762 = vsub.f32 %v118, %v5761
    %5763 = vmatpush1.msra.mxu0 %v5762
    %v5764 = vand.u32 %v111, 4294901760
    %v5765 = vsub.f32 %v111, %v5764
    %5766 = vmatprep.subr.mxu0 %v5765
    %v5767 = vand.u32 %v110, 4294901760
    %v5768 = vsub.f32 %v110, %v5767
    %5769 = vmatpush1.msra.mxu0 %v5768
    %v5770 = vand.u32 %v103, 4294901760
    %v5771 = vsub.f32 %v103, %v5770
    %5772 = vmatprep.subr.mxu0 %v5771
    %v5773 = vand.u32 %v102, 4294901760
    %v5774 = vsub.f32 %v102, %v5773
    %5775 = vmatpush1.msra.mxu0 %v5774
    %5776 = vmatprep.subr.mxu0 0.0
    %5777 = vmatpush2.msra.mxu0 0.0
    %5778 = vmatprep.subr.mxu0 0.0
    %5779 = vmatpush2.msra.mxu0 0.0
    %5780 = vmatprep.subr.mxu0 0.0
    %5781 = vmatpush2.msra.mxu0 0.0
    %5782 = vmatprep.subr.mxu0 0.0
    %5783 = vmatpush2.msra.mxu0 0.0
    %5784 = vmatprep.subr.mxu0 0.0
    %5785 = vmatpush2.msra.mxu0 0.0
    %5786 = vmatprep.subr.mxu0 0.0
    %5787 = vmatpush2.msra.mxu0 0.0
    %5788 = vmatprep.subr.mxu0 0.0
    %5789 = vmatpush2.msra.mxu0 0.0
    %5790 = vmatprep.subr.mxu0 0.0
    %5791 = vmatpush2.msra.mxu0 0.0
    %5792 = vmatprep.subr.mxu0 0.0
    %5793 = vmatpush2.msra.mxu0 0.0
    %5794 = vmatprep.subr.mxu0 0.0
    %5795 = vmatpush2.msra.mxu0 0.0
    %5796 = vmatprep.subr.mxu0 0.0
    %5797 = vmatpush2.msra.mxu0 0.0
    %5798 = vmatprep.subr.mxu0 0.0
    %5799 = vmatpush2.msra.mxu0 0.0
    %5800 = vmatprep.subr.mxu0 0.0
    %5801 = vmatpush2.msra.mxu0 0.0
    %5802 = vmatprep.subr.mxu0 0.0
    %5803 = vmatpush2.msra.mxu0 0.0
    %5804 = vmatprep.subr.mxu0 0.0
    %5805 = vmatpush2.msra.mxu0 0.0
    %5806 = vmatprep.subr.mxu0 0.0
    %5807 = vmatpush2.msra.mxu0 0.0
    %5808 = vmatprep.mubr.f32.mxu0 0.0
    %v5809 = vand.u32 %v5530, 4294901760
    %v5810 = vsub.f32 %v5530, %v5809
    %5811 = vmatmul.mubr.f32.gmra.mxu0 %v5810
    %v5812 = vpop.f32.mrf.mxu0
    %v5813 = vadd.f32 %v5724, %v5812
    %v5814 = vpop.f32.mrf.mxu0
    %v5815 = vadd.f32 %v5726, %v5814
    %5816 = vdwg.mxu0
    %5817 = vmatprep.subr.mxu0 0.0
    %5818 = vmatpush1.msra.mxu0 0.0
    %5819 = vmatprep.subr.mxu0 0.0
    %5820 = vmatpush1.msra.mxu0 0.0
    %5821 = vmatprep.subr.mxu0 0.0
    %5822 = vmatpush1.msra.mxu0 0.0
    %5823 = vmatprep.subr.mxu0 0.0
    %5824 = vmatpush1.msra.mxu0 0.0
    %5825 = vmatprep.subr.mxu0 0.0
    %5826 = vmatpush1.msra.mxu0 0.0
    %5827 = vmatprep.subr.mxu0 0.0
    %5828 = vmatpush1.msra.mxu0 0.0
    %5829 = vmatprep.subr.mxu0 0.0
    %5830 = vmatpush1.msra.mxu0 0.0
    %5831 = vmatprep.subr.mxu0 0.0
    %5832 = vmatpush1.msra.mxu0 0.0
    %5833 = vmatprep.subr.mxu0 0.0
    %5834 = vmatpush1.msra.mxu0 0.0
    %5835 = vmatprep.subr.mxu0 0.0
    %5836 = vmatpush1.msra.mxu0 0.0
    %5837 = vmatprep.subr.mxu0 0.0
    %5838 = vmatpush1.msra.mxu0 0.0
    %5839 = vmatprep.subr.mxu0 0.0
    %5840 = vmatpush1.msra.mxu0 0.0
    %v5841 = vand.u32 %v127, 4294901760
    %5842 = vmatprep.subr.mxu0 %v5841
    %v5843 = vand.u32 %v126, 4294901760
    %5844 = vmatpush1.msra.mxu0 %v5843
    %v5845 = vand.u32 %v119, 4294901760
    %5846 = vmatprep.subr.mxu0 %v5845
    %v5847 = vand.u32 %v118, 4294901760
    %5848 = vmatpush1.msra.mxu0 %v5847
    %v5849 = vand.u32 %v111, 4294901760
    %5850 = vmatprep.subr.mxu0 %v5849
    %v5851 = vand.u32 %v110, 4294901760
    %5852 = vmatpush1.msra.mxu0 %v5851
    %v5853 = vand.u32 %v103, 4294901760
    %5854 = vmatprep.subr.mxu0 %v5853
    %v5855 = vand.u32 %v102, 4294901760
    %5856 = vmatpush1.msra.mxu0 %v5855
    %5857 = vmatprep.subr.mxu0 0.0
    %5858 = vmatpush2.msra.mxu0 0.0
    %5859 = vmatprep.subr.mxu0 0.0
    %5860 = vmatpush2.msra.mxu0 0.0
    %5861 = vmatprep.subr.mxu0 0.0
    %5862 = vmatpush2.msra.mxu0 0.0
    %5863 = vmatprep.subr.mxu0 0.0
    %5864 = vmatpush2.msra.mxu0 0.0
    %5865 = vmatprep.subr.mxu0 0.0
    %5866 = vmatpush2.msra.mxu0 0.0
    %5867 = vmatprep.subr.mxu0 0.0
    %5868 = vmatpush2.msra.mxu0 0.0
    %5869 = vmatprep.subr.mxu0 0.0
    %5870 = vmatpush2.msra.mxu0 0.0
    %5871 = vmatprep.subr.mxu0 0.0
    %5872 = vmatpush2.msra.mxu0 0.0
    %5873 = vmatprep.subr.mxu0 0.0
    %5874 = vmatpush2.msra.mxu0 0.0
    %5875 = vmatprep.subr.mxu0 0.0
    %5876 = vmatpush2.msra.mxu0 0.0
    %5877 = vmatprep.subr.mxu0 0.0
    %5878 = vmatpush2.msra.mxu0 0.0
    %5879 = vmatprep.subr.mxu0 0.0
    %5880 = vmatpush2.msra.mxu0 0.0
    %5881 = vmatprep.subr.mxu0 0.0
    %5882 = vmatpush2.msra.mxu0 0.0
    %5883 = vmatprep.subr.mxu0 0.0
    %5884 = vmatpush2.msra.mxu0 0.0
    %5885 = vmatprep.subr.mxu0 0.0
    %5886 = vmatpush2.msra.mxu0 0.0
    %5887 = vmatprep.subr.mxu0 0.0
    %5888 = vmatpush2.msra.mxu0 0.0
    %5889 = vmatprep.mubr.f32.mxu0 0.0
    %v5890 = vand.u32 %v5530, 4294901760
    %v5891 = vsub.f32 %v5530, %v5890
    %v5892 = vand.u32 %v5891, 4294901760
    %5893 = vmatmul.mubr.f32.gmra.mxu0 %v5892
    %v5894 = vpop.f32.mrf.mxu0
    %v5895 = vadd.f32 %v5813, %v5894
    %v5896 = vpop.f32.mrf.mxu0
    %v5897 = vadd.f32 %v5815, %v5896
    %5898 = vdwg.mxu0
    %5899 = vmatprep.subr.mxu0 0.0
    %5900 = vmatpush1.msra.mxu0 0.0
    %5901 = vmatprep.subr.mxu0 0.0
    %5902 = vmatpush1.msra.mxu0 0.0
    %5903 = vmatprep.subr.mxu0 0.0
    %5904 = vmatpush1.msra.mxu0 0.0
    %5905 = vmatprep.subr.mxu0 0.0
    %5906 = vmatpush1.msra.mxu0 0.0
    %5907 = vmatprep.subr.mxu0 0.0
    %5908 = vmatpush1.msra.mxu0 0.0
    %5909 = vmatprep.subr.mxu0 0.0
    %5910 = vmatpush1.msra.mxu0 0.0
    %5911 = vmatprep.subr.mxu0 0.0
    %5912 = vmatpush1.msra.mxu0 0.0
    %5913 = vmatprep.subr.mxu0 0.0
    %5914 = vmatpush1.msra.mxu0 0.0
    %5915 = vmatprep.subr.mxu0 0.0
    %5916 = vmatpush1.msra.mxu0 0.0
    %5917 = vmatprep.subr.mxu0 0.0
    %5918 = vmatpush1.msra.mxu0 0.0
    %5919 = vmatprep.subr.mxu0 0.0
    %5920 = vmatpush1.msra.mxu0 0.0
    %5921 = vmatprep.subr.mxu0 0.0
    %5922 = vmatpush1.msra.mxu0 0.0
    %v5923 = vand.u32 %v127, 4294901760
    %v5924 = vsub.f32 %v127, %v5923
    %v5925 = vand.u32 %v5924, 4294901760
    %5926 = vmatprep.subr.mxu0 %v5925
    %v5927 = vand.u32 %v126, 4294901760
    %v5928 = vsub.f32 %v126, %v5927
    %v5929 = vand.u32 %v5928, 4294901760
    %5930 = vmatpush1.msra.mxu0 %v5929
    %v5931 = vand.u32 %v119, 4294901760
    %v5932 = vsub.f32 %v119, %v5931
    %v5933 = vand.u32 %v5932, 4294901760
    %5934 = vmatprep.subr.mxu0 %v5933
    %v5935 = vand.u32 %v118, 4294901760
    %v5936 = vsub.f32 %v118, %v5935
    %v5937 = vand.u32 %v5936, 4294901760
    %5938 = vmatpush1.msra.mxu0 %v5937
    %v5939 = vand.u32 %v111, 4294901760
    %v5940 = vsub.f32 %v111, %v5939
    %v5941 = vand.u32 %v5940, 4294901760
    %5942 = vmatprep.subr.mxu0 %v5941
    %v5943 = vand.u32 %v110, 4294901760
    %v5944 = vsub.f32 %v110, %v5943
    %v5945 = vand.u32 %v5944, 4294901760
    %5946 = vmatpush1.msra.mxu0 %v5945
    %v5947 = vand.u32 %v103, 4294901760
    %v5948 = vsub.f32 %v103, %v5947
    %v5949 = vand.u32 %v5948, 4294901760
    %5950 = vmatprep.subr.mxu0 %v5949
    %v5951 = vand.u32 %v102, 4294901760
    %v5952 = vsub.f32 %v102, %v5951
    %v5953 = vand.u32 %v5952, 4294901760
    %5954 = vmatpush1.msra.mxu0 %v5953
    %5955 = vmatprep.subr.mxu0 0.0
    %5956 = vmatpush2.msra.mxu0 0.0
    %5957 = vmatprep.subr.mxu0 0.0
    %5958 = vmatpush2.msra.mxu0 0.0
    %5959 = vmatprep.subr.mxu0 0.0
    %5960 = vmatpush2.msra.mxu0 0.0
    %5961 = vmatprep.subr.mxu0 0.0
    %5962 = vmatpush2.msra.mxu0 0.0
    %5963 = vmatprep.subr.mxu0 0.0
    %5964 = vmatpush2.msra.mxu0 0.0
    %5965 = vmatprep.subr.mxu0 0.0
    %5966 = vmatpush2.msra.mxu0 0.0
    %5967 = vmatprep.subr.mxu0 0.0
    %5968 = vmatpush2.msra.mxu0 0.0
    %5969 = vmatprep.subr.mxu0 0.0
    %5970 = vmatpush2.msra.mxu0 0.0
    %5971 = vmatprep.subr.mxu0 0.0
    %5972 = vmatpush2.msra.mxu0 0.0
    %5973 = vmatprep.subr.mxu0 0.0
    %5974 = vmatpush2.msra.mxu0 0.0
    %5975 = vmatprep.subr.mxu0 0.0
    %5976 = vmatpush2.msra.mxu0 0.0
    %5977 = vmatprep.subr.mxu0 0.0
    %5978 = vmatpush2.msra.mxu0 0.0
    %5979 = vmatprep.subr.mxu0 0.0
    %5980 = vmatpush2.msra.mxu0 0.0
    %5981 = vmatprep.subr.mxu0 0.0
    %5982 = vmatpush2.msra.mxu0 0.0
    %5983 = vmatprep.subr.mxu0 0.0
    %5984 = vmatpush2.msra.mxu0 0.0
    %5985 = vmatprep.subr.mxu0 0.0
    %5986 = vmatpush2.msra.mxu0 0.0
    %5987 = vmatprep.mubr.f32.mxu0 0.0
    %v5988 = vand.u32 %v5530, 4294901760
    %5989 = vmatmul.mubr.f32.gmra.mxu0 %v5988
    %v5990 = vpop.f32.mrf.mxu0
    %v5991 = vadd.f32 %v5895, %v5990
    %v5992 = vpop.f32.mrf.mxu0
    %v5993 = vadd.f32 %v5897, %v5992
    %5994 = vdwg.mxu0
    %5995 = vmatprep.subr.mxu0 0.0
    %5996 = vmatpush1.msra.mxu0 0.0
    %5997 = vmatprep.subr.mxu0 0.0
    %5998 = vmatpush1.msra.mxu0 0.0
    %5999 = vmatprep.subr.mxu0 0.0
    %6000 = vmatpush1.msra.mxu0 0.0
    %6001 = vmatprep.subr.mxu0 0.0
    %6002 = vmatpush1.msra.mxu0 0.0
    %6003 = vmatprep.subr.mxu0 0.0
    %6004 = vmatpush1.msra.mxu0 0.0
    %6005 = vmatprep.subr.mxu0 0.0
    %6006 = vmatpush1.msra.mxu0 0.0
    %6007 = vmatprep.subr.mxu0 0.0
    %6008 = vmatpush1.msra.mxu0 0.0
    %6009 = vmatprep.subr.mxu0 0.0
    %6010 = vmatpush1.msra.mxu0 0.0
    %6011 = vmatprep.subr.mxu0 0.0
    %6012 = vmatpush1.msra.mxu0 0.0
    %6013 = vmatprep.subr.mxu0 0.0
    %6014 = vmatpush1.msra.mxu0 0.0
    %6015 = vmatprep.subr.mxu0 0.0
    %6016 = vmatpush1.msra.mxu0 0.0
    %6017 = vmatprep.subr.mxu0 0.0
    %6018 = vmatpush1.msra.mxu0 0.0
    %v6019 = vand.u32 %v127, 4294901760
    %6020 = vmatprep.subr.mxu0 %v6019
    %v6021 = vand.u32 %v126, 4294901760
    %6022 = vmatpush1.msra.mxu0 %v6021
    %v6023 = vand.u32 %v119, 4294901760
    %6024 = vmatprep.subr.mxu0 %v6023
    %v6025 = vand.u32 %v118, 4294901760
    %6026 = vmatpush1.msra.mxu0 %v6025
    %v6027 = vand.u32 %v111, 4294901760
    %6028 = vmatprep.subr.mxu0 %v6027
    %v6029 = vand.u32 %v110, 4294901760
    %6030 = vmatpush1.msra.mxu0 %v6029
    %v6031 = vand.u32 %v103, 4294901760
    %6032 = vmatprep.subr.mxu0 %v6031
    %v6033 = vand.u32 %v102, 4294901760
    %6034 = vmatpush1.msra.mxu0 %v6033
    %6035 = vmatprep.subr.mxu0 0.0
    %6036 = vmatpush2.msra.mxu0 0.0
    %6037 = vmatprep.subr.mxu0 0.0
    %6038 = vmatpush2.msra.mxu0 0.0
    %6039 = vmatprep.subr.mxu0 0.0
    %6040 = vmatpush2.msra.mxu0 0.0
    %6041 = vmatprep.subr.mxu0 0.0
    %6042 = vmatpush2.msra.mxu0 0.0
    %6043 = vmatprep.subr.mxu0 0.0
    %6044 = vmatpush2.msra.mxu0 0.0
    %6045 = vmatprep.subr.mxu0 0.0
    %6046 = vmatpush2.msra.mxu0 0.0
    %6047 = vmatprep.subr.mxu0 0.0
    %6048 = vmatpush2.msra.mxu0 0.0
    %6049 = vmatprep.subr.mxu0 0.0
    %6050 = vmatpush2.msra.mxu0 0.0
    %6051 = vmatprep.subr.mxu0 0.0
    %6052 = vmatpush2.msra.mxu0 0.0
    %6053 = vmatprep.subr.mxu0 0.0
    %6054 = vmatpush2.msra.mxu0 0.0
    %6055 = vmatprep.subr.mxu0 0.0
    %6056 = vmatpush2.msra.mxu0 0.0
    %6057 = vmatprep.subr.mxu0 0.0
    %6058 = vmatpush2.msra.mxu0 0.0
    %6059 = vmatprep.subr.mxu0 0.0
    %6060 = vmatpush2.msra.mxu0 0.0
    %6061 = vmatprep.subr.mxu0 0.0
    %6062 = vmatpush2.msra.mxu0 0.0
    %6063 = vmatprep.subr.mxu0 0.0
    %6064 = vmatpush2.msra.mxu0 0.0
    %6065 = vmatprep.subr.mxu0 0.0
    %6066 = vmatpush2.msra.mxu0 0.0
    %6067 = vmatprep.mubr.f32.mxu0 0.0
    %v6068 = vand.u32 %v5530, 4294901760
    %6069 = vmatmul.mubr.f32.gmra.mxu0 %v6068
    %v6070 = vpop.f32.mrf.mxu0
    %v6071 = vadd.f32 %v5991, %v6070
    %v6072 = vpop.f32.mrf.mxu0
    %v6073 = vadd.f32 %v5993, %v6072
    %6074 = vdwg.mxu0
    %6075 = vmatprep.subr.mxu0 0.0
    %6076 = vmatpush1.msra.mxu0 0.0
    %6077 = vmatprep.subr.mxu0 0.0
    %6078 = vmatpush1.msra.mxu0 0.0
    %6079 = vmatprep.subr.mxu0 0.0
    %6080 = vmatpush1.msra.mxu0 0.0
    %6081 = vmatprep.subr.mxu0 0.0
    %6082 = vmatpush1.msra.mxu0 0.0
    %6083 = vmatprep.subr.mxu0 0.0
    %6084 = vmatpush1.msra.mxu0 0.0
    %6085 = vmatprep.subr.mxu0 0.0
    %6086 = vmatpush1.msra.mxu0 0.0
    %6087 = vmatprep.subr.mxu0 0.0
    %6088 = vmatpush1.msra.mxu0 0.0
    %6089 = vmatprep.subr.mxu0 0.0
    %6090 = vmatpush1.msra.mxu0 0.0
    %6091 = vmatprep.subr.mxu0 0.0
    %6092 = vmatpush1.msra.mxu0 0.0
    %6093 = vmatprep.subr.mxu0 0.0
    %6094 = vmatpush1.msra.mxu0 0.0
    %6095 = vmatprep.subr.mxu0 0.0
    %6096 = vmatpush1.msra.mxu0 0.0
    %6097 = vmatprep.subr.mxu0 0.0
    %6098 = vmatpush1.msra.mxu0 0.0
    %v6099 = vand.u32 %v129, 4294901760
    %6100 = vmatprep.subr.mxu0 %v6099
    %v6101 = vand.u32 %v128, 4294901760
    %6102 = vmatpush1.msra.mxu0 %v6101
    %v6103 = vand.u32 %v121, 4294901760
    %6104 = vmatprep.subr.mxu0 %v6103
    %v6105 = vand.u32 %v120, 4294901760
    %6106 = vmatpush1.msra.mxu0 %v6105
    %v6107 = vand.u32 %v113, 4294901760
    %6108 = vmatprep.subr.mxu0 %v6107
    %v6109 = vand.u32 %v112, 4294901760
    %6110 = vmatpush1.msra.mxu0 %v6109
    %v6111 = vand.u32 %v105, 4294901760
    %6112 = vmatprep.subr.mxu0 %v6111
    %v6113 = vand.u32 %v104, 4294901760
    %6114 = vmatpush1.msra.mxu0 %v6113
    %6115 = vmatprep.subr.mxu0 0.0
    %6116 = vmatpush2.msra.mxu0 0.0
    %6117 = vmatprep.subr.mxu0 0.0
    %6118 = vmatpush2.msra.mxu0 0.0
    %6119 = vmatprep.subr.mxu0 0.0
    %6120 = vmatpush2.msra.mxu0 0.0
    %6121 = vmatprep.subr.mxu0 0.0
    %6122 = vmatpush2.msra.mxu0 0.0
    %6123 = vmatprep.subr.mxu0 0.0
    %6124 = vmatpush2.msra.mxu0 0.0
    %6125 = vmatprep.subr.mxu0 0.0
    %6126 = vmatpush2.msra.mxu0 0.0
    %6127 = vmatprep.subr.mxu0 0.0
    %6128 = vmatpush2.msra.mxu0 0.0
    %6129 = vmatprep.subr.mxu0 0.0
    %6130 = vmatpush2.msra.mxu0 0.0
    %6131 = vmatprep.subr.mxu0 0.0
    %6132 = vmatpush2.msra.mxu0 0.0
    %6133 = vmatprep.subr.mxu0 0.0
    %6134 = vmatpush2.msra.mxu0 0.0
    %6135 = vmatprep.subr.mxu0 0.0
    %6136 = vmatpush2.msra.mxu0 0.0
    %6137 = vmatprep.subr.mxu0 0.0
    %6138 = vmatpush2.msra.mxu0 0.0
    %6139 = vmatprep.subr.mxu0 0.0
    %6140 = vmatpush2.msra.mxu0 0.0
    %6141 = vmatprep.subr.mxu0 0.0
    %6142 = vmatpush2.msra.mxu0 0.0
    %6143 = vmatprep.subr.mxu0 0.0
    %6144 = vmatpush2.msra.mxu0 0.0
    %6145 = vmatprep.subr.mxu0 0.0
    %6146 = vmatpush2.msra.mxu0 0.0
    %6147 = vmatprep.mubr.f32.mxu0 0.0
    %v6148 = vand.u32 %v5530, 4294901760
    %v6149 = vsub.f32 %v5530, %v6148
    %v6150 = vand.u32 %v6149, 4294901760
    %v6151 = vsub.f32 %v6149, %v6150
    %v6152 = vand.u32 %v6151, 4294901760
    %6153 = vmatmul.mubr.f32.gmra.mxu0 %v6152
    %v6154 = vpop.f32.mrf.mxu0
    %v6155 = vadd.f32 %v2956, %v6154
    %v6156 = vpop.f32.mrf.mxu0
    %v6157 = vadd.f32 %v2958, %v6156
    %6158 = vdwg.mxu0
    %6159 = vmatprep.subr.mxu0 0.0
    %6160 = vmatpush1.msra.mxu0 0.0
    %6161 = vmatprep.subr.mxu0 0.0
    %6162 = vmatpush1.msra.mxu0 0.0
    %6163 = vmatprep.subr.mxu0 0.0
    %6164 = vmatpush1.msra.mxu0 0.0
    %6165 = vmatprep.subr.mxu0 0.0
    %6166 = vmatpush1.msra.mxu0 0.0
    %6167 = vmatprep.subr.mxu0 0.0
    %6168 = vmatpush1.msra.mxu0 0.0
    %6169 = vmatprep.subr.mxu0 0.0
    %6170 = vmatpush1.msra.mxu0 0.0
    %6171 = vmatprep.subr.mxu0 0.0
    %6172 = vmatpush1.msra.mxu0 0.0
    %6173 = vmatprep.subr.mxu0 0.0
    %6174 = vmatpush1.msra.mxu0 0.0
    %6175 = vmatprep.subr.mxu0 0.0
    %6176 = vmatpush1.msra.mxu0 0.0
    %6177 = vmatprep.subr.mxu0 0.0
    %6178 = vmatpush1.msra.mxu0 0.0
    %6179 = vmatprep.subr.mxu0 0.0
    %6180 = vmatpush1.msra.mxu0 0.0
    %6181 = vmatprep.subr.mxu0 0.0
    %6182 = vmatpush1.msra.mxu0 0.0
    %v6183 = vand.u32 %v129, 4294901760
    %v6184 = vsub.f32 %v129, %v6183
    %v6185 = vand.u32 %v6184, 4294901760
    %v6186 = vsub.f32 %v6184, %v6185
    %v6187 = vand.u32 %v6186, 4294901760
    %6188 = vmatprep.subr.mxu0 %v6187
    %v6189 = vand.u32 %v128, 4294901760
    %v6190 = vsub.f32 %v128, %v6189
    %v6191 = vand.u32 %v6190, 4294901760
    %v6192 = vsub.f32 %v6190, %v6191
    %v6193 = vand.u32 %v6192, 4294901760
    %6194 = vmatpush1.msra.mxu0 %v6193
    %v6195 = vand.u32 %v121, 4294901760
    %v6196 = vsub.f32 %v121, %v6195
    %v6197 = vand.u32 %v6196, 4294901760
    %v6198 = vsub.f32 %v6196, %v6197
    %v6199 = vand.u32 %v6198, 4294901760
    %6200 = vmatprep.subr.mxu0 %v6199
    %v6201 = vand.u32 %v120, 4294901760
    %v6202 = vsub.f32 %v120, %v6201
    %v6203 = vand.u32 %v6202, 4294901760
    %v6204 = vsub.f32 %v6202, %v6203
    %v6205 = vand.u32 %v6204, 4294901760
    %6206 = vmatpush1.msra.mxu0 %v6205
    %v6207 = vand.u32 %v113, 4294901760
    %v6208 = vsub.f32 %v113, %v6207
    %v6209 = vand.u32 %v6208, 4294901760
    %v6210 = vsub.f32 %v6208, %v6209
    %v6211 = vand.u32 %v6210, 4294901760
    %6212 = vmatprep.subr.mxu0 %v6211
    %v6213 = vand.u32 %v112, 4294901760
    %v6214 = vsub.f32 %v112, %v6213
    %v6215 = vand.u32 %v6214, 4294901760
    %v6216 = vsub.f32 %v6214, %v6215
    %v6217 = vand.u32 %v6216, 4294901760
    %6218 = vmatpush1.msra.mxu0 %v6217
    %v6219 = vand.u32 %v105, 4294901760
    %v6220 = vsub.f32 %v105, %v6219
    %v6221 = vand.u32 %v6220, 4294901760
    %v6222 = vsub.f32 %v6220, %v6221
    %v6223 = vand.u32 %v6222, 4294901760
    %6224 = vmatprep.subr.mxu0 %v6223
    %v6225 = vand.u32 %v104, 4294901760
    %v6226 = vsub.f32 %v104, %v6225
    %v6227 = vand.u32 %v6226, 4294901760
    %v6228 = vsub.f32 %v6226, %v6227
    %v6229 = vand.u32 %v6228, 4294901760
    %6230 = vmatpush1.msra.mxu0 %v6229
    %6231 = vmatprep.subr.mxu0 0.0
    %6232 = vmatpush2.msra.mxu0 0.0
    %6233 = vmatprep.subr.mxu0 0.0
    %6234 = vmatpush2.msra.mxu0 0.0
    %6235 = vmatprep.subr.mxu0 0.0
    %6236 = vmatpush2.msra.mxu0 0.0
    %6237 = vmatprep.subr.mxu0 0.0
    %6238 = vmatpush2.msra.mxu0 0.0
    %6239 = vmatprep.subr.mxu0 0.0
    %6240 = vmatpush2.msra.mxu0 0.0
    %6241 = vmatprep.subr.mxu0 0.0
    %6242 = vmatpush2.msra.mxu0 0.0
    %6243 = vmatprep.subr.mxu0 0.0
    %6244 = vmatpush2.msra.mxu0 0.0
    %6245 = vmatprep.subr.mxu0 0.0
    %6246 = vmatpush2.msra.mxu0 0.0
    %6247 = vmatprep.subr.mxu0 0.0
    %6248 = vmatpush2.msra.mxu0 0.0
    %6249 = vmatprep.subr.mxu0 0.0
    %6250 = vmatpush2.msra.mxu0 0.0
    %6251 = vmatprep.subr.mxu0 0.0
    %6252 = vmatpush2.msra.mxu0 0.0
    %6253 = vmatprep.subr.mxu0 0.0
    %6254 = vmatpush2.msra.mxu0 0.0
    %6255 = vmatprep.subr.mxu0 0.0
    %6256 = vmatpush2.msra.mxu0 0.0
    %6257 = vmatprep.subr.mxu0 0.0
    %6258 = vmatpush2.msra.mxu0 0.0
    %6259 = vmatprep.subr.mxu0 0.0
    %6260 = vmatpush2.msra.mxu0 0.0
    %6261 = vmatprep.subr.mxu0 0.0
    %6262 = vmatpush2.msra.mxu0 0.0
    %6263 = vmatprep.mubr.f32.mxu0 0.0
    %v6264 = vand.u32 %v5530, 4294901760
    %6265 = vmatmul.mubr.f32.gmra.mxu0 %v6264
    %v6266 = vpop.f32.mrf.mxu0
    %v6267 = vadd.f32 %v6155, %v6266
    %v6268 = vpop.f32.mrf.mxu0
    %v6269 = vadd.f32 %v6157, %v6268
    %6270 = vdwg.mxu0
    %6271 = vmatprep.subr.mxu0 0.0
    %6272 = vmatpush1.msra.mxu0 0.0
    %6273 = vmatprep.subr.mxu0 0.0
    %6274 = vmatpush1.msra.mxu0 0.0
    %6275 = vmatprep.subr.mxu0 0.0
    %6276 = vmatpush1.msra.mxu0 0.0
    %6277 = vmatprep.subr.mxu0 0.0
    %6278 = vmatpush1.msra.mxu0 0.0
    %6279 = vmatprep.subr.mxu0 0.0
    %6280 = vmatpush1.msra.mxu0 0.0
    %6281 = vmatprep.subr.mxu0 0.0
    %6282 = vmatpush1.msra.mxu0 0.0
    %6283 = vmatprep.subr.mxu0 0.0
    %6284 = vmatpush1.msra.mxu0 0.0
    %6285 = vmatprep.subr.mxu0 0.0
    %6286 = vmatpush1.msra.mxu0 0.0
    %6287 = vmatprep.subr.mxu0 0.0
    %6288 = vmatpush1.msra.mxu0 0.0
    %6289 = vmatprep.subr.mxu0 0.0
    %6290 = vmatpush1.msra.mxu0 0.0
    %6291 = vmatprep.subr.mxu0 0.0
    %6292 = vmatpush1.msra.mxu0 0.0
    %6293 = vmatprep.subr.mxu0 0.0
    %6294 = vmatpush1.msra.mxu0 0.0
    %v6295 = vand.u32 %v129, 4294901760
    %v6296 = vsub.f32 %v129, %v6295
    %6297 = vmatprep.subr.mxu0 %v6296
    %v6298 = vand.u32 %v128, 4294901760
    %v6299 = vsub.f32 %v128, %v6298
    %6300 = vmatpush1.msra.mxu0 %v6299
    %v6301 = vand.u32 %v121, 4294901760
    %v6302 = vsub.f32 %v121, %v6301
    %6303 = vmatprep.subr.mxu0 %v6302
    %v6304 = vand.u32 %v120, 4294901760
    %v6305 = vsub.f32 %v120, %v6304
    %6306 = vmatpush1.msra.mxu0 %v6305
    %v6307 = vand.u32 %v113, 4294901760
    %v6308 = vsub.f32 %v113, %v6307
    %6309 = vmatprep.subr.mxu0 %v6308
    %v6310 = vand.u32 %v112, 4294901760
    %v6311 = vsub.f32 %v112, %v6310
    %6312 = vmatpush1.msra.mxu0 %v6311
    %v6313 = vand.u32 %v105, 4294901760
    %v6314 = vsub.f32 %v105, %v6313
    %6315 = vmatprep.subr.mxu0 %v6314
    %v6316 = vand.u32 %v104, 4294901760
    %v6317 = vsub.f32 %v104, %v6316
    %6318 = vmatpush1.msra.mxu0 %v6317
    %6319 = vmatprep.subr.mxu0 0.0
    %6320 = vmatpush2.msra.mxu0 0.0
    %6321 = vmatprep.subr.mxu0 0.0
    %6322 = vmatpush2.msra.mxu0 0.0
    %6323 = vmatprep.subr.mxu0 0.0
    %6324 = vmatpush2.msra.mxu0 0.0
    %6325 = vmatprep.subr.mxu0 0.0
    %6326 = vmatpush2.msra.mxu0 0.0
    %6327 = vmatprep.subr.mxu0 0.0
    %6328 = vmatpush2.msra.mxu0 0.0
    %6329 = vmatprep.subr.mxu0 0.0
    %6330 = vmatpush2.msra.mxu0 0.0
    %6331 = vmatprep.subr.mxu0 0.0
    %6332 = vmatpush2.msra.mxu0 0.0
    %6333 = vmatprep.subr.mxu0 0.0
    %6334 = vmatpush2.msra.mxu0 0.0
    %6335 = vmatprep.subr.mxu0 0.0
    %6336 = vmatpush2.msra.mxu0 0.0
    %6337 = vmatprep.subr.mxu0 0.0
    %6338 = vmatpush2.msra.mxu0 0.0
    %6339 = vmatprep.subr.mxu0 0.0
    %6340 = vmatpush2.msra.mxu0 0.0
    %6341 = vmatprep.subr.mxu0 0.0
    %6342 = vmatpush2.msra.mxu0 0.0
    %6343 = vmatprep.subr.mxu0 0.0
    %6344 = vmatpush2.msra.mxu0 0.0
    %6345 = vmatprep.subr.mxu0 0.0
    %6346 = vmatpush2.msra.mxu0 0.0
    %6347 = vmatprep.subr.mxu0 0.0
    %6348 = vmatpush2.msra.mxu0 0.0
    %6349 = vmatprep.subr.mxu0 0.0
    %6350 = vmatpush2.msra.mxu0 0.0
    %6351 = vmatprep.mubr.f32.mxu0 0.0
    %v6352 = vand.u32 %v5530, 4294901760
    %v6353 = vsub.f32 %v5530, %v6352
    %6354 = vmatmul.mubr.f32.gmra.mxu0 %v6353
    %v6355 = vpop.f32.mrf.mxu0
    %v6356 = vadd.f32 %v6267, %v6355
    %v6357 = vpop.f32.mrf.mxu0
    %v6358 = vadd.f32 %v6269, %v6357
    %6359 = vdwg.mxu0
    %6360 = vmatprep.subr.mxu0 0.0
    %6361 = vmatpush1.msra.mxu0 0.0
    %6362 = vmatprep.subr.mxu0 0.0
    %6363 = vmatpush1.msra.mxu0 0.0
    %6364 = vmatprep.subr.mxu0 0.0
    %6365 = vmatpush1.msra.mxu0 0.0
    %6366 = vmatprep.subr.mxu0 0.0
    %6367 = vmatpush1.msra.mxu0 0.0
    %6368 = vmatprep.subr.mxu0 0.0
    %6369 = vmatpush1.msra.mxu0 0.0
    %6370 = vmatprep.subr.mxu0 0.0
    %6371 = vmatpush1.msra.mxu0 0.0
    %6372 = vmatprep.subr.mxu0 0.0
    %6373 = vmatpush1.msra.mxu0 0.0
    %6374 = vmatprep.subr.mxu0 0.0
    %6375 = vmatpush1.msra.mxu0 0.0
    %6376 = vmatprep.subr.mxu0 0.0
    %6377 = vmatpush1.msra.mxu0 0.0
    %6378 = vmatprep.subr.mxu0 0.0
    %6379 = vmatpush1.msra.mxu0 0.0
    %6380 = vmatprep.subr.mxu0 0.0
    %6381 = vmatpush1.msra.mxu0 0.0
    %6382 = vmatprep.subr.mxu0 0.0
    %6383 = vmatpush1.msra.mxu0 0.0
    %v6384 = vand.u32 %v129, 4294901760
    %6385 = vmatprep.subr.mxu0 %v6384
    %v6386 = vand.u32 %v128, 4294901760
    %6387 = vmatpush1.msra.mxu0 %v6386
    %v6388 = vand.u32 %v121, 4294901760
    %6389 = vmatprep.subr.mxu0 %v6388
    %v6390 = vand.u32 %v120, 4294901760
    %6391 = vmatpush1.msra.mxu0 %v6390
    %v6392 = vand.u32 %v113, 4294901760
    %6393 = vmatprep.subr.mxu0 %v6392
    %v6394 = vand.u32 %v112, 4294901760
    %6395 = vmatpush1.msra.mxu0 %v6394
    %v6396 = vand.u32 %v105, 4294901760
    %6397 = vmatprep.subr.mxu0 %v6396
    %v6398 = vand.u32 %v104, 4294901760
    %6399 = vmatpush1.msra.mxu0 %v6398
    %6400 = vmatprep.subr.mxu0 0.0
    %6401 = vmatpush2.msra.mxu0 0.0
    %6402 = vmatprep.subr.mxu0 0.0
    %6403 = vmatpush2.msra.mxu0 0.0
    %6404 = vmatprep.subr.mxu0 0.0
    %6405 = vmatpush2.msra.mxu0 0.0
    %6406 = vmatprep.subr.mxu0 0.0
    %6407 = vmatpush2.msra.mxu0 0.0
    %6408 = vmatprep.subr.mxu0 0.0
    %6409 = vmatpush2.msra.mxu0 0.0
    %6410 = vmatprep.subr.mxu0 0.0
    %6411 = vmatpush2.msra.mxu0 0.0
    %6412 = vmatprep.subr.mxu0 0.0
    %6413 = vmatpush2.msra.mxu0 0.0
    %6414 = vmatprep.subr.mxu0 0.0
    %6415 = vmatpush2.msra.mxu0 0.0
    %6416 = vmatprep.subr.mxu0 0.0
    %6417 = vmatpush2.msra.mxu0 0.0
    %6418 = vmatprep.subr.mxu0 0.0
    %6419 = vmatpush2.msra.mxu0 0.0
    %6420 = vmatprep.subr.mxu0 0.0
    %6421 = vmatpush2.msra.mxu0 0.0
    %6422 = vmatprep.subr.mxu0 0.0
    %6423 = vmatpush2.msra.mxu0 0.0
    %6424 = vmatprep.subr.mxu0 0.0
    %6425 = vmatpush2.msra.mxu0 0.0
    %6426 = vmatprep.subr.mxu0 0.0
    %6427 = vmatpush2.msra.mxu0 0.0
    %6428 = vmatprep.subr.mxu0 0.0
    %6429 = vmatpush2.msra.mxu0 0.0
    %6430 = vmatprep.subr.mxu0 0.0
    %6431 = vmatpush2.msra.mxu0 0.0
    %6432 = vmatprep.mubr.f32.mxu0 0.0
    %v6433 = vand.u32 %v5530, 4294901760
    %v6434 = vsub.f32 %v5530, %v6433
    %v6435 = vand.u32 %v6434, 4294901760
    %6436 = vmatmul.mubr.f32.gmra.mxu0 %v6435
    %v6437 = vpop.f32.mrf.mxu0
    %v6438 = vadd.f32 %v6356, %v6437
    %v6439 = vpop.f32.mrf.mxu0
    %v6440 = vadd.f32 %v6358, %v6439
    %6441 = vdwg.mxu0
    %6442 = vmatprep.subr.mxu0 0.0
    %6443 = vmatpush1.msra.mxu0 0.0
    %6444 = vmatprep.subr.mxu0 0.0
    %6445 = vmatpush1.msra.mxu0 0.0
    %6446 = vmatprep.subr.mxu0 0.0
    %6447 = vmatpush1.msra.mxu0 0.0
    %6448 = vmatprep.subr.mxu0 0.0
    %6449 = vmatpush1.msra.mxu0 0.0
    %6450 = vmatprep.subr.mxu0 0.0
    %6451 = vmatpush1.msra.mxu0 0.0
    %6452 = vmatprep.subr.mxu0 0.0
    %6453 = vmatpush1.msra.mxu0 0.0
    %6454 = vmatprep.subr.mxu0 0.0
    %6455 = vmatpush1.msra.mxu0 0.0
    %6456 = vmatprep.subr.mxu0 0.0
    %6457 = vmatpush1.msra.mxu0 0.0
    %6458 = vmatprep.subr.mxu0 0.0
    %6459 = vmatpush1.msra.mxu0 0.0
    %6460 = vmatprep.subr.mxu0 0.0
    %6461 = vmatpush1.msra.mxu0 0.0
    %6462 = vmatprep.subr.mxu0 0.0
    %6463 = vmatpush1.msra.mxu0 0.0
    %6464 = vmatprep.subr.mxu0 0.0
    %6465 = vmatpush1.msra.mxu0 0.0
    %v6466 = vand.u32 %v129, 4294901760
    %v6467 = vsub.f32 %v129, %v6466
    %v6468 = vand.u32 %v6467, 4294901760
    %6469 = vmatprep.subr.mxu0 %v6468
    %v6470 = vand.u32 %v128, 4294901760
    %v6471 = vsub.f32 %v128, %v6470
    %v6472 = vand.u32 %v6471, 4294901760
    %6473 = vmatpush1.msra.mxu0 %v6472
    %v6474 = vand.u32 %v121, 4294901760
    %v6475 = vsub.f32 %v121, %v6474
    %v6476 = vand.u32 %v6475, 4294901760
    %6477 = vmatprep.subr.mxu0 %v6476
    %v6478 = vand.u32 %v120, 4294901760
    %v6479 = vsub.f32 %v120, %v6478
    %v6480 = vand.u32 %v6479, 4294901760
    %6481 = vmatpush1.msra.mxu0 %v6480
    %v6482 = vand.u32 %v113, 4294901760
    %v6483 = vsub.f32 %v113, %v6482
    %v6484 = vand.u32 %v6483, 4294901760
    %6485 = vmatprep.subr.mxu0 %v6484
    %v6486 = vand.u32 %v112, 4294901760
    %v6487 = vsub.f32 %v112, %v6486
    %v6488 = vand.u32 %v6487, 4294901760
    %6489 = vmatpush1.msra.mxu0 %v6488
    %v6490 = vand.u32 %v105, 4294901760
    %v6491 = vsub.f32 %v105, %v6490
    %v6492 = vand.u32 %v6491, 4294901760
    %6493 = vmatprep.subr.mxu0 %v6492
    %v6494 = vand.u32 %v104, 4294901760
    %v6495 = vsub.f32 %v104, %v6494
    %v6496 = vand.u32 %v6495, 4294901760
    %6497 = vmatpush1.msra.mxu0 %v6496
    %6498 = vmatprep.subr.mxu0 0.0
    %6499 = vmatpush2.msra.mxu0 0.0
    %6500 = vmatprep.subr.mxu0 0.0
    %6501 = vmatpush2.msra.mxu0 0.0
    %6502 = vmatprep.subr.mxu0 0.0
    %6503 = vmatpush2.msra.mxu0 0.0
    %6504 = vmatprep.subr.mxu0 0.0
    %6505 = vmatpush2.msra.mxu0 0.0
    %6506 = vmatprep.subr.mxu0 0.0
    %6507 = vmatpush2.msra.mxu0 0.0
    %6508 = vmatprep.subr.mxu0 0.0
    %6509 = vmatpush2.msra.mxu0 0.0
    %6510 = vmatprep.subr.mxu0 0.0
    %6511 = vmatpush2.msra.mxu0 0.0
    %6512 = vmatprep.subr.mxu0 0.0
    %6513 = vmatpush2.msra.mxu0 0.0
    %6514 = vmatprep.subr.mxu0 0.0
    %6515 = vmatpush2.msra.mxu0 0.0
    %6516 = vmatprep.subr.mxu0 0.0
    %6517 = vmatpush2.msra.mxu0 0.0
    %6518 = vmatprep.subr.mxu0 0.0
    %6519 = vmatpush2.msra.mxu0 0.0
    %6520 = vmatprep.subr.mxu0 0.0
    %6521 = vmatpush2.msra.mxu0 0.0
    %6522 = vmatprep.subr.mxu0 0.0
    %6523 = vmatpush2.msra.mxu0 0.0
    %6524 = vmatprep.subr.mxu0 0.0
    %6525 = vmatpush2.msra.mxu0 0.0
    %6526 = vmatprep.subr.mxu0 0.0
    %6527 = vmatpush2.msra.mxu0 0.0
    %6528 = vmatprep.subr.mxu0 0.0
    %6529 = vmatpush2.msra.mxu0 0.0
    %6530 = vmatprep.mubr.f32.mxu0 0.0
    %v6531 = vand.u32 %v5530, 4294901760
    %6532 = vmatmul.mubr.f32.gmra.mxu0 %v6531
    %v6533 = vpop.f32.mrf.mxu0
    %v6534 = vadd.f32 %v6438, %v6533
    %v6535 = vpop.f32.mrf.mxu0
    %v6536 = vadd.f32 %v6440, %v6535
    %6537 = vdwg.mxu0
    %6538 = vmatprep.subr.mxu0 0.0
    %6539 = vmatpush1.msra.mxu0 0.0
    %6540 = vmatprep.subr.mxu0 0.0
    %6541 = vmatpush1.msra.mxu0 0.0
    %6542 = vmatprep.subr.mxu0 0.0
    %6543 = vmatpush1.msra.mxu0 0.0
    %6544 = vmatprep.subr.mxu0 0.0
    %6545 = vmatpush1.msra.mxu0 0.0
    %6546 = vmatprep.subr.mxu0 0.0
    %6547 = vmatpush1.msra.mxu0 0.0
    %6548 = vmatprep.subr.mxu0 0.0
    %6549 = vmatpush1.msra.mxu0 0.0
    %6550 = vmatprep.subr.mxu0 0.0
    %6551 = vmatpush1.msra.mxu0 0.0
    %6552 = vmatprep.subr.mxu0 0.0
    %6553 = vmatpush1.msra.mxu0 0.0
    %6554 = vmatprep.subr.mxu0 0.0
    %6555 = vmatpush1.msra.mxu0 0.0
    %6556 = vmatprep.subr.mxu0 0.0
    %6557 = vmatpush1.msra.mxu0 0.0
    %6558 = vmatprep.subr.mxu0 0.0
    %6559 = vmatpush1.msra.mxu0 0.0
    %6560 = vmatprep.subr.mxu0 0.0
    %6561 = vmatpush1.msra.mxu0 0.0
    %v6562 = vand.u32 %v129, 4294901760
    %6563 = vmatprep.subr.mxu0 %v6562
    %v6564 = vand.u32 %v128, 4294901760
    %6565 = vmatpush1.msra.mxu0 %v6564
    %v6566 = vand.u32 %v121, 4294901760
    %6567 = vmatprep.subr.mxu0 %v6566
    %v6568 = vand.u32 %v120, 4294901760
    %6569 = vmatpush1.msra.mxu0 %v6568
    %v6570 = vand.u32 %v113, 4294901760
    %6571 = vmatprep.subr.mxu0 %v6570
    %v6572 = vand.u32 %v112, 4294901760
    %6573 = vmatpush1.msra.mxu0 %v6572
    %v6574 = vand.u32 %v105, 4294901760
    %6575 = vmatprep.subr.mxu0 %v6574
    %v6576 = vand.u32 %v104, 4294901760
    %6577 = vmatpush1.msra.mxu0 %v6576
    %6578 = vmatprep.subr.mxu0 0.0
    %6579 = vmatpush2.msra.mxu0 0.0
    %6580 = vmatprep.subr.mxu0 0.0
    %6581 = vmatpush2.msra.mxu0 0.0
    %6582 = vmatprep.subr.mxu0 0.0
    %6583 = vmatpush2.msra.mxu0 0.0
    %6584 = vmatprep.subr.mxu0 0.0
    %6585 = vmatpush2.msra.mxu0 0.0
    %6586 = vmatprep.subr.mxu0 0.0
    %6587 = vmatpush2.msra.mxu0 0.0
    %6588 = vmatprep.subr.mxu0 0.0
    %6589 = vmatpush2.msra.mxu0 0.0
    %6590 = vmatprep.subr.mxu0 0.0
    %6591 = vmatpush2.msra.mxu0 0.0
    %6592 = vmatprep.subr.mxu0 0.0
    %6593 = vmatpush2.msra.mxu0 0.0
    %6594 = vmatprep.subr.mxu0 0.0
    %6595 = vmatpush2.msra.mxu0 0.0
    %6596 = vmatprep.subr.mxu0 0.0
    %6597 = vmatpush2.msra.mxu0 0.0
    %6598 = vmatprep.subr.mxu0 0.0
    %6599 = vmatpush2.msra.mxu0 0.0
    %6600 = vmatprep.subr.mxu0 0.0
    %6601 = vmatpush2.msra.mxu0 0.0
    %6602 = vmatprep.subr.mxu0 0.0
    %6603 = vmatpush2.msra.mxu0 0.0
    %6604 = vmatprep.subr.mxu0 0.0
    %6605 = vmatpush2.msra.mxu0 0.0
    %6606 = vmatprep.subr.mxu0 0.0
    %6607 = vmatpush2.msra.mxu0 0.0
    %6608 = vmatprep.subr.mxu0 0.0
    %6609 = vmatpush2.msra.mxu0 0.0
    %6610 = vmatprep.mubr.f32.mxu0 0.0
    %v6611 = vand.u32 %v5530, 4294901760
    %6612 = vmatmul.mubr.f32.gmra.mxu0 %v6611
    %v6613 = vpop.f32.mrf.mxu0
    %v6614 = vadd.f32 %v6534, %v6613
    %v6615 = vpop.f32.mrf.mxu0
    %v6616 = vadd.f32 %v6536, %v6615
    %6617 = vdwg.mxu0
    %6618 = vmatprep.subr.mxu0 0.0
    %6619 = vmatpush1.msra.mxu0 0.0
    %6620 = vmatprep.subr.mxu0 0.0
    %6621 = vmatpush1.msra.mxu0 0.0
    %6622 = vmatprep.subr.mxu0 0.0
    %6623 = vmatpush1.msra.mxu0 0.0
    %6624 = vmatprep.subr.mxu0 0.0
    %6625 = vmatpush1.msra.mxu0 0.0
    %6626 = vmatprep.subr.mxu0 0.0
    %6627 = vmatpush1.msra.mxu0 0.0
    %6628 = vmatprep.subr.mxu0 0.0
    %6629 = vmatpush1.msra.mxu0 0.0
    %6630 = vmatprep.subr.mxu0 0.0
    %6631 = vmatpush1.msra.mxu0 0.0
    %6632 = vmatprep.subr.mxu0 0.0
    %6633 = vmatpush1.msra.mxu0 0.0
    %6634 = vmatprep.subr.mxu0 0.0
    %6635 = vmatpush1.msra.mxu0 0.0
    %6636 = vmatprep.subr.mxu0 0.0
    %6637 = vmatpush1.msra.mxu0 0.0
    %6638 = vmatprep.subr.mxu0 0.0
    %6639 = vmatpush1.msra.mxu0 0.0
    %6640 = vmatprep.subr.mxu0 0.0
    %6641 = vmatpush1.msra.mxu0 0.0
    %v6642 = vand.u32 %v131, 4294901760
    %6643 = vmatprep.subr.mxu0 %v6642
    %v6644 = vand.u32 %v130, 4294901760
    %6645 = vmatpush1.msra.mxu0 %v6644
    %v6646 = vand.u32 %v123, 4294901760
    %6647 = vmatprep.subr.mxu0 %v6646
    %v6648 = vand.u32 %v122, 4294901760
    %6649 = vmatpush1.msra.mxu0 %v6648
    %v6650 = vand.u32 %v115, 4294901760
    %6651 = vmatprep.subr.mxu0 %v6650
    %v6652 = vand.u32 %v114, 4294901760
    %6653 = vmatpush1.msra.mxu0 %v6652
    %v6654 = vand.u32 %v107, 4294901760
    %6655 = vmatprep.subr.mxu0 %v6654
    %v6656 = vand.u32 %v106, 4294901760
    %6657 = vmatpush1.msra.mxu0 %v6656
    %6658 = vmatprep.subr.mxu0 0.0
    %6659 = vmatpush2.msra.mxu0 0.0
    %6660 = vmatprep.subr.mxu0 0.0
    %6661 = vmatpush2.msra.mxu0 0.0
    %6662 = vmatprep.subr.mxu0 0.0
    %6663 = vmatpush2.msra.mxu0 0.0
    %6664 = vmatprep.subr.mxu0 0.0
    %6665 = vmatpush2.msra.mxu0 0.0
    %6666 = vmatprep.subr.mxu0 0.0
    %6667 = vmatpush2.msra.mxu0 0.0
    %6668 = vmatprep.subr.mxu0 0.0
    %6669 = vmatpush2.msra.mxu0 0.0
    %6670 = vmatprep.subr.mxu0 0.0
    %6671 = vmatpush2.msra.mxu0 0.0
    %6672 = vmatprep.subr.mxu0 0.0
    %6673 = vmatpush2.msra.mxu0 0.0
    %6674 = vmatprep.subr.mxu0 0.0
    %6675 = vmatpush2.msra.mxu0 0.0
    %6676 = vmatprep.subr.mxu0 0.0
    %6677 = vmatpush2.msra.mxu0 0.0
    %6678 = vmatprep.subr.mxu0 0.0
    %6679 = vmatpush2.msra.mxu0 0.0
    %6680 = vmatprep.subr.mxu0 0.0
    %6681 = vmatpush2.msra.mxu0 0.0
    %6682 = vmatprep.subr.mxu0 0.0
    %6683 = vmatpush2.msra.mxu0 0.0
    %6684 = vmatprep.subr.mxu0 0.0
    %6685 = vmatpush2.msra.mxu0 0.0
    %6686 = vmatprep.subr.mxu0 0.0
    %6687 = vmatpush2.msra.mxu0 0.0
    %6688 = vmatprep.subr.mxu0 0.0
    %6689 = vmatpush2.msra.mxu0 0.0
    %6690 = vmatprep.mubr.f32.mxu0 0.0
    %v6691 = vand.u32 %v5530, 4294901760
    %v6692 = vsub.f32 %v5530, %v6691
    %v6693 = vand.u32 %v6692, 4294901760
    %v6694 = vsub.f32 %v6692, %v6693
    %v6695 = vand.u32 %v6694, 4294901760
    %6696 = vmatmul.mubr.f32.gmra.mxu0 %v6695
    %v6697 = vpop.f32.mrf.mxu0
    %v6698 = vadd.f32 %v4240, %v6697
    %v6699 = vpop.f32.mrf.mxu0
    %v6700 = vadd.f32 %v4242, %v6699
    %6701 = vdwg.mxu0
    %6702 = vmatprep.subr.mxu0 0.0
    %6703 = vmatpush1.msra.mxu0 0.0
    %6704 = vmatprep.subr.mxu0 0.0
    %6705 = vmatpush1.msra.mxu0 0.0
    %6706 = vmatprep.subr.mxu0 0.0
    %6707 = vmatpush1.msra.mxu0 0.0
    %6708 = vmatprep.subr.mxu0 0.0
    %6709 = vmatpush1.msra.mxu0 0.0
    %6710 = vmatprep.subr.mxu0 0.0
    %6711 = vmatpush1.msra.mxu0 0.0
    %6712 = vmatprep.subr.mxu0 0.0
    %6713 = vmatpush1.msra.mxu0 0.0
    %6714 = vmatprep.subr.mxu0 0.0
    %6715 = vmatpush1.msra.mxu0 0.0
    %6716 = vmatprep.subr.mxu0 0.0
    %6717 = vmatpush1.msra.mxu0 0.0
    %6718 = vmatprep.subr.mxu0 0.0
    %6719 = vmatpush1.msra.mxu0 0.0
    %6720 = vmatprep.subr.mxu0 0.0
    %6721 = vmatpush1.msra.mxu0 0.0
    %6722 = vmatprep.subr.mxu0 0.0
    %6723 = vmatpush1.msra.mxu0 0.0
    %6724 = vmatprep.subr.mxu0 0.0
    %6725 = vmatpush1.msra.mxu0 0.0
    %v6726 = vand.u32 %v131, 4294901760
    %v6727 = vsub.f32 %v131, %v6726
    %v6728 = vand.u32 %v6727, 4294901760
    %v6729 = vsub.f32 %v6727, %v6728
    %v6730 = vand.u32 %v6729, 4294901760
    %6731 = vmatprep.subr.mxu0 %v6730
    %v6732 = vand.u32 %v130, 4294901760
    %v6733 = vsub.f32 %v130, %v6732
    %v6734 = vand.u32 %v6733, 4294901760
    %v6735 = vsub.f32 %v6733, %v6734
    %v6736 = vand.u32 %v6735, 4294901760
    %6737 = vmatpush1.msra.mxu0 %v6736
    %v6738 = vand.u32 %v123, 4294901760
    %v6739 = vsub.f32 %v123, %v6738
    %v6740 = vand.u32 %v6739, 4294901760
    %v6741 = vsub.f32 %v6739, %v6740
    %v6742 = vand.u32 %v6741, 4294901760
    %6743 = vmatprep.subr.mxu0 %v6742
    %v6744 = vand.u32 %v122, 4294901760
    %v6745 = vsub.f32 %v122, %v6744
    %v6746 = vand.u32 %v6745, 4294901760
    %v6747 = vsub.f32 %v6745, %v6746
    %v6748 = vand.u32 %v6747, 4294901760
    %6749 = vmatpush1.msra.mxu0 %v6748
    %v6750 = vand.u32 %v115, 4294901760
    %v6751 = vsub.f32 %v115, %v6750
    %v6752 = vand.u32 %v6751, 4294901760
    %v6753 = vsub.f32 %v6751, %v6752
    %v6754 = vand.u32 %v6753, 4294901760
    %6755 = vmatprep.subr.mxu0 %v6754
    %v6756 = vand.u32 %v114, 4294901760
    %v6757 = vsub.f32 %v114, %v6756
    %v6758 = vand.u32 %v6757, 4294901760
    %v6759 = vsub.f32 %v6757, %v6758
    %v6760 = vand.u32 %v6759, 4294901760
    %6761 = vmatpush1.msra.mxu0 %v6760
    %v6762 = vand.u32 %v107, 4294901760
    %v6763 = vsub.f32 %v107, %v6762
    %v6764 = vand.u32 %v6763, 4294901760
    %v6765 = vsub.f32 %v6763, %v6764
    %v6766 = vand.u32 %v6765, 4294901760
    %6767 = vmatprep.subr.mxu0 %v6766
    %v6768 = vand.u32 %v106, 4294901760
    %v6769 = vsub.f32 %v106, %v6768
    %v6770 = vand.u32 %v6769, 4294901760
    %v6771 = vsub.f32 %v6769, %v6770
    %v6772 = vand.u32 %v6771, 4294901760
    %6773 = vmatpush1.msra.mxu0 %v6772
    %6774 = vmatprep.subr.mxu0 0.0
    %6775 = vmatpush2.msra.mxu0 0.0
    %6776 = vmatprep.subr.mxu0 0.0
    %6777 = vmatpush2.msra.mxu0 0.0
    %6778 = vmatprep.subr.mxu0 0.0
    %6779 = vmatpush2.msra.mxu0 0.0
    %6780 = vmatprep.subr.mxu0 0.0
    %6781 = vmatpush2.msra.mxu0 0.0
    %6782 = vmatprep.subr.mxu0 0.0
    %6783 = vmatpush2.msra.mxu0 0.0
    %6784 = vmatprep.subr.mxu0 0.0
    %6785 = vmatpush2.msra.mxu0 0.0
    %6786 = vmatprep.subr.mxu0 0.0
    %6787 = vmatpush2.msra.mxu0 0.0
    %6788 = vmatprep.subr.mxu0 0.0
    %6789 = vmatpush2.msra.mxu0 0.0
    %6790 = vmatprep.subr.mxu0 0.0
    %6791 = vmatpush2.msra.mxu0 0.0
    %6792 = vmatprep.subr.mxu0 0.0
    %6793 = vmatpush2.msra.mxu0 0.0
    %6794 = vmatprep.subr.mxu0 0.0
    %6795 = vmatpush2.msra.mxu0 0.0
    %6796 = vmatprep.subr.mxu0 0.0
    %6797 = vmatpush2.msra.mxu0 0.0
    %6798 = vmatprep.subr.mxu0 0.0
    %6799 = vmatpush2.msra.mxu0 0.0
    %6800 = vmatprep.subr.mxu0 0.0
    %6801 = vmatpush2.msra.mxu0 0.0
    %6802 = vmatprep.subr.mxu0 0.0
    %6803 = vmatpush2.msra.mxu0 0.0
    %6804 = vmatprep.subr.mxu0 0.0
    %6805 = vmatpush2.msra.mxu0 0.0
    %6806 = vmatprep.mubr.f32.mxu0 0.0
    %v6807 = vand.u32 %v5530, 4294901760
    %6808 = vmatmul.mubr.f32.gmra.mxu0 %v6807
    %v6809 = vpop.f32.mrf.mxu0
    %v6810 = vadd.f32 %v6698, %v6809
    %v6811 = vpop.f32.mrf.mxu0
    %v6812 = vadd.f32 %v6700, %v6811
    %6813 = vdwg.mxu0
    %6814 = vmatprep.subr.mxu0 0.0
    %6815 = vmatpush1.msra.mxu0 0.0
    %6816 = vmatprep.subr.mxu0 0.0
    %6817 = vmatpush1.msra.mxu0 0.0
    %6818 = vmatprep.subr.mxu0 0.0
    %6819 = vmatpush1.msra.mxu0 0.0
    %6820 = vmatprep.subr.mxu0 0.0
    %6821 = vmatpush1.msra.mxu0 0.0
    %6822 = vmatprep.subr.mxu0 0.0
    %6823 = vmatpush1.msra.mxu0 0.0
    %6824 = vmatprep.subr.mxu0 0.0
    %6825 = vmatpush1.msra.mxu0 0.0
    %6826 = vmatprep.subr.mxu0 0.0
    %6827 = vmatpush1.msra.mxu0 0.0
    %6828 = vmatprep.subr.mxu0 0.0
    %6829 = vmatpush1.msra.mxu0 0.0
    %6830 = vmatprep.subr.mxu0 0.0
    %6831 = vmatpush1.msra.mxu0 0.0
    %6832 = vmatprep.subr.mxu0 0.0
    %6833 = vmatpush1.msra.mxu0 0.0
    %6834 = vmatprep.subr.mxu0 0.0
    %6835 = vmatpush1.msra.mxu0 0.0
    %6836 = vmatprep.subr.mxu0 0.0
    %6837 = vmatpush1.msra.mxu0 0.0
    %v6838 = vand.u32 %v131, 4294901760
    %v6839 = vsub.f32 %v131, %v6838
    %6840 = vmatprep.subr.mxu0 %v6839
    %v6841 = vand.u32 %v130, 4294901760
    %v6842 = vsub.f32 %v130, %v6841
    %6843 = vmatpush1.msra.mxu0 %v6842
    %v6844 = vand.u32 %v123, 4294901760
    %v6845 = vsub.f32 %v123, %v6844
    %6846 = vmatprep.subr.mxu0 %v6845
    %v6847 = vand.u32 %v122, 4294901760
    %v6848 = vsub.f32 %v122, %v6847
    %6849 = vmatpush1.msra.mxu0 %v6848
    %v6850 = vand.u32 %v115, 4294901760
    %v6851 = vsub.f32 %v115, %v6850
    %6852 = vmatprep.subr.mxu0 %v6851
    %v6853 = vand.u32 %v114, 4294901760
    %v6854 = vsub.f32 %v114, %v6853
    %6855 = vmatpush1.msra.mxu0 %v6854
    %v6856 = vand.u32 %v107, 4294901760
    %v6857 = vsub.f32 %v107, %v6856
    %6858 = vmatprep.subr.mxu0 %v6857
    %v6859 = vand.u32 %v106, 4294901760
    %v6860 = vsub.f32 %v106, %v6859
    %6861 = vmatpush1.msra.mxu0 %v6860
    %6862 = vmatprep.subr.mxu0 0.0
    %6863 = vmatpush2.msra.mxu0 0.0
    %6864 = vmatprep.subr.mxu0 0.0
    %6865 = vmatpush2.msra.mxu0 0.0
    %6866 = vmatprep.subr.mxu0 0.0
    %6867 = vmatpush2.msra.mxu0 0.0
    %6868 = vmatprep.subr.mxu0 0.0
    %6869 = vmatpush2.msra.mxu0 0.0
    %6870 = vmatprep.subr.mxu0 0.0
    %6871 = vmatpush2.msra.mxu0 0.0
    %6872 = vmatprep.subr.mxu0 0.0
    %6873 = vmatpush2.msra.mxu0 0.0
    %6874 = vmatprep.subr.mxu0 0.0
    %6875 = vmatpush2.msra.mxu0 0.0
    %6876 = vmatprep.subr.mxu0 0.0
    %6877 = vmatpush2.msra.mxu0 0.0
    %6878 = vmatprep.subr.mxu0 0.0
    %6879 = vmatpush2.msra.mxu0 0.0
    %6880 = vmatprep.subr.mxu0 0.0
    %6881 = vmatpush2.msra.mxu0 0.0
    %6882 = vmatprep.subr.mxu0 0.0
    %6883 = vmatpush2.msra.mxu0 0.0
    %6884 = vmatprep.subr.mxu0 0.0
    %6885 = vmatpush2.msra.mxu0 0.0
    %6886 = vmatprep.subr.mxu0 0.0
    %6887 = vmatpush2.msra.mxu0 0.0
    %6888 = vmatprep.subr.mxu0 0.0
    %6889 = vmatpush2.msra.mxu0 0.0
    %6890 = vmatprep.subr.mxu0 0.0
    %6891 = vmatpush2.msra.mxu0 0.0
    %6892 = vmatprep.subr.mxu0 0.0
    %6893 = vmatpush2.msra.mxu0 0.0
    %6894 = vmatprep.mubr.f32.mxu0 0.0
    %v6895 = vand.u32 %v5530, 4294901760
    %v6896 = vsub.f32 %v5530, %v6895
    %6897 = vmatmul.mubr.f32.gmra.mxu0 %v6896
    %v6898 = vpop.f32.mrf.mxu0
    %v6899 = vadd.f32 %v6810, %v6898
    %v6900 = vpop.f32.mrf.mxu0
    %v6901 = vadd.f32 %v6812, %v6900
    %6902 = vdwg.mxu0
    %6903 = vmatprep.subr.mxu0 0.0
    %6904 = vmatpush1.msra.mxu0 0.0
    %6905 = vmatprep.subr.mxu0 0.0
    %6906 = vmatpush1.msra.mxu0 0.0
    %6907 = vmatprep.subr.mxu0 0.0
    %6908 = vmatpush1.msra.mxu0 0.0
    %6909 = vmatprep.subr.mxu0 0.0
    %6910 = vmatpush1.msra.mxu0 0.0
    %6911 = vmatprep.subr.mxu0 0.0
    %6912 = vmatpush1.msra.mxu0 0.0
    %6913 = vmatprep.subr.mxu0 0.0
    %6914 = vmatpush1.msra.mxu0 0.0
    %6915 = vmatprep.subr.mxu0 0.0
    %6916 = vmatpush1.msra.mxu0 0.0
    %6917 = vmatprep.subr.mxu0 0.0
    %6918 = vmatpush1.msra.mxu0 0.0
    %6919 = vmatprep.subr.mxu0 0.0
    %6920 = vmatpush1.msra.mxu0 0.0
    %6921 = vmatprep.subr.mxu0 0.0
    %6922 = vmatpush1.msra.mxu0 0.0
    %6923 = vmatprep.subr.mxu0 0.0
    %6924 = vmatpush1.msra.mxu0 0.0
    %6925 = vmatprep.subr.mxu0 0.0
    %6926 = vmatpush1.msra.mxu0 0.0
    %v6927 = vand.u32 %v131, 4294901760
    %6928 = vmatprep.subr.mxu0 %v6927
    %v6929 = vand.u32 %v130, 4294901760
    %6930 = vmatpush1.msra.mxu0 %v6929
    %v6931 = vand.u32 %v123, 4294901760
    %6932 = vmatprep.subr.mxu0 %v6931
    %v6933 = vand.u32 %v122, 4294901760
    %6934 = vmatpush1.msra.mxu0 %v6933
    %v6935 = vand.u32 %v115, 4294901760
    %6936 = vmatprep.subr.mxu0 %v6935
    %v6937 = vand.u32 %v114, 4294901760
    %6938 = vmatpush1.msra.mxu0 %v6937
    %v6939 = vand.u32 %v107, 4294901760
    %6940 = vmatprep.subr.mxu0 %v6939
    %v6941 = vand.u32 %v106, 4294901760
    %6942 = vmatpush1.msra.mxu0 %v6941
    %6943 = vmatprep.subr.mxu0 0.0
    %6944 = vmatpush2.msra.mxu0 0.0
    %6945 = vmatprep.subr.mxu0 0.0
    %6946 = vmatpush2.msra.mxu0 0.0
    %6947 = vmatprep.subr.mxu0 0.0
    %6948 = vmatpush2.msra.mxu0 0.0
    %6949 = vmatprep.subr.mxu0 0.0
    %6950 = vmatpush2.msra.mxu0 0.0
    %6951 = vmatprep.subr.mxu0 0.0
    %6952 = vmatpush2.msra.mxu0 0.0
    %6953 = vmatprep.subr.mxu0 0.0
    %6954 = vmatpush2.msra.mxu0 0.0
    %6955 = vmatprep.subr.mxu0 0.0
    %6956 = vmatpush2.msra.mxu0 0.0
    %6957 = vmatprep.subr.mxu0 0.0
    %6958 = vmatpush2.msra.mxu0 0.0
    %6959 = vmatprep.subr.mxu0 0.0
    %6960 = vmatpush2.msra.mxu0 0.0
    %6961 = vmatprep.subr.mxu0 0.0
    %6962 = vmatpush2.msra.mxu0 0.0
    %6963 = vmatprep.subr.mxu0 0.0
    %6964 = vmatpush2.msra.mxu0 0.0
    %6965 = vmatprep.subr.mxu0 0.0
    %6966 = vmatpush2.msra.mxu0 0.0
    %6967 = vmatprep.subr.mxu0 0.0
    %6968 = vmatpush2.msra.mxu0 0.0
    %6969 = vmatprep.subr.mxu0 0.0
    %6970 = vmatpush2.msra.mxu0 0.0
    %6971 = vmatprep.subr.mxu0 0.0
    %6972 = vmatpush2.msra.mxu0 0.0
    %6973 = vmatprep.subr.mxu0 0.0
    %6974 = vmatpush2.msra.mxu0 0.0
    %6975 = vmatprep.mubr.f32.mxu0 0.0
    %v6976 = vand.u32 %v5530, 4294901760
    %v6977 = vsub.f32 %v5530, %v6976
    %v6978 = vand.u32 %v6977, 4294901760
    %6979 = vmatmul.mubr.f32.gmra.mxu0 %v6978
    %v6980 = vpop.f32.mrf.mxu0
    %v6981 = vadd.f32 %v6899, %v6980
    %v6982 = vpop.f32.mrf.mxu0
    %v6983 = vadd.f32 %v6901, %v6982
    %6984 = vdwg.mxu0
    %6985 = vmatprep.subr.mxu0 0.0
    %6986 = vmatpush1.msra.mxu0 0.0
    %6987 = vmatprep.subr.mxu0 0.0
    %6988 = vmatpush1.msra.mxu0 0.0
    %6989 = vmatprep.subr.mxu0 0.0
    %6990 = vmatpush1.msra.mxu0 0.0
    %6991 = vmatprep.subr.mxu0 0.0
    %6992 = vmatpush1.msra.mxu0 0.0
    %6993 = vmatprep.subr.mxu0 0.0
    %6994 = vmatpush1.msra.mxu0 0.0
    %6995 = vmatprep.subr.mxu0 0.0
    %6996 = vmatpush1.msra.mxu0 0.0
    %6997 = vmatprep.subr.mxu0 0.0
    %6998 = vmatpush1.msra.mxu0 0.0
    %6999 = vmatprep.subr.mxu0 0.0
    %7000 = vmatpush1.msra.mxu0 0.0
    %7001 = vmatprep.subr.mxu0 0.0
    %7002 = vmatpush1.msra.mxu0 0.0
    %7003 = vmatprep.subr.mxu0 0.0
    %7004 = vmatpush1.msra.mxu0 0.0
    %7005 = vmatprep.subr.mxu0 0.0
    %7006 = vmatpush1.msra.mxu0 0.0
    %7007 = vmatprep.subr.mxu0 0.0
    %7008 = vmatpush1.msra.mxu0 0.0
    %v7009 = vand.u32 %v131, 4294901760
    %v7010 = vsub.f32 %v131, %v7009
    %v7011 = vand.u32 %v7010, 4294901760
    %7012 = vmatprep.subr.mxu0 %v7011
    %v7013 = vand.u32 %v130, 4294901760
    %v7014 = vsub.f32 %v130, %v7013
    %v7015 = vand.u32 %v7014, 4294901760
    %7016 = vmatpush1.msra.mxu0 %v7015
    %v7017 = vand.u32 %v123, 4294901760
    %v7018 = vsub.f32 %v123, %v7017
    %v7019 = vand.u32 %v7018, 4294901760
    %7020 = vmatprep.subr.mxu0 %v7019
    %v7021 = vand.u32 %v122, 4294901760
    %v7022 = vsub.f32 %v122, %v7021
    %v7023 = vand.u32 %v7022, 4294901760
    %7024 = vmatpush1.msra.mxu0 %v7023
    %v7025 = vand.u32 %v115, 4294901760
    %v7026 = vsub.f32 %v115, %v7025
    %v7027 = vand.u32 %v7026, 4294901760
    %7028 = vmatprep.subr.mxu0 %v7027
    %v7029 = vand.u32 %v114, 4294901760
    %v7030 = vsub.f32 %v114, %v7029
    %v7031 = vand.u32 %v7030, 4294901760
    %7032 = vmatpush1.msra.mxu0 %v7031
    %v7033 = vand.u32 %v107, 4294901760
    %v7034 = vsub.f32 %v107, %v7033
    %v7035 = vand.u32 %v7034, 4294901760
    %7036 = vmatprep.subr.mxu0 %v7035
    %v7037 = vand.u32 %v106, 4294901760
    %v7038 = vsub.f32 %v106, %v7037
    %v7039 = vand.u32 %v7038, 4294901760
    %7040 = vmatpush1.msra.mxu0 %v7039
    %7041 = vmatprep.subr.mxu0 0.0
    %7042 = vmatpush2.msra.mxu0 0.0
    %7043 = vmatprep.subr.mxu0 0.0
    %7044 = vmatpush2.msra.mxu0 0.0
    %7045 = vmatprep.subr.mxu0 0.0
    %7046 = vmatpush2.msra.mxu0 0.0
    %7047 = vmatprep.subr.mxu0 0.0
    %7048 = vmatpush2.msra.mxu0 0.0
    %7049 = vmatprep.subr.mxu0 0.0
    %7050 = vmatpush2.msra.mxu0 0.0
    %7051 = vmatprep.subr.mxu0 0.0
    %7052 = vmatpush2.msra.mxu0 0.0
    %7053 = vmatprep.subr.mxu0 0.0
    %7054 = vmatpush2.msra.mxu0 0.0
    %7055 = vmatprep.subr.mxu0 0.0
    %7056 = vmatpush2.msra.mxu0 0.0
    %7057 = vmatprep.subr.mxu0 0.0
    %7058 = vmatpush2.msra.mxu0 0.0
    %7059 = vmatprep.subr.mxu0 0.0
    %7060 = vmatpush2.msra.mxu0 0.0
    %7061 = vmatprep.subr.mxu0 0.0
    %7062 = vmatpush2.msra.mxu0 0.0
    %7063 = vmatprep.subr.mxu0 0.0
    %7064 = vmatpush2.msra.mxu0 0.0
    %7065 = vmatprep.subr.mxu0 0.0
    %7066 = vmatpush2.msra.mxu0 0.0
    %7067 = vmatprep.subr.mxu0 0.0
    %7068 = vmatpush2.msra.mxu0 0.0
    %7069 = vmatprep.subr.mxu0 0.0
    %7070 = vmatpush2.msra.mxu0 0.0
    %7071 = vmatprep.subr.mxu0 0.0
    %7072 = vmatpush2.msra.mxu0 0.0
    %7073 = vmatprep.mubr.f32.mxu0 0.0
    %v7074 = vand.u32 %v5530, 4294901760
    %7075 = vmatmul.mubr.f32.gmra.mxu0 %v7074
    %v7076 = vpop.f32.mrf.mxu0
    %v7077 = vadd.f32 %v6981, %v7076
    %v7078 = vpop.f32.mrf.mxu0
    %v7079 = vadd.f32 %v6983, %v7078
    %7080 = vdwg.mxu0
    %7081 = vmatprep.subr.mxu0 0.0
    %7082 = vmatpush1.msra.mxu0 0.0
    %7083 = vmatprep.subr.mxu0 0.0
    %7084 = vmatpush1.msra.mxu0 0.0
    %7085 = vmatprep.subr.mxu0 0.0
    %7086 = vmatpush1.msra.mxu0 0.0
    %7087 = vmatprep.subr.mxu0 0.0
    %7088 = vmatpush1.msra.mxu0 0.0
    %7089 = vmatprep.subr.mxu0 0.0
    %7090 = vmatpush1.msra.mxu0 0.0
    %7091 = vmatprep.subr.mxu0 0.0
    %7092 = vmatpush1.msra.mxu0 0.0
    %7093 = vmatprep.subr.mxu0 0.0
    %7094 = vmatpush1.msra.mxu0 0.0
    %7095 = vmatprep.subr.mxu0 0.0
    %7096 = vmatpush1.msra.mxu0 0.0
    %7097 = vmatprep.subr.mxu0 0.0
    %7098 = vmatpush1.msra.mxu0 0.0
    %7099 = vmatprep.subr.mxu0 0.0
    %7100 = vmatpush1.msra.mxu0 0.0
    %7101 = vmatprep.subr.mxu0 0.0
    %7102 = vmatpush1.msra.mxu0 0.0
    %7103 = vmatprep.subr.mxu0 0.0
    %7104 = vmatpush1.msra.mxu0 0.0
    %v7105 = vand.u32 %v131, 4294901760
    %7106 = vmatprep.subr.mxu0 %v7105
    %v7107 = vand.u32 %v130, 4294901760
    %7108 = vmatpush1.msra.mxu0 %v7107
    %v7109 = vand.u32 %v123, 4294901760
    %7110 = vmatprep.subr.mxu0 %v7109
    %v7111 = vand.u32 %v122, 4294901760
    %7112 = vmatpush1.msra.mxu0 %v7111
    %v7113 = vand.u32 %v115, 4294901760
    %7114 = vmatprep.subr.mxu0 %v7113
    %v7115 = vand.u32 %v114, 4294901760
    %7116 = vmatpush1.msra.mxu0 %v7115
    %v7117 = vand.u32 %v107, 4294901760
    %7118 = vmatprep.subr.mxu0 %v7117
    %v7119 = vand.u32 %v106, 4294901760
    %7120 = vmatpush1.msra.mxu0 %v7119
    %7121 = vmatprep.subr.mxu0 0.0
    %7122 = vmatpush2.msra.mxu0 0.0
    %7123 = vmatprep.subr.mxu0 0.0
    %7124 = vmatpush2.msra.mxu0 0.0
    %7125 = vmatprep.subr.mxu0 0.0
    %7126 = vmatpush2.msra.mxu0 0.0
    %7127 = vmatprep.subr.mxu0 0.0
    %7128 = vmatpush2.msra.mxu0 0.0
    %7129 = vmatprep.subr.mxu0 0.0
    %7130 = vmatpush2.msra.mxu0 0.0
    %7131 = vmatprep.subr.mxu0 0.0
    %7132 = vmatpush2.msra.mxu0 0.0
    %7133 = vmatprep.subr.mxu0 0.0
    %7134 = vmatpush2.msra.mxu0 0.0
    %7135 = vmatprep.subr.mxu0 0.0
    %7136 = vmatpush2.msra.mxu0 0.0
    %7137 = vmatprep.subr.mxu0 0.0
    %7138 = vmatpush2.msra.mxu0 0.0
    %7139 = vmatprep.subr.mxu0 0.0
    %7140 = vmatpush2.msra.mxu0 0.0
    %7141 = vmatprep.subr.mxu0 0.0
    %7142 = vmatpush2.msra.mxu0 0.0
    %7143 = vmatprep.subr.mxu0 0.0
    %7144 = vmatpush2.msra.mxu0 0.0
    %7145 = vmatprep.subr.mxu0 0.0
    %7146 = vmatpush2.msra.mxu0 0.0
    %7147 = vmatprep.subr.mxu0 0.0
    %7148 = vmatpush2.msra.mxu0 0.0
    %7149 = vmatprep.subr.mxu0 0.0
    %7150 = vmatpush2.msra.mxu0 0.0
    %7151 = vmatprep.subr.mxu0 0.0
    %7152 = vmatpush2.msra.mxu0 0.0
    %7153 = vmatprep.mubr.f32.mxu0 0.0
    %v7154 = vand.u32 %v5530, 4294901760
    %7155 = vmatmul.mubr.f32.gmra.mxu0 %v7154
    %v7156 = vpop.f32.mrf.mxu0
    %v7157 = vadd.f32 %v7077, %v7156
    %v7158 = vpop.f32.mrf.mxu0
    %v7159 = vadd.f32 %v7079, %v7158
    %7160 = vdwg.mxu0
    %7161 = vmatprep.subr.mxu0 0.0
    %7162 = vmatpush1.msra.mxu0 0.0
    %7163 = vmatprep.subr.mxu0 0.0
    %7164 = vmatpush1.msra.mxu0 0.0
    %7165 = vmatprep.subr.mxu0 0.0
    %7166 = vmatpush1.msra.mxu0 0.0
    %7167 = vmatprep.subr.mxu0 0.0
    %7168 = vmatpush1.msra.mxu0 0.0
    %7169 = vmatprep.subr.mxu0 0.0
    %7170 = vmatpush1.msra.mxu0 0.0
    %7171 = vmatprep.subr.mxu0 0.0
    %7172 = vmatpush1.msra.mxu0 0.0
    %7173 = vmatprep.subr.mxu0 0.0
    %7174 = vmatpush1.msra.mxu0 0.0
    %7175 = vmatprep.subr.mxu0 0.0
    %7176 = vmatpush1.msra.mxu0 0.0
    %7177 = vmatprep.subr.mxu0 0.0
    %7178 = vmatpush1.msra.mxu0 0.0
    %7179 = vmatprep.subr.mxu0 0.0
    %7180 = vmatpush1.msra.mxu0 0.0
    %7181 = vmatprep.subr.mxu0 0.0
    %7182 = vmatpush1.msra.mxu0 0.0
    %7183 = vmatprep.subr.mxu0 0.0
    %7184 = vmatpush1.msra.mxu0 0.0
    %v7185 = vand.u32 %v133, 4294901760
    %7186 = vmatprep.subr.mxu0 %v7185
    %v7187 = vand.u32 %v132, 4294901760
    %7188 = vmatpush1.msra.mxu0 %v7187
    %v7189 = vand.u32 %v125, 4294901760
    %7190 = vmatprep.subr.mxu0 %v7189
    %v7191 = vand.u32 %v124, 4294901760
    %7192 = vmatpush1.msra.mxu0 %v7191
    %v7193 = vand.u32 %v117, 4294901760
    %7194 = vmatprep.subr.mxu0 %v7193
    %v7195 = vand.u32 %v116, 4294901760
    %7196 = vmatpush1.msra.mxu0 %v7195
    %v7197 = vand.u32 %v109, 4294901760
    %7198 = vmatprep.subr.mxu0 %v7197
    %v7199 = vand.u32 %v108, 4294901760
    %7200 = vmatpush1.msra.mxu0 %v7199
    %7201 = vmatprep.subr.mxu0 0.0
    %7202 = vmatpush2.msra.mxu0 0.0
    %7203 = vmatprep.subr.mxu0 0.0
    %7204 = vmatpush2.msra.mxu0 0.0
    %7205 = vmatprep.subr.mxu0 0.0
    %7206 = vmatpush2.msra.mxu0 0.0
    %7207 = vmatprep.subr.mxu0 0.0
    %7208 = vmatpush2.msra.mxu0 0.0
    %7209 = vmatprep.subr.mxu0 0.0
    %7210 = vmatpush2.msra.mxu0 0.0
    %7211 = vmatprep.subr.mxu0 0.0
    %7212 = vmatpush2.msra.mxu0 0.0
    %7213 = vmatprep.subr.mxu0 0.0
    %7214 = vmatpush2.msra.mxu0 0.0
    %7215 = vmatprep.subr.mxu0 0.0
    %7216 = vmatpush2.msra.mxu0 0.0
    %7217 = vmatprep.subr.mxu0 0.0
    %7218 = vmatpush2.msra.mxu0 0.0
    %7219 = vmatprep.subr.mxu0 0.0
    %7220 = vmatpush2.msra.mxu0 0.0
    %7221 = vmatprep.subr.mxu0 0.0
    %7222 = vmatpush2.msra.mxu0 0.0
    %7223 = vmatprep.subr.mxu0 0.0
    %7224 = vmatpush2.msra.mxu0 0.0
    %7225 = vmatprep.subr.mxu0 0.0
    %7226 = vmatpush2.msra.mxu0 0.0
    %7227 = vmatprep.subr.mxu0 0.0
    %7228 = vmatpush2.msra.mxu0 0.0
    %7229 = vmatprep.subr.mxu0 0.0
    %7230 = vmatpush2.msra.mxu0 0.0
    %7231 = vmatprep.subr.mxu0 0.0
    %7232 = vmatpush2.msra.mxu0 0.0
    %7233 = vmatprep.mubr.f32.mxu0 0.0
    %v7234 = vand.u32 %v5530, 4294901760
    %v7235 = vsub.f32 %v5530, %v7234
    %v7236 = vand.u32 %v7235, 4294901760
    %v7237 = vsub.f32 %v7235, %v7236
    %v7238 = vand.u32 %v7237, 4294901760
    %7239 = vmatmul.mubr.f32.gmra.mxu0 %v7238
    %v7240 = vpop.f32.mrf.mxu0
    %v7241 = vadd.f32 %v5524, %v7240
    %v7242 = vpop.f32.mrf.mxu0
    %v7243 = vadd.f32 %v5526, %v7242
    %7244 = vdwg.mxu0
    %7245 = vmatprep.subr.mxu0 0.0
    %7246 = vmatpush1.msra.mxu0 0.0
    %7247 = vmatprep.subr.mxu0 0.0
    %7248 = vmatpush1.msra.mxu0 0.0
    %7249 = vmatprep.subr.mxu0 0.0
    %7250 = vmatpush1.msra.mxu0 0.0
    %7251 = vmatprep.subr.mxu0 0.0
    %7252 = vmatpush1.msra.mxu0 0.0
    %7253 = vmatprep.subr.mxu0 0.0
    %7254 = vmatpush1.msra.mxu0 0.0
    %7255 = vmatprep.subr.mxu0 0.0
    %7256 = vmatpush1.msra.mxu0 0.0
    %7257 = vmatprep.subr.mxu0 0.0
    %7258 = vmatpush1.msra.mxu0 0.0
    %7259 = vmatprep.subr.mxu0 0.0
    %7260 = vmatpush1.msra.mxu0 0.0
    %7261 = vmatprep.subr.mxu0 0.0
    %7262 = vmatpush1.msra.mxu0 0.0
    %7263 = vmatprep.subr.mxu0 0.0
    %7264 = vmatpush1.msra.mxu0 0.0
    %7265 = vmatprep.subr.mxu0 0.0
    %7266 = vmatpush1.msra.mxu0 0.0
    %7267 = vmatprep.subr.mxu0 0.0
    %7268 = vmatpush1.msra.mxu0 0.0
    %v7269 = vand.u32 %v133, 4294901760
    %v7270 = vsub.f32 %v133, %v7269
    %v7271 = vand.u32 %v7270, 4294901760
    %v7272 = vsub.f32 %v7270, %v7271
    %v7273 = vand.u32 %v7272, 4294901760
    %7274 = vmatprep.subr.mxu0 %v7273
    %v7275 = vand.u32 %v132, 4294901760
    %v7276 = vsub.f32 %v132, %v7275
    %v7277 = vand.u32 %v7276, 4294901760
    %v7278 = vsub.f32 %v7276, %v7277
    %v7279 = vand.u32 %v7278, 4294901760
    %7280 = vmatpush1.msra.mxu0 %v7279
    %v7281 = vand.u32 %v125, 4294901760
    %v7282 = vsub.f32 %v125, %v7281
    %v7283 = vand.u32 %v7282, 4294901760
    %v7284 = vsub.f32 %v7282, %v7283
    %v7285 = vand.u32 %v7284, 4294901760
    %7286 = vmatprep.subr.mxu0 %v7285
    %v7287 = vand.u32 %v124, 4294901760
    %v7288 = vsub.f32 %v124, %v7287
    %v7289 = vand.u32 %v7288, 4294901760
    %v7290 = vsub.f32 %v7288, %v7289
    %v7291 = vand.u32 %v7290, 4294901760
    %7292 = vmatpush1.msra.mxu0 %v7291
    %v7293 = vand.u32 %v117, 4294901760
    %v7294 = vsub.f32 %v117, %v7293
    %v7295 = vand.u32 %v7294, 4294901760
    %v7296 = vsub.f32 %v7294, %v7295
    %v7297 = vand.u32 %v7296, 4294901760
    %7298 = vmatprep.subr.mxu0 %v7297
    %v7299 = vand.u32 %v116, 4294901760
    %v7300 = vsub.f32 %v116, %v7299
    %v7301 = vand.u32 %v7300, 4294901760
    %v7302 = vsub.f32 %v7300, %v7301
    %v7303 = vand.u32 %v7302, 4294901760
    %7304 = vmatpush1.msra.mxu0 %v7303
    %v7305 = vand.u32 %v109, 4294901760
    %v7306 = vsub.f32 %v109, %v7305
    %v7307 = vand.u32 %v7306, 4294901760
    %v7308 = vsub.f32 %v7306, %v7307
    %v7309 = vand.u32 %v7308, 4294901760
    %7310 = vmatprep.subr.mxu0 %v7309
    %v7311 = vand.u32 %v108, 4294901760
    %v7312 = vsub.f32 %v108, %v7311
    %v7313 = vand.u32 %v7312, 4294901760
    %v7314 = vsub.f32 %v7312, %v7313
    %v7315 = vand.u32 %v7314, 4294901760
    %7316 = vmatpush1.msra.mxu0 %v7315
    %7317 = vmatprep.subr.mxu0 0.0
    %7318 = vmatpush2.msra.mxu0 0.0
    %7319 = vmatprep.subr.mxu0 0.0
    %7320 = vmatpush2.msra.mxu0 0.0
    %7321 = vmatprep.subr.mxu0 0.0
    %7322 = vmatpush2.msra.mxu0 0.0
    %7323 = vmatprep.subr.mxu0 0.0
    %7324 = vmatpush2.msra.mxu0 0.0
    %7325 = vmatprep.subr.mxu0 0.0
    %7326 = vmatpush2.msra.mxu0 0.0
    %7327 = vmatprep.subr.mxu0 0.0
    %7328 = vmatpush2.msra.mxu0 0.0
    %7329 = vmatprep.subr.mxu0 0.0
    %7330 = vmatpush2.msra.mxu0 0.0
    %7331 = vmatprep.subr.mxu0 0.0
    %7332 = vmatpush2.msra.mxu0 0.0
    %7333 = vmatprep.subr.mxu0 0.0
    %7334 = vmatpush2.msra.mxu0 0.0
    %7335 = vmatprep.subr.mxu0 0.0
    %7336 = vmatpush2.msra.mxu0 0.0
    %7337 = vmatprep.subr.mxu0 0.0
    %7338 = vmatpush2.msra.mxu0 0.0
    %7339 = vmatprep.subr.mxu0 0.0
    %7340 = vmatpush2.msra.mxu0 0.0
    %7341 = vmatprep.subr.mxu0 0.0
    %7342 = vmatpush2.msra.mxu0 0.0
    %7343 = vmatprep.subr.mxu0 0.0
    %7344 = vmatpush2.msra.mxu0 0.0
    %7345 = vmatprep.subr.mxu0 0.0
    %7346 = vmatpush2.msra.mxu0 0.0
    %7347 = vmatprep.subr.mxu0 0.0
    %7348 = vmatpush2.msra.mxu0 0.0
    %7349 = vmatprep.mubr.f32.mxu0 0.0
    %v7350 = vand.u32 %v5530, 4294901760
    %7351 = vmatmul.mubr.f32.gmra.mxu0 %v7350
    %v7352 = vpop.f32.mrf.mxu0
    %v7353 = vadd.f32 %v7241, %v7352
    %v7354 = vpop.f32.mrf.mxu0
    %v7355 = vadd.f32 %v7243, %v7354
    %7356 = vdwg.mxu0
    %7357 = vmatprep.subr.mxu0 0.0
    %7358 = vmatpush1.msra.mxu0 0.0
    %7359 = vmatprep.subr.mxu0 0.0
    %7360 = vmatpush1.msra.mxu0 0.0
    %7361 = vmatprep.subr.mxu0 0.0
    %7362 = vmatpush1.msra.mxu0 0.0
    %7363 = vmatprep.subr.mxu0 0.0
    %7364 = vmatpush1.msra.mxu0 0.0
    %7365 = vmatprep.subr.mxu0 0.0
    %7366 = vmatpush1.msra.mxu0 0.0
    %7367 = vmatprep.subr.mxu0 0.0
    %7368 = vmatpush1.msra.mxu0 0.0
    %7369 = vmatprep.subr.mxu0 0.0
    %7370 = vmatpush1.msra.mxu0 0.0
    %7371 = vmatprep.subr.mxu0 0.0
    %7372 = vmatpush1.msra.mxu0 0.0
    %7373 = vmatprep.subr.mxu0 0.0
    %7374 = vmatpush1.msra.mxu0 0.0
    %7375 = vmatprep.subr.mxu0 0.0
    %7376 = vmatpush1.msra.mxu0 0.0
    %7377 = vmatprep.subr.mxu0 0.0
    %7378 = vmatpush1.msra.mxu0 0.0
    %7379 = vmatprep.subr.mxu0 0.0
    %7380 = vmatpush1.msra.mxu0 0.0
    %v7381 = vand.u32 %v133, 4294901760
    %v7382 = vsub.f32 %v133, %v7381
    %7383 = vmatprep.subr.mxu0 %v7382
    %v7384 = vand.u32 %v132, 4294901760
    %v7385 = vsub.f32 %v132, %v7384
    %7386 = vmatpush1.msra.mxu0 %v7385
    %v7387 = vand.u32 %v125, 4294901760
    %v7388 = vsub.f32 %v125, %v7387
    %7389 = vmatprep.subr.mxu0 %v7388
    %v7390 = vand.u32 %v124, 4294901760
    %v7391 = vsub.f32 %v124, %v7390
    %7392 = vmatpush1.msra.mxu0 %v7391
    %v7393 = vand.u32 %v117, 4294901760
    %v7394 = vsub.f32 %v117, %v7393
    %7395 = vmatprep.subr.mxu0 %v7394
    %v7396 = vand.u32 %v116, 4294901760
    %v7397 = vsub.f32 %v116, %v7396
    %7398 = vmatpush1.msra.mxu0 %v7397
    %v7399 = vand.u32 %v109, 4294901760
    %v7400 = vsub.f32 %v109, %v7399
    %7401 = vmatprep.subr.mxu0 %v7400
    %v7402 = vand.u32 %v108, 4294901760
    %v7403 = vsub.f32 %v108, %v7402
    %7404 = vmatpush1.msra.mxu0 %v7403
    %7405 = vmatprep.subr.mxu0 0.0
    %7406 = vmatpush2.msra.mxu0 0.0
    %7407 = vmatprep.subr.mxu0 0.0
    %7408 = vmatpush2.msra.mxu0 0.0
    %7409 = vmatprep.subr.mxu0 0.0
    %7410 = vmatpush2.msra.mxu0 0.0
    %7411 = vmatprep.subr.mxu0 0.0
    %7412 = vmatpush2.msra.mxu0 0.0
    %7413 = vmatprep.subr.mxu0 0.0
    %7414 = vmatpush2.msra.mxu0 0.0
    %7415 = vmatprep.subr.mxu0 0.0
    %7416 = vmatpush2.msra.mxu0 0.0
    %7417 = vmatprep.subr.mxu0 0.0
    %7418 = vmatpush2.msra.mxu0 0.0
    %7419 = vmatprep.subr.mxu0 0.0
    %7420 = vmatpush2.msra.mxu0 0.0
    %7421 = vmatprep.subr.mxu0 0.0
    %7422 = vmatpush2.msra.mxu0 0.0
    %7423 = vmatprep.subr.mxu0 0.0
    %7424 = vmatpush2.msra.mxu0 0.0
    %7425 = vmatprep.subr.mxu0 0.0
    %7426 = vmatpush2.msra.mxu0 0.0
    %7427 = vmatprep.subr.mxu0 0.0
    %7428 = vmatpush2.msra.mxu0 0.0
    %7429 = vmatprep.subr.mxu0 0.0
    %7430 = vmatpush2.msra.mxu0 0.0
    %7431 = vmatprep.subr.mxu0 0.0
    %7432 = vmatpush2.msra.mxu0 0.0
    %7433 = vmatprep.subr.mxu0 0.0
    %7434 = vmatpush2.msra.mxu0 0.0
    %7435 = vmatprep.subr.mxu0 0.0
    %7436 = vmatpush2.msra.mxu0 0.0
    %7437 = vmatprep.mubr.f32.mxu0 0.0
    %v7438 = vand.u32 %v5530, 4294901760
    %v7439 = vsub.f32 %v5530, %v7438
    %7440 = vmatmul.mubr.f32.gmra.mxu0 %v7439
    %v7441 = vpop.f32.mrf.mxu0
    %v7442 = vadd.f32 %v7353, %v7441
    %v7443 = vpop.f32.mrf.mxu0
    %v7444 = vadd.f32 %v7355, %v7443
    %7445 = vdwg.mxu0
    %7446 = vmatprep.subr.mxu0 0.0
    %7447 = vmatpush1.msra.mxu0 0.0
    %7448 = vmatprep.subr.mxu0 0.0
    %7449 = vmatpush1.msra.mxu0 0.0
    %7450 = vmatprep.subr.mxu0 0.0
    %7451 = vmatpush1.msra.mxu0 0.0
    %7452 = vmatprep.subr.mxu0 0.0
    %7453 = vmatpush1.msra.mxu0 0.0
    %7454 = vmatprep.subr.mxu0 0.0
    %7455 = vmatpush1.msra.mxu0 0.0
    %7456 = vmatprep.subr.mxu0 0.0
    %7457 = vmatpush1.msra.mxu0 0.0
    %7458 = vmatprep.subr.mxu0 0.0
    %7459 = vmatpush1.msra.mxu0 0.0
    %7460 = vmatprep.subr.mxu0 0.0
    %7461 = vmatpush1.msra.mxu0 0.0
    %7462 = vmatprep.subr.mxu0 0.0
    %7463 = vmatpush1.msra.mxu0 0.0
    %7464 = vmatprep.subr.mxu0 0.0
    %7465 = vmatpush1.msra.mxu0 0.0
    %7466 = vmatprep.subr.mxu0 0.0
    %7467 = vmatpush1.msra.mxu0 0.0
    %7468 = vmatprep.subr.mxu0 0.0
    %7469 = vmatpush1.msra.mxu0 0.0
    %v7470 = vand.u32 %v133, 4294901760
    %7471 = vmatprep.subr.mxu0 %v7470
    %v7472 = vand.u32 %v132, 4294901760
    %7473 = vmatpush1.msra.mxu0 %v7472
    %v7474 = vand.u32 %v125, 4294901760
    %7475 = vmatprep.subr.mxu0 %v7474
    %v7476 = vand.u32 %v124, 4294901760
    %7477 = vmatpush1.msra.mxu0 %v7476
    %v7478 = vand.u32 %v117, 4294901760
    %7479 = vmatprep.subr.mxu0 %v7478
    %v7480 = vand.u32 %v116, 4294901760
    %7481 = vmatpush1.msra.mxu0 %v7480
    %v7482 = vand.u32 %v109, 4294901760
    %7483 = vmatprep.subr.mxu0 %v7482
    %v7484 = vand.u32 %v108, 4294901760
    %7485 = vmatpush1.msra.mxu0 %v7484
    %7486 = vmatprep.subr.mxu0 0.0
    %7487 = vmatpush2.msra.mxu0 0.0
    %7488 = vmatprep.subr.mxu0 0.0
    %7489 = vmatpush2.msra.mxu0 0.0
    %7490 = vmatprep.subr.mxu0 0.0
    %7491 = vmatpush2.msra.mxu0 0.0
    %7492 = vmatprep.subr.mxu0 0.0
    %7493 = vmatpush2.msra.mxu0 0.0
    %7494 = vmatprep.subr.mxu0 0.0
    %7495 = vmatpush2.msra.mxu0 0.0
    %7496 = vmatprep.subr.mxu0 0.0
    %7497 = vmatpush2.msra.mxu0 0.0
    %7498 = vmatprep.subr.mxu0 0.0
    %7499 = vmatpush2.msra.mxu0 0.0
    %7500 = vmatprep.subr.mxu0 0.0
    %7501 = vmatpush2.msra.mxu0 0.0
    %7502 = vmatprep.subr.mxu0 0.0
    %7503 = vmatpush2.msra.mxu0 0.0
    %7504 = vmatprep.subr.mxu0 0.0
    %7505 = vmatpush2.msra.mxu0 0.0
    %7506 = vmatprep.subr.mxu0 0.0
    %7507 = vmatpush2.msra.mxu0 0.0
    %7508 = vmatprep.subr.mxu0 0.0
    %7509 = vmatpush2.msra.mxu0 0.0
    %7510 = vmatprep.subr.mxu0 0.0
    %7511 = vmatpush2.msra.mxu0 0.0
    %7512 = vmatprep.subr.mxu0 0.0
    %7513 = vmatpush2.msra.mxu0 0.0
    %7514 = vmatprep.subr.mxu0 0.0
    %7515 = vmatpush2.msra.mxu0 0.0
    %7516 = vmatprep.subr.mxu0 0.0
    %7517 = vmatpush2.msra.mxu0 0.0
    %7518 = vmatprep.mubr.f32.mxu0 0.0
    %v7519 = vand.u32 %v5530, 4294901760
    %v7520 = vsub.f32 %v5530, %v7519
    %v7521 = vand.u32 %v7520, 4294901760
    %7522 = vmatmul.mubr.f32.gmra.mxu0 %v7521
    %v7523 = vpop.f32.mrf.mxu0
    %v7524 = vadd.f32 %v7442, %v7523
    %v7525 = vpop.f32.mrf.mxu0
    %v7526 = vadd.f32 %v7444, %v7525
    %7527 = vdwg.mxu0
    %7528 = vmatprep.subr.mxu0 0.0
    %7529 = vmatpush1.msra.mxu0 0.0
    %7530 = vmatprep.subr.mxu0 0.0
    %7531 = vmatpush1.msra.mxu0 0.0
    %7532 = vmatprep.subr.mxu0 0.0
    %7533 = vmatpush1.msra.mxu0 0.0
    %7534 = vmatprep.subr.mxu0 0.0
    %7535 = vmatpush1.msra.mxu0 0.0
    %7536 = vmatprep.subr.mxu0 0.0
    %7537 = vmatpush1.msra.mxu0 0.0
    %7538 = vmatprep.subr.mxu0 0.0
    %7539 = vmatpush1.msra.mxu0 0.0
    %7540 = vmatprep.subr.mxu0 0.0
    %7541 = vmatpush1.msra.mxu0 0.0
    %7542 = vmatprep.subr.mxu0 0.0
    %7543 = vmatpush1.msra.mxu0 0.0
    %7544 = vmatprep.subr.mxu0 0.0
    %7545 = vmatpush1.msra.mxu0 0.0
    %7546 = vmatprep.subr.mxu0 0.0
    %7547 = vmatpush1.msra.mxu0 0.0
    %7548 = vmatprep.subr.mxu0 0.0
    %7549 = vmatpush1.msra.mxu0 0.0
    %7550 = vmatprep.subr.mxu0 0.0
    %7551 = vmatpush1.msra.mxu0 0.0
    %v7552 = vand.u32 %v133, 4294901760
    %v7553 = vsub.f32 %v133, %v7552
    %v7554 = vand.u32 %v7553, 4294901760
    %7555 = vmatprep.subr.mxu0 %v7554
    %v7556 = vand.u32 %v132, 4294901760
    %v7557 = vsub.f32 %v132, %v7556
    %v7558 = vand.u32 %v7557, 4294901760
    %7559 = vmatpush1.msra.mxu0 %v7558
    %v7560 = vand.u32 %v125, 4294901760
    %v7561 = vsub.f32 %v125, %v7560
    %v7562 = vand.u32 %v7561, 4294901760
    %7563 = vmatprep.subr.mxu0 %v7562
    %v7564 = vand.u32 %v124, 4294901760
    %v7565 = vsub.f32 %v124, %v7564
    %v7566 = vand.u32 %v7565, 4294901760
    %7567 = vmatpush1.msra.mxu0 %v7566
    %v7568 = vand.u32 %v117, 4294901760
    %v7569 = vsub.f32 %v117, %v7568
    %v7570 = vand.u32 %v7569, 4294901760
    %7571 = vmatprep.subr.mxu0 %v7570
    %v7572 = vand.u32 %v116, 4294901760
    %v7573 = vsub.f32 %v116, %v7572
    %v7574 = vand.u32 %v7573, 4294901760
    %7575 = vmatpush1.msra.mxu0 %v7574
    %v7576 = vand.u32 %v109, 4294901760
    %v7577 = vsub.f32 %v109, %v7576
    %v7578 = vand.u32 %v7577, 4294901760
    %7579 = vmatprep.subr.mxu0 %v7578
    %v7580 = vand.u32 %v108, 4294901760
    %v7581 = vsub.f32 %v108, %v7580
    %v7582 = vand.u32 %v7581, 4294901760
    %7583 = vmatpush1.msra.mxu0 %v7582
    %7584 = vmatprep.subr.mxu0 0.0
    %7585 = vmatpush2.msra.mxu0 0.0
    %7586 = vmatprep.subr.mxu0 0.0
    %7587 = vmatpush2.msra.mxu0 0.0
    %7588 = vmatprep.subr.mxu0 0.0
    %7589 = vmatpush2.msra.mxu0 0.0
    %7590 = vmatprep.subr.mxu0 0.0
    %7591 = vmatpush2.msra.mxu0 0.0
    %7592 = vmatprep.subr.mxu0 0.0
    %7593 = vmatpush2.msra.mxu0 0.0
    %7594 = vmatprep.subr.mxu0 0.0
    %7595 = vmatpush2.msra.mxu0 0.0
    %7596 = vmatprep.subr.mxu0 0.0
    %7597 = vmatpush2.msra.mxu0 0.0
    %7598 = vmatprep.subr.mxu0 0.0
    %7599 = vmatpush2.msra.mxu0 0.0
    %7600 = vmatprep.subr.mxu0 0.0
    %7601 = vmatpush2.msra.mxu0 0.0
    %7602 = vmatprep.subr.mxu0 0.0
    %7603 = vmatpush2.msra.mxu0 0.0
    %7604 = vmatprep.subr.mxu0 0.0
    %7605 = vmatpush2.msra.mxu0 0.0
    %7606 = vmatprep.subr.mxu0 0.0
    %7607 = vmatpush2.msra.mxu0 0.0
    %7608 = vmatprep.subr.mxu0 0.0
    %7609 = vmatpush2.msra.mxu0 0.0
    %7610 = vmatprep.subr.mxu0 0.0
    %7611 = vmatpush2.msra.mxu0 0.0
    %7612 = vmatprep.subr.mxu0 0.0
    %7613 = vmatpush2.msra.mxu0 0.0
    %7614 = vmatprep.subr.mxu0 0.0
    %7615 = vmatpush2.msra.mxu0 0.0
    %7616 = vmatprep.mubr.f32.mxu0 0.0
    %v7617 = vand.u32 %v5530, 4294901760
    %7618 = vmatmul.mubr.f32.gmra.mxu0 %v7617
    %v7619 = vpop.f32.mrf.mxu0
    %v7620 = vadd.f32 %v7524, %v7619
    %v7621 = vpop.f32.mrf.mxu0
    %v7622 = vadd.f32 %v7526, %v7621
    %7623 = vdwg.mxu0
    %7624 = vmatprep.subr.mxu0 0.0
    %7625 = vmatpush1.msra.mxu0 0.0
    %7626 = vmatprep.subr.mxu0 0.0
    %7627 = vmatpush1.msra.mxu0 0.0
    %7628 = vmatprep.subr.mxu0 0.0
    %7629 = vmatpush1.msra.mxu0 0.0
    %7630 = vmatprep.subr.mxu0 0.0
    %7631 = vmatpush1.msra.mxu0 0.0
    %7632 = vmatprep.subr.mxu0 0.0
    %7633 = vmatpush1.msra.mxu0 0.0
    %7634 = vmatprep.subr.mxu0 0.0
    %7635 = vmatpush1.msra.mxu0 0.0
    %7636 = vmatprep.subr.mxu0 0.0
    %7637 = vmatpush1.msra.mxu0 0.0
    %7638 = vmatprep.subr.mxu0 0.0
    %7639 = vmatpush1.msra.mxu0 0.0
    %7640 = vmatprep.subr.mxu0 0.0
    %7641 = vmatpush1.msra.mxu0 0.0
    %7642 = vmatprep.subr.mxu0 0.0
    %7643 = vmatpush1.msra.mxu0 0.0
    %7644 = vmatprep.subr.mxu0 0.0
    %7645 = vmatpush1.msra.mxu0 0.0
    %7646 = vmatprep.subr.mxu0 0.0
    %7647 = vmatpush1.msra.mxu0 0.0
    %v7648 = vand.u32 %v133, 4294901760
    %7649 = vmatprep.subr.mxu0 %v7648
    %v7650 = vand.u32 %v132, 4294901760
    %7651 = vmatpush1.msra.mxu0 %v7650
    %v7652 = vand.u32 %v125, 4294901760
    %7653 = vmatprep.subr.mxu0 %v7652
    %v7654 = vand.u32 %v124, 4294901760
    %7655 = vmatpush1.msra.mxu0 %v7654
    %v7656 = vand.u32 %v117, 4294901760
    %7657 = vmatprep.subr.mxu0 %v7656
    %v7658 = vand.u32 %v116, 4294901760
    %7659 = vmatpush1.msra.mxu0 %v7658
    %v7660 = vand.u32 %v109, 4294901760
    %7661 = vmatprep.subr.mxu0 %v7660
    %v7662 = vand.u32 %v108, 4294901760
    %7663 = vmatpush1.msra.mxu0 %v7662
    %7664 = vmatprep.subr.mxu0 0.0
    %7665 = vmatpush2.msra.mxu0 0.0
    %7666 = vmatprep.subr.mxu0 0.0
    %7667 = vmatpush2.msra.mxu0 0.0
    %7668 = vmatprep.subr.mxu0 0.0
    %7669 = vmatpush2.msra.mxu0 0.0
    %7670 = vmatprep.subr.mxu0 0.0
    %7671 = vmatpush2.msra.mxu0 0.0
    %7672 = vmatprep.subr.mxu0 0.0
    %7673 = vmatpush2.msra.mxu0 0.0
    %7674 = vmatprep.subr.mxu0 0.0
    %7675 = vmatpush2.msra.mxu0 0.0
    %7676 = vmatprep.subr.mxu0 0.0
    %7677 = vmatpush2.msra.mxu0 0.0
    %7678 = vmatprep.subr.mxu0 0.0
    %7679 = vmatpush2.msra.mxu0 0.0
    %7680 = vmatprep.subr.mxu0 0.0
    %7681 = vmatpush2.msra.mxu0 0.0
    %7682 = vmatprep.subr.mxu0 0.0
    %7683 = vmatpush2.msra.mxu0 0.0
    %7684 = vmatprep.subr.mxu0 0.0
    %7685 = vmatpush2.msra.mxu0 0.0
    %7686 = vmatprep.subr.mxu0 0.0
    %7687 = vmatpush2.msra.mxu0 0.0
    %7688 = vmatprep.subr.mxu0 0.0
    %7689 = vmatpush2.msra.mxu0 0.0
    %7690 = vmatprep.subr.mxu0 0.0
    %7691 = vmatpush2.msra.mxu0 0.0
    %7692 = vmatprep.subr.mxu0 0.0
    %7693 = vmatpush2.msra.mxu0 0.0
    %7694 = vmatprep.subr.mxu0 0.0
    %7695 = vmatpush2.msra.mxu0 0.0
    %7696 = vmatprep.mubr.f32.mxu0 0.0
    %v7697 = vand.u32 %v5530, 4294901760
    %7698 = vmatmul.mubr.f32.gmra.mxu0 %v7697
    %v7699 = vpop.f32.mrf.mxu0
    %v7700 = vadd.f32 %v7620, %v7699
    %v7701 = vpop.f32.mrf.mxu0
    %v7702 = vadd.f32 %v7622, %v7701
    %7703 = vdwg.mxu0
    %v7704 = vld [vmem:[#allocation10] sm:$0xff]
    %v7706 = vlaneseq
    %v7707 = vshrl.u32 %v7706, 7
    %v7708 = vsub.s32 0, %v7707
    %v7709 = vrot.slane %v7704, %v7708
    %v7710 = vlaneseq
    %v7711 = vshrl.u32 %v7710, 7
    %v7712 = vsub.s32 1, %v7711
    %v7713 = vrot.slane %v7704, %v7712
    %v7714 = vlaneseq
    %v7715 = vshrl.u32 %v7714, 7
    %v7716 = vsub.s32 2, %v7715
    %v7717 = vrot.slane %v7704, %v7716
    %v7718 = vlaneseq
    %v7719 = vshrl.u32 %v7718, 7
    %v7720 = vsub.s32 3, %v7719
    %v7721 = vrot.slane %v7704, %v7720
    %v7722 = vlaneseq
    %v7723 = vshrl.u32 %v7722, 7
    %v7724 = vsub.s32 4, %v7723
    %v7725 = vrot.slane %v7704, %v7724
    %v7726 = vlaneseq
    %v7727 = vshrl.u32 %v7726, 7
    %v7728 = vsub.s32 5, %v7727
    %v7729 = vrot.slane %v7704, %v7728
    %v7730 = vlaneseq
    %v7731 = vshrl.u32 %v7730, 7
    %v7732 = vsub.s32 6, %v7731
    %v7733 = vrot.slane %v7704, %v7732
    %v7734 = vlaneseq
    %v7735 = vshrl.u32 %v7734, 7
    %v7736 = vsub.s32 7, %v7735
    %v7737 = vrot.slane %v7704, %v7736
    %v7746 = vadd.f32 %v6071, %v7709
    %v7747 = vadd.f32 %v6073, %v7713
    %v7748 = vadd.f32 %v6614, %v7717
    %v7749 = vadd.f32 %v6616, %v7721
    %v7750 = vadd.f32 %v7157, %v7725
    %v7751 = vadd.f32 %v7159, %v7729
    %v7752 = vadd.f32 %v7700, %v7733
    %v7753 = vadd.f32 %v7702, %v7737
    %v7754 = vmul.f32 %v7746, 0.5
    %v7755 = vmul.f32 %v7747, 0.5
    %v7756 = vtanh.pop %v7754
    %v7757 = vtanh.pop %v7755
    %v7758 = vmul.f32 %v7756, 0.5
    %v7759 = vmul.f32 %v7757, 0.5
    %v7760 = vadd.f32 %v7758, 0.5
    %v7761 = vadd.f32 %v7759, 0.5
    %v7762 = vmul.f32 %v7748, 0.5
    %v7763 = vmul.f32 %v7749, 0.5
    %v7764 = vtanh.pop %v7762
    %v7765 = vtanh.pop %v7763
    %v7766 = vmul.f32 %v7764, 0.5
    %v7767 = vmul.f32 %v7765, 0.5
    %v7768 = vadd.f32 %v7766, 0.5
    %v7769 = vadd.f32 %v7767, 0.5
    %v7770 = vmul.f32 %v7752, 0.5
    %v7771 = vmul.f32 %v7753, 0.5
    %v7772 = vtanh.pop %v7770
    %v7773 = vtanh.pop %v7771
    %v7774 = vmul.f32 %v7772, 0.5
    %v7775 = vmul.f32 %v7773, 0.5
    %v7776 = vadd.f32 %v7774, 0.5
    %v7777 = vadd.f32 %v7775, 0.5
    %v7778 = vtanh.pop %v7750
    %v7779 = vtanh.pop %v7751
    %v7780 = vld [vmem:[#allocation11] sm:$0xff]
    %v7781 = vld [vmem:[#allocation11 + $0x8] sm:$0xff]
    %v7782 = vmul.f32 %v7768, %v7780
    %v7783 = vmul.f32 %v7769, %v7781
    %v7784 = vmul.f32 %v7760, %v7778
    %v7785 = vmul.f32 %v7761, %v7779
    %v7786 = vadd.f32 %v7782, %v7784
    %v7787 = vadd.f32 %v7783, %v7785
    %v7788 = vtanh.pop %v7786
    %v7789 = vtanh.pop %v7787
    %v7790 = vmul.f32 %v7776, %v7788
    %v7791 = vmul.f32 %v7777, %v7789
    %7792 = vst [vmem:[#allocation14] sm:$0xff] %v7786
    %7793 = vst [vmem:[#allocation14 + $0x8] sm:$0xff] %v7787
    %7794 = vst [vmem:[#allocation13] sm:$0xff] %v7790
    %7795 = vst [vmem:[#allocation13 + $0x8] sm:$0xff] %v7791
    // Predicated region
    $region50: #{tpu_custom_call.1} parent=1 // pred_check
      _
    $region51: #{tpu_custom_call.1} parent=1 // pred_check_branch
      %7797 = sbr.rel (0) target = $region53
    $region52: #{tpu_custom_call.1} parent=1 // pred_region
      %s7799 = ssub.s32 256, 256
      %7800 = vsyncadd [#allocation4], %s7799
      %s7802 = sshll.u32 [#allocation13], 4
      %s7803 = int_to_ptr.vmem [resolvable:$true] %s7802
      %7805 = dma.vmem_to_hbm [thread:$0]  %s7803, 256, %s6, [#allocation4]
    $region53: #{tpu_custom_call.1} parent=1 // pred_fallthru
      _
    // Predicated region
    $region54: #{tpu_custom_call.1} parent=1 // pred_check
      _
    $region55: #{tpu_custom_call.1} parent=1 // pred_check_branch
      %7807 = sbr.rel (0) target = $region57
    $region56: #{tpu_custom_call.1} parent=1 // pred_region
      %s7809 = ssub.s32 256, 256
      %7810 = vsyncadd [#allocation15], %s7809
      %s7812 = sshll.u32 [#allocation14], 4
      %s7813 = int_to_ptr.vmem [resolvable:$true] %s7812
      %7815 = dma.vmem_to_hbm [thread:$0]  %s7813, 256, %s7, [#allocation15]
    $region57: #{tpu_custom_call.1} parent=1 // pred_fallthru
      _
    // Predicated region
    $region58: #{tpu_custom_call.1} parent=1 // pred_check
      _
    $region59: #{tpu_custom_call.1} parent=1 // pred_check_branch
      %7817 = sbr.rel (0) target = $region61
    $region60: #{tpu_custom_call.1} parent=1 // pred_region
      %7818 = dma.done [#allocation4], 256
    $region61: #{tpu_custom_call.1} parent=1 // pred_fallthru
      _
    // Predicated region
    $region62: #{tpu_custom_call.1} parent=1 // pred_check
      _
    $region63: #{tpu_custom_call.1} parent=1 // pred_check_branch
      %7820 = sbr.rel (0) target = $region65
    $region64: #{tpu_custom_call.1} parent=1 // pred_region
      %7821 = dma.done [#allocation15], 256
    $region65: #{tpu_custom_call.1} parent=1 // pred_fallthru
      _
    %7822 = vsyncpa [#allocation3], 1
    %7823 = vsyncpa [#allocation6], 1
    %7824 = vsyncpa [#allocation9], 1
    %7825 = vsyncpa [#allocation12], 1
    %7826 = vsyncpa [#allocation4], 1
    %7827 = vsyncpa [#allocation15], 1

</llo_original>
